<compile_context>
chip_gen: v5e
topology: v5e:2x2
jax: 0.10.0
libtpu: 0.0.40
codegen_flags: <defaults>
</compile_context>

<pallas_src>
import jax
import jax.numpy as jnp
from jax import lax
from jax.experimental import pallas as pl
from jax.experimental.pallas import tpu as pltpu


def _full_spec(shape):
    """Full-array VMEM block for a grid=(1,) kernel."""
    zeros = (0,) * len(shape)
    return pl.BlockSpec(shape, lambda i, _z=zeros: _z)


def _lstm_step(gates, c, Hg):
    """One LSTM cell update from gate pre-activations.

    gates: (B, 4*Hg) with gate blocks [i | f | g | o], each of width Hg.
    sigmoid/tanh are computed once on the full gate vector (2 EUP passes) and
    lane-sliced afterwards, plus one tanh(c) -> 3 transcendental passes/step.
    """
    sig = jax.nn.sigmoid(gates)
    th = jnp.tanh(gates)
    i = sig[:, 0:Hg]
    f = sig[:, Hg:2 * Hg]
    g = th[:, 2 * Hg:3 * Hg]
    o = sig[:, 3 * Hg:4 * Hg]
    c_new = f * c + i * g
    h_new = o * jnp.tanh(c_new)
    return h_new, c_new


# ---------------------------------------------------------------------------
# Fused kernel: BiLSTM -> residual LSTM stack -> hidden2tag -> Viterbi + backtrace
# ---------------------------------------------------------------------------

def reslstm_crf_kernel(x_ref, wih_cat_ref, whh_cat_ref, b_cat_ref,
                       h0cat_ref, c0cat_ref,
                       lstm_wih_ref, lstm_whh_ref, lstm_b_ref, h0s_ref, c0s_ref,
                       wtag_ref, btag_ref, trans_ref, mask_ref,
                       score_ref, tags_ref,
                       bilstm_buf, layer_buf):
    T, Bp, E = x_ref.shape
    Hcat = whh_cat_ref.shape[0]          # = 2*Hh = hidden_dim
    Hh = Hcat // 2
    L, H, _ = lstm_wih_ref.shape         # H == hidden_dim
    K = trans_ref.shape[0]

    # ------------------- BiLSTM (both directions in one recurrence) ----------
    # Hoisted input projection: one (T*Bp, E) @ (E, 8*Hh) MXU matmul for both
    # directions; gate column layout is [i_f i_b f_f f_b g_f g_b o_f o_b].
    x2d = x_ref[...].reshape(T * Bp, E)
    gx_cat = (jnp.dot(x2d, wih_cat_ref[...], preferred_element_type=jnp.float32)
              + b_cat_ref[...]).reshape(T, Bp, 4 * Hcat)

    whh_cat = whh_cat_ref[...]           # block-diag (2*Hh, 8*Hh)

    # fwd columns are the even Hh-wide blocks, bwd columns the odd ones.
    lane = lax.broadcasted_iota(jnp.int32, (Bp, 4 * Hcat), 1)
    fwd_mask = (lane % (2 * Hh)) < Hh

    h_cat = h0cat_ref[...]               # (Bp, 2*Hh) = [h_f | h_b]
    c_cat = c0cat_ref[...]
    for s in range(T):                   # T is small & static -> unrolled
        # fwd half consumes x[s], bwd half consumes x[T-1-s]; this select only
        # depends on the precomputed gx, so it is off the recurrent chain.
        gx_t = jnp.where(fwd_mask, gx_cat[s], gx_cat[T - 1 - s])
        gates = gx_t + jnp.dot(h_cat, whh_cat, preferred_element_type=jnp.float32)
        h_cat, c_cat = _lstm_step(gates, c_cat, Hcat)
        # per-step stores straight into VMEM scratch (fwd at time s, bwd at T-1-s)
        bilstm_buf[s, :, 0:Hh] = h_cat[:, 0:Hh]
        bilstm_buf[T - 1 - s, :, Hh:2 * Hh] = h_cat[:, Hh:2 * Hh]

    # ------------------- residual LSTM stack + hidden2tag --------------------
    cur = bilstm_buf[...]                # (T, Bp, H), stays in VMEM
    for l in range(L):
        gx = (jnp.dot(cur.reshape(T * Bp, H), lstm_wih_ref[l],
                      preferred_element_type=jnp.float32)
              + lstm_b_ref[l]).reshape(T, Bp, 4 * H)
        whh_l = lstm_whh_ref[l]
        h = h0s_ref[l]
        c = c0s_ref[l]
        for t in range(T):
            gates = gx[t] + jnp.dot(h, whh_l, preferred_element_type=jnp.float32)
            h, c = _lstm_step(gates, c, H)
            layer_buf[t] = h
        cur = layer_buf[...] + cur       # residual connection, no HBM round-trip

    feats = (jnp.dot(cur.reshape(T * Bp, H), wtag_ref[...],
                     preferred_element_type=jnp.float32)
             + btag_ref[...]).reshape(T, Bp, K)

    # ------------------- CRF Viterbi (forward + in-kernel backtrace) ---------
    # transitions[i, j] = score of transitioning TO tag i FROM tag j.
    # START tag index = K-2, STOP tag index = K-1.
    trans = trans_ref[...]
    colK = lax.broadcasted_iota(jnp.int32, (Bp, K), 1)
    idx3 = lax.broadcasted_iota(jnp.int32, (Bp, K, K), 2)

    score = jnp.where(colK == K - 2, jnp.float32(0.0), jnp.float32(-1e4))

    bps = []
    for t in range(T):
        cand = score[:, None, :] + trans[None, :, :]          # (Bp, K_next, K_prev)
        best = jnp.max(cand, axis=-1)                         # (Bp, K)
        bp_t = jnp.min(jnp.where(cand >= best[:, :, None], idx3, K),
                       axis=-1).astype(jnp.int32)             # smallest-index tie-break
        new_score = best + feats[t]
        m = mask_ref[t] > jnp.float32(0.5)                    # (Bp, 1) length mask
        score = jnp.where(m, new_score, score)
        bps.append(jnp.where(m, bp_t, colK))                  # identity bp on padding

    term = score + trans[K - 1:K, :]                          # transition to STOP
    best_final = jnp.max(term, axis=1, keepdims=True)         # (Bp, 1)
    score_ref[...] = best_final
    cur_tag = jnp.min(jnp.where(term >= best_final, colK, K),
                      axis=1, keepdims=True).astype(jnp.int32)  # (Bp, 1)

    # Backtrace: one-hot lane select of bp[t][b, cur_tag[b]] per step, all in-kernel.
    tags = [None] * T
    for t in range(T - 1, -1, -1):
        tags[t] = cur_tag
        sel = jnp.where(colK == cur_tag, bps[t], 0)
        cur_tag = jnp.sum(sel, axis=1, keepdims=True).astype(jnp.int32)
    tags_ref[...] = jnp.concatenate(tags, axis=1)             # (Bp, T) int32


def reslstm_crf_call(x, wih_cat, whh_cat, b_cat, h0cat, c0cat,
                     lstm_wih, lstm_whh, lstm_b, h0s, c0s,
                     w_tag, b_tag, transitions, mask):
    T, Bp, _ = x.shape
    H = lstm_whh.shape[1]
    K = transitions.shape[0]
    args = (x, wih_cat, whh_cat, b_cat, h0cat, c0cat,
            lstm_wih, lstm_whh, lstm_b, h0s, c0s,
            w_tag, b_tag, transitions, mask)
    out_shapes = (jax.ShapeDtypeStruct((Bp, 1), jnp.float32),
                  jax.ShapeDtypeStruct((Bp, T), jnp.int32))
    return pl.pallas_call(
        reslstm_crf_kernel,
        out_shape=out_shapes,
        grid_spec=pltpu.PrefetchScalarGridSpec(
            num_scalar_prefetch=0,
            grid=(1,),
            in_specs=[_full_spec(a.shape) for a in args],
            out_specs=[_full_spec(s.shape) for s in out_shapes],
            scratch_shapes=[pltpu.VMEM((T, Bp, H), jnp.float32),   # BiLSTM output
                            pltpu.VMEM((T, Bp, H), jnp.float32)],  # per-layer hidden states
        ),
        compiler_params=pltpu.CompilerParams(
            dimension_semantics=("arbitrary",),
            # Whole-sequence-resident design: usage here is a few hundred KB.
            # 32 MiB is within the scoped-VMEM budget on v5e/v6e/v7x; if T/B/H
            # grow beyond this, tile T with a real grid and carry (h, c) in scratch.
            vmem_limit_bytes=32 * 1024 * 1024,
        ),
    )(*args)


# ---------------------------------------------------------------------------
# Wrapper: weight fusion, batch padding, embedding lookup
# ---------------------------------------------------------------------------

def _fuse_bilstm_weights(wih_f, whh_f, b_f, wih_b, whh_b, b_b, Hh):
    """Interleave fwd/bwd gate columns -> [i_f i_b f_f f_b g_f g_b o_f o_b]
    and build the block-diagonal recurrent matrix so that one matmul with
    h_cat = [h_f | h_b] drives both directions."""
    def gate(w, g):
        return w[:, g * Hh:(g + 1) * Hh]

    wih_cat = jnp.concatenate([gate(wih_f, 0), gate(wih_b, 0),
                               gate(wih_f, 1), gate(wih_b, 1),
                               gate(wih_f, 2), gate(wih_b, 2),
                               gate(wih_f, 3), gate(wih_b, 3)], axis=1)
    b_cat = jnp.concatenate([gate(b_f, 0), gate(b_b, 0),
                             gate(b_f, 1), gate(b_b, 1),
                             gate(b_f, 2), gate(b_b, 2),
                             gate(b_f, 3), gate(b_b, 3)], axis=1)
    z = jnp.zeros((Hh, Hh), dtype=whh_f.dtype)

    def blk(g):
        top = jnp.concatenate([gate(whh_f, g), z], axis=1)     # rows: h_f
        bot = jnp.concatenate([z, gate(whh_b, g)], axis=1)     # rows: h_b
        return jnp.concatenate([top, bot], axis=0)             # (2Hh, 2Hh)

    whh_cat = jnp.concatenate([blk(0), blk(1), blk(2), blk(3)], axis=1)  # (2Hh, 8Hh)
    return wih_cat, whh_cat, b_cat


def res_lstm_crf_forward(params, sentence, lengths):
    """sentence: (B, T) int32 token ids; lengths: (B,) int32.
    Returns (score (B,), tag_seq (B, T))."""
    B, T = sentence.shape
    H = params["hidden_dim"]
    Hh = H // 2
    L = params["num_layers"]
    K = params["tagset_size"]

    # Pad batch to a multiple of 8 so per-step vregs are full sublane tiles.
    Bp = ((B + 7) // 8) * 8
    pad = Bp - B

    # Embedding + (eval-mode) dropout -> time-major
    embeds = params["embedding"][sentence]                      # (B, T, E)
    x = jnp.transpose(embeds, (1, 0, 2)).astype(jnp.float32)    # (T, B, E)
    lengths = lengths.astype(jnp.int32)
    if pad:
        x = jnp.pad(x, ((0, 0), (0, pad), (0, 0)))
        lengths_p = jnp.concatenate(
            [lengths, jnp.full((pad,), T, dtype=jnp.int32)])
    else:
        lengths_p = lengths

    # Fused BiLSTM weights (both directions, interleaved gate layout).
    wih_cat, whh_cat, b_cat = _fuse_bilstm_weights(
        params["bilstm_fwd_wih"], params["bilstm_fwd_whh"], params["bilstm_fwd_b"],
        params["bilstm_bwd_wih"], params["bilstm_bwd_whh"], params["bilstm_bwd_b"], Hh)

    h0cat = jnp.concatenate(
        [jnp.broadcast_to(params["hidden1_h"][0], (Bp, Hh)),
         jnp.broadcast_to(params["hidden1_h"][1], (Bp, Hh))], axis=-1)
    c0cat = jnp.concatenate(
        [jnp.broadcast_to(params["hidden1_c"][0], (Bp, Hh)),
         jnp.broadcast_to(params["hidden1_c"][1], (Bp, Hh))], axis=-1)

    h0s = jnp.broadcast_to(params["hidden2_h"], (L, Bp, H))
    c0s = jnp.broadcast_to(params["hidden2_c"], (L, Bp, H))

    mask = (jnp.arange(T, dtype=jnp.int32)[:, None, None]
            < lengths_p[None, :, None]).astype(jnp.float32)     # (T, Bp, 1)

    score_p, tags_p = reslstm_crf_call(
        x, wih_cat, whh_cat, b_cat, h0cat, c0cat,
        params["lstm_wih"], params["lstm_whh"], params["lstm_b"], h0s, c0s,
        params["h2t_w"], params["h2t_b"], params["transitions"], mask)

    return score_p[:B, 0], tags_p[:B, :]


# ---------------------------------------------------------------------------
# Deterministic parameter init
# ---------------------------------------------------------------------------

def _normal(key, shape, scale=0.1):
    return scale * jax.random.normal(key, shape, dtype=jnp.float32)


def init_params(key, vocab_size, embedding_dim, hidden_dim, num_layers, tagset_size_plus2):
    keys = iter(jax.random.split(key, 128))
    E, H, K, L = embedding_dim, hidden_dim, tagset_size_plus2, num_layers
    Hh = H // 2
    p = {"hidden_dim": H, "num_layers": L, "tagset_size": K}

    p["embedding"] = _normal(next(keys), (vocab_size, E))

    # BiLSTM weights, pre-transposed to (in, 4*Hh); combined bias (1, 4*Hh)
    for d in ("fwd", "bwd"):
        p[f"bilstm_{d}_wih"] = _normal(next(keys), (E, 4 * Hh))
        p[f"bilstm_{d}_whh"] = _normal(next(keys), (Hh, 4 * Hh))
        p[f"bilstm_{d}_b"] = _normal(next(keys), (1, 4 * Hh))

    p["hidden1_h"] = _normal(next(keys), (2, 1, Hh), scale=1.0)
    p["hidden1_c"] = _normal(next(keys), (2, 1, Hh), scale=1.0)
    p["hidden2_h"] = _normal(next(keys), (L, 1, H), scale=1.0)
    p["hidden2_c"] = _normal(next(keys), (L, 1, H), scale=1.0)

    # Stacked residual LSTM weights, stacked along a leading layer axis
    p["lstm_wih"] = _normal(next(keys), (L, H, 4 * H))
    p["lstm_whh"] = _normal(next(keys), (L, H, 4 * H))
    p["lstm_b"] = _normal(next(keys), (L, 1, 4 * H))

    p["h2t_w"] = _normal(next(keys), (H, K))
    p["h2t_b"] = _normal(next(keys), (1, K))

    # CRF transitions[i, j] = score of transitioning to tag i from tag j.
    # START = K-2, STOP = K-1; forbid transitions TO START and FROM STOP.
    trans = _normal(next(keys), (K, K), scale=1.0)
    trans = trans.at[K - 2, :].set(-10000.0)
    trans = trans.at[:, K - 1].set(-10000.0)
    p["transitions"] = trans
    return p


# ---------------------------------------------------------------------------

if __name__ == "__main__":
    key = jax.random.PRNGKey(0)

    # Small config consistent with the module's forward
    B, T = 2, 8
    vocab_size = 50
    embedding_dim = 32
    hidden_dim = 32
    num_layers = 2
    tagset_size = 5
    K = tagset_size + 2

    params = init_params(key, vocab_size, embedding_dim, hidden_dim, num_layers, K)

    sentence = jax.random.randint(jax.random.fold_in(key, 100), (B, T), 0, vocab_size,
                                  dtype=jnp.int32)
    lengths = jnp.array([T, T], dtype=jnp.int32)   # full-length (pack_padded is a no-op)

    score, tag_seq = res_lstm_crf_forward(params, sentence, lengths)
    jax.block_until_ready((score, tag_seq))
    assert score.shape == (B,)
    assert tag_seq.shape == (B, T)
    print("KERNEL_OK")
</pallas_src>

<mosaic_0001>
module attributes {stable_mosaic.version = 11 : i64} {
  func.func @reslstm_crf_kernel(%arg0: i32, %arg1: memref<8x8x32xf32, #tpu.memory_space<vmem>>, %arg2: memref<32x128xf32, #tpu.memory_space<vmem>>, %arg3: memref<32x128xf32, #tpu.memory_space<vmem>>, %arg4: memref<1x128xf32, #tpu.memory_space<vmem>>, %arg5: memref<8x32xf32, #tpu.memory_space<vmem>>, %arg6: memref<8x32xf32, #tpu.memory_space<vmem>>, %arg7: memref<2x32x128xf32, #tpu.memory_space<vmem>>, %arg8: memref<2x32x128xf32, #tpu.memory_space<vmem>>, %arg9: memref<2x1x128xf32, #tpu.memory_space<vmem>>, %arg10: memref<2x8x32xf32, #tpu.memory_space<vmem>>, %arg11: memref<2x8x32xf32, #tpu.memory_space<vmem>>, %arg12: memref<32x7xf32, #tpu.memory_space<vmem>>, %arg13: memref<1x7xf32, #tpu.memory_space<vmem>>, %arg14: memref<7x7xf32, #tpu.memory_space<vmem>>, %arg15: memref<8x8x1xf32, #tpu.memory_space<vmem>>, %arg16: memref<8x1xf32, #tpu.memory_space<vmem>>, %arg17: memref<8x8xi32, #tpu.memory_space<vmem>>, %arg18: memref<8x8x32xf32, #tpu.memory_space<vmem>>, %arg19: memref<8x8x32xf32, #tpu.memory_space<vmem>>) attributes {dimension_semantics = [#tpu.dimension_semantics<arbitrary>], iteration_bounds = array<i64: 1>, scalar_prefetch = 0 : i64, scratch_operands = 2 : i64, tpu.core_type = #tpu.core_type<tc>, window_params = [{pipeline_mode = #tpu.pipeline_mode<synchronous>, transform_indices = @transform_0, window_bounds = array<i64: 8, 8, 32>}, {pipeline_mode = #tpu.pipeline_mode<synchronous>, transform_indices = @transform_1, window_bounds = array<i64: 32, 128>}, {pipeline_mode = #tpu.pipeline_mode<synchronous>, transform_indices = @transform_2, window_bounds = array<i64: 32, 128>}, {pipeline_mode = #tpu.pipeline_mode<synchronous>, transform_indices = @transform_3, window_bounds = array<i64: 1, 128>}, {pipeline_mode = #tpu.pipeline_mode<synchronous>, transform_indices = @transform_4, window_bounds = array<i64: 8, 32>}, {pipeline_mode = #tpu.pipeline_mode<synchronous>, transform_indices = @transform_5, window_bounds = array<i64: 8, 32>}, {pipeline_mode = #tpu.pipeline_mode<synchronous>, transform_indices = @transform_6, window_bounds = array<i64: 2, 32, 128>}, {pipeline_mode = #tpu.pipeline_mode<synchronous>, transform_indices = @transform_7, window_bounds = array<i64: 2, 32, 128>}, {pipeline_mode = #tpu.pipeline_mode<synchronous>, transform_indices = @transform_8, window_bounds = array<i64: 2, 1, 128>}, {pipeline_mode = #tpu.pipeline_mode<synchronous>, transform_indices = @transform_9, window_bounds = array<i64: 2, 8, 32>}, {pipeline_mode = #tpu.pipeline_mode<synchronous>, transform_indices = @transform_10, window_bounds = array<i64: 2, 8, 32>}, {pipeline_mode = #tpu.pipeline_mode<synchronous>, transform_indices = @transform_11, window_bounds = array<i64: 32, 7>}, {pipeline_mode = #tpu.pipeline_mode<synchronous>, transform_indices = @transform_12, window_bounds = array<i64: 1, 7>}, {pipeline_mode = #tpu.pipeline_mode<synchronous>, transform_indices = @transform_13, window_bounds = array<i64: 7, 7>}, {pipeline_mode = #tpu.pipeline_mode<synchronous>, transform_indices = @transform_14, window_bounds = array<i64: 8, 8, 1>}, {pipeline_mode = #tpu.pipeline_mode<synchronous>, transform_indices = @transform_15, window_bounds = array<i64: 8, 1>}, {pipeline_mode = #tpu.pipeline_mode<synchronous>, transform_indices = @transform_16, window_bounds = array<i64: 8, 8>}]} {
    %c0 = arith.constant 0 : index
    %c0_0 = arith.constant 0 : index
    %c0_1 = arith.constant 0 : index
    %0 = vector.load %arg1[%c0, %c0_0, %c0_1] : memref<8x8x32xf32, #tpu.memory_space<vmem>>, vector<8x8x32xf32>
    %1 = vector.shape_cast %0 : vector<8x8x32xf32> to vector<64x32xf32>
    %c0_2 = arith.constant 0 : index
    %c0_3 = arith.constant 0 : index
    %2 = vector.load %arg2[%c0_2, %c0_3] : memref<32x128xf32, #tpu.memory_space<vmem>>, vector<32x128xf32>
    %cst = arith.constant dense<0.000000e+00> : vector<64x128xf32>
    %3 = tpu.matmul %1, %2, %cst {dimension_numbers = #tpu.dot_dimension_numbers<[1], [0], [0], [1], [0, 0, 1, 1], [], []>} : vector<64x32xf32>, vector<32x128xf32>, vector<64x128xf32> -> vector<64x128xf32>
    %c0_4 = arith.constant 0 : index
    %c0_5 = arith.constant 0 : index
    %4 = vector.load %arg4[%c0_4, %c0_5] : memref<1x128xf32, #tpu.memory_space<vmem>>, vector<1x128xf32>
    %5 = vector.broadcast %4 : vector<1x128xf32> to vector<64x128xf32>
    %6 = arith.addf %3, %5 : vector<64x128xf32>
    %7 = vector.shape_cast %6 : vector<64x128xf32> to vector<8x8x128xf32>
    %c0_6 = arith.constant 0 : index
    %c0_7 = arith.constant 0 : index
    %8 = vector.load %arg3[%c0_6, %c0_7] : memref<32x128xf32, #tpu.memory_space<vmem>>, vector<32x128xf32>
    %9 = tpu.iota {dimensions = array<i32: 1>} : vector<8x128xi32>
    %c32_i32 = arith.constant 32 : i32
    %c0_i32 = arith.constant 0 : i32
    %10 = arith.cmpi eq, %c32_i32, %c0_i32 : i32
    %c1_i32 = arith.constant 1 : i32
    %11 = arith.select %10, %c1_i32, %c32_i32 : i32
    %12 = vector.broadcast %11 : i32 to vector<8x128xi32>
    %13 = arith.remsi %9, %12 : vector<8x128xi32>
    %c0_i32_8 = arith.constant 0 : i32
    %14 = vector.broadcast %c0_i32_8 : i32 to vector<8x128xi32>
    %15 = arith.cmpi ne, %13, %14 : vector<8x128xi32>
    %c0_i32_9 = arith.constant 0 : i32
    %16 = vector.broadcast %c0_i32_9 : i32 to vector<8x128xi32>
    %17 = arith.cmpi slt, %13, %16 : vector<8x128xi32>
    %c0_i32_10 = arith.constant 0 : i32
    %18 = arith.cmpi slt, %11, %c0_i32_10 : i32
    %19 = vector.broadcast %18 : i1 to vector<8x128xi1>
    %20 = vector.broadcast %19 : vector<8x128xi1> to vector<8x128xi1>
    %21 = arith.xori %17, %20 : vector<8x128xi1>
    %22 = arith.andi %21, %15 : vector<8x128xi1>
    %23 = vector.broadcast %11 : i32 to vector<8x128xi32>
    %24 = arith.addi %13, %23 : vector<8x128xi32>
    %25 = arith.select %22, %24, %13 : vector<8x128xi1>, vector<8x128xi32>
    %c16_i32 = arith.constant 16 : i32
    %26 = vector.broadcast %c16_i32 : i32 to vector<8x128xi32>
    %27 = arith.cmpi slt, %25, %26 : vector<8x128xi32>
    %c0_11 = arith.constant 0 : index
    %c0_12 = arith.constant 0 : index
    %28 = vector.load %arg5[%c0_11, %c0_12] : memref<8x32xf32, #tpu.memory_space<vmem>>, vector<8x32xf32>
    %c0_13 = arith.constant 0 : index
    %c0_14 = arith.constant 0 : index
    %29 = vector.load %arg6[%c0_13, %c0_14] : memref<8x32xf32, #tpu.memory_space<vmem>>, vector<8x32xf32>
    %30 = vector.extract_strided_slice %7 {offsets = [0, 0, 0], sizes = [1, 8, 128], strides = [1, 1, 1]} : vector<8x8x128xf32> to vector<1x8x128xf32>
    %31 = vector.shape_cast %30 : vector<1x8x128xf32> to vector<8x128xf32>
    %32 = vector.extract_strided_slice %7 {offsets = [7, 0, 0], sizes = [1, 8, 128], strides = [1, 1, 1]} : vector<8x8x128xf32> to vector<1x8x128xf32>
    %33 = vector.shape_cast %32 : vector<1x8x128xf32> to vector<8x128xf32>
    %34 = arith.select %27, %31, %33 : vector<8x128xi1>, vector<8x128xf32>
    %cst_15 = arith.constant dense<0.000000e+00> : vector<8x128xf32>
    %35 = tpu.matmul %28, %8, %cst_15 {dimension_numbers = #tpu.dot_dimension_numbers<[1], [0], [0], [1], [0, 0, 1, 1], [], []>} : vector<8x32xf32>, vector<32x128xf32>, vector<8x128xf32> -> vector<8x128xf32>
    %36 = arith.addf %34, %35 : vector<8x128xf32>
    %37 = arith.negf %36 : vector<8x128xf32>
    %38 = math.exp %37 : vector<8x128xf32>
    %cst_16 = arith.constant 1.000000e+00 : f32
    %39 = vector.broadcast %cst_16 : f32 to vector<8x128xf32>
    %40 = arith.addf %39, %38 : vector<8x128xf32>
    %41 = arith.divf %39, %40 : vector<8x128xf32>
    %42 = math.tanh %36 : vector<8x128xf32>
    %43 = vector.extract_strided_slice %41 {offsets = [0, 0], sizes = [8, 32], strides = [1, 1]} : vector<8x128xf32> to vector<8x32xf32>
    %44 = vector.extract_strided_slice %41 {offsets = [0, 32], sizes = [8, 32], strides = [1, 1]} : vector<8x128xf32> to vector<8x32xf32>
    %45 = vector.extract_strided_slice %42 {offsets = [0, 64], sizes = [8, 32], strides = [1, 1]} : vector<8x128xf32> to vector<8x32xf32>
    %46 = vector.extract_strided_slice %41 {offsets = [0, 96], sizes = [8, 32], strides = [1, 1]} : vector<8x128xf32> to vector<8x32xf32>
    %47 = arith.mulf %44, %29 : vector<8x32xf32>
    %48 = arith.mulf %43, %45 : vector<8x32xf32>
    %49 = arith.addf %47, %48 : vector<8x32xf32>
    %50 = math.tanh %49 : vector<8x32xf32>
    %51 = arith.mulf %46, %50 : vector<8x32xf32>
    %52 = vector.extract_strided_slice %51 {offsets = [0, 0], sizes = [8, 16], strides = [1, 1]} : vector<8x32xf32> to vector<8x16xf32>
    %c0_17 = arith.constant 0 : index
    %c0_18 = arith.constant 0 : index
    %c0_19 = arith.constant 0 : index
    %53 = vector.load %arg18[%c0_17, %c0_18, %c0_19] : memref<8x8x32xf32, #tpu.memory_space<vmem>>, vector<1x8x16xf32>
    %54 = vector.shape_cast %53 : vector<1x8x16xf32> to vector<8x16xf32>
    %55 = vector.shape_cast %52 : vector<8x16xf32> to vector<1x8x16xf32>
    tpu.vector_store %arg18[%c0_17, %c0_18, %c0_19], %55 {strides = array<i32>} : memref<8x8x32xf32, #tpu.memory_space<vmem>>, vector<1x8x16xf32>,
    %56 = vector.extract_strided_slice %51 {offsets = [0, 16], sizes = [8, 16], strides = [1, 1]} : vector<8x32xf32> to vector<8x16xf32>
    %c7 = arith.constant 7 : index
    %c0_20 = arith.constant 0 : index
    %c16 = arith.constant 16 : index
    %57 = vector.load %arg18[%c7, %c0_20, %c16] : memref<8x8x32xf32, #tpu.memory_space<vmem>>, vector<1x8x16xf32>
    %58 = vector.shape_cast %57 : vector<1x8x16xf32> to vector<8x16xf32>
    %59 = vector.shape_cast %56 : vector<8x16xf32> to vector<1x8x16xf32>
    tpu.vector_store %arg18[%c7, %c0_20, %c16], %59 {strides = array<i32>} : memref<8x8x32xf32, #tpu.memory_space<vmem>>, vector<1x8x16xf32>,
    %60 = vector.extract_strided_slice %7 {offsets = [1, 0, 0], sizes = [1, 8, 128], strides = [1, 1, 1]} : vector<8x8x128xf32> to vector<1x8x128xf32>
    %61 = vector.shape_cast %60 : vector<1x8x128xf32> to vector<8x128xf32>
    %62 = vector.extract_strided_slice %7 {offsets = [6, 0, 0], sizes = [1, 8, 128], strides = [1, 1, 1]} : vector<8x8x128xf32> to vector<1x8x128xf32>
    %63 = vector.shape_cast %62 : vector<1x8x128xf32> to vector<8x128xf32>
    %64 = arith.select %27, %61, %63 : vector<8x128xi1>, vector<8x128xf32>
    %cst_21 = arith.constant dense<0.000000e+00> : vector<8x128xf32>
    %65 = tpu.matmul %51, %8, %cst_21 {dimension_numbers = #tpu.dot_dimension_numbers<[1], [0], [0], [1], [0, 0, 1, 1], [], []>} : vector<8x32xf32>, vector<32x128xf32>, vector<8x128xf32> -> vector<8x128xf32>
    %66 = arith.addf %64, %65 : vector<8x128xf32>
    %67 = arith.negf %66 : vector<8x128xf32>
    %68 = math.exp %67 : vector<8x128xf32>
    %cst_22 = arith.constant 1.000000e+00 : f32
    %69 = vector.broadcast %cst_22 : f32 to vector<8x128xf32>
    %70 = arith.addf %69, %68 : vector<8x128xf32>
    %71 = arith.divf %69, %70 : vector<8x128xf32>
    %72 = math.tanh %66 : vector<8x128xf32>
    %73 = vector.extract_strided_slice %71 {offsets = [0, 0], sizes = [8, 32], strides = [1, 1]} : vector<8x128xf32> to vector<8x32xf32>
    %74 = vector.extract_strided_slice %71 {offsets = [0, 32], sizes = [8, 32], strides = [1, 1]} : vector<8x128xf32> to vector<8x32xf32>
    %75 = vector.extract_strided_slice %72 {offsets = [0, 64], sizes = [8, 32], strides = [1, 1]} : vector<8x128xf32> to vector<8x32xf32>
    %76 = vector.extract_strided_slice %71 {offsets = [0, 96], sizes = [8, 32], strides = [1, 1]} : vector<8x128xf32> to vector<8x32xf32>
    %77 = arith.mulf %74, %49 : vector<8x32xf32>
    %78 = arith.mulf %73, %75 : vector<8x32xf32>
    %79 = arith.addf %77, %78 : vector<8x32xf32>
    %80 = math.tanh %79 : vector<8x32xf32>
    %81 = arith.mulf %76, %80 : vector<8x32xf32>
    %82 = vector.extract_strided_slice %81 {offsets = [0, 0], sizes = [8, 16], strides = [1, 1]} : vector<8x32xf32> to vector<8x16xf32>
    %c1 = arith.constant 1 : index
    %c0_23 = arith.constant 0 : index
    %c0_24 = arith.constant 0 : index
    %83 = vector.load %arg18[%c1, %c0_23, %c0_24] : memref<8x8x32xf32, #tpu.memory_space<vmem>>, vector<1x8x16xf32>
    %84 = vector.shape_cast %83 : vector<1x8x16xf32> to vector<8x16xf32>
    %85 = vector.shape_cast %82 : vector<8x16xf32> to vector<1x8x16xf32>
    tpu.vector_store %arg18[%c1, %c0_23, %c0_24], %85 {strides = array<i32>} : memref<8x8x32xf32, #tpu.memory_space<vmem>>, vector<1x8x16xf32>,
    %86 = vector.extract_strided_slice %81 {offsets = [0, 16], sizes = [8, 16], strides = [1, 1]} : vector<8x32xf32> to vector<8x16xf32>
    %c6 = arith.constant 6 : index
    %c0_25 = arith.constant 0 : index
    %c16_26 = arith.constant 16 : index
    %87 = vector.load %arg18[%c6, %c0_25, %c16_26] : memref<8x8x32xf32, #tpu.memory_space<vmem>>, vector<1x8x16xf32>
    %88 = vector.shape_cast %87 : vector<1x8x16xf32> to vector<8x16xf32>
    %89 = vector.shape_cast %86 : vector<8x16xf32> to vector<1x8x16xf32>
    tpu.vector_store %arg18[%c6, %c0_25, %c16_26], %89 {strides = array<i32>} : memref<8x8x32xf32, #tpu.memory_space<vmem>>, vector<1x8x16xf32>,
    %90 = vector.extract_strided_slice %7 {offsets = [2, 0, 0], sizes = [1, 8, 128], strides = [1, 1, 1]} : vector<8x8x128xf32> to vector<1x8x128xf32>
    %91 = vector.shape_cast %90 : vector<1x8x128xf32> to vector<8x128xf32>
    %92 = vector.extract_strided_slice %7 {offsets = [5, 0, 0], sizes = [1, 8, 128], strides = [1, 1, 1]} : vector<8x8x128xf32> to vector<1x8x128xf32>
    %93 = vector.shape_cast %92 : vector<1x8x128xf32> to vector<8x128xf32>
    %94 = arith.select %27, %91, %93 : vector<8x128xi1>, vector<8x128xf32>
    %cst_27 = arith.constant dense<0.000000e+00> : vector<8x128xf32>
    %95 = tpu.matmul %81, %8, %cst_27 {dimension_numbers = #tpu.dot_dimension_numbers<[1], [0], [0], [1], [0, 0, 1, 1], [], []>} : vector<8x32xf32>, vector<32x128xf32>, vector<8x128xf32> -> vector<8x128xf32>
    %96 = arith.addf %94, %95 : vector<8x128xf32>
    %97 = arith.negf %96 : vector<8x128xf32>
    %98 = math.exp %97 : vector<8x128xf32>
    %cst_28 = arith.constant 1.000000e+00 : f32
    %99 = vector.broadcast %cst_28 : f32 to vector<8x128xf32>
    %100 = arith.addf %99, %98 : vector<8x128xf32>
    %101 = arith.divf %99, %100 : vector<8x128xf32>
    %102 = math.tanh %96 : vector<8x128xf32>
    %103 = vector.extract_strided_slice %101 {offsets = [0, 0], sizes = [8, 32], strides = [1, 1]} : vector<8x128xf32> to vector<8x32xf32>
    %104 = vector.extract_strided_slice %101 {offsets = [0, 32], sizes = [8, 32], strides = [1, 1]} : vector<8x128xf32> to vector<8x32xf32>
    %105 = vector.extract_strided_slice %102 {offsets = [0, 64], sizes = [8, 32], strides = [1, 1]} : vector<8x128xf32> to vector<8x32xf32>
    %106 = vector.extract_strided_slice %101 {offsets = [0, 96], sizes = [8, 32], strides = [1, 1]} : vector<8x128xf32> to vector<8x32xf32>
    %107 = arith.mulf %104, %79 : vector<8x32xf32>
    %108 = arith.mulf %103, %105 : vector<8x32xf32>
    %109 = arith.addf %107, %108 : vector<8x32xf32>
    %110 = math.tanh %109 : vector<8x32xf32>
    %111 = arith.mulf %106, %110 : vector<8x32xf32>
    %112 = vector.extract_strided_slice %111 {offsets = [0, 0], sizes = [8, 16], strides = [1, 1]} : vector<8x32xf32> to vector<8x16xf32>
    %c2 = arith.constant 2 : index
    %c0_29 = arith.constant 0 : index
    %c0_30 = arith.constant 0 : index
    %113 = vector.load %arg18[%c2, %c0_29, %c0_30] : memref<8x8x32xf32, #tpu.memory_space<vmem>>, vector<1x8x16xf32>
    %114 = vector.shape_cast %113 : vector<1x8x16xf32> to vector<8x16xf32>
    %115 = vector.shape_cast %112 : vector<8x16xf32> to vector<1x8x16xf32>
    tpu.vector_store %arg18[%c2, %c0_29, %c0_30], %115 {strides = array<i32>} : memref<8x8x32xf32, #tpu.memory_space<vmem>>, vector<1x8x16xf32>,
    %116 = vector.extract_strided_slice %111 {offsets = [0, 16], sizes = [8, 16], strides = [1, 1]} : vector<8x32xf32> to vector<8x16xf32>
    %c5 = arith.constant 5 : index
    %c0_31 = arith.constant 0 : index
    %c16_32 = arith.constant 16 : index
    %117 = vector.load %arg18[%c5, %c0_31, %c16_32] : memref<8x8x32xf32, #tpu.memory_space<vmem>>, vector<1x8x16xf32>
    %118 = vector.shape_cast %117 : vector<1x8x16xf32> to vector<8x16xf32>
    %119 = vector.shape_cast %116 : vector<8x16xf32> to vector<1x8x16xf32>
    tpu.vector_store %arg18[%c5, %c0_31, %c16_32], %119 {strides = array<i32>} : memref<8x8x32xf32, #tpu.memory_space<vmem>>, vector<1x8x16xf32>,
    %120 = vector.extract_strided_slice %7 {offsets = [3, 0, 0], sizes = [1, 8, 128], strides = [1, 1, 1]} : vector<8x8x128xf32> to vector<1x8x128xf32>
    %121 = vector.shape_cast %120 : vector<1x8x128xf32> to vector<8x128xf32>
    %122 = vector.extract_strided_slice %7 {offsets = [4, 0, 0], sizes = [1, 8, 128], strides = [1, 1, 1]} : vector<8x8x128xf32> to vector<1x8x128xf32>
    %123 = vector.shape_cast %122 : vector<1x8x128xf32> to vector<8x128xf32>
    %124 = arith.select %27, %121, %123 : vector<8x128xi1>, vector<8x128xf32>
    %cst_33 = arith.constant dense<0.000000e+00> : vector<8x128xf32>
    %125 = tpu.matmul %111, %8, %cst_33 {dimension_numbers = #tpu.dot_dimension_numbers<[1], [0], [0], [1], [0, 0, 1, 1], [], []>} : vector<8x32xf32>, vector<32x128xf32>, vector<8x128xf32> -> vector<8x128xf32>
    %126 = arith.addf %124, %125 : vector<8x128xf32>
    %127 = arith.negf %126 : vector<8x128xf32>
    %128 = math.exp %127 : vector<8x128xf32>
    %cst_34 = arith.constant 1.000000e+00 : f32
    %129 = vector.broadcast %cst_34 : f32 to vector<8x128xf32>
    %130 = arith.addf %129, %128 : vector<8x128xf32>
    %131 = arith.divf %129, %130 : vector<8x128xf32>
    %132 = math.tanh %126 : vector<8x128xf32>
    %133 = vector.extract_strided_slice %131 {offsets = [0, 0], sizes = [8, 32], strides = [1, 1]} : vector<8x128xf32> to vector<8x32xf32>
    %134 = vector.extract_strided_slice %131 {offsets = [0, 32], sizes = [8, 32], strides = [1, 1]} : vector<8x128xf32> to vector<8x32xf32>
    %135 = vector.extract_strided_slice %132 {offsets = [0, 64], sizes = [8, 32], strides = [1, 1]} : vector<8x128xf32> to vector<8x32xf32>
    %136 = vector.extract_strided_slice %131 {offsets = [0, 96], sizes = [8, 32], strides = [1, 1]} : vector<8x128xf32> to vector<8x32xf32>
    %137 = arith.mulf %134, %109 : vector<8x32xf32>
    %138 = arith.mulf %133, %135 : vector<8x32xf32>
    %139 = arith.addf %137, %138 : vector<8x32xf32>
    %140 = math.tanh %139 : vector<8x32xf32>
    %141 = arith.mulf %136, %140 : vector<8x32xf32>
    %142 = vector.extract_strided_slice %141 {offsets = [0, 0], sizes = [8, 16], strides = [1, 1]} : vector<8x32xf32> to vector<8x16xf32>
    %c3 = arith.constant 3 : index
    %c0_35 = arith.constant 0 : index
    %c0_36 = arith.constant 0 : index
    %143 = vector.load %arg18[%c3, %c0_35, %c0_36] : memref<8x8x32xf32, #tpu.memory_space<vmem>>, vector<1x8x16xf32>
    %144 = vector.shape_cast %143 : vector<1x8x16xf32> to vector<8x16xf32>
    %145 = vector.shape_cast %142 : vector<8x16xf32> to vector<1x8x16xf32>
    tpu.vector_store %arg18[%c3, %c0_35, %c0_36], %145 {strides = array<i32>} : memref<8x8x32xf32, #tpu.memory_space<vmem>>, vector<1x8x16xf32>,
    %146 = vector.extract_strided_slice %141 {offsets = [0, 16], sizes = [8, 16], strides = [1, 1]} : vector<8x32xf32> to vector<8x16xf32>
    %c4 = arith.constant 4 : index
    %c0_37 = arith.constant 0 : index
    %c16_38 = arith.constant 16 : index
    %147 = vector.load %arg18[%c4, %c0_37, %c16_38] : memref<8x8x32xf32, #tpu.memory_space<vmem>>, vector<1x8x16xf32>
    %148 = vector.shape_cast %147 : vector<1x8x16xf32> to vector<8x16xf32>
    %149 = vector.shape_cast %146 : vector<8x16xf32> to vector<1x8x16xf32>
    tpu.vector_store %arg18[%c4, %c0_37, %c16_38], %149 {strides = array<i32>} : memref<8x8x32xf32, #tpu.memory_space<vmem>>, vector<1x8x16xf32>,
    %150 = vector.extract_strided_slice %7 {offsets = [4, 0, 0], sizes = [1, 8, 128], strides = [1, 1, 1]} : vector<8x8x128xf32> to vector<1x8x128xf32>
    %151 = vector.shape_cast %150 : vector<1x8x128xf32> to vector<8x128xf32>
    %152 = vector.extract_strided_slice %7 {offsets = [3, 0, 0], sizes = [1, 8, 128], strides = [1, 1, 1]} : vector<8x8x128xf32> to vector<1x8x128xf32>
    %153 = vector.shape_cast %152 : vector<1x8x128xf32> to vector<8x128xf32>
    %154 = arith.select %27, %151, %153 : vector<8x128xi1>, vector<8x128xf32>
    %cst_39 = arith.constant dense<0.000000e+00> : vector<8x128xf32>
    %155 = tpu.matmul %141, %8, %cst_39 {dimension_numbers = #tpu.dot_dimension_numbers<[1], [0], [0], [1], [0, 0, 1, 1], [], []>} : vector<8x32xf32>, vector<32x128xf32>, vector<8x128xf32> -> vector<8x128xf32>
    %156 = arith.addf %154, %155 : vector<8x128xf32>
    %157 = arith.negf %156 : vector<8x128xf32>
    %158 = math.exp %157 : vector<8x128xf32>
    %cst_40 = arith.constant 1.000000e+00 : f32
    %159 = vector.broadcast %cst_40 : f32 to vector<8x128xf32>
    %160 = arith.addf %159, %158 : vector<8x128xf32>
    %161 = arith.divf %159, %160 : vector<8x128xf32>
    %162 = math.tanh %156 : vector<8x128xf32>
    %163 = vector.extract_strided_slice %161 {offsets = [0, 0], sizes = [8, 32], strides = [1, 1]} : vector<8x128xf32> to vector<8x32xf32>
    %164 = vector.extract_strided_slice %161 {offsets = [0, 32], sizes = [8, 32], strides = [1, 1]} : vector<8x128xf32> to vector<8x32xf32>
    %165 = vector.extract_strided_slice %162 {offsets = [0, 64], sizes = [8, 32], strides = [1, 1]} : vector<8x128xf32> to vector<8x32xf32>
    %166 = vector.extract_strided_slice %161 {offsets = [0, 96], sizes = [8, 32], strides = [1, 1]} : vector<8x128xf32> to vector<8x32xf32>
    %167 = arith.mulf %164, %139 : vector<8x32xf32>
    %168 = arith.mulf %163, %165 : vector<8x32xf32>
    %169 = arith.addf %167, %168 : vector<8x32xf32>
    %170 = math.tanh %169 : vector<8x32xf32>
    %171 = arith.mulf %166, %170 : vector<8x32xf32>
    %172 = vector.extract_strided_slice %171 {offsets = [0, 0], sizes = [8, 16], strides = [1, 1]} : vector<8x32xf32> to vector<8x16xf32>
    %c4_41 = arith.constant 4 : index
    %c0_42 = arith.constant 0 : index
    %c0_43 = arith.constant 0 : index
    %173 = vector.load %arg18[%c4_41, %c0_42, %c0_43] : memref<8x8x32xf32, #tpu.memory_space<vmem>>, vector<1x8x16xf32>
    %174 = vector.shape_cast %173 : vector<1x8x16xf32> to vector<8x16xf32>
    %175 = vector.shape_cast %172 : vector<8x16xf32> to vector<1x8x16xf32>
    tpu.vector_store %arg18[%c4_41, %c0_42, %c0_43], %175 {strides = array<i32>} : memref<8x8x32xf32, #tpu.memory_space<vmem>>, vector<1x8x16xf32>,
    %176 = vector.extract_strided_slice %171 {offsets = [0, 16], sizes = [8, 16], strides = [1, 1]} : vector<8x32xf32> to vector<8x16xf32>
    %c3_44 = arith.constant 3 : index
    %c0_45 = arith.constant 0 : index
    %c16_46 = arith.constant 16 : index
    %177 = vector.load %arg18[%c3_44, %c0_45, %c16_46] : memref<8x8x32xf32, #tpu.memory_space<vmem>>, vector<1x8x16xf32>
    %178 = vector.shape_cast %177 : vector<1x8x16xf32> to vector<8x16xf32>
    %179 = vector.shape_cast %176 : vector<8x16xf32> to vector<1x8x16xf32>
    tpu.vector_store %arg18[%c3_44, %c0_45, %c16_46], %179 {strides = array<i32>} : memref<8x8x32xf32, #tpu.memory_space<vmem>>, vector<1x8x16xf32>,
    %180 = vector.extract_strided_slice %7 {offsets = [5, 0, 0], sizes = [1, 8, 128], strides = [1, 1, 1]} : vector<8x8x128xf32> to vector<1x8x128xf32>
    %181 = vector.shape_cast %180 : vector<1x8x128xf32> to vector<8x128xf32>
    %182 = vector.extract_strided_slice %7 {offsets = [2, 0, 0], sizes = [1, 8, 128], strides = [1, 1, 1]} : vector<8x8x128xf32> to vector<1x8x128xf32>
    %183 = vector.shape_cast %182 : vector<1x8x128xf32> to vector<8x128xf32>
    %184 = arith.select %27, %181, %183 : vector<8x128xi1>, vector<8x128xf32>
    %cst_47 = arith.constant dense<0.000000e+00> : vector<8x128xf32>
    %185 = tpu.matmul %171, %8, %cst_47 {dimension_numbers = #tpu.dot_dimension_numbers<[1], [0], [0], [1], [0, 0, 1, 1], [], []>} : vector<8x32xf32>, vector<32x128xf32>, vector<8x128xf32> -> vector<8x128xf32>
    %186 = arith.addf %184, %185 : vector<8x128xf32>
    %187 = arith.negf %186 : vector<8x128xf32>
    %188 = math.exp %187 : vector<8x128xf32>
    %cst_48 = arith.constant 1.000000e+00 : f32
    %189 = vector.broadcast %cst_48 : f32 to vector<8x128xf32>
    %190 = arith.addf %189, %188 : vector<8x128xf32>
    %191 = arith.divf %189, %190 : vector<8x128xf32>
    %192 = math.tanh %186 : vector<8x128xf32>
    %193 = vector.extract_strided_slice %191 {offsets = [0, 0], sizes = [8, 32], strides = [1, 1]} : vector<8x128xf32> to vector<8x32xf32>
    %194 = vector.extract_strided_slice %191 {offsets = [0, 32], sizes = [8, 32], strides = [1, 1]} : vector<8x128xf32> to vector<8x32xf32>
    %195 = vector.extract_strided_slice %192 {offsets = [0, 64], sizes = [8, 32], strides = [1, 1]} : vector<8x128xf32> to vector<8x32xf32>
    %196 = vector.extract_strided_slice %191 {offsets = [0, 96], sizes = [8, 32], strides = [1, 1]} : vector<8x128xf32> to vector<8x32xf32>
    %197 = arith.mulf %194, %169 : vector<8x32xf32>
    %198 = arith.mulf %193, %195 : vector<8x32xf32>
    %199 = arith.addf %197, %198 : vector<8x32xf32>
    %200 = math.tanh %199 : vector<8x32xf32>
    %201 = arith.mulf %196, %200 : vector<8x32xf32>
    %202 = vector.extract_strided_slice %201 {offsets = [0, 0], sizes = [8, 16], strides = [1, 1]} : vector<8x32xf32> to vector<8x16xf32>
    %c5_49 = arith.constant 5 : index
    %c0_50 = arith.constant 0 : index
    %c0_51 = arith.constant 0 : index
    %203 = vector.load %arg18[%c5_49, %c0_50, %c0_51] : memref<8x8x32xf32, #tpu.memory_space<vmem>>, vector<1x8x16xf32>
    %204 = vector.shape_cast %203 : vector<1x8x16xf32> to vector<8x16xf32>
    %205 = vector.shape_cast %202 : vector<8x16xf32> to vector<1x8x16xf32>
    tpu.vector_store %arg18[%c5_49, %c0_50, %c0_51], %205 {strides = array<i32>} : memref<8x8x32xf32, #tpu.memory_space<vmem>>, vector<1x8x16xf32>,
    %206 = vector.extract_strided_slice %201 {offsets = [0, 16], sizes = [8, 16], strides = [1, 1]} : vector<8x32xf32> to vector<8x16xf32>
    %c2_52 = arith.constant 2 : index
    %c0_53 = arith.constant 0 : index
    %c16_54 = arith.constant 16 : index
    %207 = vector.load %arg18[%c2_52, %c0_53, %c16_54] : memref<8x8x32xf32, #tpu.memory_space<vmem>>, vector<1x8x16xf32>
    %208 = vector.shape_cast %207 : vector<1x8x16xf32> to vector<8x16xf32>
    %209 = vector.shape_cast %206 : vector<8x16xf32> to vector<1x8x16xf32>
    tpu.vector_store %arg18[%c2_52, %c0_53, %c16_54], %209 {strides = array<i32>} : memref<8x8x32xf32, #tpu.memory_space<vmem>>, vector<1x8x16xf32>,
    %210 = vector.extract_strided_slice %7 {offsets = [6, 0, 0], sizes = [1, 8, 128], strides = [1, 1, 1]} : vector<8x8x128xf32> to vector<1x8x128xf32>
    %211 = vector.shape_cast %210 : vector<1x8x128xf32> to vector<8x128xf32>
    %212 = vector.extract_strided_slice %7 {offsets = [1, 0, 0], sizes = [1, 8, 128], strides = [1, 1, 1]} : vector<8x8x128xf32> to vector<1x8x128xf32>
    %213 = vector.shape_cast %212 : vector<1x8x128xf32> to vector<8x128xf32>
    %214 = arith.select %27, %211, %213 : vector<8x128xi1>, vector<8x128xf32>
    %cst_55 = arith.constant dense<0.000000e+00> : vector<8x128xf32>
    %215 = tpu.matmul %201, %8, %cst_55 {dimension_numbers = #tpu.dot_dimension_numbers<[1], [0], [0], [1], [0, 0, 1, 1], [], []>} : vector<8x32xf32>, vector<32x128xf32>, vector<8x128xf32> -> vector<8x128xf32>
    %216 = arith.addf %214, %215 : vector<8x128xf32>
    %217 = arith.negf %216 : vector<8x128xf32>
    %218 = math.exp %217 : vector<8x128xf32>
    %cst_56 = arith.constant 1.000000e+00 : f32
    %219 = vector.broadcast %cst_56 : f32 to vector<8x128xf32>
    %220 = arith.addf %219, %218 : vector<8x128xf32>
    %221 = arith.divf %219, %220 : vector<8x128xf32>
    %222 = math.tanh %216 : vector<8x128xf32>
    %223 = vector.extract_strided_slice %221 {offsets = [0, 0], sizes = [8, 32], strides = [1, 1]} : vector<8x128xf32> to vector<8x32xf32>
    %224 = vector.extract_strided_slice %221 {offsets = [0, 32], sizes = [8, 32], strides = [1, 1]} : vector<8x128xf32> to vector<8x32xf32>
    %225 = vector.extract_strided_slice %222 {offsets = [0, 64], sizes = [8, 32], strides = [1, 1]} : vector<8x128xf32> to vector<8x32xf32>
    %226 = vector.extract_strided_slice %221 {offsets = [0, 96], sizes = [8, 32], strides = [1, 1]} : vector<8x128xf32> to vector<8x32xf32>
    %227 = arith.mulf %224, %199 : vector<8x32xf32>
    %228 = arith.mulf %223, %225 : vector<8x32xf32>
    %229 = arith.addf %227, %228 : vector<8x32xf32>
    %230 = math.tanh %229 : vector<8x32xf32>
    %231 = arith.mulf %226, %230 : vector<8x32xf32>
    %232 = vector.extract_strided_slice %231 {offsets = [0, 0], sizes = [8, 16], strides = [1, 1]} : vector<8x32xf32> to vector<8x16xf32>
    %c6_57 = arith.constant 6 : index
    %c0_58 = arith.constant 0 : index
    %c0_59 = arith.constant 0 : index
    %233 = vector.load %arg18[%c6_57, %c0_58, %c0_59] : memref<8x8x32xf32, #tpu.memory_space<vmem>>, vector<1x8x16xf32>
    %234 = vector.shape_cast %233 : vector<1x8x16xf32> to vector<8x16xf32>
    %235 = vector.shape_cast %232 : vector<8x16xf32> to vector<1x8x16xf32>
    tpu.vector_store %arg18[%c6_57, %c0_58, %c0_59], %235 {strides = array<i32>} : memref<8x8x32xf32, #tpu.memory_space<vmem>>, vector<1x8x16xf32>,
    %236 = vector.extract_strided_slice %231 {offsets = [0, 16], sizes = [8, 16], strides = [1, 1]} : vector<8x32xf32> to vector<8x16xf32>
    %c1_60 = arith.constant 1 : index
    %c0_61 = arith.constant 0 : index
    %c16_62 = arith.constant 16 : index
    %237 = vector.load %arg18[%c1_60, %c0_61, %c16_62] : memref<8x8x32xf32, #tpu.memory_space<vmem>>, vector<1x8x16xf32>
    %238 = vector.shape_cast %237 : vector<1x8x16xf32> to vector<8x16xf32>
    %239 = vector.shape_cast %236 : vector<8x16xf32> to vector<1x8x16xf32>
    tpu.vector_store %arg18[%c1_60, %c0_61, %c16_62], %239 {strides = array<i32>} : memref<8x8x32xf32, #tpu.memory_space<vmem>>, vector<1x8x16xf32>,
    %240 = vector.extract_strided_slice %7 {offsets = [7, 0, 0], sizes = [1, 8, 128], strides = [1, 1, 1]} : vector<8x8x128xf32> to vector<1x8x128xf32>
    %241 = vector.shape_cast %240 : vector<1x8x128xf32> to vector<8x128xf32>
    %242 = vector.extract_strided_slice %7 {offsets = [0, 0, 0], sizes = [1, 8, 128], strides = [1, 1, 1]} : vector<8x8x128xf32> to vector<1x8x128xf32>
    %243 = vector.shape_cast %242 : vector<1x8x128xf32> to vector<8x128xf32>
    %244 = arith.select %27, %241, %243 : vector<8x128xi1>, vector<8x128xf32>
    %cst_63 = arith.constant dense<0.000000e+00> : vector<8x128xf32>
    %245 = tpu.matmul %231, %8, %cst_63 {dimension_numbers = #tpu.dot_dimension_numbers<[1], [0], [0], [1], [0, 0, 1, 1], [], []>} : vector<8x32xf32>, vector<32x128xf32>, vector<8x128xf32> -> vector<8x128xf32>
    %246 = arith.addf %244, %245 : vector<8x128xf32>
    %247 = arith.negf %246 : vector<8x128xf32>
    %248 = math.exp %247 : vector<8x128xf32>
    %cst_64 = arith.constant 1.000000e+00 : f32
    %249 = vector.broadcast %cst_64 : f32 to vector<8x128xf32>
    %250 = arith.addf %249, %248 : vector<8x128xf32>
    %251 = arith.divf %249, %250 : vector<8x128xf32>
    %252 = math.tanh %246 : vector<8x128xf32>
    %253 = vector.extract_strided_slice %251 {offsets = [0, 0], sizes = [8, 32], strides = [1, 1]} : vector<8x128xf32> to vector<8x32xf32>
    %254 = vector.extract_strided_slice %251 {offsets = [0, 32], sizes = [8, 32], strides = [1, 1]} : vector<8x128xf32> to vector<8x32xf32>
    %255 = vector.extract_strided_slice %252 {offsets = [0, 64], sizes = [8, 32], strides = [1, 1]} : vector<8x128xf32> to vector<8x32xf32>
    %256 = vector.extract_strided_slice %251 {offsets = [0, 96], sizes = [8, 32], strides = [1, 1]} : vector<8x128xf32> to vector<8x32xf32>
    %257 = arith.mulf %254, %229 : vector<8x32xf32>
    %258 = arith.mulf %253, %255 : vector<8x32xf32>
    %259 = arith.addf %257, %258 : vector<8x32xf32>
    %260 = math.tanh %259 : vector<8x32xf32>
    %261 = arith.mulf %256, %260 : vector<8x32xf32>
    %262 = vector.extract_strided_slice %261 {offsets = [0, 0], sizes = [8, 16], strides = [1, 1]} : vector<8x32xf32> to vector<8x16xf32>
    %c7_65 = arith.constant 7 : index
    %c0_66 = arith.constant 0 : index
    %c0_67 = arith.constant 0 : index
    %263 = vector.load %arg18[%c7_65, %c0_66, %c0_67] : memref<8x8x32xf32, #tpu.memory_space<vmem>>, vector<1x8x16xf32>
    %264 = vector.shape_cast %263 : vector<1x8x16xf32> to vector<8x16xf32>
    %265 = vector.shape_cast %262 : vector<8x16xf32> to vector<1x8x16xf32>
    tpu.vector_store %arg18[%c7_65, %c0_66, %c0_67], %265 {strides = array<i32>} : memref<8x8x32xf32, #tpu.memory_space<vmem>>, vector<1x8x16xf32>,
    %266 = vector.extract_strided_slice %261 {offsets = [0, 16], sizes = [8, 16], strides = [1, 1]} : vector<8x32xf32> to vector<8x16xf32>
    %c0_68 = arith.constant 0 : index
    %c0_69 = arith.constant 0 : index
    %c16_70 = arith.constant 16 : index
    %267 = vector.load %arg18[%c0_68, %c0_69, %c16_70] : memref<8x8x32xf32, #tpu.memory_space<vmem>>, vector<1x8x16xf32>
    %268 = vector.shape_cast %267 : vector<1x8x16xf32> to vector<8x16xf32>
    %269 = vector.shape_cast %266 : vector<8x16xf32> to vector<1x8x16xf32>
    tpu.vector_store %arg18[%c0_68, %c0_69, %c16_70], %269 {strides = array<i32>} : memref<8x8x32xf32, #tpu.memory_space<vmem>>, vector<1x8x16xf32>,
    %c0_71 = arith.constant 0 : index
    %c0_72 = arith.constant 0 : index
    %c0_73 = arith.constant 0 : index
    %270 = vector.load %arg18[%c0_71, %c0_72, %c0_73] : memref<8x8x32xf32, #tpu.memory_space<vmem>>, vector<8x8x32xf32>
    %271 = vector.shape_cast %270 : vector<8x8x32xf32> to vector<64x32xf32>
    %c0_74 = arith.constant 0 : index
    %c0_75 = arith.constant 0 : index
    %c0_76 = arith.constant 0 : index
    %272 = vector.load %arg7[%c0_74, %c0_75, %c0_76] : memref<2x32x128xf32, #tpu.memory_space<vmem>>, vector<1x32x128xf32>
    %273 = vector.shape_cast %272 : vector<1x32x128xf32> to vector<32x128xf32>
    %cst_77 = arith.constant dense<0.000000e+00> : vector<64x128xf32>
    %274 = tpu.matmul %271, %273, %cst_77 {dimension_numbers = #tpu.dot_dimension_numbers<[1], [0], [0], [1], [0, 0, 1, 1], [], []>} : vector<64x32xf32>, vector<32x128xf32>, vector<64x128xf32> -> vector<64x128xf32>
    %c0_78 = arith.constant 0 : index
    %c0_79 = arith.constant 0 : index
    %c0_80 = arith.constant 0 : index
    %275 = vector.load %arg9[%c0_78, %c0_79, %c0_80] : memref<2x1x128xf32, #tpu.memory_space<vmem>>, vector<1x1x128xf32>
    %276 = vector.shape_cast %275 : vector<1x1x128xf32> to vector<1x128xf32>
    %277 = vector.broadcast %276 : vector<1x128xf32> to vector<64x128xf32>
    %278 = arith.addf %274, %277 : vector<64x128xf32>
    %279 = vector.shape_cast %278 : vector<64x128xf32> to vector<8x8x128xf32>
    %c0_81 = arith.constant 0 : index
    %c0_82 = arith.constant 0 : index
    %c0_83 = arith.constant 0 : index
    %280 = vector.load %arg8[%c0_81, %c0_82, %c0_83] : memref<2x32x128xf32, #tpu.memory_space<vmem>>, vector<1x32x128xf32>
    %281 = vector.shape_cast %280 : vector<1x32x128xf32> to vector<32x128xf32>
    %c0_84 = arith.constant 0 : index
    %c0_85 = arith.constant 0 : index
    %c0_86 = arith.constant 0 : index
    %282 = vector.load %arg10[%c0_84, %c0_85, %c0_86] : memref<2x8x32xf32, #tpu.memory_space<vmem>>, vector<1x8x32xf32>
    %283 = vector.shape_cast %282 : vector<1x8x32xf32> to vector<8x32xf32>
    %c0_87 = arith.constant 0 : index
    %c0_88 = arith.constant 0 : index
    %c0_89 = arith.constant 0 : index
    %284 = vector.load %arg11[%c0_87, %c0_88, %c0_89] : memref<2x8x32xf32, #tpu.memory_space<vmem>>, vector<1x8x32xf32>
    %285 = vector.shape_cast %284 : vector<1x8x32xf32> to vector<8x32xf32>
    %286 = vector.extract_strided_slice %279 {offsets = [0, 0, 0], sizes = [1, 8, 128], strides = [1, 1, 1]} : vector<8x8x128xf32> to vector<1x8x128xf32>
    %287 = vector.shape_cast %286 : vector<1x8x128xf32> to vector<8x128xf32>
    %cst_90 = arith.constant dense<0.000000e+00> : vector<8x128xf32>
    %288 = tpu.matmul %283, %281, %cst_90 {dimension_numbers = #tpu.dot_dimension_numbers<[1], [0], [0], [1], [0, 0, 1, 1], [], []>} : vector<8x32xf32>, vector<32x128xf32>, vector<8x128xf32> -> vector<8x128xf32>
    %289 = arith.addf %287, %288 : vector<8x128xf32>
    %290 = arith.negf %289 : vector<8x128xf32>
    %291 = math.exp %290 : vector<8x128xf32>
    %cst_91 = arith.constant 1.000000e+00 : f32
    %292 = vector.broadcast %cst_91 : f32 to vector<8x128xf32>
    %293 = arith.addf %292, %291 : vector<8x128xf32>
    %294 = arith.divf %292, %293 : vector<8x128xf32>
    %295 = math.tanh %289 : vector<8x128xf32>
    %296 = vector.extract_strided_slice %294 {offsets = [0, 0], sizes = [8, 32], strides = [1, 1]} : vector<8x128xf32> to vector<8x32xf32>
    %297 = vector.extract_strided_slice %294 {offsets = [0, 32], sizes = [8, 32], strides = [1, 1]} : vector<8x128xf32> to vector<8x32xf32>
    %298 = vector.extract_strided_slice %295 {offsets = [0, 64], sizes = [8, 32], strides = [1, 1]} : vector<8x128xf32> to vector<8x32xf32>
    %299 = vector.extract_strided_slice %294 {offsets = [0, 96], sizes = [8, 32], strides = [1, 1]} : vector<8x128xf32> to vector<8x32xf32>
    %300 = arith.mulf %297, %285 : vector<8x32xf32>
    %301 = arith.mulf %296, %298 : vector<8x32xf32>
    %302 = arith.addf %300, %301 : vector<8x32xf32>
    %303 = math.tanh %302 : vector<8x32xf32>
    %304 = arith.mulf %299, %303 : vector<8x32xf32>
    %c0_92 = arith.constant 0 : index
    %c0_93 = arith.constant 0 : index
    %c0_94 = arith.constant 0 : index
    %305 = vector.load %arg19[%c0_92, %c0_93, %c0_94] : memref<8x8x32xf32, #tpu.memory_space<vmem>>, vector<1x8x32xf32>
    %306 = vector.shape_cast %305 : vector<1x8x32xf32> to vector<8x32xf32>
    %307 = vector.shape_cast %304 : vector<8x32xf32> to vector<1x8x32xf32>
    tpu.vector_store %arg19[%c0_92, %c0_93, %c0_94], %307 {strides = array<i32>} : memref<8x8x32xf32, #tpu.memory_space<vmem>>, vector<1x8x32xf32>,
    %308 = vector.extract_strided_slice %279 {offsets = [1, 0, 0], sizes = [1, 8, 128], strides = [1, 1, 1]} : vector<8x8x128xf32> to vector<1x8x128xf32>
    %309 = vector.shape_cast %308 : vector<1x8x128xf32> to vector<8x128xf32>
    %cst_95 = arith.constant dense<0.000000e+00> : vector<8x128xf32>
    %310 = tpu.matmul %304, %281, %cst_95 {dimension_numbers = #tpu.dot_dimension_numbers<[1], [0], [0], [1], [0, 0, 1, 1], [], []>} : vector<8x32xf32>, vector<32x128xf32>, vector<8x128xf32> -> vector<8x128xf32>
    %311 = arith.addf %309, %310 : vector<8x128xf32>
    %312 = arith.negf %311 : vector<8x128xf32>
    %313 = math.exp %312 : vector<8x128xf32>
    %cst_96 = arith.constant 1.000000e+00 : f32
    %314 = vector.broadcast %cst_96 : f32 to vector<8x128xf32>
    %315 = arith.addf %314, %313 : vector<8x128xf32>
    %316 = arith.divf %314, %315 : vector<8x128xf32>
    %317 = math.tanh %311 : vector<8x128xf32>
    %318 = vector.extract_strided_slice %316 {offsets = [0, 0], sizes = [8, 32], strides = [1, 1]} : vector<8x128xf32> to vector<8x32xf32>
    %319 = vector.extract_strided_slice %316 {offsets = [0, 32], sizes = [8, 32], strides = [1, 1]} : vector<8x128xf32> to vector<8x32xf32>
    %320 = vector.extract_strided_slice %317 {offsets = [0, 64], sizes = [8, 32], strides = [1, 1]} : vector<8x128xf32> to vector<8x32xf32>
    %321 = vector.extract_strided_slice %316 {offsets = [0, 96], sizes = [8, 32], strides = [1, 1]} : vector<8x128xf32> to vector<8x32xf32>
    %322 = arith.mulf %319, %302 : vector<8x32xf32>
    %323 = arith.mulf %318, %320 : vector<8x32xf32>
    %324 = arith.addf %322, %323 : vector<8x32xf32>
    %325 = math.tanh %324 : vector<8x32xf32>
    %326 = arith.mulf %321, %325 : vector<8x32xf32>
    %c1_97 = arith.constant 1 : index
    %c0_98 = arith.constant 0 : index
    %c0_99 = arith.constant 0 : index
    %327 = vector.load %arg19[%c1_97, %c0_98, %c0_99] : memref<8x8x32xf32, #tpu.memory_space<vmem>>, vector<1x8x32xf32>
    %328 = vector.shape_cast %327 : vector<1x8x32xf32> to vector<8x32xf32>
    %329 = vector.shape_cast %326 : vector<8x32xf32> to vector<1x8x32xf32>
    tpu.vector_store %arg19[%c1_97, %c0_98, %c0_99], %329 {strides = array<i32>} : memref<8x8x32xf32, #tpu.memory_space<vmem>>, vector<1x8x32xf32>,
    %330 = vector.extract_strided_slice %279 {offsets = [2, 0, 0], sizes = [1, 8, 128], strides = [1, 1, 1]} : vector<8x8x128xf32> to vector<1x8x128xf32>
    %331 = vector.shape_cast %330 : vector<1x8x128xf32> to vector<8x128xf32>
    %cst_100 = arith.constant dense<0.000000e+00> : vector<8x128xf32>
    %332 = tpu.matmul %326, %281, %cst_100 {dimension_numbers = #tpu.dot_dimension_numbers<[1], [0], [0], [1], [0, 0, 1, 1], [], []>} : vector<8x32xf32>, vector<32x128xf32>, vector<8x128xf32> -> vector<8x128xf32>
    %333 = arith.addf %331, %332 : vector<8x128xf32>
    %334 = arith.negf %333 : vector<8x128xf32>
    %335 = math.exp %334 : vector<8x128xf32>
    %cst_101 = arith.constant 1.000000e+00 : f32
    %336 = vector.broadcast %cst_101 : f32 to vector<8x128xf32>
    %337 = arith.addf %336, %335 : vector<8x128xf32>
    %338 = arith.divf %336, %337 : vector<8x128xf32>
    %339 = math.tanh %333 : vector<8x128xf32>
    %340 = vector.extract_strided_slice %338 {offsets = [0, 0], sizes = [8, 32], strides = [1, 1]} : vector<8x128xf32> to vector<8x32xf32>
    %341 = vector.extract_strided_slice %338 {offsets = [0, 32], sizes = [8, 32], strides = [1, 1]} : vector<8x128xf32> to vector<8x32xf32>
    %342 = vector.extract_strided_slice %339 {offsets = [0, 64], sizes = [8, 32], strides = [1, 1]} : vector<8x128xf32> to vector<8x32xf32>
    %343 = vector.extract_strided_slice %338 {offsets = [0, 96], sizes = [8, 32], strides = [1, 1]} : vector<8x128xf32> to vector<8x32xf32>
    %344 = arith.mulf %341, %324 : vector<8x32xf32>
    %345 = arith.mulf %340, %342 : vector<8x32xf32>
    %346 = arith.addf %344, %345 : vector<8x32xf32>
    %347 = math.tanh %346 : vector<8x32xf32>
    %348 = arith.mulf %343, %347 : vector<8x32xf32>
    %c2_102 = arith.constant 2 : index
    %c0_103 = arith.constant 0 : index
    %c0_104 = arith.constant 0 : index
    %349 = vector.load %arg19[%c2_102, %c0_103, %c0_104] : memref<8x8x32xf32, #tpu.memory_space<vmem>>, vector<1x8x32xf32>
    %350 = vector.shape_cast %349 : vector<1x8x32xf32> to vector<8x32xf32>
    %351 = vector.shape_cast %348 : vector<8x32xf32> to vector<1x8x32xf32>
    tpu.vector_store %arg19[%c2_102, %c0_103, %c0_104], %351 {strides = array<i32>} : memref<8x8x32xf32, #tpu.memory_space<vmem>>, vector<1x8x32xf32>,
    %352 = vector.extract_strided_slice %279 {offsets = [3, 0, 0], sizes = [1, 8, 128], strides = [1, 1, 1]} : vector<8x8x128xf32> to vector<1x8x128xf32>
    %353 = vector.shape_cast %352 : vector<1x8x128xf32> to vector<8x128xf32>
    %cst_105 = arith.constant dense<0.000000e+00> : vector<8x128xf32>
    %354 = tpu.matmul %348, %281, %cst_105 {dimension_numbers = #tpu.dot_dimension_numbers<[1], [0], [0], [1], [0, 0, 1, 1], [], []>} : vector<8x32xf32>, vector<32x128xf32>, vector<8x128xf32> -> vector<8x128xf32>
    %355 = arith.addf %353, %354 : vector<8x128xf32>
    %356 = arith.negf %355 : vector<8x128xf32>
    %357 = math.exp %356 : vector<8x128xf32>
    %cst_106 = arith.constant 1.000000e+00 : f32
    %358 = vector.broadcast %cst_106 : f32 to vector<8x128xf32>
    %359 = arith.addf %358, %357 : vector<8x128xf32>
    %360 = arith.divf %358, %359 : vector<8x128xf32>
    %361 = math.tanh %355 : vector<8x128xf32>
    %362 = vector.extract_strided_slice %360 {offsets = [0, 0], sizes = [8, 32], strides = [1, 1]} : vector<8x128xf32> to vector<8x32xf32>
    %363 = vector.extract_strided_slice %360 {offsets = [0, 32], sizes = [8, 32], strides = [1, 1]} : vector<8x128xf32> to vector<8x32xf32>
    %364 = vector.extract_strided_slice %361 {offsets = [0, 64], sizes = [8, 32], strides = [1, 1]} : vector<8x128xf32> to vector<8x32xf32>
    %365 = vector.extract_strided_slice %360 {offsets = [0, 96], sizes = [8, 32], strides = [1, 1]} : vector<8x128xf32> to vector<8x32xf32>
    %366 = arith.mulf %363, %346 : vector<8x32xf32>
    %367 = arith.mulf %362, %364 : vector<8x32xf32>
    %368 = arith.addf %366, %367 : vector<8x32xf32>
    %369 = math.tanh %368 : vector<8x32xf32>
    %370 = arith.mulf %365, %369 : vector<8x32xf32>
    %c3_107 = arith.constant 3 : index
    %c0_108 = arith.constant 0 : index
    %c0_109 = arith.constant 0 : index
    %371 = vector.load %arg19[%c3_107, %c0_108, %c0_109] : memref<8x8x32xf32, #tpu.memory_space<vmem>>, vector<1x8x32xf32>
    %372 = vector.shape_cast %371 : vector<1x8x32xf32> to vector<8x32xf32>
    %373 = vector.shape_cast %370 : vector<8x32xf32> to vector<1x8x32xf32>
    tpu.vector_store %arg19[%c3_107, %c0_108, %c0_109], %373 {strides = array<i32>} : memref<8x8x32xf32, #tpu.memory_space<vmem>>, vector<1x8x32xf32>,
    %374 = vector.extract_strided_slice %279 {offsets = [4, 0, 0], sizes = [1, 8, 128], strides = [1, 1, 1]} : vector<8x8x128xf32> to vector<1x8x128xf32>
    %375 = vector.shape_cast %374 : vector<1x8x128xf32> to vector<8x128xf32>
    %cst_110 = arith.constant dense<0.000000e+00> : vector<8x128xf32>
    %376 = tpu.matmul %370, %281, %cst_110 {dimension_numbers = #tpu.dot_dimension_numbers<[1], [0], [0], [1], [0, 0, 1, 1], [], []>} : vector<8x32xf32>, vector<32x128xf32>, vector<8x128xf32> -> vector<8x128xf32>
    %377 = arith.addf %375, %376 : vector<8x128xf32>
    %378 = arith.negf %377 : vector<8x128xf32>
    %379 = math.exp %378 : vector<8x128xf32>
    %cst_111 = arith.constant 1.000000e+00 : f32
    %380 = vector.broadcast %cst_111 : f32 to vector<8x128xf32>
    %381 = arith.addf %380, %379 : vector<8x128xf32>
    %382 = arith.divf %380, %381 : vector<8x128xf32>
    %383 = math.tanh %377 : vector<8x128xf32>
    %384 = vector.extract_strided_slice %382 {offsets = [0, 0], sizes = [8, 32], strides = [1, 1]} : vector<8x128xf32> to vector<8x32xf32>
    %385 = vector.extract_strided_slice %382 {offsets = [0, 32], sizes = [8, 32], strides = [1, 1]} : vector<8x128xf32> to vector<8x32xf32>
    %386 = vector.extract_strided_slice %383 {offsets = [0, 64], sizes = [8, 32], strides = [1, 1]} : vector<8x128xf32> to vector<8x32xf32>
    %387 = vector.extract_strided_slice %382 {offsets = [0, 96], sizes = [8, 32], strides = [1, 1]} : vector<8x128xf32> to vector<8x32xf32>
    %388 = arith.mulf %385, %368 : vector<8x32xf32>
    %389 = arith.mulf %384, %386 : vector<8x32xf32>
    %390 = arith.addf %388, %389 : vector<8x32xf32>
    %391 = math.tanh %390 : vector<8x32xf32>
    %392 = arith.mulf %387, %391 : vector<8x32xf32>
    %c4_112 = arith.constant 4 : index
    %c0_113 = arith.constant 0 : index
    %c0_114 = arith.constant 0 : index
    %393 = vector.load %arg19[%c4_112, %c0_113, %c0_114] : memref<8x8x32xf32, #tpu.memory_space<vmem>>, vector<1x8x32xf32>
    %394 = vector.shape_cast %393 : vector<1x8x32xf32> to vector<8x32xf32>
    %395 = vector.shape_cast %392 : vector<8x32xf32> to vector<1x8x32xf32>
    tpu.vector_store %arg19[%c4_112, %c0_113, %c0_114], %395 {strides = array<i32>} : memref<8x8x32xf32, #tpu.memory_space<vmem>>, vector<1x8x32xf32>,
    %396 = vector.extract_strided_slice %279 {offsets = [5, 0, 0], sizes = [1, 8, 128], strides = [1, 1, 1]} : vector<8x8x128xf32> to vector<1x8x128xf32>
    %397 = vector.shape_cast %396 : vector<1x8x128xf32> to vector<8x128xf32>
    %cst_115 = arith.constant dense<0.000000e+00> : vector<8x128xf32>
    %398 = tpu.matmul %392, %281, %cst_115 {dimension_numbers = #tpu.dot_dimension_numbers<[1], [0], [0], [1], [0, 0, 1, 1], [], []>} : vector<8x32xf32>, vector<32x128xf32>, vector<8x128xf32> -> vector<8x128xf32>
    %399 = arith.addf %397, %398 : vector<8x128xf32>
    %400 = arith.negf %399 : vector<8x128xf32>
    %401 = math.exp %400 : vector<8x128xf32>
    %cst_116 = arith.constant 1.000000e+00 : f32
    %402 = vector.broadcast %cst_116 : f32 to vector<8x128xf32>
    %403 = arith.addf %402, %401 : vector<8x128xf32>
    %404 = arith.divf %402, %403 : vector<8x128xf32>
    %405 = math.tanh %399 : vector<8x128xf32>
    %406 = vector.extract_strided_slice %404 {offsets = [0, 0], sizes = [8, 32], strides = [1, 1]} : vector<8x128xf32> to vector<8x32xf32>
    %407 = vector.extract_strided_slice %404 {offsets = [0, 32], sizes = [8, 32], strides = [1, 1]} : vector<8x128xf32> to vector<8x32xf32>
    %408 = vector.extract_strided_slice %405 {offsets = [0, 64], sizes = [8, 32], strides = [1, 1]} : vector<8x128xf32> to vector<8x32xf32>
    %409 = vector.extract_strided_slice %404 {offsets = [0, 96], sizes = [8, 32], strides = [1, 1]} : vector<8x128xf32> to vector<8x32xf32>
    %410 = arith.mulf %407, %390 : vector<8x32xf32>
    %411 = arith.mulf %406, %408 : vector<8x32xf32>
    %412 = arith.addf %410, %411 : vector<8x32xf32>
    %413 = math.tanh %412 : vector<8x32xf32>
    %414 = arith.mulf %409, %413 : vector<8x32xf32>
    %c5_117 = arith.constant 5 : index
    %c0_118 = arith.constant 0 : index
    %c0_119 = arith.constant 0 : index
    %415 = vector.load %arg19[%c5_117, %c0_118, %c0_119] : memref<8x8x32xf32, #tpu.memory_space<vmem>>, vector<1x8x32xf32>
    %416 = vector.shape_cast %415 : vector<1x8x32xf32> to vector<8x32xf32>
    %417 = vector.shape_cast %414 : vector<8x32xf32> to vector<1x8x32xf32>
    tpu.vector_store %arg19[%c5_117, %c0_118, %c0_119], %417 {strides = array<i32>} : memref<8x8x32xf32, #tpu.memory_space<vmem>>, vector<1x8x32xf32>,
    %418 = vector.extract_strided_slice %279 {offsets = [6, 0, 0], sizes = [1, 8, 128], strides = [1, 1, 1]} : vector<8x8x128xf32> to vector<1x8x128xf32>
    %419 = vector.shape_cast %418 : vector<1x8x128xf32> to vector<8x128xf32>
    %cst_120 = arith.constant dense<0.000000e+00> : vector<8x128xf32>
    %420 = tpu.matmul %414, %281, %cst_120 {dimension_numbers = #tpu.dot_dimension_numbers<[1], [0], [0], [1], [0, 0, 1, 1], [], []>} : vector<8x32xf32>, vector<32x128xf32>, vector<8x128xf32> -> vector<8x128xf32>
    %421 = arith.addf %419, %420 : vector<8x128xf32>
    %422 = arith.negf %421 : vector<8x128xf32>
    %423 = math.exp %422 : vector<8x128xf32>
    %cst_121 = arith.constant 1.000000e+00 : f32
    %424 = vector.broadcast %cst_121 : f32 to vector<8x128xf32>
    %425 = arith.addf %424, %423 : vector<8x128xf32>
    %426 = arith.divf %424, %425 : vector<8x128xf32>
    %427 = math.tanh %421 : vector<8x128xf32>
    %428 = vector.extract_strided_slice %426 {offsets = [0, 0], sizes = [8, 32], strides = [1, 1]} : vector<8x128xf32> to vector<8x32xf32>
    %429 = vector.extract_strided_slice %426 {offsets = [0, 32], sizes = [8, 32], strides = [1, 1]} : vector<8x128xf32> to vector<8x32xf32>
    %430 = vector.extract_strided_slice %427 {offsets = [0, 64], sizes = [8, 32], strides = [1, 1]} : vector<8x128xf32> to vector<8x32xf32>
    %431 = vector.extract_strided_slice %426 {offsets = [0, 96], sizes = [8, 32], strides = [1, 1]} : vector<8x128xf32> to vector<8x32xf32>
    %432 = arith.mulf %429, %412 : vector<8x32xf32>
    %433 = arith.mulf %428, %430 : vector<8x32xf32>
    %434 = arith.addf %432, %433 : vector<8x32xf32>
    %435 = math.tanh %434 : vector<8x32xf32>
    %436 = arith.mulf %431, %435 : vector<8x32xf32>
    %c6_122 = arith.constant 6 : index
    %c0_123 = arith.constant 0 : index
    %c0_124 = arith.constant 0 : index
    %437 = vector.load %arg19[%c6_122, %c0_123, %c0_124] : memref<8x8x32xf32, #tpu.memory_space<vmem>>, vector<1x8x32xf32>
    %438 = vector.shape_cast %437 : vector<1x8x32xf32> to vector<8x32xf32>
    %439 = vector.shape_cast %436 : vector<8x32xf32> to vector<1x8x32xf32>
    tpu.vector_store %arg19[%c6_122, %c0_123, %c0_124], %439 {strides = array<i32>} : memref<8x8x32xf32, #tpu.memory_space<vmem>>, vector<1x8x32xf32>,
    %440 = vector.extract_strided_slice %279 {offsets = [7, 0, 0], sizes = [1, 8, 128], strides = [1, 1, 1]} : vector<8x8x128xf32> to vector<1x8x128xf32>
    %441 = vector.shape_cast %440 : vector<1x8x128xf32> to vector<8x128xf32>
    %cst_125 = arith.constant dense<0.000000e+00> : vector<8x128xf32>
    %442 = tpu.matmul %436, %281, %cst_125 {dimension_numbers = #tpu.dot_dimension_numbers<[1], [0], [0], [1], [0, 0, 1, 1], [], []>} : vector<8x32xf32>, vector<32x128xf32>, vector<8x128xf32> -> vector<8x128xf32>
    %443 = arith.addf %441, %442 : vector<8x128xf32>
    %444 = arith.negf %443 : vector<8x128xf32>
    %445 = math.exp %444 : vector<8x128xf32>
    %cst_126 = arith.constant 1.000000e+00 : f32
    %446 = vector.broadcast %cst_126 : f32 to vector<8x128xf32>
    %447 = arith.addf %446, %445 : vector<8x128xf32>
    %448 = arith.divf %446, %447 : vector<8x128xf32>
    %449 = math.tanh %443 : vector<8x128xf32>
    %450 = vector.extract_strided_slice %448 {offsets = [0, 0], sizes = [8, 32], strides = [1, 1]} : vector<8x128xf32> to vector<8x32xf32>
    %451 = vector.extract_strided_slice %448 {offsets = [0, 32], sizes = [8, 32], strides = [1, 1]} : vector<8x128xf32> to vector<8x32xf32>
    %452 = vector.extract_strided_slice %449 {offsets = [0, 64], sizes = [8, 32], strides = [1, 1]} : vector<8x128xf32> to vector<8x32xf32>
    %453 = vector.extract_strided_slice %448 {offsets = [0, 96], sizes = [8, 32], strides = [1, 1]} : vector<8x128xf32> to vector<8x32xf32>
    %454 = arith.mulf %451, %434 : vector<8x32xf32>
    %455 = arith.mulf %450, %452 : vector<8x32xf32>
    %456 = arith.addf %454, %455 : vector<8x32xf32>
    %457 = math.tanh %456 : vector<8x32xf32>
    %458 = arith.mulf %453, %457 : vector<8x32xf32>
    %c7_127 = arith.constant 7 : index
    %c0_128 = arith.constant 0 : index
    %c0_129 = arith.constant 0 : index
    %459 = vector.load %arg19[%c7_127, %c0_128, %c0_129] : memref<8x8x32xf32, #tpu.memory_space<vmem>>, vector<1x8x32xf32>
    %460 = vector.shape_cast %459 : vector<1x8x32xf32> to vector<8x32xf32>
    %461 = vector.shape_cast %458 : vector<8x32xf32> to vector<1x8x32xf32>
    tpu.vector_store %arg19[%c7_127, %c0_128, %c0_129], %461 {strides = array<i32>} : memref<8x8x32xf32, #tpu.memory_space<vmem>>, vector<1x8x32xf32>,
    %c0_130 = arith.constant 0 : index
    %c0_131 = arith.constant 0 : index
    %c0_132 = arith.constant 0 : index
    %462 = vector.load %arg19[%c0_130, %c0_131, %c0_132] : memref<8x8x32xf32, #tpu.memory_space<vmem>>, vector<8x8x32xf32>
    %463 = arith.addf %462, %270 : vector<8x8x32xf32>
    %464 = vector.shape_cast %463 : vector<8x8x32xf32> to vector<64x32xf32>
    %c1_133 = arith.constant 1 : index
    %c0_134 = arith.constant 0 : index
    %c0_135 = arith.constant 0 : index
    %465 = vector.load %arg7[%c1_133, %c0_134, %c0_135] : memref<2x32x128xf32, #tpu.memory_space<vmem>>, vector<1x32x128xf32>
    %466 = vector.shape_cast %465 : vector<1x32x128xf32> to vector<32x128xf32>
    %cst_136 = arith.constant dense<0.000000e+00> : vector<64x128xf32>
    %467 = tpu.matmul %464, %466, %cst_136 {dimension_numbers = #tpu.dot_dimension_numbers<[1], [0], [0], [1], [0, 0, 1, 1], [], []>} : vector<64x32xf32>, vector<32x128xf32>, vector<64x128xf32> -> vector<64x128xf32>
    %c1_137 = arith.constant 1 : index
    %c0_138 = arith.constant 0 : index
    %c0_139 = arith.constant 0 : index
    %468 = vector.load %arg9[%c1_137, %c0_138, %c0_139] : memref<2x1x128xf32, #tpu.memory_space<vmem>>, vector<1x1x128xf32>
    %469 = vector.shape_cast %468 : vector<1x1x128xf32> to vector<1x128xf32>
    %470 = vector.broadcast %469 : vector<1x128xf32> to vector<64x128xf32>
    %471 = arith.addf %467, %470 : vector<64x128xf32>
    %472 = vector.shape_cast %471 : vector<64x128xf32> to vector<8x8x128xf32>
    %c1_140 = arith.constant 1 : index
    %c0_141 = arith.constant 0 : index
    %c0_142 = arith.constant 0 : index
    %473 = vector.load %arg8[%c1_140, %c0_141, %c0_142] : memref<2x32x128xf32, #tpu.memory_space<vmem>>, vector<1x32x128xf32>
    %474 = vector.shape_cast %473 : vector<1x32x128xf32> to vector<32x128xf32>
    %c1_143 = arith.constant 1 : index
    %c0_144 = arith.constant 0 : index
    %c0_145 = arith.constant 0 : index
    %475 = vector.load %arg10[%c1_143, %c0_144, %c0_145] : memref<2x8x32xf32, #tpu.memory_space<vmem>>, vector<1x8x32xf32>
    %476 = vector.shape_cast %475 : vector<1x8x32xf32> to vector<8x32xf32>
    %c1_146 = arith.constant 1 : index
    %c0_147 = arith.constant 0 : index
    %c0_148 = arith.constant 0 : index
    %477 = vector.load %arg11[%c1_146, %c0_147, %c0_148] : memref<2x8x32xf32, #tpu.memory_space<vmem>>, vector<1x8x32xf32>
    %478 = vector.shape_cast %477 : vector<1x8x32xf32> to vector<8x32xf32>
    %479 = vector.extract_strided_slice %472 {offsets = [0, 0, 0], sizes = [1, 8, 128], strides = [1, 1, 1]} : vector<8x8x128xf32> to vector<1x8x128xf32>
    %480 = vector.shape_cast %479 : vector<1x8x128xf32> to vector<8x128xf32>
    %cst_149 = arith.constant dense<0.000000e+00> : vector<8x128xf32>
    %481 = tpu.matmul %476, %474, %cst_149 {dimension_numbers = #tpu.dot_dimension_numbers<[1], [0], [0], [1], [0, 0, 1, 1], [], []>} : vector<8x32xf32>, vector<32x128xf32>, vector<8x128xf32> -> vector<8x128xf32>
    %482 = arith.addf %480, %481 : vector<8x128xf32>
    %483 = arith.negf %482 : vector<8x128xf32>
    %484 = math.exp %483 : vector<8x128xf32>
    %cst_150 = arith.constant 1.000000e+00 : f32
    %485 = vector.broadcast %cst_150 : f32 to vector<8x128xf32>
    %486 = arith.addf %485, %484 : vector<8x128xf32>
    %487 = arith.divf %485, %486 : vector<8x128xf32>
    %488 = math.tanh %482 : vector<8x128xf32>
    %489 = vector.extract_strided_slice %487 {offsets = [0, 0], sizes = [8, 32], strides = [1, 1]} : vector<8x128xf32> to vector<8x32xf32>
    %490 = vector.extract_strided_slice %487 {offsets = [0, 32], sizes = [8, 32], strides = [1, 1]} : vector<8x128xf32> to vector<8x32xf32>
    %491 = vector.extract_strided_slice %488 {offsets = [0, 64], sizes = [8, 32], strides = [1, 1]} : vector<8x128xf32> to vector<8x32xf32>
    %492 = vector.extract_strided_slice %487 {offsets = [0, 96], sizes = [8, 32], strides = [1, 1]} : vector<8x128xf32> to vector<8x32xf32>
    %493 = arith.mulf %490, %478 : vector<8x32xf32>
    %494 = arith.mulf %489, %491 : vector<8x32xf32>
    %495 = arith.addf %493, %494 : vector<8x32xf32>
    %496 = math.tanh %495 : vector<8x32xf32>
    %497 = arith.mulf %492, %496 : vector<8x32xf32>
    %c0_151 = arith.constant 0 : index
    %c0_152 = arith.constant 0 : index
    %c0_153 = arith.constant 0 : index
    %498 = vector.load %arg19[%c0_151, %c0_152, %c0_153] : memref<8x8x32xf32, #tpu.memory_space<vmem>>, vector<1x8x32xf32>
    %499 = vector.shape_cast %498 : vector<1x8x32xf32> to vector<8x32xf32>
    %500 = vector.shape_cast %497 : vector<8x32xf32> to vector<1x8x32xf32>
    tpu.vector_store %arg19[%c0_151, %c0_152, %c0_153], %500 {strides = array<i32>} : memref<8x8x32xf32, #tpu.memory_space<vmem>>, vector<1x8x32xf32>,
    %501 = vector.extract_strided_slice %472 {offsets = [1, 0, 0], sizes = [1, 8, 128], strides = [1, 1, 1]} : vector<8x8x128xf32> to vector<1x8x128xf32>
    %502 = vector.shape_cast %501 : vector<1x8x128xf32> to vector<8x128xf32>
    %cst_154 = arith.constant dense<0.000000e+00> : vector<8x128xf32>
    %503 = tpu.matmul %497, %474, %cst_154 {dimension_numbers = #tpu.dot_dimension_numbers<[1], [0], [0], [1], [0, 0, 1, 1], [], []>} : vector<8x32xf32>, vector<32x128xf32>, vector<8x128xf32> -> vector<8x128xf32>
    %504 = arith.addf %502, %503 : vector<8x128xf32>
    %505 = arith.negf %504 : vector<8x128xf32>
    %506 = math.exp %505 : vector<8x128xf32>
    %cst_155 = arith.constant 1.000000e+00 : f32
    %507 = vector.broadcast %cst_155 : f32 to vector<8x128xf32>
    %508 = arith.addf %507, %506 : vector<8x128xf32>
    %509 = arith.divf %507, %508 : vector<8x128xf32>
    %510 = math.tanh %504 : vector<8x128xf32>
    %511 = vector.extract_strided_slice %509 {offsets = [0, 0], sizes = [8, 32], strides = [1, 1]} : vector<8x128xf32> to vector<8x32xf32>
    %512 = vector.extract_strided_slice %509 {offsets = [0, 32], sizes = [8, 32], strides = [1, 1]} : vector<8x128xf32> to vector<8x32xf32>
    %513 = vector.extract_strided_slice %510 {offsets = [0, 64], sizes = [8, 32], strides = [1, 1]} : vector<8x128xf32> to vector<8x32xf32>
    %514 = vector.extract_strided_slice %509 {offsets = [0, 96], sizes = [8, 32], strides = [1, 1]} : vector<8x128xf32> to vector<8x32xf32>
    %515 = arith.mulf %512, %495 : vector<8x32xf32>
    %516 = arith.mulf %511, %513 : vector<8x32xf32>
    %517 = arith.addf %515, %516 : vector<8x32xf32>
    %518 = math.tanh %517 : vector<8x32xf32>
    %519 = arith.mulf %514, %518 : vector<8x32xf32>
    %c1_156 = arith.constant 1 : index
    %c0_157 = arith.constant 0 : index
    %c0_158 = arith.constant 0 : index
    %520 = vector.load %arg19[%c1_156, %c0_157, %c0_158] : memref<8x8x32xf32, #tpu.memory_space<vmem>>, vector<1x8x32xf32>
    %521 = vector.shape_cast %520 : vector<1x8x32xf32> to vector<8x32xf32>
    %522 = vector.shape_cast %519 : vector<8x32xf32> to vector<1x8x32xf32>
    tpu.vector_store %arg19[%c1_156, %c0_157, %c0_158], %522 {strides = array<i32>} : memref<8x8x32xf32, #tpu.memory_space<vmem>>, vector<1x8x32xf32>,
    %523 = vector.extract_strided_slice %472 {offsets = [2, 0, 0], sizes = [1, 8, 128], strides = [1, 1, 1]} : vector<8x8x128xf32> to vector<1x8x128xf32>
    %524 = vector.shape_cast %523 : vector<1x8x128xf32> to vector<8x128xf32>
    %cst_159 = arith.constant dense<0.000000e+00> : vector<8x128xf32>
    %525 = tpu.matmul %519, %474, %cst_159 {dimension_numbers = #tpu.dot_dimension_numbers<[1], [0], [0], [1], [0, 0, 1, 1], [], []>} : vector<8x32xf32>, vector<32x128xf32>, vector<8x128xf32> -> vector<8x128xf32>
    %526 = arith.addf %524, %525 : vector<8x128xf32>
    %527 = arith.negf %526 : vector<8x128xf32>
    %528 = math.exp %527 : vector<8x128xf32>
    %cst_160 = arith.constant 1.000000e+00 : f32
    %529 = vector.broadcast %cst_160 : f32 to vector<8x128xf32>
    %530 = arith.addf %529, %528 : vector<8x128xf32>
    %531 = arith.divf %529, %530 : vector<8x128xf32>
    %532 = math.tanh %526 : vector<8x128xf32>
    %533 = vector.extract_strided_slice %531 {offsets = [0, 0], sizes = [8, 32], strides = [1, 1]} : vector<8x128xf32> to vector<8x32xf32>
    %534 = vector.extract_strided_slice %531 {offsets = [0, 32], sizes = [8, 32], strides = [1, 1]} : vector<8x128xf32> to vector<8x32xf32>
    %535 = vector.extract_strided_slice %532 {offsets = [0, 64], sizes = [8, 32], strides = [1, 1]} : vector<8x128xf32> to vector<8x32xf32>
    %536 = vector.extract_strided_slice %531 {offsets = [0, 96], sizes = [8, 32], strides = [1, 1]} : vector<8x128xf32> to vector<8x32xf32>
    %537 = arith.mulf %534, %517 : vector<8x32xf32>
    %538 = arith.mulf %533, %535 : vector<8x32xf32>
    %539 = arith.addf %537, %538 : vector<8x32xf32>
    %540 = math.tanh %539 : vector<8x32xf32>
    %541 = arith.mulf %536, %540 : vector<8x32xf32>
    %c2_161 = arith.constant 2 : index
    %c0_162 = arith.constant 0 : index
    %c0_163 = arith.constant 0 : index
    %542 = vector.load %arg19[%c2_161, %c0_162, %c0_163] : memref<8x8x32xf32, #tpu.memory_space<vmem>>, vector<1x8x32xf32>
    %543 = vector.shape_cast %542 : vector<1x8x32xf32> to vector<8x32xf32>
    %544 = vector.shape_cast %541 : vector<8x32xf32> to vector<1x8x32xf32>
    tpu.vector_store %arg19[%c2_161, %c0_162, %c0_163], %544 {strides = array<i32>} : memref<8x8x32xf32, #tpu.memory_space<vmem>>, vector<1x8x32xf32>,
    %545 = vector.extract_strided_slice %472 {offsets = [3, 0, 0], sizes = [1, 8, 128], strides = [1, 1, 1]} : vector<8x8x128xf32> to vector<1x8x128xf32>
    %546 = vector.shape_cast %545 : vector<1x8x128xf32> to vector<8x128xf32>
    %cst_164 = arith.constant dense<0.000000e+00> : vector<8x128xf32>
    %547 = tpu.matmul %541, %474, %cst_164 {dimension_numbers = #tpu.dot_dimension_numbers<[1], [0], [0], [1], [0, 0, 1, 1], [], []>} : vector<8x32xf32>, vector<32x128xf32>, vector<8x128xf32> -> vector<8x128xf32>
    %548 = arith.addf %546, %547 : vector<8x128xf32>
    %549 = arith.negf %548 : vector<8x128xf32>
    %550 = math.exp %549 : vector<8x128xf32>
    %cst_165 = arith.constant 1.000000e+00 : f32
    %551 = vector.broadcast %cst_165 : f32 to vector<8x128xf32>
    %552 = arith.addf %551, %550 : vector<8x128xf32>
    %553 = arith.divf %551, %552 : vector<8x128xf32>
    %554 = math.tanh %548 : vector<8x128xf32>
    %555 = vector.extract_strided_slice %553 {offsets = [0, 0], sizes = [8, 32], strides = [1, 1]} : vector<8x128xf32> to vector<8x32xf32>
    %556 = vector.extract_strided_slice %553 {offsets = [0, 32], sizes = [8, 32], strides = [1, 1]} : vector<8x128xf32> to vector<8x32xf32>
    %557 = vector.extract_strided_slice %554 {offsets = [0, 64], sizes = [8, 32], strides = [1, 1]} : vector<8x128xf32> to vector<8x32xf32>
    %558 = vector.extract_strided_slice %553 {offsets = [0, 96], sizes = [8, 32], strides = [1, 1]} : vector<8x128xf32> to vector<8x32xf32>
    %559 = arith.mulf %556, %539 : vector<8x32xf32>
    %560 = arith.mulf %555, %557 : vector<8x32xf32>
    %561 = arith.addf %559, %560 : vector<8x32xf32>
    %562 = math.tanh %561 : vector<8x32xf32>
    %563 = arith.mulf %558, %562 : vector<8x32xf32>
    %c3_166 = arith.constant 3 : index
    %c0_167 = arith.constant 0 : index
    %c0_168 = arith.constant 0 : index
    %564 = vector.load %arg19[%c3_166, %c0_167, %c0_168] : memref<8x8x32xf32, #tpu.memory_space<vmem>>, vector<1x8x32xf32>
    %565 = vector.shape_cast %564 : vector<1x8x32xf32> to vector<8x32xf32>
    %566 = vector.shape_cast %563 : vector<8x32xf32> to vector<1x8x32xf32>
    tpu.vector_store %arg19[%c3_166, %c0_167, %c0_168], %566 {strides = array<i32>} : memref<8x8x32xf32, #tpu.memory_space<vmem>>, vector<1x8x32xf32>,
    %567 = vector.extract_strided_slice %472 {offsets = [4, 0, 0], sizes = [1, 8, 128], strides = [1, 1, 1]} : vector<8x8x128xf32> to vector<1x8x128xf32>
    %568 = vector.shape_cast %567 : vector<1x8x128xf32> to vector<8x128xf32>
    %cst_169 = arith.constant dense<0.000000e+00> : vector<8x128xf32>
    %569 = tpu.matmul %563, %474, %cst_169 {dimension_numbers = #tpu.dot_dimension_numbers<[1], [0], [0], [1], [0, 0, 1, 1], [], []>} : vector<8x32xf32>, vector<32x128xf32>, vector<8x128xf32> -> vector<8x128xf32>
    %570 = arith.addf %568, %569 : vector<8x128xf32>
    %571 = arith.negf %570 : vector<8x128xf32>
    %572 = math.exp %571 : vector<8x128xf32>
    %cst_170 = arith.constant 1.000000e+00 : f32
    %573 = vector.broadcast %cst_170 : f32 to vector<8x128xf32>
    %574 = arith.addf %573, %572 : vector<8x128xf32>
    %575 = arith.divf %573, %574 : vector<8x128xf32>
    %576 = math.tanh %570 : vector<8x128xf32>
    %577 = vector.extract_strided_slice %575 {offsets = [0, 0], sizes = [8, 32], strides = [1, 1]} : vector<8x128xf32> to vector<8x32xf32>
    %578 = vector.extract_strided_slice %575 {offsets = [0, 32], sizes = [8, 32], strides = [1, 1]} : vector<8x128xf32> to vector<8x32xf32>
    %579 = vector.extract_strided_slice %576 {offsets = [0, 64], sizes = [8, 32], strides = [1, 1]} : vector<8x128xf32> to vector<8x32xf32>
    %580 = vector.extract_strided_slice %575 {offsets = [0, 96], sizes = [8, 32], strides = [1, 1]} : vector<8x128xf32> to vector<8x32xf32>
    %581 = arith.mulf %578, %561 : vector<8x32xf32>
    %582 = arith.mulf %577, %579 : vector<8x32xf32>
    %583 = arith.addf %581, %582 : vector<8x32xf32>
    %584 = math.tanh %583 : vector<8x32xf32>
    %585 = arith.mulf %580, %584 : vector<8x32xf32>
    %c4_171 = arith.constant 4 : index
    %c0_172 = arith.constant 0 : index
    %c0_173 = arith.constant 0 : index
    %586 = vector.load %arg19[%c4_171, %c0_172, %c0_173] : memref<8x8x32xf32, #tpu.memory_space<vmem>>, vector<1x8x32xf32>
    %587 = vector.shape_cast %586 : vector<1x8x32xf32> to vector<8x32xf32>
    %588 = vector.shape_cast %585 : vector<8x32xf32> to vector<1x8x32xf32>
    tpu.vector_store %arg19[%c4_171, %c0_172, %c0_173], %588 {strides = array<i32>} : memref<8x8x32xf32, #tpu.memory_space<vmem>>, vector<1x8x32xf32>,
    %589 = vector.extract_strided_slice %472 {offsets = [5, 0, 0], sizes = [1, 8, 128], strides = [1, 1, 1]} : vector<8x8x128xf32> to vector<1x8x128xf32>
    %590 = vector.shape_cast %589 : vector<1x8x128xf32> to vector<8x128xf32>
    %cst_174 = arith.constant dense<0.000000e+00> : vector<8x128xf32>
    %591 = tpu.matmul %585, %474, %cst_174 {dimension_numbers = #tpu.dot_dimension_numbers<[1], [0], [0], [1], [0, 0, 1, 1], [], []>} : vector<8x32xf32>, vector<32x128xf32>, vector<8x128xf32> -> vector<8x128xf32>
    %592 = arith.addf %590, %591 : vector<8x128xf32>
    %593 = arith.negf %592 : vector<8x128xf32>
    %594 = math.exp %593 : vector<8x128xf32>
    %cst_175 = arith.constant 1.000000e+00 : f32
    %595 = vector.broadcast %cst_175 : f32 to vector<8x128xf32>
    %596 = arith.addf %595, %594 : vector<8x128xf32>
    %597 = arith.divf %595, %596 : vector<8x128xf32>
    %598 = math.tanh %592 : vector<8x128xf32>
    %599 = vector.extract_strided_slice %597 {offsets = [0, 0], sizes = [8, 32], strides = [1, 1]} : vector<8x128xf32> to vector<8x32xf32>
    %600 = vector.extract_strided_slice %597 {offsets = [0, 32], sizes = [8, 32], strides = [1, 1]} : vector<8x128xf32> to vector<8x32xf32>
    %601 = vector.extract_strided_slice %598 {offsets = [0, 64], sizes = [8, 32], strides = [1, 1]} : vector<8x128xf32> to vector<8x32xf32>
    %602 = vector.extract_strided_slice %597 {offsets = [0, 96], sizes = [8, 32], strides = [1, 1]} : vector<8x128xf32> to vector<8x32xf32>
    %603 = arith.mulf %600, %583 : vector<8x32xf32>
    %604 = arith.mulf %599, %601 : vector<8x32xf32>
    %605 = arith.addf %603, %604 : vector<8x32xf32>
    %606 = math.tanh %605 : vector<8x32xf32>
    %607 = arith.mulf %602, %606 : vector<8x32xf32>
    %c5_176 = arith.constant 5 : index
    %c0_177 = arith.constant 0 : index
    %c0_178 = arith.constant 0 : index
    %608 = vector.load %arg19[%c5_176, %c0_177, %c0_178] : memref<8x8x32xf32, #tpu.memory_space<vmem>>, vector<1x8x32xf32>
    %609 = vector.shape_cast %608 : vector<1x8x32xf32> to vector<8x32xf32>
    %610 = vector.shape_cast %607 : vector<8x32xf32> to vector<1x8x32xf32>
    tpu.vector_store %arg19[%c5_176, %c0_177, %c0_178], %610 {strides = array<i32>} : memref<8x8x32xf32, #tpu.memory_space<vmem>>, vector<1x8x32xf32>,
    %611 = vector.extract_strided_slice %472 {offsets = [6, 0, 0], sizes = [1, 8, 128], strides = [1, 1, 1]} : vector<8x8x128xf32> to vector<1x8x128xf32>
    %612 = vector.shape_cast %611 : vector<1x8x128xf32> to vector<8x128xf32>
    %cst_179 = arith.constant dense<0.000000e+00> : vector<8x128xf32>
    %613 = tpu.matmul %607, %474, %cst_179 {dimension_numbers = #tpu.dot_dimension_numbers<[1], [0], [0], [1], [0, 0, 1, 1], [], []>} : vector<8x32xf32>, vector<32x128xf32>, vector<8x128xf32> -> vector<8x128xf32>
    %614 = arith.addf %612, %613 : vector<8x128xf32>
    %615 = arith.negf %614 : vector<8x128xf32>
    %616 = math.exp %615 : vector<8x128xf32>
    %cst_180 = arith.constant 1.000000e+00 : f32
    %617 = vector.broadcast %cst_180 : f32 to vector<8x128xf32>
    %618 = arith.addf %617, %616 : vector<8x128xf32>
    %619 = arith.divf %617, %618 : vector<8x128xf32>
    %620 = math.tanh %614 : vector<8x128xf32>
    %621 = vector.extract_strided_slice %619 {offsets = [0, 0], sizes = [8, 32], strides = [1, 1]} : vector<8x128xf32> to vector<8x32xf32>
    %622 = vector.extract_strided_slice %619 {offsets = [0, 32], sizes = [8, 32], strides = [1, 1]} : vector<8x128xf32> to vector<8x32xf32>
    %623 = vector.extract_strided_slice %620 {offsets = [0, 64], sizes = [8, 32], strides = [1, 1]} : vector<8x128xf32> to vector<8x32xf32>
    %624 = vector.extract_strided_slice %619 {offsets = [0, 96], sizes = [8, 32], strides = [1, 1]} : vector<8x128xf32> to vector<8x32xf32>
    %625 = arith.mulf %622, %605 : vector<8x32xf32>
    %626 = arith.mulf %621, %623 : vector<8x32xf32>
    %627 = arith.addf %625, %626 : vector<8x32xf32>
    %628 = math.tanh %627 : vector<8x32xf32>
    %629 = arith.mulf %624, %628 : vector<8x32xf32>
    %c6_181 = arith.constant 6 : index
    %c0_182 = arith.constant 0 : index
    %c0_183 = arith.constant 0 : index
    %630 = vector.load %arg19[%c6_181, %c0_182, %c0_183] : memref<8x8x32xf32, #tpu.memory_space<vmem>>, vector<1x8x32xf32>
    %631 = vector.shape_cast %630 : vector<1x8x32xf32> to vector<8x32xf32>
    %632 = vector.shape_cast %629 : vector<8x32xf32> to vector<1x8x32xf32>
    tpu.vector_store %arg19[%c6_181, %c0_182, %c0_183], %632 {strides = array<i32>} : memref<8x8x32xf32, #tpu.memory_space<vmem>>, vector<1x8x32xf32>,
    %633 = vector.extract_strided_slice %472 {offsets = [7, 0, 0], sizes = [1, 8, 128], strides = [1, 1, 1]} : vector<8x8x128xf32> to vector<1x8x128xf32>
    %634 = vector.shape_cast %633 : vector<1x8x128xf32> to vector<8x128xf32>
    %cst_184 = arith.constant dense<0.000000e+00> : vector<8x128xf32>
    %635 = tpu.matmul %629, %474, %cst_184 {dimension_numbers = #tpu.dot_dimension_numbers<[1], [0], [0], [1], [0, 0, 1, 1], [], []>} : vector<8x32xf32>, vector<32x128xf32>, vector<8x128xf32> -> vector<8x128xf32>
    %636 = arith.addf %634, %635 : vector<8x128xf32>
    %637 = arith.negf %636 : vector<8x128xf32>
    %638 = math.exp %637 : vector<8x128xf32>
    %cst_185 = arith.constant 1.000000e+00 : f32
    %639 = vector.broadcast %cst_185 : f32 to vector<8x128xf32>
    %640 = arith.addf %639, %638 : vector<8x128xf32>
    %641 = arith.divf %639, %640 : vector<8x128xf32>
    %642 = math.tanh %636 : vector<8x128xf32>
    %643 = vector.extract_strided_slice %641 {offsets = [0, 0], sizes = [8, 32], strides = [1, 1]} : vector<8x128xf32> to vector<8x32xf32>
    %644 = vector.extract_strided_slice %641 {offsets = [0, 32], sizes = [8, 32], strides = [1, 1]} : vector<8x128xf32> to vector<8x32xf32>
    %645 = vector.extract_strided_slice %642 {offsets = [0, 64], sizes = [8, 32], strides = [1, 1]} : vector<8x128xf32> to vector<8x32xf32>
    %646 = vector.extract_strided_slice %641 {offsets = [0, 96], sizes = [8, 32], strides = [1, 1]} : vector<8x128xf32> to vector<8x32xf32>
    %647 = arith.mulf %644, %627 : vector<8x32xf32>
    %648 = arith.mulf %643, %645 : vector<8x32xf32>
    %649 = arith.addf %647, %648 : vector<8x32xf32>
    %650 = math.tanh %649 : vector<8x32xf32>
    %651 = arith.mulf %646, %650 : vector<8x32xf32>
    %c7_186 = arith.constant 7 : index
    %c0_187 = arith.constant 0 : index
    %c0_188 = arith.constant 0 : index
    %652 = vector.load %arg19[%c7_186, %c0_187, %c0_188] : memref<8x8x32xf32, #tpu.memory_space<vmem>>, vector<1x8x32xf32>
    %653 = vector.shape_cast %652 : vector<1x8x32xf32> to vector<8x32xf32>
    %654 = vector.shape_cast %651 : vector<8x32xf32> to vector<1x8x32xf32>
    tpu.vector_store %arg19[%c7_186, %c0_187, %c0_188], %654 {strides = array<i32>} : memref<8x8x32xf32, #tpu.memory_space<vmem>>, vector<1x8x32xf32>,
    %c0_189 = arith.constant 0 : index
    %c0_190 = arith.constant 0 : index
    %c0_191 = arith.constant 0 : index
    %655 = vector.load %arg19[%c0_189, %c0_190, %c0_191] : memref<8x8x32xf32, #tpu.memory_space<vmem>>, vector<8x8x32xf32>
    %656 = arith.addf %655, %463 : vector<8x8x32xf32>
    %657 = vector.shape_cast %656 : vector<8x8x32xf32> to vector<64x32xf32>
    %c0_192 = arith.constant 0 : index
    %c0_193 = arith.constant 0 : index
    %658 = vector.load %arg12[%c0_192, %c0_193] : memref<32x7xf32, #tpu.memory_space<vmem>>, vector<32x7xf32>
    %cst_194 = arith.constant dense<0.000000e+00> : vector<64x7xf32>
    %659 = tpu.matmul %657, %658, %cst_194 {dimension_numbers = #tpu.dot_dimension_numbers<[1], [0], [0], [1], [0, 0, 1, 1], [], []>} : vector<64x32xf32>, vector<32x7xf32>, vector<64x7xf32> -> vector<64x7xf32>
    %c0_195 = arith.constant 0 : index
    %c0_196 = arith.constant 0 : index
    %660 = vector.load %arg13[%c0_195, %c0_196] : memref<1x7xf32, #tpu.memory_space<vmem>>, vector<1x7xf32>
    %661 = vector.broadcast %660 : vector<1x7xf32> to vector<64x7xf32>
    %662 = arith.addf %659, %661 : vector<64x7xf32>
    %663 = vector.shape_cast %662 : vector<64x7xf32> to vector<8x8x7xf32>
    %c0_197 = arith.constant 0 : index
    %c0_198 = arith.constant 0 : index
    %664 = vector.load %arg14[%c0_197, %c0_198] : memref<7x7xf32, #tpu.memory_space<vmem>>, vector<7x7xf32>
    %665 = tpu.iota {dimensions = array<i32: 1>} : vector<8x7xi32>
    %666 = tpu.iota {dimensions = array<i32: 2>} : vector<8x7x7xi32>
    %c5_i32 = arith.constant 5 : i32
    %667 = vector.broadcast %c5_i32 : i32 to vector<8x7xi32>
    %668 = arith.cmpi eq, %665, %667 : vector<8x7xi32>
    %cst_199 = arith.constant 0.000000e+00 : f32
    %cst_200 = arith.constant -1.000000e+04 : f32
    %669 = vector.broadcast %cst_199 : f32 to vector<8x7xf32>
    %670 = vector.broadcast %cst_200 : f32 to vector<8x7xf32>
    %671 = arith.select %668, %669, %670 : vector<8x7xi1>, vector<8x7xf32>
    %672 = vector.shape_cast %671 : vector<8x7xf32> to vector<8x1x7xf32>
    %673 = vector.shape_cast %664 : vector<7x7xf32> to vector<1x7x7xf32>
    %674 = vector.broadcast %672 : vector<8x1x7xf32> to vector<8x7x7xf32>
    %675 = vector.broadcast %673 : vector<1x7x7xf32> to vector<8x7x7xf32>
    %676 = arith.addf %674, %675 : vector<8x7x7xf32>
    %cst_201 = arith.constant dense<0xFF800000> : vector<8x7xf32>
    %677 = vector.multi_reduction <maximumf>, %676, %cst_201 [2] : vector<8x7x7xf32> to vector<8x7xf32>
    %678 = vector.extract_strided_slice %663 {offsets = [0, 0, 0], sizes = [1, 8, 7], strides = [1, 1, 1]} : vector<8x8x7xf32> to vector<1x8x7xf32>
    %679 = vector.shape_cast %678 : vector<1x8x7xf32> to vector<8x7xf32>
    %680 = arith.addf %677, %679 : vector<8x7xf32>
    %c0_202 = arith.constant 0 : index
    %c0_203 = arith.constant 0 : index
    %c0_204 = arith.constant 0 : index
    %681 = vector.load %arg15[%c0_202, %c0_203, %c0_204] : memref<8x8x1xf32, #tpu.memory_space<vmem>>, vector<1x8x1xf32>
    %682 = vector.shape_cast %681 : vector<1x8x1xf32> to vector<8x1xf32>
    %cst_205 = arith.constant 5.000000e-01 : f32
    %683 = vector.broadcast %cst_205 : f32 to vector<8x1xf32>
    %684 = arith.cmpf ogt, %682, %683 : vector<8x1xf32>
    %685 = vector.shape_cast %684 : vector<8x1xi1> to vector<8x1xi1>
    %686 = vector.broadcast %685 : vector<8x1xi1> to vector<8x7xi1>
    %687 = arith.select %686, %680, %671 : vector<8x7xi1>, vector<8x7xf32>
    %688 = vector.shape_cast %687 : vector<8x7xf32> to vector<8x1x7xf32>
    %689 = vector.shape_cast %664 : vector<7x7xf32> to vector<1x7x7xf32>
    %690 = vector.broadcast %688 : vector<8x1x7xf32> to vector<8x7x7xf32>
    %691 = vector.broadcast %689 : vector<1x7x7xf32> to vector<8x7x7xf32>
    %692 = arith.addf %690, %691 : vector<8x7x7xf32>
    %cst_206 = arith.constant dense<0xFF800000> : vector<8x7xf32>
    %693 = vector.multi_reduction <maximumf>, %692, %cst_206 [2] : vector<8x7x7xf32> to vector<8x7xf32>
    %694 = vector.shape_cast %693 : vector<8x7xf32> to vector<8x7x1xf32>
    %695 = vector.broadcast %694 : vector<8x7x1xf32> to vector<8x7x7xf32>
    %696 = arith.cmpf oge, %692, %695 : vector<8x7x7xf32>
    %c7_i32 = arith.constant 7 : i32
    %697 = vector.broadcast %c7_i32 : i32 to vector<8x7x7xi32>
    %698 = arith.select %696, %666, %697 : vector<8x7x7xi1>, vector<8x7x7xi32>
    %cst_207 = arith.constant dense<2147483647> : vector<8x7xi32>
    %699 = vector.multi_reduction <minsi>, %698, %cst_207 [2] : vector<8x7x7xi32> to vector<8x7xi32>
    %700 = vector.extract_strided_slice %663 {offsets = [1, 0, 0], sizes = [1, 8, 7], strides = [1, 1, 1]} : vector<8x8x7xf32> to vector<1x8x7xf32>
    %701 = vector.shape_cast %700 : vector<1x8x7xf32> to vector<8x7xf32>
    %702 = arith.addf %693, %701 : vector<8x7xf32>
    %c1_208 = arith.constant 1 : index
    %c0_209 = arith.constant 0 : index
    %c0_210 = arith.constant 0 : index
    %703 = vector.load %arg15[%c1_208, %c0_209, %c0_210] : memref<8x8x1xf32, #tpu.memory_space<vmem>>, vector<1x8x1xf32>
    %704 = vector.shape_cast %703 : vector<1x8x1xf32> to vector<8x1xf32>
    %cst_211 = arith.constant 5.000000e-01 : f32
    %705 = vector.broadcast %cst_211 : f32 to vector<8x1xf32>
    %706 = arith.cmpf ogt, %704, %705 : vector<8x1xf32>
    %707 = vector.shape_cast %706 : vector<8x1xi1> to vector<8x1xi1>
    %708 = vector.broadcast %707 : vector<8x1xi1> to vector<8x7xi1>
    %709 = arith.select %708, %702, %687 : vector<8x7xi1>, vector<8x7xf32>
    %710 = vector.shape_cast %706 : vector<8x1xi1> to vector<8x1xi1>
    %711 = vector.broadcast %710 : vector<8x1xi1> to vector<8x7xi1>
    %712 = arith.select %711, %699, %665 : vector<8x7xi1>, vector<8x7xi32>
    %713 = vector.shape_cast %709 : vector<8x7xf32> to vector<8x1x7xf32>
    %714 = vector.shape_cast %664 : vector<7x7xf32> to vector<1x7x7xf32>
    %715 = vector.broadcast %713 : vector<8x1x7xf32> to vector<8x7x7xf32>
    %716 = vector.broadcast %714 : vector<1x7x7xf32> to vector<8x7x7xf32>
    %717 = arith.addf %715, %716 : vector<8x7x7xf32>
    %cst_212 = arith.constant dense<0xFF800000> : vector<8x7xf32>
    %718 = vector.multi_reduction <maximumf>, %717, %cst_212 [2] : vector<8x7x7xf32> to vector<8x7xf32>
    %719 = vector.shape_cast %718 : vector<8x7xf32> to vector<8x7x1xf32>
    %720 = vector.broadcast %719 : vector<8x7x1xf32> to vector<8x7x7xf32>
    %721 = arith.cmpf oge, %717, %720 : vector<8x7x7xf32>
    %c7_i32_213 = arith.constant 7 : i32
    %722 = vector.broadcast %c7_i32_213 : i32 to vector<8x7x7xi32>
    %723 = arith.select %721, %666, %722 : vector<8x7x7xi1>, vector<8x7x7xi32>
    %cst_214 = arith.constant dense<2147483647> : vector<8x7xi32>
    %724 = vector.multi_reduction <minsi>, %723, %cst_214 [2] : vector<8x7x7xi32> to vector<8x7xi32>
    %725 = vector.extract_strided_slice %663 {offsets = [2, 0, 0], sizes = [1, 8, 7], strides = [1, 1, 1]} : vector<8x8x7xf32> to vector<1x8x7xf32>
    %726 = vector.shape_cast %725 : vector<1x8x7xf32> to vector<8x7xf32>
    %727 = arith.addf %718, %726 : vector<8x7xf32>
    %c2_215 = arith.constant 2 : index
    %c0_216 = arith.constant 0 : index
    %c0_217 = arith.constant 0 : index
    %728 = vector.load %arg15[%c2_215, %c0_216, %c0_217] : memref<8x8x1xf32, #tpu.memory_space<vmem>>, vector<1x8x1xf32>
    %729 = vector.shape_cast %728 : vector<1x8x1xf32> to vector<8x1xf32>
    %cst_218 = arith.constant 5.000000e-01 : f32
    %730 = vector.broadcast %cst_218 : f32 to vector<8x1xf32>
    %731 = arith.cmpf ogt, %729, %730 : vector<8x1xf32>
    %732 = vector.shape_cast %731 : vector<8x1xi1> to vector<8x1xi1>
    %733 = vector.broadcast %732 : vector<8x1xi1> to vector<8x7xi1>
    %734 = arith.select %733, %727, %709 : vector<8x7xi1>, vector<8x7xf32>
    %735 = vector.shape_cast %731 : vector<8x1xi1> to vector<8x1xi1>
    %736 = vector.broadcast %735 : vector<8x1xi1> to vector<8x7xi1>
    %737 = arith.select %736, %724, %665 : vector<8x7xi1>, vector<8x7xi32>
    %738 = vector.shape_cast %734 : vector<8x7xf32> to vector<8x1x7xf32>
    %739 = vector.shape_cast %664 : vector<7x7xf32> to vector<1x7x7xf32>
    %740 = vector.broadcast %738 : vector<8x1x7xf32> to vector<8x7x7xf32>
    %741 = vector.broadcast %739 : vector<1x7x7xf32> to vector<8x7x7xf32>
    %742 = arith.addf %740, %741 : vector<8x7x7xf32>
    %cst_219 = arith.constant dense<0xFF800000> : vector<8x7xf32>
    %743 = vector.multi_reduction <maximumf>, %742, %cst_219 [2] : vector<8x7x7xf32> to vector<8x7xf32>
    %744 = vector.shape_cast %743 : vector<8x7xf32> to vector<8x7x1xf32>
    %745 = vector.broadcast %744 : vector<8x7x1xf32> to vector<8x7x7xf32>
    %746 = arith.cmpf oge, %742, %745 : vector<8x7x7xf32>
    %c7_i32_220 = arith.constant 7 : i32
    %747 = vector.broadcast %c7_i32_220 : i32 to vector<8x7x7xi32>
    %748 = arith.select %746, %666, %747 : vector<8x7x7xi1>, vector<8x7x7xi32>
    %cst_221 = arith.constant dense<2147483647> : vector<8x7xi32>
    %749 = vector.multi_reduction <minsi>, %748, %cst_221 [2] : vector<8x7x7xi32> to vector<8x7xi32>
    %750 = vector.extract_strided_slice %663 {offsets = [3, 0, 0], sizes = [1, 8, 7], strides = [1, 1, 1]} : vector<8x8x7xf32> to vector<1x8x7xf32>
    %751 = vector.shape_cast %750 : vector<1x8x7xf32> to vector<8x7xf32>
    %752 = arith.addf %743, %751 : vector<8x7xf32>
    %c3_222 = arith.constant 3 : index
    %c0_223 = arith.constant 0 : index
    %c0_224 = arith.constant 0 : index
    %753 = vector.load %arg15[%c3_222, %c0_223, %c0_224] : memref<8x8x1xf32, #tpu.memory_space<vmem>>, vector<1x8x1xf32>
    %754 = vector.shape_cast %753 : vector<1x8x1xf32> to vector<8x1xf32>
    %cst_225 = arith.constant 5.000000e-01 : f32
    %755 = vector.broadcast %cst_225 : f32 to vector<8x1xf32>
    %756 = arith.cmpf ogt, %754, %755 : vector<8x1xf32>
    %757 = vector.shape_cast %756 : vector<8x1xi1> to vector<8x1xi1>
    %758 = vector.broadcast %757 : vector<8x1xi1> to vector<8x7xi1>
    %759 = arith.select %758, %752, %734 : vector<8x7xi1>, vector<8x7xf32>
    %760 = vector.shape_cast %756 : vector<8x1xi1> to vector<8x1xi1>
    %761 = vector.broadcast %760 : vector<8x1xi1> to vector<8x7xi1>
    %762 = arith.select %761, %749, %665 : vector<8x7xi1>, vector<8x7xi32>
    %763 = vector.shape_cast %759 : vector<8x7xf32> to vector<8x1x7xf32>
    %764 = vector.shape_cast %664 : vector<7x7xf32> to vector<1x7x7xf32>
    %765 = vector.broadcast %763 : vector<8x1x7xf32> to vector<8x7x7xf32>
    %766 = vector.broadcast %764 : vector<1x7x7xf32> to vector<8x7x7xf32>
    %767 = arith.addf %765, %766 : vector<8x7x7xf32>
    %cst_226 = arith.constant dense<0xFF800000> : vector<8x7xf32>
    %768 = vector.multi_reduction <maximumf>, %767, %cst_226 [2] : vector<8x7x7xf32> to vector<8x7xf32>
    %769 = vector.shape_cast %768 : vector<8x7xf32> to vector<8x7x1xf32>
    %770 = vector.broadcast %769 : vector<8x7x1xf32> to vector<8x7x7xf32>
    %771 = arith.cmpf oge, %767, %770 : vector<8x7x7xf32>
    %c7_i32_227 = arith.constant 7 : i32
    %772 = vector.broadcast %c7_i32_227 : i32 to vector<8x7x7xi32>
    %773 = arith.select %771, %666, %772 : vector<8x7x7xi1>, vector<8x7x7xi32>
    %cst_228 = arith.constant dense<2147483647> : vector<8x7xi32>
    %774 = vector.multi_reduction <minsi>, %773, %cst_228 [2] : vector<8x7x7xi32> to vector<8x7xi32>
    %775 = vector.extract_strided_slice %663 {offsets = [4, 0, 0], sizes = [1, 8, 7], strides = [1, 1, 1]} : vector<8x8x7xf32> to vector<1x8x7xf32>
    %776 = vector.shape_cast %775 : vector<1x8x7xf32> to vector<8x7xf32>
    %777 = arith.addf %768, %776 : vector<8x7xf32>
    %c4_229 = arith.constant 4 : index
    %c0_230 = arith.constant 0 : index
    %c0_231 = arith.constant 0 : index
    %778 = vector.load %arg15[%c4_229, %c0_230, %c0_231] : memref<8x8x1xf32, #tpu.memory_space<vmem>>, vector<1x8x1xf32>
    %779 = vector.shape_cast %778 : vector<1x8x1xf32> to vector<8x1xf32>
    %cst_232 = arith.constant 5.000000e-01 : f32
    %780 = vector.broadcast %cst_232 : f32 to vector<8x1xf32>
    %781 = arith.cmpf ogt, %779, %780 : vector<8x1xf32>
    %782 = vector.shape_cast %781 : vector<8x1xi1> to vector<8x1xi1>
    %783 = vector.broadcast %782 : vector<8x1xi1> to vector<8x7xi1>
    %784 = arith.select %783, %777, %759 : vector<8x7xi1>, vector<8x7xf32>
    %785 = vector.shape_cast %781 : vector<8x1xi1> to vector<8x1xi1>
    %786 = vector.broadcast %785 : vector<8x1xi1> to vector<8x7xi1>
    %787 = arith.select %786, %774, %665 : vector<8x7xi1>, vector<8x7xi32>
    %788 = vector.shape_cast %784 : vector<8x7xf32> to vector<8x1x7xf32>
    %789 = vector.shape_cast %664 : vector<7x7xf32> to vector<1x7x7xf32>
    %790 = vector.broadcast %788 : vector<8x1x7xf32> to vector<8x7x7xf32>
    %791 = vector.broadcast %789 : vector<1x7x7xf32> to vector<8x7x7xf32>
    %792 = arith.addf %790, %791 : vector<8x7x7xf32>
    %cst_233 = arith.constant dense<0xFF800000> : vector<8x7xf32>
    %793 = vector.multi_reduction <maximumf>, %792, %cst_233 [2] : vector<8x7x7xf32> to vector<8x7xf32>
    %794 = vector.shape_cast %793 : vector<8x7xf32> to vector<8x7x1xf32>
    %795 = vector.broadcast %794 : vector<8x7x1xf32> to vector<8x7x7xf32>
    %796 = arith.cmpf oge, %792, %795 : vector<8x7x7xf32>
    %c7_i32_234 = arith.constant 7 : i32
    %797 = vector.broadcast %c7_i32_234 : i32 to vector<8x7x7xi32>
    %798 = arith.select %796, %666, %797 : vector<8x7x7xi1>, vector<8x7x7xi32>
    %cst_235 = arith.constant dense<2147483647> : vector<8x7xi32>
    %799 = vector.multi_reduction <minsi>, %798, %cst_235 [2] : vector<8x7x7xi32> to vector<8x7xi32>
    %800 = vector.extract_strided_slice %663 {offsets = [5, 0, 0], sizes = [1, 8, 7], strides = [1, 1, 1]} : vector<8x8x7xf32> to vector<1x8x7xf32>
    %801 = vector.shape_cast %800 : vector<1x8x7xf32> to vector<8x7xf32>
    %802 = arith.addf %793, %801 : vector<8x7xf32>
    %c5_236 = arith.constant 5 : index
    %c0_237 = arith.constant 0 : index
    %c0_238 = arith.constant 0 : index
    %803 = vector.load %arg15[%c5_236, %c0_237, %c0_238] : memref<8x8x1xf32, #tpu.memory_space<vmem>>, vector<1x8x1xf32>
    %804 = vector.shape_cast %803 : vector<1x8x1xf32> to vector<8x1xf32>
    %cst_239 = arith.constant 5.000000e-01 : f32
    %805 = vector.broadcast %cst_239 : f32 to vector<8x1xf32>
    %806 = arith.cmpf ogt, %804, %805 : vector<8x1xf32>
    %807 = vector.shape_cast %806 : vector<8x1xi1> to vector<8x1xi1>
    %808 = vector.broadcast %807 : vector<8x1xi1> to vector<8x7xi1>
    %809 = arith.select %808, %802, %784 : vector<8x7xi1>, vector<8x7xf32>
    %810 = vector.shape_cast %806 : vector<8x1xi1> to vector<8x1xi1>
    %811 = vector.broadcast %810 : vector<8x1xi1> to vector<8x7xi1>
    %812 = arith.select %811, %799, %665 : vector<8x7xi1>, vector<8x7xi32>
    %813 = vector.shape_cast %809 : vector<8x7xf32> to vector<8x1x7xf32>
    %814 = vector.shape_cast %664 : vector<7x7xf32> to vector<1x7x7xf32>
    %815 = vector.broadcast %813 : vector<8x1x7xf32> to vector<8x7x7xf32>
    %816 = vector.broadcast %814 : vector<1x7x7xf32> to vector<8x7x7xf32>
    %817 = arith.addf %815, %816 : vector<8x7x7xf32>
    %cst_240 = arith.constant dense<0xFF800000> : vector<8x7xf32>
    %818 = vector.multi_reduction <maximumf>, %817, %cst_240 [2] : vector<8x7x7xf32> to vector<8x7xf32>
    %819 = vector.shape_cast %818 : vector<8x7xf32> to vector<8x7x1xf32>
    %820 = vector.broadcast %819 : vector<8x7x1xf32> to vector<8x7x7xf32>
    %821 = arith.cmpf oge, %817, %820 : vector<8x7x7xf32>
    %c7_i32_241 = arith.constant 7 : i32
    %822 = vector.broadcast %c7_i32_241 : i32 to vector<8x7x7xi32>
    %823 = arith.select %821, %666, %822 : vector<8x7x7xi1>, vector<8x7x7xi32>
    %cst_242 = arith.constant dense<2147483647> : vector<8x7xi32>
    %824 = vector.multi_reduction <minsi>, %823, %cst_242 [2] : vector<8x7x7xi32> to vector<8x7xi32>
    %825 = vector.extract_strided_slice %663 {offsets = [6, 0, 0], sizes = [1, 8, 7], strides = [1, 1, 1]} : vector<8x8x7xf32> to vector<1x8x7xf32>
    %826 = vector.shape_cast %825 : vector<1x8x7xf32> to vector<8x7xf32>
    %827 = arith.addf %818, %826 : vector<8x7xf32>
    %c6_243 = arith.constant 6 : index
    %c0_244 = arith.constant 0 : index
    %c0_245 = arith.constant 0 : index
    %828 = vector.load %arg15[%c6_243, %c0_244, %c0_245] : memref<8x8x1xf32, #tpu.memory_space<vmem>>, vector<1x8x1xf32>
    %829 = vector.shape_cast %828 : vector<1x8x1xf32> to vector<8x1xf32>
    %cst_246 = arith.constant 5.000000e-01 : f32
    %830 = vector.broadcast %cst_246 : f32 to vector<8x1xf32>
    %831 = arith.cmpf ogt, %829, %830 : vector<8x1xf32>
    %832 = vector.shape_cast %831 : vector<8x1xi1> to vector<8x1xi1>
    %833 = vector.broadcast %832 : vector<8x1xi1> to vector<8x7xi1>
    %834 = arith.select %833, %827, %809 : vector<8x7xi1>, vector<8x7xf32>
    %835 = vector.shape_cast %831 : vector<8x1xi1> to vector<8x1xi1>
    %836 = vector.broadcast %835 : vector<8x1xi1> to vector<8x7xi1>
    %837 = arith.select %836, %824, %665 : vector<8x7xi1>, vector<8x7xi32>
    %838 = vector.shape_cast %834 : vector<8x7xf32> to vector<8x1x7xf32>
    %839 = vector.shape_cast %664 : vector<7x7xf32> to vector<1x7x7xf32>
    %840 = vector.broadcast %838 : vector<8x1x7xf32> to vector<8x7x7xf32>
    %841 = vector.broadcast %839 : vector<1x7x7xf32> to vector<8x7x7xf32>
    %842 = arith.addf %840, %841 : vector<8x7x7xf32>
    %cst_247 = arith.constant dense<0xFF800000> : vector<8x7xf32>
    %843 = vector.multi_reduction <maximumf>, %842, %cst_247 [2] : vector<8x7x7xf32> to vector<8x7xf32>
    %844 = vector.shape_cast %843 : vector<8x7xf32> to vector<8x7x1xf32>
    %845 = vector.broadcast %844 : vector<8x7x1xf32> to vector<8x7x7xf32>
    %846 = arith.cmpf oge, %842, %845 : vector<8x7x7xf32>
    %c7_i32_248 = arith.constant 7 : i32
    %847 = vector.broadcast %c7_i32_248 : i32 to vector<8x7x7xi32>
    %848 = arith.select %846, %666, %847 : vector<8x7x7xi1>, vector<8x7x7xi32>
    %cst_249 = arith.constant dense<2147483647> : vector<8x7xi32>
    %849 = vector.multi_reduction <minsi>, %848, %cst_249 [2] : vector<8x7x7xi32> to vector<8x7xi32>
    %850 = vector.extract_strided_slice %663 {offsets = [7, 0, 0], sizes = [1, 8, 7], strides = [1, 1, 1]} : vector<8x8x7xf32> to vector<1x8x7xf32>
    %851 = vector.shape_cast %850 : vector<1x8x7xf32> to vector<8x7xf32>
    %852 = arith.addf %843, %851 : vector<8x7xf32>
    %c7_250 = arith.constant 7 : index
    %c0_251 = arith.constant 0 : index
    %c0_252 = arith.constant 0 : index
    %853 = vector.load %arg15[%c7_250, %c0_251, %c0_252] : memref<8x8x1xf32, #tpu.memory_space<vmem>>, vector<1x8x1xf32>
    %854 = vector.shape_cast %853 : vector<1x8x1xf32> to vector<8x1xf32>
    %cst_253 = arith.constant 5.000000e-01 : f32
    %855 = vector.broadcast %cst_253 : f32 to vector<8x1xf32>
    %856 = arith.cmpf ogt, %854, %855 : vector<8x1xf32>
    %857 = vector.shape_cast %856 : vector<8x1xi1> to vector<8x1xi1>
    %858 = vector.broadcast %857 : vector<8x1xi1> to vector<8x7xi1>
    %859 = arith.select %858, %852, %834 : vector<8x7xi1>, vector<8x7xf32>
    %860 = vector.shape_cast %856 : vector<8x1xi1> to vector<8x1xi1>
    %861 = vector.broadcast %860 : vector<8x1xi1> to vector<8x7xi1>
    %862 = arith.select %861, %849, %665 : vector<8x7xi1>, vector<8x7xi32>
    %863 = vector.extract_strided_slice %664 {offsets = [6, 0], sizes = [1, 7], strides = [1, 1]} : vector<7x7xf32> to vector<1x7xf32>
    %864 = vector.broadcast %863 : vector<1x7xf32> to vector<8x7xf32>
    %865 = arith.addf %859, %864 : vector<8x7xf32>
    %cst_254 = arith.constant dense<0xFF800000> : vector<8xf32>
    %866 = vector.multi_reduction <maximumf>, %865, %cst_254 [1] : vector<8x7xf32> to vector<8xf32>
    %867 = vector.shape_cast %866 : vector<8xf32> to vector<8x1xf32>
    %c0_255 = arith.constant 0 : index
    %c0_256 = arith.constant 0 : index
    %868 = vector.load %arg16[%c0_255, %c0_256] : memref<8x1xf32, #tpu.memory_space<vmem>>, vector<8x1xf32>
    tpu.vector_store %arg16[%c0_255, %c0_256], %867 {strides = array<i32>} : memref<8x1xf32, #tpu.memory_space<vmem>>, vector<8x1xf32>,
    %869 = vector.broadcast %867 : vector<8x1xf32> to vector<8x7xf32>
    %870 = arith.cmpf oge, %865, %869 : vector<8x7xf32>
    %c7_i32_257 = arith.constant 7 : i32
    %871 = vector.broadcast %c7_i32_257 : i32 to vector<8x7xi32>
    %872 = arith.select %870, %665, %871 : vector<8x7xi1>, vector<8x7xi32>
    %cst_258 = arith.constant dense<2147483647> : vector<8xi32>
    %873 = vector.multi_reduction <minsi>, %872, %cst_258 [1] : vector<8x7xi32> to vector<8xi32>
    %874 = vector.shape_cast %873 : vector<8xi32> to vector<8x1xi32>
    %875 = vector.broadcast %874 : vector<8x1xi32> to vector<8x7xi32>
    %876 = arith.cmpi eq, %665, %875 : vector<8x7xi32>
    %c0_i32_259 = arith.constant 0 : i32
    %877 = vector.broadcast %c0_i32_259 : i32 to vector<8x7xi32>
    %878 = arith.select %876, %862, %877 : vector<8x7xi1>, vector<8x7xi32>
    %cst_260 = arith.constant dense<0> : vector<8xi32>
    %879 = vector.multi_reduction <add>, %878, %cst_260 [1] : vector<8x7xi32> to vector<8xi32>
    %880 = vector.shape_cast %879 : vector<8xi32> to vector<8x1xi32>
    %881 = vector.broadcast %880 : vector<8x1xi32> to vector<8x7xi32>
    %882 = arith.cmpi eq, %665, %881 : vector<8x7xi32>
    %c0_i32_261 = arith.constant 0 : i32
    %883 = vector.broadcast %c0_i32_261 : i32 to vector<8x7xi32>
    %884 = arith.select %882, %837, %883 : vector<8x7xi1>, vector<8x7xi32>
    %cst_262 = arith.constant dense<0> : vector<8xi32>
    %885 = vector.multi_reduction <add>, %884, %cst_262 [1] : vector<8x7xi32> to vector<8xi32>
    %886 = vector.shape_cast %885 : vector<8xi32> to vector<8x1xi32>
    %887 = vector.broadcast %886 : vector<8x1xi32> to vector<8x7xi32>
    %888 = arith.cmpi eq, %665, %887 : vector<8x7xi32>
    %c0_i32_263 = arith.constant 0 : i32
    %889 = vector.broadcast %c0_i32_263 : i32 to vector<8x7xi32>
    %890 = arith.select %888, %812, %889 : vector<8x7xi1>, vector<8x7xi32>
    %cst_264 = arith.constant dense<0> : vector<8xi32>
    %891 = vector.multi_reduction <add>, %890, %cst_264 [1] : vector<8x7xi32> to vector<8xi32>
    %892 = vector.shape_cast %891 : vector<8xi32> to vector<8x1xi32>
    %893 = vector.broadcast %892 : vector<8x1xi32> to vector<8x7xi32>
    %894 = arith.cmpi eq, %665, %893 : vector<8x7xi32>
    %c0_i32_265 = arith.constant 0 : i32
    %895 = vector.broadcast %c0_i32_265 : i32 to vector<8x7xi32>
    %896 = arith.select %894, %787, %895 : vector<8x7xi1>, vector<8x7xi32>
    %cst_266 = arith.constant dense<0> : vector<8xi32>
    %897 = vector.multi_reduction <add>, %896, %cst_266 [1] : vector<8x7xi32> to vector<8xi32>
    %898 = vector.shape_cast %897 : vector<8xi32> to vector<8x1xi32>
    %899 = vector.broadcast %898 : vector<8x1xi32> to vector<8x7xi32>
    %900 = arith.cmpi eq, %665, %899 : vector<8x7xi32>
    %c0_i32_267 = arith.constant 0 : i32
    %901 = vector.broadcast %c0_i32_267 : i32 to vector<8x7xi32>
    %902 = arith.select %900, %762, %901 : vector<8x7xi1>, vector<8x7xi32>
    %cst_268 = arith.constant dense<0> : vector<8xi32>
    %903 = vector.multi_reduction <add>, %902, %cst_268 [1] : vector<8x7xi32> to vector<8xi32>
    %904 = vector.shape_cast %903 : vector<8xi32> to vector<8x1xi32>
    %905 = vector.broadcast %904 : vector<8x1xi32> to vector<8x7xi32>
    %906 = arith.cmpi eq, %665, %905 : vector<8x7xi32>
    %c0_i32_269 = arith.constant 0 : i32
    %907 = vector.broadcast %c0_i32_269 : i32 to vector<8x7xi32>
    %908 = arith.select %906, %737, %907 : vector<8x7xi1>, vector<8x7xi32>
    %cst_270 = arith.constant dense<0> : vector<8xi32>
    %909 = vector.multi_reduction <add>, %908, %cst_270 [1] : vector<8x7xi32> to vector<8xi32>
    %910 = vector.shape_cast %909 : vector<8xi32> to vector<8x1xi32>
    %911 = vector.broadcast %910 : vector<8x1xi32> to vector<8x7xi32>
    %912 = arith.cmpi eq, %665, %911 : vector<8x7xi32>
    %c0_i32_271 = arith.constant 0 : i32
    %913 = vector.broadcast %c0_i32_271 : i32 to vector<8x7xi32>
    %914 = arith.select %912, %712, %913 : vector<8x7xi1>, vector<8x7xi32>
    %cst_272 = arith.constant dense<0> : vector<8xi32>
    %915 = vector.multi_reduction <add>, %914, %cst_272 [1] : vector<8x7xi32> to vector<8xi32>
    %916 = vector.shape_cast %915 : vector<8xi32> to vector<8x1xi32>
    %917 = tpu.concatenate %916, %910, %904, %898, %892, %886, %880, %874 in 1 : vector<8x1xi32>, vector<8x1xi32>, vector<8x1xi32>, vector<8x1xi32>, vector<8x1xi32>, vector<8x1xi32>, vector<8x1xi32>, vector<8x1xi32> -> vector<8x8xi32>
    %c0_273 = arith.constant 0 : index
    %c0_274 = arith.constant 0 : index
    %918 = vector.load %arg17[%c0_273, %c0_274] : memref<8x8xi32, #tpu.memory_space<vmem>>, vector<8x8xi32>
    tpu.vector_store %arg17[%c0_273, %c0_274], %917 {strides = array<i32>} : memref<8x8xi32, #tpu.memory_space<vmem>>, vector<8x8xi32>,
    return
  }
  func.func @transform_0(%arg0: i32) -> (i32, i32, i32) {
    %c0_i32 = arith.constant 0 : i32
    %c0_i32_0 = arith.constant 0 : i32
    %c0_i32_1 = arith.constant 0 : i32
    %c0_i32_2 = arith.constant 0 : i32
    return %c0_i32, %c0_i32_0, %c0_i32_1 : i32, i32, i32
  }
  func.func @transform_1(%arg0: i32) -> (i32, i32) {
    %c0_i32 = arith.constant 0 : i32
    %c0_i32_0 = arith.constant 0 : i32
    %c0_i32_1 = arith.constant 0 : i32
    return %c0_i32, %c0_i32_0 : i32, i32
  }
  func.func @transform_2(%arg0: i32) -> (i32, i32) {
    %c0_i32 = arith.constant 0 : i32
    %c0_i32_0 = arith.constant 0 : i32
    %c0_i32_1 = arith.constant 0 : i32
    return %c0_i32, %c0_i32_0 : i32, i32
  }
  func.func @transform_3(%arg0: i32) -> (i32, i32) {
    %c0_i32 = arith.constant 0 : i32
    %c0_i32_0 = arith.constant 0 : i32
    %c0_i32_1 = arith.constant 0 : i32
    return %c0_i32, %c0_i32_0 : i32, i32
  }
  func.func @transform_4(%arg0: i32) -> (i32, i32) {
    %c0_i32 = arith.constant 0 : i32
    %c0_i32_0 = arith.constant 0 : i32
    %c0_i32_1 = arith.constant 0 : i32
    return %c0_i32, %c0_i32_0 : i32, i32
  }
  func.func @transform_5(%arg0: i32) -> (i32, i32) {
    %c0_i32 = arith.constant 0 : i32
    %c0_i32_0 = arith.constant 0 : i32
    %c0_i32_1 = arith.constant 0 : i32
    return %c0_i32, %c0_i32_0 : i32, i32
  }
  func.func @transform_6(%arg0: i32) -> (i32, i32, i32) {
    %c0_i32 = arith.constant 0 : i32
    %c0_i32_0 = arith.constant 0 : i32
    %c0_i32_1 = arith.constant 0 : i32
    %c0_i32_2 = arith.constant 0 : i32
    return %c0_i32, %c0_i32_0, %c0_i32_1 : i32, i32, i32
  }
  func.func @transform_7(%arg0: i32) -> (i32, i32, i32) {
    %c0_i32 = arith.constant 0 : i32
    %c0_i32_0 = arith.constant 0 : i32
    %c0_i32_1 = arith.constant 0 : i32
    %c0_i32_2 = arith.constant 0 : i32
    return %c0_i32, %c0_i32_0, %c0_i32_1 : i32, i32, i32
  }
  func.func @transform_8(%arg0: i32) -> (i32, i32, i32) {
    %c0_i32 = arith.constant 0 : i32
    %c0_i32_0 = arith.constant 0 : i32
    %c0_i32_1 = arith.constant 0 : i32
    %c0_i32_2 = arith.constant 0 : i32
    return %c0_i32, %c0_i32_0, %c0_i32_1 : i32, i32, i32
  }
  func.func @transform_9(%arg0: i32) -> (i32, i32, i32) {
    %c0_i32 = arith.constant 0 : i32
    %c0_i32_0 = arith.constant 0 : i32
    %c0_i32_1 = arith.constant 0 : i32
    %c0_i32_2 = arith.constant 0 : i32
    return %c0_i32, %c0_i32_0, %c0_i32_1 : i32, i32, i32
  }
  func.func @transform_10(%arg0: i32) -> (i32, i32, i32) {
    %c0_i32 = arith.constant 0 : i32
    %c0_i32_0 = arith.constant 0 : i32
    %c0_i32_1 = arith.constant 0 : i32
    %c0_i32_2 = arith.constant 0 : i32
    return %c0_i32, %c0_i32_0, %c0_i32_1 : i32, i32, i32
  }
  func.func @transform_11(%arg0: i32) -> (i32, i32) {
    %c0_i32 = arith.constant 0 : i32
    %c0_i32_0 = arith.constant 0 : i32
    %c0_i32_1 = arith.constant 0 : i32
    return %c0_i32, %c0_i32_0 : i32, i32
  }
  func.func @transform_12(%arg0: i32) -> (i32, i32) {
    %c0_i32 = arith.constant 0 : i32
    %c0_i32_0 = arith.constant 0 : i32
    %c0_i32_1 = arith.constant 0 : i32
    return %c0_i32, %c0_i32_0 : i32, i32
  }
  func.func @transform_13(%arg0: i32) -> (i32, i32) {
    %c0_i32 = arith.constant 0 : i32
    %c0_i32_0 = arith.constant 0 : i32
    %c0_i32_1 = arith.constant 0 : i32
    return %c0_i32, %c0_i32_0 : i32, i32
  }
  func.func @transform_14(%arg0: i32) -> (i32, i32, i32) {
    %c0_i32 = arith.constant 0 : i32
    %c0_i32_0 = arith.constant 0 : i32
    %c0_i32_1 = arith.constant 0 : i32
    %c0_i32_2 = arith.constant 0 : i32
    return %c0_i32, %c0_i32_0, %c0_i32_1 : i32, i32, i32
  }
  func.func @transform_15(%arg0: i32) -> (i32, i32) {
    %c0_i32 = arith.constant 0 : i32
    %c0_i32_0 = arith.constant 0 : i32
    %c0_i32_1 = arith.constant 0 : i32
    return %c0_i32, %c0_i32_0 : i32, i32
  }
  func.func @transform_16(%arg0: i32) -> (i32, i32) {
    %c0_i32 = arith.constant 0 : i32
    %c0_i32_0 = arith.constant 0 : i32
    %c0_i32_1 = arith.constant 0 : i32
    return %c0_i32, %c0_i32_0 : i32, i32
  }
}

</mosaic_0001>

<llo_original>
// kernel: tpu_custom_call.1
$region0: #{tpu_custom_call.1}
  #allocation0 [shape = 'u32[]', space=smem, size = 0x4, offset = 0x4, fixed_abs, tag = 'smem constant byte address 0x4 - core index']
  #allocation1 [shape = 'u32[72,128]{1,0:T(1,128)}', space=vmem, size = 0x9000, scoped, tag = 'internal scratch']
  #allocation2 [shape = 'f32[8,8,32]{2,1,0:T(8,128)}', space=vmem, size = 0x8000, scoped, tag = 'scratch operand']
  #allocation3 [shape = 'f32[8,8,32]{2,1,0:T(8,128)}', space=vmem, size = 0x8000, scoped, tag = 'scratch operand']
  %s0 = inlined_call_operand.vmem [shape: f32[8,8,32], index: 0, kind: input, shape index: {}]
  %s1 = inlined_call_operand.vmem [shape: f32[32,128], index: 1, kind: input, shape index: {}]
  %s2 = inlined_call_operand.hbm [shape: f32[32,128], index: 2, kind: input, shape index: {}]
  %s3 = inlined_call_operand.hbm [shape: f32[1,128], index: 3, kind: input, shape index: {}]
  %s4 = inlined_call_operand.vmem [shape: f32[8,32], index: 4, kind: input, shape index: {}]
  %s5 = inlined_call_operand.hbm [shape: f32[8,32], index: 5, kind: input, shape index: {}]
  %s6 = inlined_call_operand.hbm [shape: f32[2,32,128], index: 6, kind: input, shape index: {}]
  %s7 = inlined_call_operand.hbm [shape: f32[2,32,128], index: 7, kind: input, shape index: {}]
  %s8 = inlined_call_operand.vmem [shape: f32[2,1,128], index: 8, kind: input, shape index: {}]
  %s9 = inlined_call_operand.hbm [shape: f32[2,8,32], index: 9, kind: input, shape index: {}]
  %s10 = inlined_call_operand.hbm [shape: f32[2,8,32], index: 10, kind: input, shape index: {}]
  %s11 = inlined_call_operand.vmem [shape: f32[32,7], index: 11, kind: input, shape index: {}]
  %s12 = inlined_call_operand.vmem [shape: f32[1,7], index: 12, kind: input, shape index: {}]
  %s13 = inlined_call_operand.hbm [shape: f32[7,7], index: 13, kind: input, shape index: {}]
  %s14 = inlined_call_operand.vmem [shape: f32[8,8,1], index: 14, kind: input, shape index: {}]
  %s15 = inlined_call_operand.vmem [shape: f32[8,1], index: 15, kind: output, shape index: {0}]
  %s16 = inlined_call_operand.hbm [shape: s32[8,8], index: 16, kind: output, shape index: {1}]
  %17 = xla_tuple %s15, %s16
  %s18 = sld [smem:[#allocation0]]
  $region110: #{tpu_custom_call.1} parent=0
    _
  %s20 = ssub.s32 1, %s18
  %s21 = scalar_select 0, %s20, %s18
  $region1: #{tpu_custom_call.1} parent=0
    #allocation4 [shape = 'u8[16384]{0}', space=vmem, size = 0x4000, scoped, tag = 'input window, operand 2, single buffered']
    #allocation5 [shape = 's32[1]{0}', space=sflag, size = 0x4, scoped, tag = 'scoped memory for tpu_custom_call.1']
    #allocation6 [shape = 's32[1]{0}', space=sflag, size = 0x4, scoped, tag = 'scoped memory for tpu_custom_call.1']
    #allocation7 [shape = 'u8[512]{0}', space=vmem, size = 0x400, scoped, tag = 'input window, operand 3, single buffered']
    #allocation8 [shape = 's32[1]{0}', space=sflag, size = 0x4, scoped, tag = 'scoped memory for tpu_custom_call.1']
    #allocation9 [shape = 'u8[4096]{0}', space=vmem, size = 0x1000, scoped, tag = 'input window, operand 5, single buffered']
    #allocation10 [shape = 'u8[32768]{0}', space=vmem, size = 0x8000, scoped, tag = 'input window, operand 6, single buffered']
    #allocation11 [shape = 's32[1]{0}', space=sflag, size = 0x4, scoped, tag = 'scoped memory for tpu_custom_call.1']
    #allocation12 [shape = 'u8[32768]{0}', space=vmem, size = 0x8000, scoped, tag = 'input window, operand 7, single buffered']
    #allocation13 [shape = 'u8[8192]{0}', space=vmem, size = 0x2000, scoped, tag = 'input window, operand 9, single buffered']
    #allocation14 [shape = 's32[1]{0}', space=sflag, size = 0x4, scoped, tag = 'scoped memory for tpu_custom_call.1']
    #allocation15 [shape = 'u8[8192]{0}', space=vmem, size = 0x2000, scoped, tag = 'input window, operand 10, single buffered']
    #allocation16 [shape = 'u8[4096]{0}', space=vmem, size = 0x1000, scoped, tag = 'input window, operand 13, single buffered']
    #allocation17 [shape = 's32[1]{0}', space=sflag, size = 0x4, scoped, tag = 'scoped memory for tpu_custom_call.1']
    #allocation18 [shape = 'u8[4096]{0}', space=vmem, size = 0x1000, scoped, tag = 'output window, operand 1, single buffered']
    %22 = vsyncpa [#allocation5], 0
    %23 = vsyncpa [#allocation8], 0
    %24 = vsyncpa [#allocation11], 0
    %25 = vsyncpa [#allocation14], 0
    %26 = vsyncpa [#allocation17], 0
    %27 = vsyncpa [#allocation6], 0
    // Predicated region
    $region2: #{tpu_custom_call.1} parent=1 // pred_check
      _
    $region3: #{tpu_custom_call.1} parent=1 // pred_check_branch
      %29 = sbr.rel (0) target = $region5
    $region4: #{tpu_custom_call.1} parent=1 // pred_region
      _
    $region5: #{tpu_custom_call.1} parent=1 // pred_fallthru
      _
    // Predicated region
    $region6: #{tpu_custom_call.1} parent=1 // pred_check
      _
    $region7: #{tpu_custom_call.1} parent=1 // pred_check_branch
      %31 = sbr.rel (0) target = $region9
    $region8: #{tpu_custom_call.1} parent=1 // pred_region
      _
    $region9: #{tpu_custom_call.1} parent=1 // pred_fallthru
      _
    // Predicated region
    $region10: #{tpu_custom_call.1} parent=1 // pred_check
      _
    $region11: #{tpu_custom_call.1} parent=1 // pred_check_branch
      %33 = sbr.rel (0) target = $region13
    $region12: #{tpu_custom_call.1} parent=1 // pred_region
      %35 = vsyncadd [#allocation5], 0
      %s36 = sshll.u32 %s2, 4
      %s37 = int_to_ptr.hbm [resolvable:$true] %s36
      %s38 = sshll.u32 [#allocation4], 4
      %s39 = int_to_ptr.vmem [resolvable:$true] %s38
      %44 = dma.hbm_to_vmem [thread:$0]  %s37, 512, %s39, [#allocation5], 128, 128, 8
    $region13: #{tpu_custom_call.1} parent=1 // pred_fallthru
      _
    // Predicated region
    $region14: #{tpu_custom_call.1} parent=1 // pred_check
      _
    $region15: #{tpu_custom_call.1} parent=1 // pred_check_branch
      %46 = sbr.rel (0) target = $region17
    $region16: #{tpu_custom_call.1} parent=1 // pred_region
      %48 = vsyncadd [#allocation8], 0
      %s50 = sshll.u32 %s3, 4
      %s51 = int_to_ptr.hbm [resolvable:$true] %s50
      %s52 = sshll.u32 [#allocation7], 4
      %s53 = int_to_ptr.vmem [resolvable:$true] %s52
      %55 = dma.hbm_to_vmem [thread:$0]  %s51, 16, %s53, [#allocation8]
    $region17: #{tpu_custom_call.1} parent=1 // pred_fallthru
      _
    // Predicated region
    $region18: #{tpu_custom_call.1} parent=1 // pred_check
      _
    $region19: #{tpu_custom_call.1} parent=1 // pred_check_branch
      %57 = sbr.rel (0) target = $region21
    $region20: #{tpu_custom_call.1} parent=1 // pred_region
      _
    $region21: #{tpu_custom_call.1} parent=1 // pred_fallthru
      _
    // Predicated region
    $region22: #{tpu_custom_call.1} parent=1 // pred_check
      _
    $region23: #{tpu_custom_call.1} parent=1 // pred_check_branch
      %59 = sbr.rel (0) target = $region25
    $region24: #{tpu_custom_call.1} parent=1 // pred_region
      %61 = vsyncadd [#allocation8], 0
      %s63 = sshll.u32 %s5, 4
      %s64 = int_to_ptr.hbm [resolvable:$true] %s63
      %s65 = sshll.u32 [#allocation9], 4
      %s66 = int_to_ptr.vmem [resolvable:$true] %s65
      %68 = dma.hbm_to_vmem [thread:$0]  %s64, 128, %s66, [#allocation8]
    $region25: #{tpu_custom_call.1} parent=1 // pred_fallthru
      _
    // Predicated region
    $region26: #{tpu_custom_call.1} parent=1 // pred_check
      _
    $region27: #{tpu_custom_call.1} parent=1 // pred_check_branch
      %70 = sbr.rel (0) target = $region29
    $region28: #{tpu_custom_call.1} parent=1 // pred_region
      %72 = vsyncadd [#allocation11], 0
      %s73 = sshll.u32 %s6, 4
      %s74 = int_to_ptr.hbm [resolvable:$true] %s73
      %s75 = sshll.u32 [#allocation10], 4
      %s76 = int_to_ptr.vmem [resolvable:$true] %s75
      %81 = dma.hbm_to_vmem [thread:$0]  %s74, 1024, %s76, [#allocation11], 128, 128, 8
    $region29: #{tpu_custom_call.1} parent=1 // pred_fallthru
      _
    // Predicated region
    $region30: #{tpu_custom_call.1} parent=1 // pred_check
      _
    $region31: #{tpu_custom_call.1} parent=1 // pred_check_branch
      %83 = sbr.rel (0) target = $region33
    $region32: #{tpu_custom_call.1} parent=1 // pred_region
      %85 = vsyncadd [#allocation11], 0
      %s86 = sshll.u32 %s7, 4
      %s87 = int_to_ptr.hbm [resolvable:$true] %s86
      %s88 = sshll.u32 [#allocation12], 4
      %s89 = int_to_ptr.vmem [resolvable:$true] %s88
      %94 = dma.hbm_to_vmem [thread:$0]  %s87, 1024, %s89, [#allocation11], 128, 128, 8
    $region33: #{tpu_custom_call.1} parent=1 // pred_fallthru
      _
    // Predicated region
    $region34: #{tpu_custom_call.1} parent=1 // pred_check
      _
    $region35: #{tpu_custom_call.1} parent=1 // pred_check_branch
      %96 = sbr.rel (0) target = $region37
    $region36: #{tpu_custom_call.1} parent=1 // pred_region
      _
    $region37: #{tpu_custom_call.1} parent=1 // pred_fallthru
      _
    // Predicated region
    $region38: #{tpu_custom_call.1} parent=1 // pred_check
      _
    $region39: #{tpu_custom_call.1} parent=1 // pred_check_branch
      %98 = sbr.rel (0) target = $region41
    $region40: #{tpu_custom_call.1} parent=1 // pred_region
      %100 = vsyncadd [#allocation14], 0
      %s101 = sshll.u32 %s9, 4
      %s102 = int_to_ptr.hbm [resolvable:$true] %s101
      %s103 = sshll.u32 [#allocation13], 4
      %s104 = int_to_ptr.vmem [resolvable:$true] %s103
      %109 = dma.hbm_to_vmem [thread:$0]  %s102, 256, %s104, [#allocation14], 128, 128, 8
    $region41: #{tpu_custom_call.1} parent=1 // pred_fallthru
      _
    // Predicated region
    $region42: #{tpu_custom_call.1} parent=1 // pred_check
      _
    $region43: #{tpu_custom_call.1} parent=1 // pred_check_branch
      %111 = sbr.rel (0) target = $region45
    $region44: #{tpu_custom_call.1} parent=1 // pred_region
      %113 = vsyncadd [#allocation14], 0
      %s114 = sshll.u32 %s10, 4
      %s115 = int_to_ptr.hbm [resolvable:$true] %s114
      %s116 = sshll.u32 [#allocation15], 4
      %s117 = int_to_ptr.vmem [resolvable:$true] %s116
      %122 = dma.hbm_to_vmem [thread:$0]  %s115, 256, %s117, [#allocation14], 128, 128, 8
    $region45: #{tpu_custom_call.1} parent=1 // pred_fallthru
      _
    // Predicated region
    $region46: #{tpu_custom_call.1} parent=1 // pred_check
      _
    $region47: #{tpu_custom_call.1} parent=1 // pred_check_branch
      %124 = sbr.rel (0) target = $region49
    $region48: #{tpu_custom_call.1} parent=1 // pred_region
      _
    $region49: #{tpu_custom_call.1} parent=1 // pred_fallthru
      _
    // Predicated region
    $region50: #{tpu_custom_call.1} parent=1 // pred_check
      _
    $region51: #{tpu_custom_call.1} parent=1 // pred_check_branch
      %126 = sbr.rel (0) target = $region53
    $region52: #{tpu_custom_call.1} parent=1 // pred_region
      _
    $region53: #{tpu_custom_call.1} parent=1 // pred_fallthru
      _
    // Predicated region
    $region54: #{tpu_custom_call.1} parent=1 // pred_check
      _
    $region55: #{tpu_custom_call.1} parent=1 // pred_check_branch
      %128 = sbr.rel (0) target = $region57
    $region56: #{tpu_custom_call.1} parent=1 // pred_region
      %130 = vsyncadd [#allocation17], 0
      %s132 = sshll.u32 %s13, 4
      %s133 = int_to_ptr.hbm [resolvable:$true] %s132
      %s134 = sshll.u32 [#allocation16], 4
      %s135 = int_to_ptr.vmem [resolvable:$true] %s134
      %137 = dma.hbm_to_vmem [thread:$0]  %s133, 128, %s135, [#allocation17]
    $region57: #{tpu_custom_call.1} parent=1 // pred_fallthru
      _
    // Predicated region
    $region58: #{tpu_custom_call.1} parent=1 // pred_check
      _
    $region59: #{tpu_custom_call.1} parent=1 // pred_check_branch
      %139 = sbr.rel (0) target = $region61
    $region60: #{tpu_custom_call.1} parent=1 // pred_region
      _
    $region61: #{tpu_custom_call.1} parent=1 // pred_fallthru
      _
    // Predicated region
    $region62: #{tpu_custom_call.1} parent=1 // pred_check
      _
    $region63: #{tpu_custom_call.1} parent=1 // pred_check_branch
      %141 = sbr.rel (0) target = $region65
    $region64: #{tpu_custom_call.1} parent=1 // pred_region
      %143 = dma.done [#allocation5], 512
    $region65: #{tpu_custom_call.1} parent=1 // pred_fallthru
      _
    // Predicated region
    $region66: #{tpu_custom_call.1} parent=1 // pred_check
      _
    $region67: #{tpu_custom_call.1} parent=1 // pred_check_branch
      %145 = sbr.rel (0) target = $region69
    $region68: #{tpu_custom_call.1} parent=1 // pred_region
      %147 = dma.done [#allocation8], 16
    $region69: #{tpu_custom_call.1} parent=1 // pred_fallthru
      _
    // Predicated region
    $region70: #{tpu_custom_call.1} parent=1 // pred_check
      _
    $region71: #{tpu_custom_call.1} parent=1 // pred_check_branch
      %149 = sbr.rel (0) target = $region73
    $region72: #{tpu_custom_call.1} parent=1 // pred_region
      %151 = dma.done [#allocation8], 128
    $region73: #{tpu_custom_call.1} parent=1 // pred_fallthru
      _
    // Predicated region
    $region74: #{tpu_custom_call.1} parent=1 // pred_check
      _
    $region75: #{tpu_custom_call.1} parent=1 // pred_check_branch
      %153 = sbr.rel (0) target = $region77
    $region76: #{tpu_custom_call.1} parent=1 // pred_region
      %155 = dma.done [#allocation11], 1024
    $region77: #{tpu_custom_call.1} parent=1 // pred_fallthru
      _
    // Predicated region
    $region78: #{tpu_custom_call.1} parent=1 // pred_check
      _
    $region79: #{tpu_custom_call.1} parent=1 // pred_check_branch
      %157 = sbr.rel (0) target = $region81
    $region80: #{tpu_custom_call.1} parent=1 // pred_region
      %159 = dma.done [#allocation11], 1024
    $region81: #{tpu_custom_call.1} parent=1 // pred_fallthru
      _
    // Predicated region
    $region82: #{tpu_custom_call.1} parent=1 // pred_check
      _
    $region83: #{tpu_custom_call.1} parent=1 // pred_check_branch
      %161 = sbr.rel (0) target = $region85
    $region84: #{tpu_custom_call.1} parent=1 // pred_region
      %163 = dma.done [#allocation14], 256
    $region85: #{tpu_custom_call.1} parent=1 // pred_fallthru
      _
    // Predicated region
    $region86: #{tpu_custom_call.1} parent=1 // pred_check
      _
    $region87: #{tpu_custom_call.1} parent=1 // pred_check_branch
      %165 = sbr.rel (0) target = $region89
    $region88: #{tpu_custom_call.1} parent=1 // pred_region
      %167 = dma.done [#allocation14], 256
    $region89: #{tpu_custom_call.1} parent=1 // pred_fallthru
      _
    // Predicated region
    $region90: #{tpu_custom_call.1} parent=1 // pred_check
      _
    $region91: #{tpu_custom_call.1} parent=1 // pred_check_branch
      %169 = sbr.rel (0) target = $region93
    $region92: #{tpu_custom_call.1} parent=1 // pred_region
      %171 = dma.done [#allocation17], 128
    $region93: #{tpu_custom_call.1} parent=1 // pred_fallthru
      _
    %v172 = vld [vmem:[%s0] sm:$0xff]
    %v173 = vld [vmem:[%s0 + $0x8] sm:$0xff]
    %v174 = vld [vmem:[%s0 + $0x10] sm:$0xff]
    %v175 = vld [vmem:[%s0 + $0x18] sm:$0xff]
    %v176 = vld [vmem:[%s0 + $0x20] sm:$0xff]
    %v177 = vld [vmem:[%s0 + $0x28] sm:$0xff]
    %v178 = vld [vmem:[%s0 + $0x30] sm:$0xff]
    %v179 = vld [vmem:[%s0 + $0x38] sm:$0xff]
    %v180 = vld [vmem:[%s1] sm:$0xff]
    %v181 = vld [vmem:[%s1 + $0x8] sm:$0xff]
    %v182 = vld [vmem:[%s1 + $0x10] sm:$0xff]
    %v183 = vld [vmem:[%s1 + $0x18] sm:$0xff]
    %v184 = vld [vmem:[#allocation7] sm:$0x1]
    %v186 = vperm.slane %v184, 0
    %vm188 = vcmask 261120
    %v190 = vsel %vm188, %v172, 0
    %v193 = vsel %vm188, %v173, 0
    %v196 = vsel %vm188, %v174, 0
    %v199 = vsel %vm188, %v175, 0
    %v202 = vsel %vm188, %v176, 0
    %v205 = vsel %vm188, %v177, 0
    %v208 = vsel %vm188, %v178, 0
    %v211 = vsel %vm188, %v179, 0
    %213 = vmatpush.msra.mxu0 0.0
    %214 = vmatpush.msra.mxu0 0.0
    %215 = vmatpush.msra.mxu0 0.0
    %216 = vmatpush.msra.mxu0 0.0
    %217 = vmatpush.msra.mxu0 0.0
    %218 = vmatpush.msra.mxu0 0.0
    %219 = vmatpush.msra.mxu0 0.0
    %220 = vmatpush.msra.mxu0 0.0
    %221 = vmatpush.msra.mxu0 0.0
    %222 = vmatpush.msra.mxu0 0.0
    %223 = vmatpush.msra.mxu0 0.0
    %224 = vmatpush.msra.mxu0 0.0
    %225 = vmatpush.msra.mxu0 %v183
    %226 = vmatpush.msra.mxu0 %v182
    %227 = vmatpush.msra.mxu0 %v181
    %228 = vmatpush.msra.mxu0 %v180
    %229 = vmatmul.f32.gmra.mxu0 %v190
    %v230 = vpop.f32.mrf.mxu0
    %v231 = vadd.f32 %v186, %v230
    %232 = vmatmul.f32.gmra.mxu0 %v193
    %v233 = vpop.f32.mrf.mxu0
    %v234 = vadd.f32 %v186, %v233
    %235 = vmatmul.f32.gmra.mxu0 %v196
    %v236 = vpop.f32.mrf.mxu0
    %v237 = vadd.f32 %v186, %v236
    %238 = vmatmul.f32.gmra.mxu0 %v199
    %v239 = vpop.f32.mrf.mxu0
    %v240 = vadd.f32 %v186, %v239
    %241 = vmatmul.f32.gmra.mxu0 %v202
    %v242 = vpop.f32.mrf.mxu0
    %v243 = vadd.f32 %v186, %v242
    %244 = vmatmul.f32.gmra.mxu0 %v205
    %v245 = vpop.f32.mrf.mxu0
    %v246 = vadd.f32 %v186, %v245
    %247 = vmatmul.f32.gmra.mxu0 %v208
    %v248 = vpop.f32.mrf.mxu0
    %v249 = vadd.f32 %v186, %v248
    %250 = vmatmul.f32.gmra.mxu0 %v211
    %v251 = vpop.f32.mrf.mxu0
    %v252 = vadd.f32 %v186, %v251
    %253 = vdwg.mxu0
    %v254 = vld [vmem:[#allocation4] sm:$0xff]
    %v255 = vld [vmem:[#allocation4 + $0x8] sm:$0xff]
    %v256 = vld [vmem:[#allocation4 + $0x10] sm:$0xff]
    %v257 = vld [vmem:[#allocation4 + $0x18] sm:$0xff]
    %v258 = vlaneseq
    %v259 = vand.u32 %v258, 127
    %vm260 = vcmp.lt.s32.totalorder %v259, 0
    %v261 = vsub.s32 0, %v259
    %v262 = vsel %vm260, %v261, %v259
    %v263 = vshrl.u32 %v262, 5
    %v264 = vand.u32 %v262, 31
    %v265 = vsub.s32 0, %v264
    %v266 = vsel %vm260, %v265, %v264
    %vm267 = vcmp.ne.s32.totalorder %v266, 0
    %vm268 = vcmp.lt.s32.totalorder %v266, 0
    %vm269 = vmand %vm268, %vm267
    %v270 = vadd.s32 %v266, 32
    %v271 = vsel %vm269, %v270, %v266
    %vm272 = vcmp.lt.s32.totalorder %v271, 16
    %v273 = vld [vmem:[%s4] sm:$0xff]
    %v274 = vld [vmem:[#allocation9] sm:$0xff]
    %v275 = vsel %vm272, %v231, %v252
    %v277 = vsel %vm188, %v273, 0
    %279 = vmatpush.msra.mxu0 0.0
    %280 = vmatpush.msra.mxu0 0.0
    %281 = vmatpush.msra.mxu0 0.0
    %282 = vmatpush.msra.mxu0 0.0
    %283 = vmatpush.msra.mxu0 0.0
    %284 = vmatpush.msra.mxu0 0.0
    %285 = vmatpush.msra.mxu0 0.0
    %286 = vmatpush.msra.mxu0 0.0
    %287 = vmatpush.msra.mxu0 0.0
    %288 = vmatpush.msra.mxu0 0.0
    %289 = vmatpush.msra.mxu0 0.0
    %290 = vmatpush.msra.mxu0 0.0
    %291 = vmatpush.msra.mxu0 %v257
    %292 = vmatpush.msra.mxu0 %v256
    %293 = vmatpush.msra.mxu0 %v255
    %294 = vmatpush.msra.mxu0 %v254
    %295 = vmatmul.f32.gmra.mxu0 %v277
    %v296 = vpop.f32.mrf.mxu0
    %v297 = vadd.f32 0.0, %v296
    %298 = vdwg.mxu0
    %v299 = vadd.f32 %v275, %v297
    %v300 = vxor.u32 %v299, 2147483648
    %v301 = vmul.f32 %v300, 1.442695
    %v302 = vpow.pop %v301
    %v303 = vadd.f32 %v302, 1.0
    %v304 = vrcp.pop %v303
    %v305 = vmul.f32 %v303, %v304
    %v306 = vsub.f32 1.0, %v305
    %v307 = vmul.f32 %v304, %v306
    %v308 = vadd.f32 %v304, %v307
    %vm309 = vweird.f32 %v303
    %vm310 = vweird.f32 %v304
    %vm311 = vmor %vm309, %vm310
    %v312 = vsel %vm311, %v304, %v308
    %v313 = vand.u32 2147483647, %v303
    %vm314 = vcmp.eq.f32.partialorder %v313, 8.507059e+37
    %v315 = vand.u32 %v303, 2147483648
    %v316 = vor.u32 1.1754944e-38, %v315
    %v317 = vsel %vm314, %v316, %v312
    %v318 = vmul.f32 1.0, %v317
    %v319 = vtanh.pop %v299
    %321 = vrot.lane.b32.xlu0 %v274, 32
    %v322 = vpop.permute.xlu0 %321
    %v324 = vmul.f32 %v318, %v322
    %326 = vrot.lane.b32.xlu0 %v319, 64
    %v327 = vpop.permute.xlu0 %326
    %v329 = vmul.f32 %v318, %v327
    %331 = vrot.lane.b32.xlu0 %v329, 32
    %v332 = vpop.permute.xlu0 %331
    %v334 = vadd.f32 %v324, %v332
    %v335 = vtanh.pop %v334
    %337 = vrot.lane.b32.xlu0 %v335, 64
    %v338 = vpop.permute.xlu0 %337
    %v340 = vmul.f32 %v318, %v338
    %342 = vrot.lane.b32.xlu0 %v340, 32
    %v343 = vpop.permute.xlu0 %342
    %vm345 = vcmask 130048
    %346 = vst.msk [vmem:[#allocation2] sm:$0xff] %vm345, %v343
    %s347 = scalar_lea.vmem [#allocation2], 56
    %vm348 = vcmask 261248
    %349 = vst.msk [vmem:[%s347] sm:$0xff] %vm348, %v343
    %v350 = vsel %vm272, %v234, %v249
    %v351 = vsel %vm188, %v343, 0
    %353 = vmatpush.msra.mxu0 0.0
    %354 = vmatpush.msra.mxu0 0.0
    %355 = vmatpush.msra.mxu0 0.0
    %356 = vmatpush.msra.mxu0 0.0
    %357 = vmatpush.msra.mxu0 0.0
    %358 = vmatpush.msra.mxu0 0.0
    %359 = vmatpush.msra.mxu0 0.0
    %360 = vmatpush.msra.mxu0 0.0
    %361 = vmatpush.msra.mxu0 0.0
    %362 = vmatpush.msra.mxu0 0.0
    %363 = vmatpush.msra.mxu0 0.0
    %364 = vmatpush.msra.mxu0 0.0
    %365 = vmatpush.msra.mxu0 %v257
    %366 = vmatpush.msra.mxu0 %v256
    %367 = vmatpush.msra.mxu0 %v255
    %368 = vmatpush.msra.mxu0 %v254
    %369 = vmatmul.f32.gmra.mxu0 %v351
    %v370 = vpop.f32.mrf.mxu0
    %v371 = vadd.f32 0.0, %v370
    %372 = vdwg.mxu0
    %v373 = vadd.f32 %v350, %v371
    %v374 = vxor.u32 %v373, 2147483648
    %v375 = vmul.f32 %v374, 1.442695
    %v376 = vpow.pop %v375
    %v377 = vadd.f32 %v376, 1.0
    %v378 = vrcp.pop %v377
    %v379 = vmul.f32 %v377, %v378
    %v380 = vsub.f32 1.0, %v379
    %v381 = vmul.f32 %v378, %v380
    %v382 = vadd.f32 %v378, %v381
    %vm383 = vweird.f32 %v377
    %vm384 = vweird.f32 %v378
    %vm385 = vmor %vm383, %vm384
    %v386 = vsel %vm385, %v378, %v382
    %v387 = vand.u32 2147483647, %v377
    %vm388 = vcmp.eq.f32.partialorder %v387, 8.507059e+37
    %v389 = vand.u32 %v377, 2147483648
    %v390 = vor.u32 1.1754944e-38, %v389
    %v391 = vsel %vm388, %v390, %v386
    %v392 = vmul.f32 1.0, %v391
    %v393 = vtanh.pop %v373
    %v394 = vmul.f32 %v392, %v334
    %396 = vrot.lane.b32.xlu0 %v393, 64
    %v397 = vpop.permute.xlu0 %396
    %v399 = vmul.f32 %v392, %v397
    %401 = vrot.lane.b32.xlu0 %v399, 32
    %v402 = vpop.permute.xlu0 %401
    %v404 = vadd.f32 %v394, %v402
    %v405 = vtanh.pop %v404
    %407 = vrot.lane.b32.xlu0 %v405, 64
    %v408 = vpop.permute.xlu0 %407
    %v410 = vmul.f32 %v392, %v408
    %412 = vrot.lane.b32.xlu0 %v410, 32
    %v413 = vpop.permute.xlu0 %412
    %s415 = scalar_lea.vmem [#allocation2], 8
    %416 = vst.msk [vmem:[%s415] sm:$0xff] %vm345, %v413
    %s417 = scalar_lea.vmem [#allocation2], 48
    %418 = vst.msk [vmem:[%s417] sm:$0xff] %vm348, %v413
    %v419 = vsel %vm272, %v237, %v246
    %v420 = vsel %vm188, %v413, 0
    %422 = vmatpush.msra.mxu0 0.0
    %423 = vmatpush.msra.mxu0 0.0
    %424 = vmatpush.msra.mxu0 0.0
    %425 = vmatpush.msra.mxu0 0.0
    %426 = vmatpush.msra.mxu0 0.0
    %427 = vmatpush.msra.mxu0 0.0
    %428 = vmatpush.msra.mxu0 0.0
    %429 = vmatpush.msra.mxu0 0.0
    %430 = vmatpush.msra.mxu0 0.0
    %431 = vmatpush.msra.mxu0 0.0
    %432 = vmatpush.msra.mxu0 0.0
    %433 = vmatpush.msra.mxu0 0.0
    %434 = vmatpush.msra.mxu0 %v257
    %435 = vmatpush.msra.mxu0 %v256
    %436 = vmatpush.msra.mxu0 %v255
    %437 = vmatpush.msra.mxu0 %v254
    %438 = vmatmul.f32.gmra.mxu0 %v420
    %v439 = vpop.f32.mrf.mxu0
    %v440 = vadd.f32 0.0, %v439
    %441 = vdwg.mxu0
    %v442 = vadd.f32 %v419, %v440
    %v443 = vxor.u32 %v442, 2147483648
    %v444 = vmul.f32 %v443, 1.442695
    %v445 = vpow.pop %v444
    %v446 = vadd.f32 %v445, 1.0
    %v447 = vrcp.pop %v446
    %v448 = vmul.f32 %v446, %v447
    %v449 = vsub.f32 1.0, %v448
    %v450 = vmul.f32 %v447, %v449
    %v451 = vadd.f32 %v447, %v450
    %vm452 = vweird.f32 %v446
    %vm453 = vweird.f32 %v447
    %vm454 = vmor %vm452, %vm453
    %v455 = vsel %vm454, %v447, %v451
    %v456 = vand.u32 2147483647, %v446
    %vm457 = vcmp.eq.f32.partialorder %v456, 8.507059e+37
    %v458 = vand.u32 %v446, 2147483648
    %v459 = vor.u32 1.1754944e-38, %v458
    %v460 = vsel %vm457, %v459, %v455
    %v461 = vmul.f32 1.0, %v460
    %v462 = vtanh.pop %v442
    %v463 = vmul.f32 %v461, %v404
    %465 = vrot.lane.b32.xlu0 %v462, 64
    %v466 = vpop.permute.xlu0 %465
    %v468 = vmul.f32 %v461, %v466
    %470 = vrot.lane.b32.xlu0 %v468, 32
    %v471 = vpop.permute.xlu0 %470
    %v473 = vadd.f32 %v463, %v471
    %v474 = vtanh.pop %v473
    %476 = vrot.lane.b32.xlu0 %v474, 64
    %v477 = vpop.permute.xlu0 %476
    %v479 = vmul.f32 %v461, %v477
    %481 = vrot.lane.b32.xlu0 %v479, 32
    %v482 = vpop.permute.xlu0 %481
    %s484 = scalar_lea.vmem [#allocation2], 16
    %485 = vst.msk [vmem:[%s484] sm:$0xff] %vm345, %v482
    %s486 = scalar_lea.vmem [#allocation2], 40
    %487 = vst.msk [vmem:[%s486] sm:$0xff] %vm348, %v482
    %v488 = vsel %vm272, %v240, %v243
    %v489 = vsel %vm188, %v482, 0
    %491 = vmatpush.msra.mxu0 0.0
    %492 = vmatpush.msra.mxu0 0.0
    %493 = vmatpush.msra.mxu0 0.0
    %494 = vmatpush.msra.mxu0 0.0
    %495 = vmatpush.msra.mxu0 0.0
    %496 = vmatpush.msra.mxu0 0.0
    %497 = vmatpush.msra.mxu0 0.0
    %498 = vmatpush.msra.mxu0 0.0
    %499 = vmatpush.msra.mxu0 0.0
    %500 = vmatpush.msra.mxu0 0.0
    %501 = vmatpush.msra.mxu0 0.0
    %502 = vmatpush.msra.mxu0 0.0
    %503 = vmatpush.msra.mxu0 %v257
    %504 = vmatpush.msra.mxu0 %v256
    %505 = vmatpush.msra.mxu0 %v255
    %506 = vmatpush.msra.mxu0 %v254
    %507 = vmatmul.f32.gmra.mxu0 %v489
    %v508 = vpop.f32.mrf.mxu0
    %v509 = vadd.f32 0.0, %v508
    %510 = vdwg.mxu0
    %v511 = vadd.f32 %v488, %v509
    %v512 = vxor.u32 %v511, 2147483648
    %v513 = vmul.f32 %v512, 1.442695
    %v514 = vpow.pop %v513
    %v515 = vadd.f32 %v514, 1.0
    %v516 = vrcp.pop %v515
    %v517 = vmul.f32 %v515, %v516
    %v518 = vsub.f32 1.0, %v517
    %v519 = vmul.f32 %v516, %v518
    %v520 = vadd.f32 %v516, %v519
    %vm521 = vweird.f32 %v515
    %vm522 = vweird.f32 %v516
    %vm523 = vmor %vm521, %vm522
    %v524 = vsel %vm523, %v516, %v520
    %v525 = vand.u32 2147483647, %v515
    %vm526 = vcmp.eq.f32.partialorder %v525, 8.507059e+37
    %v527 = vand.u32 %v515, 2147483648
    %v528 = vor.u32 1.1754944e-38, %v527
    %v529 = vsel %vm526, %v528, %v524
    %v530 = vmul.f32 1.0, %v529
    %v531 = vtanh.pop %v511
    %v532 = vmul.f32 %v530, %v473
    %534 = vrot.lane.b32.xlu0 %v531, 64
    %v535 = vpop.permute.xlu0 %534
    %v537 = vmul.f32 %v530, %v535
    %539 = vrot.lane.b32.xlu0 %v537, 32
    %v540 = vpop.permute.xlu0 %539
    %v542 = vadd.f32 %v532, %v540
    %v543 = vtanh.pop %v542
    %545 = vrot.lane.b32.xlu0 %v543, 64
    %v546 = vpop.permute.xlu0 %545
    %v548 = vmul.f32 %v530, %v546
    %550 = vrot.lane.b32.xlu0 %v548, 32
    %v551 = vpop.permute.xlu0 %550
    %s553 = scalar_lea.vmem [#allocation2], 24
    %554 = vst.msk [vmem:[%s553] sm:$0xff] %vm345, %v551
    %s555 = scalar_lea.vmem [#allocation2], 32
    %556 = vst.msk [vmem:[%s555] sm:$0xff] %vm348, %v551
    %v557 = vsel %vm272, %v243, %v240
    %v558 = vsel %vm188, %v551, 0
    %560 = vmatpush.msra.mxu0 0.0
    %561 = vmatpush.msra.mxu0 0.0
    %562 = vmatpush.msra.mxu0 0.0
    %563 = vmatpush.msra.mxu0 0.0
    %564 = vmatpush.msra.mxu0 0.0
    %565 = vmatpush.msra.mxu0 0.0
    %566 = vmatpush.msra.mxu0 0.0
    %567 = vmatpush.msra.mxu0 0.0
    %568 = vmatpush.msra.mxu0 0.0
    %569 = vmatpush.msra.mxu0 0.0
    %570 = vmatpush.msra.mxu0 0.0
    %571 = vmatpush.msra.mxu0 0.0
    %572 = vmatpush.msra.mxu0 %v257
    %573 = vmatpush.msra.mxu0 %v256
    %574 = vmatpush.msra.mxu0 %v255
    %575 = vmatpush.msra.mxu0 %v254
    %576 = vmatmul.f32.gmra.mxu0 %v558
    %v577 = vpop.f32.mrf.mxu0
    %v578 = vadd.f32 0.0, %v577
    %579 = vdwg.mxu0
    %v580 = vadd.f32 %v557, %v578
    %v581 = vxor.u32 %v580, 2147483648
    %v582 = vmul.f32 %v581, 1.442695
    %v583 = vpow.pop %v582
    %v584 = vadd.f32 %v583, 1.0
    %v585 = vrcp.pop %v584
    %v586 = vmul.f32 %v584, %v585
    %v587 = vsub.f32 1.0, %v586
    %v588 = vmul.f32 %v585, %v587
    %v589 = vadd.f32 %v585, %v588
    %vm590 = vweird.f32 %v584
    %vm591 = vweird.f32 %v585
    %vm592 = vmor %vm590, %vm591
    %v593 = vsel %vm592, %v585, %v589
    %v594 = vand.u32 2147483647, %v584
    %vm595 = vcmp.eq.f32.partialorder %v594, 8.507059e+37
    %v596 = vand.u32 %v584, 2147483648
    %v597 = vor.u32 1.1754944e-38, %v596
    %v598 = vsel %vm595, %v597, %v593
    %v599 = vmul.f32 1.0, %v598
    %v600 = vtanh.pop %v580
    %v601 = vmul.f32 %v599, %v542
    %603 = vrot.lane.b32.xlu0 %v600, 64
    %v604 = vpop.permute.xlu0 %603
    %v606 = vmul.f32 %v599, %v604
    %608 = vrot.lane.b32.xlu0 %v606, 32
    %v609 = vpop.permute.xlu0 %608
    %v611 = vadd.f32 %v601, %v609
    %v612 = vtanh.pop %v611
    %614 = vrot.lane.b32.xlu0 %v612, 64
    %v615 = vpop.permute.xlu0 %614
    %v617 = vmul.f32 %v599, %v615
    %619 = vrot.lane.b32.xlu0 %v617, 32
    %v620 = vpop.permute.xlu0 %619
    %622 = vst.msk [vmem:[%s555] sm:$0xff] %vm345, %v620
    %623 = vst.msk [vmem:[%s553] sm:$0xff] %vm348, %v620
    %v624 = vsel %vm272, %v246, %v237
    %v625 = vsel %vm188, %v620, 0
    %627 = vmatpush.msra.mxu0 0.0
    %628 = vmatpush.msra.mxu0 0.0
    %629 = vmatpush.msra.mxu0 0.0
    %630 = vmatpush.msra.mxu0 0.0
    %631 = vmatpush.msra.mxu0 0.0
    %632 = vmatpush.msra.mxu0 0.0
    %633 = vmatpush.msra.mxu0 0.0
    %634 = vmatpush.msra.mxu0 0.0
    %635 = vmatpush.msra.mxu0 0.0
    %636 = vmatpush.msra.mxu0 0.0
    %637 = vmatpush.msra.mxu0 0.0
    %638 = vmatpush.msra.mxu0 0.0
    %639 = vmatpush.msra.mxu0 %v257
    %640 = vmatpush.msra.mxu0 %v256
    %641 = vmatpush.msra.mxu0 %v255
    %642 = vmatpush.msra.mxu0 %v254
    %643 = vmatmul.f32.gmra.mxu0 %v625
    %v644 = vpop.f32.mrf.mxu0
    %v645 = vadd.f32 0.0, %v644
    %646 = vdwg.mxu0
    %v647 = vadd.f32 %v624, %v645
    %v648 = vxor.u32 %v647, 2147483648
    %v649 = vmul.f32 %v648, 1.442695
    %v650 = vpow.pop %v649
    %v651 = vadd.f32 %v650, 1.0
    %v652 = vrcp.pop %v651
    %v653 = vmul.f32 %v651, %v652
    %v654 = vsub.f32 1.0, %v653
    %v655 = vmul.f32 %v652, %v654
    %v656 = vadd.f32 %v652, %v655
    %vm657 = vweird.f32 %v651
    %vm658 = vweird.f32 %v652
    %vm659 = vmor %vm657, %vm658
    %v660 = vsel %vm659, %v652, %v656
    %v661 = vand.u32 2147483647, %v651
    %vm662 = vcmp.eq.f32.partialorder %v661, 8.507059e+37
    %v663 = vand.u32 %v651, 2147483648
    %v664 = vor.u32 1.1754944e-38, %v663
    %v665 = vsel %vm662, %v664, %v660
    %v666 = vmul.f32 1.0, %v665
    %v667 = vtanh.pop %v647
    %v668 = vmul.f32 %v666, %v611
    %670 = vrot.lane.b32.xlu0 %v667, 64
    %v671 = vpop.permute.xlu0 %670
    %v673 = vmul.f32 %v666, %v671
    %675 = vrot.lane.b32.xlu0 %v673, 32
    %v676 = vpop.permute.xlu0 %675
    %v678 = vadd.f32 %v668, %v676
    %v679 = vtanh.pop %v678
    %681 = vrot.lane.b32.xlu0 %v679, 64
    %v682 = vpop.permute.xlu0 %681
    %v684 = vmul.f32 %v666, %v682
    %686 = vrot.lane.b32.xlu0 %v684, 32
    %v687 = vpop.permute.xlu0 %686
    %689 = vst.msk [vmem:[%s486] sm:$0xff] %vm345, %v687
    %690 = vst.msk [vmem:[%s484] sm:$0xff] %vm348, %v687
    %v691 = vsel %vm272, %v249, %v234
    %v692 = vsel %vm188, %v687, 0
    %694 = vmatpush.msra.mxu0 0.0
    %695 = vmatpush.msra.mxu0 0.0
    %696 = vmatpush.msra.mxu0 0.0
    %697 = vmatpush.msra.mxu0 0.0
    %698 = vmatpush.msra.mxu0 0.0
    %699 = vmatpush.msra.mxu0 0.0
    %700 = vmatpush.msra.mxu0 0.0
    %701 = vmatpush.msra.mxu0 0.0
    %702 = vmatpush.msra.mxu0 0.0
    %703 = vmatpush.msra.mxu0 0.0
    %704 = vmatpush.msra.mxu0 0.0
    %705 = vmatpush.msra.mxu0 0.0
    %706 = vmatpush.msra.mxu0 %v257
    %707 = vmatpush.msra.mxu0 %v256
    %708 = vmatpush.msra.mxu0 %v255
    %709 = vmatpush.msra.mxu0 %v254
    %710 = vmatmul.f32.gmra.mxu0 %v692
    %v711 = vpop.f32.mrf.mxu0
    %v712 = vadd.f32 0.0, %v711
    %713 = vdwg.mxu0
    %v714 = vadd.f32 %v691, %v712
    %v715 = vxor.u32 %v714, 2147483648
    %v716 = vmul.f32 %v715, 1.442695
    %v717 = vpow.pop %v716
    %v718 = vadd.f32 %v717, 1.0
    %v719 = vrcp.pop %v718
    %v720 = vmul.f32 %v718, %v719
    %v721 = vsub.f32 1.0, %v720
    %v722 = vmul.f32 %v719, %v721
    %v723 = vadd.f32 %v719, %v722
    %vm724 = vweird.f32 %v718
    %vm725 = vweird.f32 %v719
    %vm726 = vmor %vm724, %vm725
    %v727 = vsel %vm726, %v719, %v723
    %v728 = vand.u32 2147483647, %v718
    %vm729 = vcmp.eq.f32.partialorder %v728, 8.507059e+37
    %v730 = vand.u32 %v718, 2147483648
    %v731 = vor.u32 1.1754944e-38, %v730
    %v732 = vsel %vm729, %v731, %v727
    %v733 = vmul.f32 1.0, %v732
    %v734 = vtanh.pop %v714
    %v735 = vmul.f32 %v733, %v678
    %737 = vrot.lane.b32.xlu0 %v734, 64
    %v738 = vpop.permute.xlu0 %737
    %v740 = vmul.f32 %v733, %v738
    %742 = vrot.lane.b32.xlu0 %v740, 32
    %v743 = vpop.permute.xlu0 %742
    %v745 = vadd.f32 %v735, %v743
    %v746 = vtanh.pop %v745
    %748 = vrot.lane.b32.xlu0 %v746, 64
    %v749 = vpop.permute.xlu0 %748
    %v751 = vmul.f32 %v733, %v749
    %753 = vrot.lane.b32.xlu0 %v751, 32
    %v754 = vpop.permute.xlu0 %753
    %756 = vst.msk [vmem:[%s417] sm:$0xff] %vm345, %v754
    %757 = vst.msk [vmem:[%s415] sm:$0xff] %vm348, %v754
    %v758 = vsel %vm272, %v252, %v231
    %v759 = vsel %vm188, %v754, 0
    %761 = vmatpush.msra.mxu0 0.0
    %762 = vmatpush.msra.mxu0 0.0
    %763 = vmatpush.msra.mxu0 0.0
    %764 = vmatpush.msra.mxu0 0.0
    %765 = vmatpush.msra.mxu0 0.0
    %766 = vmatpush.msra.mxu0 0.0
    %767 = vmatpush.msra.mxu0 0.0
    %768 = vmatpush.msra.mxu0 0.0
    %769 = vmatpush.msra.mxu0 0.0
    %770 = vmatpush.msra.mxu0 0.0
    %771 = vmatpush.msra.mxu0 0.0
    %772 = vmatpush.msra.mxu0 0.0
    %773 = vmatpush.msra.mxu0 %v257
    %774 = vmatpush.msra.mxu0 %v256
    %775 = vmatpush.msra.mxu0 %v255
    %776 = vmatpush.msra.mxu0 %v254
    %777 = vmatmul.f32.gmra.mxu0 %v759
    %v778 = vpop.f32.mrf.mxu0
    %v779 = vadd.f32 0.0, %v778
    %780 = vdwg.mxu0
    %v781 = vadd.f32 %v758, %v779
    %v782 = vxor.u32 %v781, 2147483648
    %v783 = vmul.f32 %v782, 1.442695
    %v784 = vpow.pop %v783
    %v785 = vadd.f32 %v784, 1.0
    %v786 = vrcp.pop %v785
    %v787 = vmul.f32 %v785, %v786
    %v788 = vsub.f32 1.0, %v787
    %v789 = vmul.f32 %v786, %v788
    %v790 = vadd.f32 %v786, %v789
    %vm791 = vweird.f32 %v785
    %vm792 = vweird.f32 %v786
    %vm793 = vmor %vm791, %vm792
    %v794 = vsel %vm793, %v786, %v790
    %v795 = vand.u32 2147483647, %v785
    %vm796 = vcmp.eq.f32.partialorder %v795, 8.507059e+37
    %v797 = vand.u32 %v785, 2147483648
    %v798 = vor.u32 1.1754944e-38, %v797
    %v799 = vsel %vm796, %v798, %v794
    %v800 = vmul.f32 1.0, %v799
    %v801 = vtanh.pop %v781
    %v802 = vmul.f32 %v800, %v745
    %804 = vrot.lane.b32.xlu0 %v801, 64
    %v805 = vpop.permute.xlu0 %804
    %v807 = vmul.f32 %v800, %v805
    %809 = vrot.lane.b32.xlu0 %v807, 32
    %v810 = vpop.permute.xlu0 %809
    %v812 = vadd.f32 %v802, %v810
    %v813 = vtanh.pop %v812
    %815 = vrot.lane.b32.xlu0 %v813, 64
    %v816 = vpop.permute.xlu0 %815
    %v818 = vmul.f32 %v800, %v816
    %820 = vrot.lane.b32.xlu0 %v818, 32
    %v821 = vpop.permute.xlu0 %820
    %823 = vst.msk [vmem:[%s347] sm:$0xff] %vm345, %v821
    %824 = vst.msk [vmem:[#allocation2] sm:$0xff] %vm348, %v821
    %v825 = vld [vmem:[#allocation2] sm:$0xff]
    %v826 = vld [vmem:[#allocation2 + $0x8] sm:$0xff]
    %v827 = vld [vmem:[#allocation2 + $0x10] sm:$0xff]
    %v828 = vld [vmem:[#allocation2 + $0x18] sm:$0xff]
    %v829 = vld [vmem:[#allocation2 + $0x20] sm:$0xff]
    %v830 = vld [vmem:[#allocation2 + $0x28] sm:$0xff]
    %v831 = vld [vmem:[#allocation2 + $0x30] sm:$0xff]
    %v832 = vld [vmem:[#allocation2 + $0x38] sm:$0xff]
    %v833 = vld [vmem:[#allocation10] sm:$0xff]
    %v834 = vld [vmem:[#allocation10 + $0x8] sm:$0xff]
    %v835 = vld [vmem:[#allocation10 + $0x10] sm:$0xff]
    %v836 = vld [vmem:[#allocation10 + $0x18] sm:$0xff]
    %v837 = vld [vmem:[%s8] sm:$0x1]
    %v839 = vperm.slane %v837, 0
    %v842 = vsel %vm188, %v825, 0
    %v845 = vsel %vm188, %v826, 0
    %v848 = vsel %vm188, %v827, 0
    %v851 = vsel %vm188, %v828, 0
    %v854 = vsel %vm188, %v829, 0
    %v857 = vsel %vm188, %v830, 0
    %v860 = vsel %vm188, %v831, 0
    %v863 = vsel %vm188, %v832, 0
    %865 = vmatpush.msra.mxu0 0.0
    %866 = vmatpush.msra.mxu0 0.0
    %867 = vmatpush.msra.mxu0 0.0
    %868 = vmatpush.msra.mxu0 0.0
    %869 = vmatpush.msra.mxu0 0.0
    %870 = vmatpush.msra.mxu0 0.0
    %871 = vmatpush.msra.mxu0 0.0
    %872 = vmatpush.msra.mxu0 0.0
    %873 = vmatpush.msra.mxu0 0.0
    %874 = vmatpush.msra.mxu0 0.0
    %875 = vmatpush.msra.mxu0 0.0
    %876 = vmatpush.msra.mxu0 0.0
    %877 = vmatpush.msra.mxu0 %v836
    %878 = vmatpush.msra.mxu0 %v835
    %879 = vmatpush.msra.mxu0 %v834
    %880 = vmatpush.msra.mxu0 %v833
    %881 = vmatmul.f32.gmra.mxu0 %v842
    %v882 = vpop.f32.mrf.mxu0
    %v883 = vadd.f32 %v839, %v882
    %884 = vmatmul.f32.gmra.mxu0 %v845
    %v885 = vpop.f32.mrf.mxu0
    %v886 = vadd.f32 %v839, %v885
    %887 = vmatmul.f32.gmra.mxu0 %v848
    %v888 = vpop.f32.mrf.mxu0
    %v889 = vadd.f32 %v839, %v888
    %890 = vmatmul.f32.gmra.mxu0 %v851
    %v891 = vpop.f32.mrf.mxu0
    %v892 = vadd.f32 %v839, %v891
    %893 = vmatmul.f32.gmra.mxu0 %v854
    %v894 = vpop.f32.mrf.mxu0
    %v895 = vadd.f32 %v839, %v894
    %896 = vmatmul.f32.gmra.mxu0 %v857
    %v897 = vpop.f32.mrf.mxu0
    %v898 = vadd.f32 %v839, %v897
    %899 = vmatmul.f32.gmra.mxu0 %v860
    %v900 = vpop.f32.mrf.mxu0
    %v901 = vadd.f32 %v839, %v900
    %902 = vmatmul.f32.gmra.mxu0 %v863
    %v903 = vpop.f32.mrf.mxu0
    %v904 = vadd.f32 %v839, %v903
    %905 = vdwg.mxu0
    %v906 = vld [vmem:[#allocation12] sm:$0xff]
    %v907 = vld [vmem:[#allocation12 + $0x8] sm:$0xff]
    %v908 = vld [vmem:[#allocation12 + $0x10] sm:$0xff]
    %v909 = vld [vmem:[#allocation12 + $0x18] sm:$0xff]
    %v910 = vld [vmem:[#allocation13] sm:$0xff]
    %v911 = vld [vmem:[#allocation15] sm:$0xff]
    %v913 = vsel %vm188, %v910, 0
    %915 = vmatpush.msra.mxu0 0.0
    %916 = vmatpush.msra.mxu0 0.0
    %917 = vmatpush.msra.mxu0 0.0
    %918 = vmatpush.msra.mxu0 0.0
    %919 = vmatpush.msra.mxu0 0.0
    %920 = vmatpush.msra.mxu0 0.0
    %921 = vmatpush.msra.mxu0 0.0
    %922 = vmatpush.msra.mxu0 0.0
    %923 = vmatpush.msra.mxu0 0.0
    %924 = vmatpush.msra.mxu0 0.0
    %925 = vmatpush.msra.mxu0 0.0
    %926 = vmatpush.msra.mxu0 0.0
    %927 = vmatpush.msra.mxu0 %v909
    %928 = vmatpush.msra.mxu0 %v908
    %929 = vmatpush.msra.mxu0 %v907
    %930 = vmatpush.msra.mxu0 %v906
    %931 = vmatmul.f32.gmra.mxu0 %v913
    %v932 = vpop.f32.mrf.mxu0
    %v933 = vadd.f32 0.0, %v932
    %934 = vdwg.mxu0
    %v935 = vadd.f32 %v883, %v933
    %v936 = vxor.u32 %v935, 2147483648
    %v937 = vmul.f32 %v936, 1.442695
    %v938 = vpow.pop %v937
    %v939 = vadd.f32 %v938, 1.0
    %v940 = vrcp.pop %v939
    %v941 = vmul.f32 %v939, %v940
    %v942 = vsub.f32 1.0, %v941
    %v943 = vmul.f32 %v940, %v942
    %v944 = vadd.f32 %v940, %v943
    %vm945 = vweird.f32 %v939
    %vm946 = vweird.f32 %v940
    %vm947 = vmor %vm945, %vm946
    %v948 = vsel %vm947, %v940, %v944
    %v949 = vand.u32 2147483647, %v939
    %vm950 = vcmp.eq.f32.partialorder %v949, 8.507059e+37
    %v951 = vand.u32 %v939, 2147483648
    %v952 = vor.u32 1.1754944e-38, %v951
    %v953 = vsel %vm950, %v952, %v948
    %v954 = vmul.f32 1.0, %v953
    %v955 = vtanh.pop %v935
    %957 = vrot.lane.b32.xlu0 %v911, 32
    %v958 = vpop.permute.xlu0 %957
    %v960 = vmul.f32 %v954, %v958
    %962 = vrot.lane.b32.xlu0 %v955, 64
    %v963 = vpop.permute.xlu0 %962
    %v965 = vmul.f32 %v954, %v963
    %967 = vrot.lane.b32.xlu0 %v965, 32
    %v968 = vpop.permute.xlu0 %967
    %v970 = vadd.f32 %v960, %v968
    %v971 = vtanh.pop %v970
    %973 = vrot.lane.b32.xlu0 %v971, 64
    %v974 = vpop.permute.xlu0 %973
    %v976 = vmul.f32 %v954, %v974
    %978 = vrot.lane.b32.xlu0 %v976, 32
    %v979 = vpop.permute.xlu0 %978
    %981 = vst.msk [vmem:[#allocation3] sm:$0xff] %vm188, %v979
    %v982 = vsel %vm188, %v979, 0
    %984 = vmatpush.msra.mxu0 0.0
    %985 = vmatpush.msra.mxu0 0.0
    %986 = vmatpush.msra.mxu0 0.0
    %987 = vmatpush.msra.mxu0 0.0
    %988 = vmatpush.msra.mxu0 0.0
    %989 = vmatpush.msra.mxu0 0.0
    %990 = vmatpush.msra.mxu0 0.0
    %991 = vmatpush.msra.mxu0 0.0
    %992 = vmatpush.msra.mxu0 0.0
    %993 = vmatpush.msra.mxu0 0.0
    %994 = vmatpush.msra.mxu0 0.0
    %995 = vmatpush.msra.mxu0 0.0
    %996 = vmatpush.msra.mxu0 %v909
    %997 = vmatpush.msra.mxu0 %v908
    %998 = vmatpush.msra.mxu0 %v907
    %999 = vmatpush.msra.mxu0 %v906
    %1000 = vmatmul.f32.gmra.mxu0 %v982
    %v1001 = vpop.f32.mrf.mxu0
    %v1002 = vadd.f32 0.0, %v1001
    %1003 = vdwg.mxu0
    %v1004 = vadd.f32 %v886, %v1002
    %v1005 = vxor.u32 %v1004, 2147483648
    %v1006 = vmul.f32 %v1005, 1.442695
    %v1007 = vpow.pop %v1006
    %v1008 = vadd.f32 %v1007, 1.0
    %v1009 = vrcp.pop %v1008
    %v1010 = vmul.f32 %v1008, %v1009
    %v1011 = vsub.f32 1.0, %v1010
    %v1012 = vmul.f32 %v1009, %v1011
    %v1013 = vadd.f32 %v1009, %v1012
    %vm1014 = vweird.f32 %v1008
    %vm1015 = vweird.f32 %v1009
    %vm1016 = vmor %vm1014, %vm1015
    %v1017 = vsel %vm1016, %v1009, %v1013
    %v1018 = vand.u32 2147483647, %v1008
    %vm1019 = vcmp.eq.f32.partialorder %v1018, 8.507059e+37
    %v1020 = vand.u32 %v1008, 2147483648
    %v1021 = vor.u32 1.1754944e-38, %v1020
    %v1022 = vsel %vm1019, %v1021, %v1017
    %v1023 = vmul.f32 1.0, %v1022
    %v1024 = vtanh.pop %v1004
    %v1025 = vmul.f32 %v1023, %v970
    %1027 = vrot.lane.b32.xlu0 %v1024, 64
    %v1028 = vpop.permute.xlu0 %1027
    %v1030 = vmul.f32 %v1023, %v1028
    %1032 = vrot.lane.b32.xlu0 %v1030, 32
    %v1033 = vpop.permute.xlu0 %1032
    %v1035 = vadd.f32 %v1025, %v1033
    %v1036 = vtanh.pop %v1035
    %1038 = vrot.lane.b32.xlu0 %v1036, 64
    %v1039 = vpop.permute.xlu0 %1038
    %v1041 = vmul.f32 %v1023, %v1039
    %1043 = vrot.lane.b32.xlu0 %v1041, 32
    %v1044 = vpop.permute.xlu0 %1043
    %s1046 = scalar_lea.vmem [#allocation3], 8
    %1047 = vst.msk [vmem:[%s1046] sm:$0xff] %vm188, %v1044
    %v1048 = vsel %vm188, %v1044, 0
    %1050 = vmatpush.msra.mxu0 0.0
    %1051 = vmatpush.msra.mxu0 0.0
    %1052 = vmatpush.msra.mxu0 0.0
    %1053 = vmatpush.msra.mxu0 0.0
    %1054 = vmatpush.msra.mxu0 0.0
    %1055 = vmatpush.msra.mxu0 0.0
    %1056 = vmatpush.msra.mxu0 0.0
    %1057 = vmatpush.msra.mxu0 0.0
    %1058 = vmatpush.msra.mxu0 0.0
    %1059 = vmatpush.msra.mxu0 0.0
    %1060 = vmatpush.msra.mxu0 0.0
    %1061 = vmatpush.msra.mxu0 0.0
    %1062 = vmatpush.msra.mxu0 %v909
    %1063 = vmatpush.msra.mxu0 %v908
    %1064 = vmatpush.msra.mxu0 %v907
    %1065 = vmatpush.msra.mxu0 %v906
    %1066 = vmatmul.f32.gmra.mxu0 %v1048
    %v1067 = vpop.f32.mrf.mxu0
    %v1068 = vadd.f32 0.0, %v1067
    %1069 = vdwg.mxu0
    %v1070 = vadd.f32 %v889, %v1068
    %v1071 = vxor.u32 %v1070, 2147483648
    %v1072 = vmul.f32 %v1071, 1.442695
    %v1073 = vpow.pop %v1072
    %v1074 = vadd.f32 %v1073, 1.0
    %v1075 = vrcp.pop %v1074
    %v1076 = vmul.f32 %v1074, %v1075
    %v1077 = vsub.f32 1.0, %v1076
    %v1078 = vmul.f32 %v1075, %v1077
    %v1079 = vadd.f32 %v1075, %v1078
    %vm1080 = vweird.f32 %v1074
    %vm1081 = vweird.f32 %v1075
    %vm1082 = vmor %vm1080, %vm1081
    %v1083 = vsel %vm1082, %v1075, %v1079
    %v1084 = vand.u32 2147483647, %v1074
    %vm1085 = vcmp.eq.f32.partialorder %v1084, 8.507059e+37
    %v1086 = vand.u32 %v1074, 2147483648
    %v1087 = vor.u32 1.1754944e-38, %v1086
    %v1088 = vsel %vm1085, %v1087, %v1083
    %v1089 = vmul.f32 1.0, %v1088
    %v1090 = vtanh.pop %v1070
    %v1091 = vmul.f32 %v1089, %v1035
    %1093 = vrot.lane.b32.xlu0 %v1090, 64
    %v1094 = vpop.permute.xlu0 %1093
    %v1096 = vmul.f32 %v1089, %v1094
    %1098 = vrot.lane.b32.xlu0 %v1096, 32
    %v1099 = vpop.permute.xlu0 %1098
    %v1101 = vadd.f32 %v1091, %v1099
    %v1102 = vtanh.pop %v1101
    %1104 = vrot.lane.b32.xlu0 %v1102, 64
    %v1105 = vpop.permute.xlu0 %1104
    %v1107 = vmul.f32 %v1089, %v1105
    %1109 = vrot.lane.b32.xlu0 %v1107, 32
    %v1110 = vpop.permute.xlu0 %1109
    %s1112 = scalar_lea.vmem [#allocation3], 16
    %1113 = vst.msk [vmem:[%s1112] sm:$0xff] %vm188, %v1110
    %v1114 = vsel %vm188, %v1110, 0
    %1116 = vmatpush.msra.mxu0 0.0
    %1117 = vmatpush.msra.mxu0 0.0
    %1118 = vmatpush.msra.mxu0 0.0
    %1119 = vmatpush.msra.mxu0 0.0
    %1120 = vmatpush.msra.mxu0 0.0
    %1121 = vmatpush.msra.mxu0 0.0
    %1122 = vmatpush.msra.mxu0 0.0
    %1123 = vmatpush.msra.mxu0 0.0
    %1124 = vmatpush.msra.mxu0 0.0
    %1125 = vmatpush.msra.mxu0 0.0
    %1126 = vmatpush.msra.mxu0 0.0
    %1127 = vmatpush.msra.mxu0 0.0
    %1128 = vmatpush.msra.mxu0 %v909
    %1129 = vmatpush.msra.mxu0 %v908
    %1130 = vmatpush.msra.mxu0 %v907
    %1131 = vmatpush.msra.mxu0 %v906
    %1132 = vmatmul.f32.gmra.mxu0 %v1114
    %v1133 = vpop.f32.mrf.mxu0
    %v1134 = vadd.f32 0.0, %v1133
    %1135 = vdwg.mxu0
    %v1136 = vadd.f32 %v892, %v1134
    %v1137 = vxor.u32 %v1136, 2147483648
    %v1138 = vmul.f32 %v1137, 1.442695
    %v1139 = vpow.pop %v1138
    %v1140 = vadd.f32 %v1139, 1.0
    %v1141 = vrcp.pop %v1140
    %v1142 = vmul.f32 %v1140, %v1141
    %v1143 = vsub.f32 1.0, %v1142
    %v1144 = vmul.f32 %v1141, %v1143
    %v1145 = vadd.f32 %v1141, %v1144
    %vm1146 = vweird.f32 %v1140
    %vm1147 = vweird.f32 %v1141
    %vm1148 = vmor %vm1146, %vm1147
    %v1149 = vsel %vm1148, %v1141, %v1145
    %v1150 = vand.u32 2147483647, %v1140
    %vm1151 = vcmp.eq.f32.partialorder %v1150, 8.507059e+37
    %v1152 = vand.u32 %v1140, 2147483648
    %v1153 = vor.u32 1.1754944e-38, %v1152
    %v1154 = vsel %vm1151, %v1153, %v1149
    %v1155 = vmul.f32 1.0, %v1154
    %v1156 = vtanh.pop %v1136
    %v1157 = vmul.f32 %v1155, %v1101
    %1159 = vrot.lane.b32.xlu0 %v1156, 64
    %v1160 = vpop.permute.xlu0 %1159
    %v1162 = vmul.f32 %v1155, %v1160
    %1164 = vrot.lane.b32.xlu0 %v1162, 32
    %v1165 = vpop.permute.xlu0 %1164
    %v1167 = vadd.f32 %v1157, %v1165
    %v1168 = vtanh.pop %v1167
    %1170 = vrot.lane.b32.xlu0 %v1168, 64
    %v1171 = vpop.permute.xlu0 %1170
    %v1173 = vmul.f32 %v1155, %v1171
    %1175 = vrot.lane.b32.xlu0 %v1173, 32
    %v1176 = vpop.permute.xlu0 %1175
    %s1178 = scalar_lea.vmem [#allocation3], 24
    %1179 = vst.msk [vmem:[%s1178] sm:$0xff] %vm188, %v1176
    %v1180 = vsel %vm188, %v1176, 0
    %1182 = vmatpush.msra.mxu0 0.0
    %1183 = vmatpush.msra.mxu0 0.0
    %1184 = vmatpush.msra.mxu0 0.0
    %1185 = vmatpush.msra.mxu0 0.0
    %1186 = vmatpush.msra.mxu0 0.0
    %1187 = vmatpush.msra.mxu0 0.0
    %1188 = vmatpush.msra.mxu0 0.0
    %1189 = vmatpush.msra.mxu0 0.0
    %1190 = vmatpush.msra.mxu0 0.0
    %1191 = vmatpush.msra.mxu0 0.0
    %1192 = vmatpush.msra.mxu0 0.0
    %1193 = vmatpush.msra.mxu0 0.0
    %1194 = vmatpush.msra.mxu0 %v909
    %1195 = vmatpush.msra.mxu0 %v908
    %1196 = vmatpush.msra.mxu0 %v907
    %1197 = vmatpush.msra.mxu0 %v906
    %1198 = vmatmul.f32.gmra.mxu0 %v1180
    %v1199 = vpop.f32.mrf.mxu0
    %v1200 = vadd.f32 0.0, %v1199
    %1201 = vdwg.mxu0
    %v1202 = vadd.f32 %v895, %v1200
    %v1203 = vxor.u32 %v1202, 2147483648
    %v1204 = vmul.f32 %v1203, 1.442695
    %v1205 = vpow.pop %v1204
    %v1206 = vadd.f32 %v1205, 1.0
    %v1207 = vrcp.pop %v1206
    %v1208 = vmul.f32 %v1206, %v1207
    %v1209 = vsub.f32 1.0, %v1208
    %v1210 = vmul.f32 %v1207, %v1209
    %v1211 = vadd.f32 %v1207, %v1210
    %vm1212 = vweird.f32 %v1206
    %vm1213 = vweird.f32 %v1207
    %vm1214 = vmor %vm1212, %vm1213
    %v1215 = vsel %vm1214, %v1207, %v1211
    %v1216 = vand.u32 2147483647, %v1206
    %vm1217 = vcmp.eq.f32.partialorder %v1216, 8.507059e+37
    %v1218 = vand.u32 %v1206, 2147483648
    %v1219 = vor.u32 1.1754944e-38, %v1218
    %v1220 = vsel %vm1217, %v1219, %v1215
    %v1221 = vmul.f32 1.0, %v1220
    %v1222 = vtanh.pop %v1202
    %v1223 = vmul.f32 %v1221, %v1167
    %1225 = vrot.lane.b32.xlu0 %v1222, 64
    %v1226 = vpop.permute.xlu0 %1225
    %v1228 = vmul.f32 %v1221, %v1226
    %1230 = vrot.lane.b32.xlu0 %v1228, 32
    %v1231 = vpop.permute.xlu0 %1230
    %v1233 = vadd.f32 %v1223, %v1231
    %v1234 = vtanh.pop %v1233
    %1236 = vrot.lane.b32.xlu0 %v1234, 64
    %v1237 = vpop.permute.xlu0 %1236
    %v1239 = vmul.f32 %v1221, %v1237
    %1241 = vrot.lane.b32.xlu0 %v1239, 32
    %v1242 = vpop.permute.xlu0 %1241
    %s1244 = scalar_lea.vmem [#allocation3], 32
    %1245 = vst.msk [vmem:[%s1244] sm:$0xff] %vm188, %v1242
    %v1246 = vsel %vm188, %v1242, 0
    %1248 = vmatpush.msra.mxu0 0.0
    %1249 = vmatpush.msra.mxu0 0.0
    %1250 = vmatpush.msra.mxu0 0.0
    %1251 = vmatpush.msra.mxu0 0.0
    %1252 = vmatpush.msra.mxu0 0.0
    %1253 = vmatpush.msra.mxu0 0.0
    %1254 = vmatpush.msra.mxu0 0.0
    %1255 = vmatpush.msra.mxu0 0.0
    %1256 = vmatpush.msra.mxu0 0.0
    %1257 = vmatpush.msra.mxu0 0.0
    %1258 = vmatpush.msra.mxu0 0.0
    %1259 = vmatpush.msra.mxu0 0.0
    %1260 = vmatpush.msra.mxu0 %v909
    %1261 = vmatpush.msra.mxu0 %v908
    %1262 = vmatpush.msra.mxu0 %v907
    %1263 = vmatpush.msra.mxu0 %v906
    %1264 = vmatmul.f32.gmra.mxu0 %v1246
    %v1265 = vpop.f32.mrf.mxu0
    %v1266 = vadd.f32 0.0, %v1265
    %1267 = vdwg.mxu0
    %v1268 = vadd.f32 %v898, %v1266
    %v1269 = vxor.u32 %v1268, 2147483648
    %v1270 = vmul.f32 %v1269, 1.442695
    %v1271 = vpow.pop %v1270
    %v1272 = vadd.f32 %v1271, 1.0
    %v1273 = vrcp.pop %v1272
    %v1274 = vmul.f32 %v1272, %v1273
    %v1275 = vsub.f32 1.0, %v1274
    %v1276 = vmul.f32 %v1273, %v1275
    %v1277 = vadd.f32 %v1273, %v1276
    %vm1278 = vweird.f32 %v1272
    %vm1279 = vweird.f32 %v1273
    %vm1280 = vmor %vm1278, %vm1279
    %v1281 = vsel %vm1280, %v1273, %v1277
    %v1282 = vand.u32 2147483647, %v1272
    %vm1283 = vcmp.eq.f32.partialorder %v1282, 8.507059e+37
    %v1284 = vand.u32 %v1272, 2147483648
    %v1285 = vor.u32 1.1754944e-38, %v1284
    %v1286 = vsel %vm1283, %v1285, %v1281
    %v1287 = vmul.f32 1.0, %v1286
    %v1288 = vtanh.pop %v1268
    %v1289 = vmul.f32 %v1287, %v1233
    %1291 = vrot.lane.b32.xlu0 %v1288, 64
    %v1292 = vpop.permute.xlu0 %1291
    %v1294 = vmul.f32 %v1287, %v1292
    %1296 = vrot.lane.b32.xlu0 %v1294, 32
    %v1297 = vpop.permute.xlu0 %1296
    %v1299 = vadd.f32 %v1289, %v1297
    %v1300 = vtanh.pop %v1299
    %1302 = vrot.lane.b32.xlu0 %v1300, 64
    %v1303 = vpop.permute.xlu0 %1302
    %v1305 = vmul.f32 %v1287, %v1303
    %1307 = vrot.lane.b32.xlu0 %v1305, 32
    %v1308 = vpop.permute.xlu0 %1307
    %s1310 = scalar_lea.vmem [#allocation3], 40
    %1311 = vst.msk [vmem:[%s1310] sm:$0xff] %vm188, %v1308
    %v1312 = vsel %vm188, %v1308, 0
    %1314 = vmatpush.msra.mxu0 0.0
    %1315 = vmatpush.msra.mxu0 0.0
    %1316 = vmatpush.msra.mxu0 0.0
    %1317 = vmatpush.msra.mxu0 0.0
    %1318 = vmatpush.msra.mxu0 0.0
    %1319 = vmatpush.msra.mxu0 0.0
    %1320 = vmatpush.msra.mxu0 0.0
    %1321 = vmatpush.msra.mxu0 0.0
    %1322 = vmatpush.msra.mxu0 0.0
    %1323 = vmatpush.msra.mxu0 0.0
    %1324 = vmatpush.msra.mxu0 0.0
    %1325 = vmatpush.msra.mxu0 0.0
    %1326 = vmatpush.msra.mxu0 %v909
    %1327 = vmatpush.msra.mxu0 %v908
    %1328 = vmatpush.msra.mxu0 %v907
    %1329 = vmatpush.msra.mxu0 %v906
    %1330 = vmatmul.f32.gmra.mxu0 %v1312
    %v1331 = vpop.f32.mrf.mxu0
    %v1332 = vadd.f32 0.0, %v1331
    %1333 = vdwg.mxu0
    %v1334 = vadd.f32 %v901, %v1332
    %v1335 = vxor.u32 %v1334, 2147483648
    %v1336 = vmul.f32 %v1335, 1.442695
    %v1337 = vpow.pop %v1336
    %v1338 = vadd.f32 %v1337, 1.0
    %v1339 = vrcp.pop %v1338
    %v1340 = vmul.f32 %v1338, %v1339
    %v1341 = vsub.f32 1.0, %v1340
    %v1342 = vmul.f32 %v1339, %v1341
    %v1343 = vadd.f32 %v1339, %v1342
    %vm1344 = vweird.f32 %v1338
    %vm1345 = vweird.f32 %v1339
    %vm1346 = vmor %vm1344, %vm1345
    %v1347 = vsel %vm1346, %v1339, %v1343
    %v1348 = vand.u32 2147483647, %v1338
    %vm1349 = vcmp.eq.f32.partialorder %v1348, 8.507059e+37
    %v1350 = vand.u32 %v1338, 2147483648
    %v1351 = vor.u32 1.1754944e-38, %v1350
    %v1352 = vsel %vm1349, %v1351, %v1347
    %v1353 = vmul.f32 1.0, %v1352
    %v1354 = vtanh.pop %v1334
    %v1355 = vmul.f32 %v1353, %v1299
    %1357 = vrot.lane.b32.xlu0 %v1354, 64
    %v1358 = vpop.permute.xlu0 %1357
    %v1360 = vmul.f32 %v1353, %v1358
    %1362 = vrot.lane.b32.xlu0 %v1360, 32
    %v1363 = vpop.permute.xlu0 %1362
    %v1365 = vadd.f32 %v1355, %v1363
    %v1366 = vtanh.pop %v1365
    %1368 = vrot.lane.b32.xlu0 %v1366, 64
    %v1369 = vpop.permute.xlu0 %1368
    %v1371 = vmul.f32 %v1353, %v1369
    %1373 = vrot.lane.b32.xlu0 %v1371, 32
    %v1374 = vpop.permute.xlu0 %1373
    %s1376 = scalar_lea.vmem [#allocation3], 48
    %1377 = vst.msk [vmem:[%s1376] sm:$0xff] %vm188, %v1374
    %v1378 = vsel %vm188, %v1374, 0
    %1380 = vmatpush.msra.mxu0 0.0
    %1381 = vmatpush.msra.mxu0 0.0
    %1382 = vmatpush.msra.mxu0 0.0
    %1383 = vmatpush.msra.mxu0 0.0
    %1384 = vmatpush.msra.mxu0 0.0
    %1385 = vmatpush.msra.mxu0 0.0
    %1386 = vmatpush.msra.mxu0 0.0
    %1387 = vmatpush.msra.mxu0 0.0
    %1388 = vmatpush.msra.mxu0 0.0
    %1389 = vmatpush.msra.mxu0 0.0
    %1390 = vmatpush.msra.mxu0 0.0
    %1391 = vmatpush.msra.mxu0 0.0
    %1392 = vmatpush.msra.mxu0 %v909
    %1393 = vmatpush.msra.mxu0 %v908
    %1394 = vmatpush.msra.mxu0 %v907
    %1395 = vmatpush.msra.mxu0 %v906
    %1396 = vmatmul.f32.gmra.mxu0 %v1378
    %v1397 = vpop.f32.mrf.mxu0
    %v1398 = vadd.f32 0.0, %v1397
    %1399 = vdwg.mxu0
    %v1400 = vadd.f32 %v904, %v1398
    %v1401 = vxor.u32 %v1400, 2147483648
    %v1402 = vmul.f32 %v1401, 1.442695
    %v1403 = vpow.pop %v1402
    %v1404 = vadd.f32 %v1403, 1.0
    %v1405 = vrcp.pop %v1404
    %v1406 = vmul.f32 %v1404, %v1405
    %v1407 = vsub.f32 1.0, %v1406
    %v1408 = vmul.f32 %v1405, %v1407
    %v1409 = vadd.f32 %v1405, %v1408
    %vm1410 = vweird.f32 %v1404
    %vm1411 = vweird.f32 %v1405
    %vm1412 = vmor %vm1410, %vm1411
    %v1413 = vsel %vm1412, %v1405, %v1409
    %v1414 = vand.u32 2147483647, %v1404
    %vm1415 = vcmp.eq.f32.partialorder %v1414, 8.507059e+37
    %v1416 = vand.u32 %v1404, 2147483648
    %v1417 = vor.u32 1.1754944e-38, %v1416
    %v1418 = vsel %vm1415, %v1417, %v1413
    %v1419 = vmul.f32 1.0, %v1418
    %v1420 = vtanh.pop %v1400
    %v1421 = vmul.f32 %v1419, %v1365
    %1423 = vrot.lane.b32.xlu0 %v1420, 64
    %v1424 = vpop.permute.xlu0 %1423
    %v1426 = vmul.f32 %v1419, %v1424
    %1428 = vrot.lane.b32.xlu0 %v1426, 32
    %v1429 = vpop.permute.xlu0 %1428
    %v1431 = vadd.f32 %v1421, %v1429
    %v1432 = vtanh.pop %v1431
    %1434 = vrot.lane.b32.xlu0 %v1432, 64
    %v1435 = vpop.permute.xlu0 %1434
    %v1437 = vmul.f32 %v1419, %v1435
    %1439 = vrot.lane.b32.xlu0 %v1437, 32
    %v1440 = vpop.permute.xlu0 %1439
    %s1442 = scalar_lea.vmem [#allocation3], 56
    %1443 = vst.msk [vmem:[%s1442] sm:$0xff] %vm188, %v1440
    %v1444 = vld [vmem:[#allocation3] sm:$0xff]
    %v1445 = vld [vmem:[#allocation3 + $0x8] sm:$0xff]
    %v1446 = vld [vmem:[#allocation3 + $0x10] sm:$0xff]
    %v1447 = vld [vmem:[#allocation3 + $0x18] sm:$0xff]
    %v1448 = vld [vmem:[#allocation3 + $0x20] sm:$0xff]
    %v1449 = vld [vmem:[#allocation3 + $0x28] sm:$0xff]
    %v1450 = vld [vmem:[#allocation3 + $0x30] sm:$0xff]
    %v1451 = vld [vmem:[#allocation3 + $0x38] sm:$0xff]
    %v1452 = vadd.f32 %v1444, %v825
    %v1453 = vadd.f32 %v1445, %v826
    %v1454 = vadd.f32 %v1446, %v827
    %v1455 = vadd.f32 %v1447, %v828
    %v1456 = vadd.f32 %v1448, %v829
    %v1457 = vadd.f32 %v1449, %v830
    %v1458 = vadd.f32 %v1450, %v831
    %v1459 = vadd.f32 %v1451, %v832
    %s1460 = scalar_lea.vmem [#allocation10], 32
    %v1461 = vld [vmem:[%s1460] sm:$0xff]
    %v1462 = vld [vmem:[%s1460 + $0x8] sm:$0xff]
    %v1463 = vld [vmem:[%s1460 + $0x10] sm:$0xff]
    %v1464 = vld [vmem:[%s1460 + $0x18] sm:$0xff]
    %s1465 = scalar_lea.vmem %s8, 1
    %v1466 = vld [vmem:[%s1465] sm:$0x1]
    %v1468 = vperm.slane %v1466, 0
    %v1471 = vsel %vm188, %v1452, 0
    %v1474 = vsel %vm188, %v1453, 0
    %v1477 = vsel %vm188, %v1454, 0
    %v1480 = vsel %vm188, %v1455, 0
    %v1483 = vsel %vm188, %v1456, 0
    %v1486 = vsel %vm188, %v1457, 0
    %v1489 = vsel %vm188, %v1458, 0
    %v1492 = vsel %vm188, %v1459, 0
    %1494 = vmatpush.msra.mxu0 0.0
    %1495 = vmatpush.msra.mxu0 0.0
    %1496 = vmatpush.msra.mxu0 0.0
    %1497 = vmatpush.msra.mxu0 0.0
    %1498 = vmatpush.msra.mxu0 0.0
    %1499 = vmatpush.msra.mxu0 0.0
    %1500 = vmatpush.msra.mxu0 0.0
    %1501 = vmatpush.msra.mxu0 0.0
    %1502 = vmatpush.msra.mxu0 0.0
    %1503 = vmatpush.msra.mxu0 0.0
    %1504 = vmatpush.msra.mxu0 0.0
    %1505 = vmatpush.msra.mxu0 0.0
    %1506 = vmatpush.msra.mxu0 %v1464
    %1507 = vmatpush.msra.mxu0 %v1463
    %1508 = vmatpush.msra.mxu0 %v1462
    %1509 = vmatpush.msra.mxu0 %v1461
    %1510 = vmatmul.f32.gmra.mxu0 %v1471
    %v1511 = vpop.f32.mrf.mxu0
    %v1512 = vadd.f32 %v1468, %v1511
    %1513 = vmatmul.f32.gmra.mxu0 %v1474
    %v1514 = vpop.f32.mrf.mxu0
    %v1515 = vadd.f32 %v1468, %v1514
    %1516 = vmatmul.f32.gmra.mxu0 %v1477
    %v1517 = vpop.f32.mrf.mxu0
    %v1518 = vadd.f32 %v1468, %v1517
    %1519 = vmatmul.f32.gmra.mxu0 %v1480
    %v1520 = vpop.f32.mrf.mxu0
    %v1521 = vadd.f32 %v1468, %v1520
    %1522 = vmatmul.f32.gmra.mxu0 %v1483
    %v1523 = vpop.f32.mrf.mxu0
    %v1524 = vadd.f32 %v1468, %v1523
    %1525 = vmatmul.f32.gmra.mxu0 %v1486
    %v1526 = vpop.f32.mrf.mxu0
    %v1527 = vadd.f32 %v1468, %v1526
    %1528 = vmatmul.f32.gmra.mxu0 %v1489
    %v1529 = vpop.f32.mrf.mxu0
    %v1530 = vadd.f32 %v1468, %v1529
    %1531 = vmatmul.f32.gmra.mxu0 %v1492
    %v1532 = vpop.f32.mrf.mxu0
    %v1533 = vadd.f32 %v1468, %v1532
    %1534 = vdwg.mxu0
    %s1535 = scalar_lea.vmem [#allocation12], 32
    %v1536 = vld [vmem:[%s1535] sm:$0xff]
    %v1537 = vld [vmem:[%s1535 + $0x8] sm:$0xff]
    %v1538 = vld [vmem:[%s1535 + $0x10] sm:$0xff]
    %v1539 = vld [vmem:[%s1535 + $0x18] sm:$0xff]
    %s1540 = scalar_lea.vmem [#allocation13], 8
    %v1541 = vld [vmem:[%s1540] sm:$0xff]
    %s1542 = scalar_lea.vmem [#allocation15], 8
    %v1543 = vld [vmem:[%s1542] sm:$0xff]
    %v1545 = vsel %vm188, %v1541, 0
    %1547 = vmatpush.msra.mxu0 0.0
    %1548 = vmatpush.msra.mxu0 0.0
    %1549 = vmatpush.msra.mxu0 0.0
    %1550 = vmatpush.msra.mxu0 0.0
    %1551 = vmatpush.msra.mxu0 0.0
    %1552 = vmatpush.msra.mxu0 0.0
    %1553 = vmatpush.msra.mxu0 0.0
    %1554 = vmatpush.msra.mxu0 0.0
    %1555 = vmatpush.msra.mxu0 0.0
    %1556 = vmatpush.msra.mxu0 0.0
    %1557 = vmatpush.msra.mxu0 0.0
    %1558 = vmatpush.msra.mxu0 0.0
    %1559 = vmatpush.msra.mxu0 %v1539
    %1560 = vmatpush.msra.mxu0 %v1538
    %1561 = vmatpush.msra.mxu0 %v1537
    %1562 = vmatpush.msra.mxu0 %v1536
    %1563 = vmatmul.f32.gmra.mxu0 %v1545
    %v1564 = vpop.f32.mrf.mxu0
    %v1565 = vadd.f32 0.0, %v1564
    %1566 = vdwg.mxu0
    %v1567 = vadd.f32 %v1512, %v1565
    %v1568 = vxor.u32 %v1567, 2147483648
    %v1569 = vmul.f32 %v1568, 1.442695
    %v1570 = vpow.pop %v1569
    %v1571 = vadd.f32 %v1570, 1.0
    %v1572 = vrcp.pop %v1571
    %v1573 = vmul.f32 %v1571, %v1572
    %v1574 = vsub.f32 1.0, %v1573
    %v1575 = vmul.f32 %v1572, %v1574
    %v1576 = vadd.f32 %v1572, %v1575
    %vm1577 = vweird.f32 %v1571
    %vm1578 = vweird.f32 %v1572
    %vm1579 = vmor %vm1577, %vm1578
    %v1580 = vsel %vm1579, %v1572, %v1576
    %v1581 = vand.u32 2147483647, %v1571
    %vm1582 = vcmp.eq.f32.partialorder %v1581, 8.507059e+37
    %v1583 = vand.u32 %v1571, 2147483648
    %v1584 = vor.u32 1.1754944e-38, %v1583
    %v1585 = vsel %vm1582, %v1584, %v1580
    %v1586 = vmul.f32 1.0, %v1585
    %v1587 = vtanh.pop %v1567
    %1589 = vrot.lane.b32.xlu0 %v1543, 32
    %v1590 = vpop.permute.xlu0 %1589
    %v1592 = vmul.f32 %v1586, %v1590
    %1594 = vrot.lane.b32.xlu0 %v1587, 64
    %v1595 = vpop.permute.xlu0 %1594
    %v1597 = vmul.f32 %v1586, %v1595
    %1599 = vrot.lane.b32.xlu0 %v1597, 32
    %v1600 = vpop.permute.xlu0 %1599
    %v1602 = vadd.f32 %v1592, %v1600
    %v1603 = vtanh.pop %v1602
    %1605 = vrot.lane.b32.xlu0 %v1603, 64
    %v1606 = vpop.permute.xlu0 %1605
    %v1608 = vmul.f32 %v1586, %v1606
    %1610 = vrot.lane.b32.xlu0 %v1608, 32
    %v1611 = vpop.permute.xlu0 %1610
    %1613 = vst.msk [vmem:[#allocation3] sm:$0xff] %vm188, %v1611
    %v1614 = vsel %vm188, %v1611, 0
    %1616 = vmatpush.msra.mxu0 0.0
    %1617 = vmatpush.msra.mxu0 0.0
    %1618 = vmatpush.msra.mxu0 0.0
    %1619 = vmatpush.msra.mxu0 0.0
    %1620 = vmatpush.msra.mxu0 0.0
    %1621 = vmatpush.msra.mxu0 0.0
    %1622 = vmatpush.msra.mxu0 0.0
    %1623 = vmatpush.msra.mxu0 0.0
    %1624 = vmatpush.msra.mxu0 0.0
    %1625 = vmatpush.msra.mxu0 0.0
    %1626 = vmatpush.msra.mxu0 0.0
    %1627 = vmatpush.msra.mxu0 0.0
    %1628 = vmatpush.msra.mxu0 %v1539
    %1629 = vmatpush.msra.mxu0 %v1538
    %1630 = vmatpush.msra.mxu0 %v1537
    %1631 = vmatpush.msra.mxu0 %v1536
    %1632 = vmatmul.f32.gmra.mxu0 %v1614
    %v1633 = vpop.f32.mrf.mxu0
    %v1634 = vadd.f32 0.0, %v1633
    %1635 = vdwg.mxu0
    %v1636 = vadd.f32 %v1515, %v1634
    %v1637 = vxor.u32 %v1636, 2147483648
    %v1638 = vmul.f32 %v1637, 1.442695
    %v1639 = vpow.pop %v1638
    %v1640 = vadd.f32 %v1639, 1.0
    %v1641 = vrcp.pop %v1640
    %v1642 = vmul.f32 %v1640, %v1641
    %v1643 = vsub.f32 1.0, %v1642
    %v1644 = vmul.f32 %v1641, %v1643
    %v1645 = vadd.f32 %v1641, %v1644
    %vm1646 = vweird.f32 %v1640
    %vm1647 = vweird.f32 %v1641
    %vm1648 = vmor %vm1646, %vm1647
    %v1649 = vsel %vm1648, %v1641, %v1645
    %v1650 = vand.u32 2147483647, %v1640
    %vm1651 = vcmp.eq.f32.partialorder %v1650, 8.507059e+37
    %v1652 = vand.u32 %v1640, 2147483648
    %v1653 = vor.u32 1.1754944e-38, %v1652
    %v1654 = vsel %vm1651, %v1653, %v1649
    %v1655 = vmul.f32 1.0, %v1654
    %v1656 = vtanh.pop %v1636
    %v1657 = vmul.f32 %v1655, %v1602
    %1659 = vrot.lane.b32.xlu0 %v1656, 64
    %v1660 = vpop.permute.xlu0 %1659
    %v1662 = vmul.f32 %v1655, %v1660
    %1664 = vrot.lane.b32.xlu0 %v1662, 32
    %v1665 = vpop.permute.xlu0 %1664
    %v1667 = vadd.f32 %v1657, %v1665
    %v1668 = vtanh.pop %v1667
    %1670 = vrot.lane.b32.xlu0 %v1668, 64
    %v1671 = vpop.permute.xlu0 %1670
    %v1673 = vmul.f32 %v1655, %v1671
    %1675 = vrot.lane.b32.xlu0 %v1673, 32
    %v1676 = vpop.permute.xlu0 %1675
    %1678 = vst.msk [vmem:[%s1046] sm:$0xff] %vm188, %v1676
    %v1679 = vsel %vm188, %v1676, 0
    %1681 = vmatpush.msra.mxu0 0.0
    %1682 = vmatpush.msra.mxu0 0.0
    %1683 = vmatpush.msra.mxu0 0.0
    %1684 = vmatpush.msra.mxu0 0.0
    %1685 = vmatpush.msra.mxu0 0.0
    %1686 = vmatpush.msra.mxu0 0.0
    %1687 = vmatpush.msra.mxu0 0.0
    %1688 = vmatpush.msra.mxu0 0.0
    %1689 = vmatpush.msra.mxu0 0.0
    %1690 = vmatpush.msra.mxu0 0.0
    %1691 = vmatpush.msra.mxu0 0.0
    %1692 = vmatpush.msra.mxu0 0.0
    %1693 = vmatpush.msra.mxu0 %v1539
    %1694 = vmatpush.msra.mxu0 %v1538
    %1695 = vmatpush.msra.mxu0 %v1537
    %1696 = vmatpush.msra.mxu0 %v1536
    %1697 = vmatmul.f32.gmra.mxu0 %v1679
    %v1698 = vpop.f32.mrf.mxu0
    %v1699 = vadd.f32 0.0, %v1698
    %1700 = vdwg.mxu0
    %v1701 = vadd.f32 %v1518, %v1699
    %v1702 = vxor.u32 %v1701, 2147483648
    %v1703 = vmul.f32 %v1702, 1.442695
    %v1704 = vpow.pop %v1703
    %v1705 = vadd.f32 %v1704, 1.0
    %v1706 = vrcp.pop %v1705
    %v1707 = vmul.f32 %v1705, %v1706
    %v1708 = vsub.f32 1.0, %v1707
    %v1709 = vmul.f32 %v1706, %v1708
    %v1710 = vadd.f32 %v1706, %v1709
    %vm1711 = vweird.f32 %v1705
    %vm1712 = vweird.f32 %v1706
    %vm1713 = vmor %vm1711, %vm1712
    %v1714 = vsel %vm1713, %v1706, %v1710
    %v1715 = vand.u32 2147483647, %v1705
    %vm1716 = vcmp.eq.f32.partialorder %v1715, 8.507059e+37
    %v1717 = vand.u32 %v1705, 2147483648
    %v1718 = vor.u32 1.1754944e-38, %v1717
    %v1719 = vsel %vm1716, %v1718, %v1714
    %v1720 = vmul.f32 1.0, %v1719
    %v1721 = vtanh.pop %v1701
    %v1722 = vmul.f32 %v1720, %v1667
    %1724 = vrot.lane.b32.xlu0 %v1721, 64
    %v1725 = vpop.permute.xlu0 %1724
    %v1727 = vmul.f32 %v1720, %v1725
    %1729 = vrot.lane.b32.xlu0 %v1727, 32
    %v1730 = vpop.permute.xlu0 %1729
    %v1732 = vadd.f32 %v1722, %v1730
    %v1733 = vtanh.pop %v1732
    %1735 = vrot.lane.b32.xlu0 %v1733, 64
    %v1736 = vpop.permute.xlu0 %1735
    %v1738 = vmul.f32 %v1720, %v1736
    %1740 = vrot.lane.b32.xlu0 %v1738, 32
    %v1741 = vpop.permute.xlu0 %1740
    %1743 = vst.msk [vmem:[%s1112] sm:$0xff] %vm188, %v1741
    %v1744 = vsel %vm188, %v1741, 0
    %1746 = vmatpush.msra.mxu0 0.0
    %1747 = vmatpush.msra.mxu0 0.0
    %1748 = vmatpush.msra.mxu0 0.0
    %1749 = vmatpush.msra.mxu0 0.0
    %1750 = vmatpush.msra.mxu0 0.0
    %1751 = vmatpush.msra.mxu0 0.0
    %1752 = vmatpush.msra.mxu0 0.0
    %1753 = vmatpush.msra.mxu0 0.0
    %1754 = vmatpush.msra.mxu0 0.0
    %1755 = vmatpush.msra.mxu0 0.0
    %1756 = vmatpush.msra.mxu0 0.0
    %1757 = vmatpush.msra.mxu0 0.0
    %1758 = vmatpush.msra.mxu0 %v1539
    %1759 = vmatpush.msra.mxu0 %v1538
    %1760 = vmatpush.msra.mxu0 %v1537
    %1761 = vmatpush.msra.mxu0 %v1536
    %1762 = vmatmul.f32.gmra.mxu0 %v1744
    %v1763 = vpop.f32.mrf.mxu0
    %v1764 = vadd.f32 0.0, %v1763
    %1765 = vdwg.mxu0
    %v1766 = vadd.f32 %v1521, %v1764
    %v1767 = vxor.u32 %v1766, 2147483648
    %v1768 = vmul.f32 %v1767, 1.442695
    %v1769 = vpow.pop %v1768
    %v1770 = vadd.f32 %v1769, 1.0
    %v1771 = vrcp.pop %v1770
    %v1772 = vmul.f32 %v1770, %v1771
    %v1773 = vsub.f32 1.0, %v1772
    %v1774 = vmul.f32 %v1771, %v1773
    %v1775 = vadd.f32 %v1771, %v1774
    %vm1776 = vweird.f32 %v1770
    %vm1777 = vweird.f32 %v1771
    %vm1778 = vmor %vm1776, %vm1777
    %v1779 = vsel %vm1778, %v1771, %v1775
    %v1780 = vand.u32 2147483647, %v1770
    %vm1781 = vcmp.eq.f32.partialorder %v1780, 8.507059e+37
    %v1782 = vand.u32 %v1770, 2147483648
    %v1783 = vor.u32 1.1754944e-38, %v1782
    %v1784 = vsel %vm1781, %v1783, %v1779
    %v1785 = vmul.f32 1.0, %v1784
    %v1786 = vtanh.pop %v1766
    %v1787 = vmul.f32 %v1785, %v1732
    %1789 = vrot.lane.b32.xlu0 %v1786, 64
    %v1790 = vpop.permute.xlu0 %1789
    %v1792 = vmul.f32 %v1785, %v1790
    %1794 = vrot.lane.b32.xlu0 %v1792, 32
    %v1795 = vpop.permute.xlu0 %1794
    %v1797 = vadd.f32 %v1787, %v1795
    %v1798 = vtanh.pop %v1797
    %1800 = vrot.lane.b32.xlu0 %v1798, 64
    %v1801 = vpop.permute.xlu0 %1800
    %v1803 = vmul.f32 %v1785, %v1801
    %1805 = vrot.lane.b32.xlu0 %v1803, 32
    %v1806 = vpop.permute.xlu0 %1805
    %1808 = vst.msk [vmem:[%s1178] sm:$0xff] %vm188, %v1806
    %v1809 = vsel %vm188, %v1806, 0
    %1811 = vmatpush.msra.mxu0 0.0
    %1812 = vmatpush.msra.mxu0 0.0
    %1813 = vmatpush.msra.mxu0 0.0
    %1814 = vmatpush.msra.mxu0 0.0
    %1815 = vmatpush.msra.mxu0 0.0
    %1816 = vmatpush.msra.mxu0 0.0
    %1817 = vmatpush.msra.mxu0 0.0
    %1818 = vmatpush.msra.mxu0 0.0
    %1819 = vmatpush.msra.mxu0 0.0
    %1820 = vmatpush.msra.mxu0 0.0
    %1821 = vmatpush.msra.mxu0 0.0
    %1822 = vmatpush.msra.mxu0 0.0
    %1823 = vmatpush.msra.mxu0 %v1539
    %1824 = vmatpush.msra.mxu0 %v1538
    %1825 = vmatpush.msra.mxu0 %v1537
    %1826 = vmatpush.msra.mxu0 %v1536
    %1827 = vmatmul.f32.gmra.mxu0 %v1809
    %v1828 = vpop.f32.mrf.mxu0
    %v1829 = vadd.f32 0.0, %v1828
    %1830 = vdwg.mxu0
    %v1831 = vadd.f32 %v1524, %v1829
    %v1832 = vxor.u32 %v1831, 2147483648
    %v1833 = vmul.f32 %v1832, 1.442695
    %v1834 = vpow.pop %v1833
    %v1835 = vadd.f32 %v1834, 1.0
    %v1836 = vrcp.pop %v1835
    %v1837 = vmul.f32 %v1835, %v1836
    %v1838 = vsub.f32 1.0, %v1837
    %v1839 = vmul.f32 %v1836, %v1838
    %v1840 = vadd.f32 %v1836, %v1839
    %vm1841 = vweird.f32 %v1835
    %vm1842 = vweird.f32 %v1836
    %vm1843 = vmor %vm1841, %vm1842
    %v1844 = vsel %vm1843, %v1836, %v1840
    %v1845 = vand.u32 2147483647, %v1835
    %vm1846 = vcmp.eq.f32.partialorder %v1845, 8.507059e+37
    %v1847 = vand.u32 %v1835, 2147483648
    %v1848 = vor.u32 1.1754944e-38, %v1847
    %v1849 = vsel %vm1846, %v1848, %v1844
    %v1850 = vmul.f32 1.0, %v1849
    %v1851 = vtanh.pop %v1831
    %v1852 = vmul.f32 %v1850, %v1797
    %1854 = vrot.lane.b32.xlu0 %v1851, 64
    %v1855 = vpop.permute.xlu0 %1854
    %v1857 = vmul.f32 %v1850, %v1855
    %1859 = vrot.lane.b32.xlu0 %v1857, 32
    %v1860 = vpop.permute.xlu0 %1859
    %v1862 = vadd.f32 %v1852, %v1860
    %v1863 = vtanh.pop %v1862
    %1865 = vrot.lane.b32.xlu0 %v1863, 64
    %v1866 = vpop.permute.xlu0 %1865
    %v1868 = vmul.f32 %v1850, %v1866
    %1870 = vrot.lane.b32.xlu0 %v1868, 32
    %v1871 = vpop.permute.xlu0 %1870
    %1873 = vst.msk [vmem:[%s1244] sm:$0xff] %vm188, %v1871
    %v1874 = vsel %vm188, %v1871, 0
    %1876 = vmatpush.msra.mxu0 0.0
    %1877 = vmatpush.msra.mxu0 0.0
    %1878 = vmatpush.msra.mxu0 0.0
    %1879 = vmatpush.msra.mxu0 0.0
    %1880 = vmatpush.msra.mxu0 0.0
    %1881 = vmatpush.msra.mxu0 0.0
    %1882 = vmatpush.msra.mxu0 0.0
    %1883 = vmatpush.msra.mxu0 0.0
    %1884 = vmatpush.msra.mxu0 0.0
    %1885 = vmatpush.msra.mxu0 0.0
    %1886 = vmatpush.msra.mxu0 0.0
    %1887 = vmatpush.msra.mxu0 0.0
    %1888 = vmatpush.msra.mxu0 %v1539
    %1889 = vmatpush.msra.mxu0 %v1538
    %1890 = vmatpush.msra.mxu0 %v1537
    %1891 = vmatpush.msra.mxu0 %v1536
    %1892 = vmatmul.f32.gmra.mxu0 %v1874
    %v1893 = vpop.f32.mrf.mxu0
    %v1894 = vadd.f32 0.0, %v1893
    %1895 = vdwg.mxu0
    %v1896 = vadd.f32 %v1527, %v1894
    %v1897 = vxor.u32 %v1896, 2147483648
    %v1898 = vmul.f32 %v1897, 1.442695
    %v1899 = vpow.pop %v1898
    %v1900 = vadd.f32 %v1899, 1.0
    %v1901 = vrcp.pop %v1900
    %v1902 = vmul.f32 %v1900, %v1901
    %v1903 = vsub.f32 1.0, %v1902
    %v1904 = vmul.f32 %v1901, %v1903
    %v1905 = vadd.f32 %v1901, %v1904
    %vm1906 = vweird.f32 %v1900
    %vm1907 = vweird.f32 %v1901
    %vm1908 = vmor %vm1906, %vm1907
    %v1909 = vsel %vm1908, %v1901, %v1905
    %v1910 = vand.u32 2147483647, %v1900
    %vm1911 = vcmp.eq.f32.partialorder %v1910, 8.507059e+37
    %v1912 = vand.u32 %v1900, 2147483648
    %v1913 = vor.u32 1.1754944e-38, %v1912
    %v1914 = vsel %vm1911, %v1913, %v1909
    %v1915 = vmul.f32 1.0, %v1914
    %v1916 = vtanh.pop %v1896
    %v1917 = vmul.f32 %v1915, %v1862
    %1919 = vrot.lane.b32.xlu0 %v1916, 64
    %v1920 = vpop.permute.xlu0 %1919
    %v1922 = vmul.f32 %v1915, %v1920
    %1924 = vrot.lane.b32.xlu0 %v1922, 32
    %v1925 = vpop.permute.xlu0 %1924
    %v1927 = vadd.f32 %v1917, %v1925
    %v1928 = vtanh.pop %v1927
    %1930 = vrot.lane.b32.xlu0 %v1928, 64
    %v1931 = vpop.permute.xlu0 %1930
    %v1933 = vmul.f32 %v1915, %v1931
    %1935 = vrot.lane.b32.xlu0 %v1933, 32
    %v1936 = vpop.permute.xlu0 %1935
    %1938 = vst.msk [vmem:[%s1310] sm:$0xff] %vm188, %v1936
    %v1939 = vsel %vm188, %v1936, 0
    %1941 = vmatpush.msra.mxu0 0.0
    %1942 = vmatpush.msra.mxu0 0.0
    %1943 = vmatpush.msra.mxu0 0.0
    %1944 = vmatpush.msra.mxu0 0.0
    %1945 = vmatpush.msra.mxu0 0.0
    %1946 = vmatpush.msra.mxu0 0.0
    %1947 = vmatpush.msra.mxu0 0.0
    %1948 = vmatpush.msra.mxu0 0.0
    %1949 = vmatpush.msra.mxu0 0.0
    %1950 = vmatpush.msra.mxu0 0.0
    %1951 = vmatpush.msra.mxu0 0.0
    %1952 = vmatpush.msra.mxu0 0.0
    %1953 = vmatpush.msra.mxu0 %v1539
    %1954 = vmatpush.msra.mxu0 %v1538
    %1955 = vmatpush.msra.mxu0 %v1537
    %1956 = vmatpush.msra.mxu0 %v1536
    %1957 = vmatmul.f32.gmra.mxu0 %v1939
    %v1958 = vpop.f32.mrf.mxu0
    %v1959 = vadd.f32 0.0, %v1958
    %1960 = vdwg.mxu0
    %v1961 = vadd.f32 %v1530, %v1959
    %v1962 = vxor.u32 %v1961, 2147483648
    %v1963 = vmul.f32 %v1962, 1.442695
    %v1964 = vpow.pop %v1963
    %v1965 = vadd.f32 %v1964, 1.0
    %v1966 = vrcp.pop %v1965
    %v1967 = vmul.f32 %v1965, %v1966
    %v1968 = vsub.f32 1.0, %v1967
    %v1969 = vmul.f32 %v1966, %v1968
    %v1970 = vadd.f32 %v1966, %v1969
    %vm1971 = vweird.f32 %v1965
    %vm1972 = vweird.f32 %v1966
    %vm1973 = vmor %vm1971, %vm1972
    %v1974 = vsel %vm1973, %v1966, %v1970
    %v1975 = vand.u32 2147483647, %v1965
    %vm1976 = vcmp.eq.f32.partialorder %v1975, 8.507059e+37
    %v1977 = vand.u32 %v1965, 2147483648
    %v1978 = vor.u32 1.1754944e-38, %v1977
    %v1979 = vsel %vm1976, %v1978, %v1974
    %v1980 = vmul.f32 1.0, %v1979
    %v1981 = vtanh.pop %v1961
    %v1982 = vmul.f32 %v1980, %v1927
    %1984 = vrot.lane.b32.xlu0 %v1981, 64
    %v1985 = vpop.permute.xlu0 %1984
    %v1987 = vmul.f32 %v1980, %v1985
    %1989 = vrot.lane.b32.xlu0 %v1987, 32
    %v1990 = vpop.permute.xlu0 %1989
    %v1992 = vadd.f32 %v1982, %v1990
    %v1993 = vtanh.pop %v1992
    %1995 = vrot.lane.b32.xlu0 %v1993, 64
    %v1996 = vpop.permute.xlu0 %1995
    %v1998 = vmul.f32 %v1980, %v1996
    %2000 = vrot.lane.b32.xlu0 %v1998, 32
    %v2001 = vpop.permute.xlu0 %2000
    %2003 = vst.msk [vmem:[%s1376] sm:$0xff] %vm188, %v2001
    %v2004 = vsel %vm188, %v2001, 0
    %2006 = vmatpush.msra.mxu0 0.0
    %2007 = vmatpush.msra.mxu0 0.0
    %2008 = vmatpush.msra.mxu0 0.0
    %2009 = vmatpush.msra.mxu0 0.0
    %2010 = vmatpush.msra.mxu0 0.0
    %2011 = vmatpush.msra.mxu0 0.0
    %2012 = vmatpush.msra.mxu0 0.0
    %2013 = vmatpush.msra.mxu0 0.0
    %2014 = vmatpush.msra.mxu0 0.0
    %2015 = vmatpush.msra.mxu0 0.0
    %2016 = vmatpush.msra.mxu0 0.0
    %2017 = vmatpush.msra.mxu0 0.0
    %2018 = vmatpush.msra.mxu0 %v1539
    %2019 = vmatpush.msra.mxu0 %v1538
    %2020 = vmatpush.msra.mxu0 %v1537
    %2021 = vmatpush.msra.mxu0 %v1536
    %2022 = vmatmul.f32.gmra.mxu0 %v2004
    %v2023 = vpop.f32.mrf.mxu0
    %v2024 = vadd.f32 0.0, %v2023
    %2025 = vdwg.mxu0
    %v2026 = vadd.f32 %v1533, %v2024
    %v2027 = vxor.u32 %v2026, 2147483648
    %v2028 = vmul.f32 %v2027, 1.442695
    %v2029 = vpow.pop %v2028
    %v2030 = vadd.f32 %v2029, 1.0
    %v2031 = vrcp.pop %v2030
    %v2032 = vmul.f32 %v2030, %v2031
    %v2033 = vsub.f32 1.0, %v2032
    %v2034 = vmul.f32 %v2031, %v2033
    %v2035 = vadd.f32 %v2031, %v2034
    %vm2036 = vweird.f32 %v2030
    %vm2037 = vweird.f32 %v2031
    %vm2038 = vmor %vm2036, %vm2037
    %v2039 = vsel %vm2038, %v2031, %v2035
    %v2040 = vand.u32 2147483647, %v2030
    %vm2041 = vcmp.eq.f32.partialorder %v2040, 8.507059e+37
    %v2042 = vand.u32 %v2030, 2147483648
    %v2043 = vor.u32 1.1754944e-38, %v2042
    %v2044 = vsel %vm2041, %v2043, %v2039
    %v2045 = vmul.f32 1.0, %v2044
    %v2046 = vtanh.pop %v2026
    %v2047 = vmul.f32 %v2045, %v1992
    %2049 = vrot.lane.b32.xlu0 %v2046, 64
    %v2050 = vpop.permute.xlu0 %2049
    %v2052 = vmul.f32 %v2045, %v2050
    %2054 = vrot.lane.b32.xlu0 %v2052, 32
    %v2055 = vpop.permute.xlu0 %2054
    %v2057 = vadd.f32 %v2047, %v2055
    %v2058 = vtanh.pop %v2057
    %2060 = vrot.lane.b32.xlu0 %v2058, 64
    %v2061 = vpop.permute.xlu0 %2060
    %v2063 = vmul.f32 %v2045, %v2061
    %2065 = vrot.lane.b32.xlu0 %v2063, 32
    %v2066 = vpop.permute.xlu0 %2065
    %2068 = vst.msk [vmem:[%s1442] sm:$0xff] %vm188, %v2066
    %v2069 = vld [vmem:[#allocation3] sm:$0xff]
    %v2070 = vld [vmem:[#allocation3 + $0x8] sm:$0xff]
    %v2071 = vld [vmem:[#allocation3 + $0x10] sm:$0xff]
    %v2072 = vld [vmem:[#allocation3 + $0x18] sm:$0xff]
    %v2073 = vld [vmem:[#allocation3 + $0x20] sm:$0xff]
    %v2074 = vld [vmem:[#allocation3 + $0x28] sm:$0xff]
    %v2075 = vld [vmem:[#allocation3 + $0x30] sm:$0xff]
    %v2076 = vld [vmem:[#allocation3 + $0x38] sm:$0xff]
    %v2077 = vadd.f32 %v2069, %v1452
    %v2078 = vadd.f32 %v2070, %v1453
    %v2079 = vadd.f32 %v2071, %v1454
    %v2080 = vadd.f32 %v2072, %v1455
    %v2081 = vadd.f32 %v2073, %v1456
    %v2082 = vadd.f32 %v2074, %v1457
    %v2083 = vadd.f32 %v2075, %v1458
    %v2084 = vadd.f32 %v2076, %v1459
    %v2085 = vld [vmem:[%s11] sm:$0xff]
    %v2086 = vld [vmem:[%s11 + $0x8] sm:$0xff]
    %v2087 = vld [vmem:[%s11 + $0x10] sm:$0xff]
    %v2088 = vld [vmem:[%s11 + $0x18] sm:$0xff]
    %v2089 = vld [vmem:[%s12] sm:$0x1]
    %v2091 = vperm.slane %v2089, 0
    %v2094 = vsel %vm188, %v2077, 0
    %v2097 = vsel %vm188, %v2078, 0
    %v2100 = vsel %vm188, %v2079, 0
    %v2103 = vsel %vm188, %v2080, 0
    %v2106 = vsel %vm188, %v2081, 0
    %v2109 = vsel %vm188, %v2082, 0
    %v2112 = vsel %vm188, %v2083, 0
    %v2115 = vsel %vm188, %v2084, 0
    %2117 = vmatpush.msra.mxu0 0.0
    %2118 = vmatpush.msra.mxu0 0.0
    %2119 = vmatpush.msra.mxu0 0.0
    %2120 = vmatpush.msra.mxu0 0.0
    %2121 = vmatpush.msra.mxu0 0.0
    %2122 = vmatpush.msra.mxu0 0.0
    %2123 = vmatpush.msra.mxu0 0.0
    %2124 = vmatpush.msra.mxu0 0.0
    %2125 = vmatpush.msra.mxu0 0.0
    %2126 = vmatpush.msra.mxu0 0.0
    %2127 = vmatpush.msra.mxu0 0.0
    %2128 = vmatpush.msra.mxu0 0.0
    %2129 = vmatpush.msra.mxu0 %v2088
    %2130 = vmatpush.msra.mxu0 %v2087
    %2131 = vmatpush.msra.mxu0 %v2086
    %2132 = vmatpush.msra.mxu0 %v2085
    %2133 = vmatmul.f32.gmra.mxu0 %v2094
    %v2134 = vpop.f32.mrf.mxu0
    %v2135 = vadd.f32 %v2091, %v2134
    %2136 = vmatmul.f32.gmra.mxu0 %v2097
    %v2137 = vpop.f32.mrf.mxu0
    %v2138 = vadd.f32 %v2091, %v2137
    %2139 = vmatmul.f32.gmra.mxu0 %v2100
    %v2140 = vpop.f32.mrf.mxu0
    %v2141 = vadd.f32 %v2091, %v2140
    %2142 = vmatmul.f32.gmra.mxu0 %v2103
    %v2143 = vpop.f32.mrf.mxu0
    %v2144 = vadd.f32 %v2091, %v2143
    %2145 = vmatmul.f32.gmra.mxu0 %v2106
    %v2146 = vpop.f32.mrf.mxu0
    %v2147 = vadd.f32 %v2091, %v2146
    %2148 = vmatmul.f32.gmra.mxu0 %v2109
    %v2149 = vpop.f32.mrf.mxu0
    %v2150 = vadd.f32 %v2091, %v2149
    %2151 = vmatmul.f32.gmra.mxu0 %v2112
    %v2152 = vpop.f32.mrf.mxu0
    %v2153 = vadd.f32 %v2091, %v2152
    %2154 = vmatmul.f32.gmra.mxu0 %v2115
    %v2155 = vpop.f32.mrf.mxu0
    %v2156 = vadd.f32 %v2091, %v2155
    %2157 = vdwg.mxu0
    %v2158 = vld [vmem:[#allocation16] sm:$0x7f]
    %vm2159 = vcmp.eq.s32.totalorder %v259, 5
    %v2160 = vsel %vm2159, 0.0, -10000.0
    %v2162 = vrot.slane %v2160, 1
    %v2163 = vrot.slane %v2160, 2
    %v2164 = vrot.slane %v2160, 3
    %v2165 = vrot.slane %v2160, 4
    %v2166 = vrot.slane %v2160, 5
    %v2167 = vrot.slane %v2160, 6
    %v2168 = vrot.slane %v2160, 7
    %v2169 = vperm.slane %v2160, 0
    %v2170 = vperm.slane %v2162, 0
    %v2171 = vperm.slane %v2163, 0
    %v2172 = vperm.slane %v2164, 0
    %v2173 = vperm.slane %v2165, 0
    %v2174 = vperm.slane %v2166, 0
    %v2175 = vperm.slane %v2167, 0
    %v2176 = vperm.slane %v2168, 0
    %v2185 = vadd.f32 %v2169, %v2158
    %v2186 = vadd.f32 %v2170, %v2158
    %v2187 = vadd.f32 %v2171, %v2158
    %v2188 = vadd.f32 %v2172, %v2158
    %v2189 = vadd.f32 %v2173, %v2158
    %v2190 = vadd.f32 %v2174, %v2158
    %v2191 = vadd.f32 %v2175, %v2158
    %v2192 = vadd.f32 %v2176, %v2158
    %vm2193 = vcmask 55296
    %v2194 = vsel %vm2193, %v2185, -inf
    %2195 = vmax.xlane.f32.xlu0 %v2194
    %v2196 = vpop.xlane.xlu0 %2195
    %v2197 = vsel %vm2193, %v2186, -inf
    %2198 = vmax.xlane.f32.xlu0 %v2197
    %v2199 = vpop.xlane.xlu0 %2198
    %v2200 = vsel %vm2193, %v2187, -inf
    %2201 = vmax.xlane.f32.xlu0 %v2200
    %v2202 = vpop.xlane.xlu0 %2201
    %v2203 = vsel %vm2193, %v2188, -inf
    %2204 = vmax.xlane.f32.xlu0 %v2203
    %v2205 = vpop.xlane.xlu0 %2204
    %v2206 = vsel %vm2193, %v2189, -inf
    %2207 = vmax.xlane.f32.xlu0 %v2206
    %v2208 = vpop.xlane.xlu0 %2207
    %v2209 = vsel %vm2193, %v2190, -inf
    %2210 = vmax.xlane.f32.xlu0 %v2209
    %v2211 = vpop.xlane.xlu0 %2210
    %v2212 = vsel %vm2193, %v2191, -inf
    %2213 = vmax.xlane.f32.xlu0 %v2212
    %v2214 = vpop.xlane.xlu0 %2213
    %v2215 = vsel %vm2193, %v2192, -inf
    %2216 = vmax.xlane.f32.xlu0 %v2215
    %v2217 = vpop.xlane.xlu0 %2216
    %v2219 = vperm.slane %v2135, 0
    %v2220 = vlaneseq
    %v2221 = vshrl.u32 %v2220, 7
    %2223 = vset.pattern.permute.xlu0 %v2221
    %2224 = vperm.xlu0 %2223, %v2219
    %v2225 = vpop.permute.xlu0 %2224
    %v2226 = vperm.slane %v2135, 1
    %v2227 = vlaneseq
    %v2228 = vshrl.u32 %v2227, 7
    %2230 = vset.pattern.permute.xlu0 %v2228
    %2231 = vperm.xlu0 %2230, %v2226
    %v2232 = vpop.permute.xlu0 %2231
    %v2233 = vperm.slane %v2135, 2
    %v2234 = vlaneseq
    %v2235 = vshrl.u32 %v2234, 7
    %2237 = vset.pattern.permute.xlu0 %v2235
    %2238 = vperm.xlu0 %2237, %v2233
    %v2239 = vpop.permute.xlu0 %2238
    %v2240 = vperm.slane %v2135, 3
    %v2241 = vlaneseq
    %v2242 = vshrl.u32 %v2241, 7
    %2244 = vset.pattern.permute.xlu0 %v2242
    %2245 = vperm.xlu0 %2244, %v2240
    %v2246 = vpop.permute.xlu0 %2245
    %v2247 = vperm.slane %v2135, 4
    %v2248 = vlaneseq
    %v2249 = vshrl.u32 %v2248, 7
    %2251 = vset.pattern.permute.xlu0 %v2249
    %2252 = vperm.xlu0 %2251, %v2247
    %v2253 = vpop.permute.xlu0 %2252
    %v2254 = vperm.slane %v2135, 5
    %v2255 = vlaneseq
    %v2256 = vshrl.u32 %v2255, 7
    %2258 = vset.pattern.permute.xlu0 %v2256
    %2259 = vperm.xlu0 %2258, %v2254
    %v2260 = vpop.permute.xlu0 %2259
    %v2261 = vperm.slane %v2135, 6
    %v2262 = vlaneseq
    %v2263 = vshrl.u32 %v2262, 7
    %2265 = vset.pattern.permute.xlu0 %v2263
    %2266 = vperm.xlu0 %2265, %v2261
    %v2267 = vpop.permute.xlu0 %2266
    %v2268 = vperm.slane %v2135, 7
    %v2269 = vlaneseq
    %v2270 = vshrl.u32 %v2269, 7
    %2272 = vset.pattern.permute.xlu0 %v2270
    %2273 = vperm.xlu0 %2272, %v2268
    %v2274 = vpop.permute.xlu0 %2273
    %v2283 = vadd.f32 %v2196, %v2225
    %v2284 = vadd.f32 %v2199, %v2232
    %v2285 = vadd.f32 %v2202, %v2239
    %v2286 = vadd.f32 %v2205, %v2246
    %v2287 = vadd.f32 %v2208, %v2253
    %v2288 = vadd.f32 %v2211, %v2260
    %v2289 = vadd.f32 %v2214, %v2267
    %v2290 = vadd.f32 %v2217, %v2274
    %v2291 = vld [vmem:[%s14] sm:$0xff]
    %vm2292 = vcmp.gt.f32.partialorder %v2291, 0.5
    %v2293 = vsel %vm2292, 1, 0
    %2294 = vset.pattern.permute.xlu0 0
    %2295 = vperm.xlu0 %2294, %v2293
    %v2296 = vpop.permute.xlu0 %2295
    %vm2297 = vcmp.eq.s32.totalorder %v2296, 1
    %2306 = vset.pattern.permute.xlu0 0
    %2307 = vperm.xlu0 %2306, %v2283
    %v2308 = vpop.permute.xlu0 %2307
    %2309 = vset.pattern.permute.xlu0 0
    %2310 = vperm.xlu0 %2309, %v2284
    %v2311 = vpop.permute.xlu0 %2310
    %2312 = vset.pattern.permute.xlu0 0
    %2313 = vperm.xlu0 %2312, %v2285
    %v2314 = vpop.permute.xlu0 %2313
    %2315 = vset.pattern.permute.xlu0 0
    %2316 = vperm.xlu0 %2315, %v2286
    %v2317 = vpop.permute.xlu0 %2316
    %2318 = vset.pattern.permute.xlu0 0
    %2319 = vperm.xlu0 %2318, %v2287
    %v2320 = vpop.permute.xlu0 %2319
    %2321 = vset.pattern.permute.xlu0 0
    %2322 = vperm.xlu0 %2321, %v2288
    %v2323 = vpop.permute.xlu0 %2322
    %2324 = vset.pattern.permute.xlu0 0
    %2325 = vperm.xlu0 %2324, %v2289
    %v2326 = vpop.permute.xlu0 %2325
    %2327 = vset.pattern.permute.xlu0 0
    %2328 = vperm.xlu0 %2327, %v2290
    %v2329 = vpop.permute.xlu0 %2328
    %v2330 = vperm.slane %v2308, %v259
    %v2331 = vperm.slane %v2311, %v259
    %v2332 = vperm.slane %v2314, %v259
    %v2333 = vperm.slane %v2317, %v259
    %v2334 = vperm.slane %v2320, %v259
    %v2335 = vperm.slane %v2323, %v259
    %v2336 = vperm.slane %v2326, %v259
    %v2337 = vperm.slane %v2329, %v259
    %vm2338 = vcmask 1041409
    %v2339 = vsel %vm2338, %v2331, %v2330
    %vm2340 = vcmask 1042434
    %v2341 = vsel %vm2340, %v2332, %v2339
    %vm2342 = vcmask 1043459
    %v2343 = vsel %vm2342, %v2333, %v2341
    %vm2344 = vcmask 1044484
    %v2345 = vsel %vm2344, %v2334, %v2343
    %vm2346 = vcmask 1045509
    %v2347 = vsel %vm2346, %v2335, %v2345
    %vm2348 = vcmask 1046534
    %v2349 = vsel %vm2348, %v2336, %v2347
    %vm2350 = vcmask 1047559
    %v2351 = vsel %vm2350, %v2337, %v2349
    %v2353 = vsel %vm2297, %v2351, %v2160
    %v2355 = vrot.slane %v2353, 1
    %v2356 = vrot.slane %v2353, 2
    %v2357 = vrot.slane %v2353, 3
    %v2358 = vrot.slane %v2353, 4
    %v2359 = vrot.slane %v2353, 5
    %v2360 = vrot.slane %v2353, 6
    %v2361 = vrot.slane %v2353, 7
    %v2362 = vperm.slane %v2353, 0
    %v2363 = vperm.slane %v2355, 0
    %v2364 = vperm.slane %v2356, 0
    %v2365 = vperm.slane %v2357, 0
    %v2366 = vperm.slane %v2358, 0
    %v2367 = vperm.slane %v2359, 0
    %v2368 = vperm.slane %v2360, 0
    %v2369 = vperm.slane %v2361, 0
    %v2378 = vadd.f32 %v2362, %v2158
    %v2379 = vadd.f32 %v2363, %v2158
    %v2380 = vadd.f32 %v2364, %v2158
    %v2381 = vadd.f32 %v2365, %v2158
    %v2382 = vadd.f32 %v2366, %v2158
    %v2383 = vadd.f32 %v2367, %v2158
    %v2384 = vadd.f32 %v2368, %v2158
    %v2385 = vadd.f32 %v2369, %v2158
    %v2386 = vsel %vm2193, %v2378, -inf
    %2387 = vmax.xlane.f32.xlu0 %v2386
    %v2388 = vpop.xlane.xlu0 %2387
    %v2389 = vsel %vm2193, %v2379, -inf
    %2390 = vmax.xlane.f32.xlu0 %v2389
    %v2391 = vpop.xlane.xlu0 %2390
    %v2392 = vsel %vm2193, %v2380, -inf
    %2393 = vmax.xlane.f32.xlu0 %v2392
    %v2394 = vpop.xlane.xlu0 %2393
    %v2395 = vsel %vm2193, %v2381, -inf
    %2396 = vmax.xlane.f32.xlu0 %v2395
    %v2397 = vpop.xlane.xlu0 %2396
    %v2398 = vsel %vm2193, %v2382, -inf
    %2399 = vmax.xlane.f32.xlu0 %v2398
    %v2400 = vpop.xlane.xlu0 %2399
    %v2401 = vsel %vm2193, %v2383, -inf
    %2402 = vmax.xlane.f32.xlu0 %v2401
    %v2403 = vpop.xlane.xlu0 %2402
    %v2404 = vsel %vm2193, %v2384, -inf
    %2405 = vmax.xlane.f32.xlu0 %v2404
    %v2406 = vpop.xlane.xlu0 %2405
    %v2407 = vsel %vm2193, %v2385, -inf
    %2408 = vmax.xlane.f32.xlu0 %v2407
    %v2409 = vpop.xlane.xlu0 %2408
    %vm2410 = vcmp.ge.f32.partialorder %v2378, %v2388
    %vm2411 = vcmp.ge.f32.partialorder %v2379, %v2391
    %vm2412 = vcmp.ge.f32.partialorder %v2380, %v2394
    %vm2413 = vcmp.ge.f32.partialorder %v2381, %v2397
    %vm2414 = vcmp.ge.f32.partialorder %v2382, %v2400
    %vm2415 = vcmp.ge.f32.partialorder %v2383, %v2403
    %vm2416 = vcmp.ge.f32.partialorder %v2384, %v2406
    %vm2417 = vcmp.ge.f32.partialorder %v2385, %v2409
    %v2418 = vsel %vm2410, %v259, 7
    %v2419 = vsel %vm2411, %v259, 7
    %v2420 = vsel %vm2412, %v259, 7
    %v2421 = vsel %vm2413, %v259, 7
    %v2422 = vsel %vm2414, %v259, 7
    %v2423 = vsel %vm2415, %v259, 7
    %v2424 = vsel %vm2416, %v259, 7
    %v2425 = vsel %vm2417, %v259, 7
    %v2426 = vsel %vm2193, %v2418, 2147483647
    %v2427 = vand.u32 %v2426, 65535
    %v2428 = vshra.s32 %v2426, 16
    %v2429 = vcvt.s32.f32 %v2427
    %v2430 = vcvt.s32.f32 %v2428
    %2431 = vmin.xlane.f32.xlu0 %v2430
    %v2432 = vpop.xlane.xlu0 %2431
    %vm2433 = vcmp.eq.f32.partialorder %v2430, %v2432
    %v2434 = vsel %vm2433, %v2429, inf
    %2435 = vmin.xlane.f32.xlu0 %v2434
    %v2436 = vpop.xlane.xlu0 %2435
    %v2437 = vcvt.f32.s32 %v2436
    %v2438 = vcvt.f32.s32 %v2432
    %v2439 = vshll.u32 %v2438, 16
    %v2440 = vadd.s32 %v2439, %v2437
    %v2441 = vsel %vm2193, %v2419, 2147483647
    %v2442 = vand.u32 %v2441, 65535
    %v2443 = vshra.s32 %v2441, 16
    %v2444 = vcvt.s32.f32 %v2442
    %v2445 = vcvt.s32.f32 %v2443
    %2446 = vmin.xlane.f32.xlu0 %v2445
    %v2447 = vpop.xlane.xlu0 %2446
    %vm2448 = vcmp.eq.f32.partialorder %v2445, %v2447
    %v2449 = vsel %vm2448, %v2444, inf
    %2450 = vmin.xlane.f32.xlu0 %v2449
    %v2451 = vpop.xlane.xlu0 %2450
    %v2452 = vcvt.f32.s32 %v2451
    %v2453 = vcvt.f32.s32 %v2447
    %v2454 = vshll.u32 %v2453, 16
    %v2455 = vadd.s32 %v2454, %v2452
    %v2456 = vsel %vm2193, %v2420, 2147483647
    %v2457 = vand.u32 %v2456, 65535
    %v2458 = vshra.s32 %v2456, 16
    %v2459 = vcvt.s32.f32 %v2457
    %v2460 = vcvt.s32.f32 %v2458
    %2461 = vmin.xlane.f32.xlu0 %v2460
    %v2462 = vpop.xlane.xlu0 %2461
    %vm2463 = vcmp.eq.f32.partialorder %v2460, %v2462
    %v2464 = vsel %vm2463, %v2459, inf
    %2465 = vmin.xlane.f32.xlu0 %v2464
    %v2466 = vpop.xlane.xlu0 %2465
    %v2467 = vcvt.f32.s32 %v2466
    %v2468 = vcvt.f32.s32 %v2462
    %v2469 = vshll.u32 %v2468, 16
    %v2470 = vadd.s32 %v2469, %v2467
    %v2471 = vsel %vm2193, %v2421, 2147483647
    %v2472 = vand.u32 %v2471, 65535
    %v2473 = vshra.s32 %v2471, 16
    %v2474 = vcvt.s32.f32 %v2472
    %v2475 = vcvt.s32.f32 %v2473
    %2476 = vmin.xlane.f32.xlu0 %v2475
    %v2477 = vpop.xlane.xlu0 %2476
    %vm2478 = vcmp.eq.f32.partialorder %v2475, %v2477
    %v2479 = vsel %vm2478, %v2474, inf
    %2480 = vmin.xlane.f32.xlu0 %v2479
    %v2481 = vpop.xlane.xlu0 %2480
    %v2482 = vcvt.f32.s32 %v2481
    %v2483 = vcvt.f32.s32 %v2477
    %v2484 = vshll.u32 %v2483, 16
    %v2485 = vadd.s32 %v2484, %v2482
    %v2486 = vsel %vm2193, %v2422, 2147483647
    %v2487 = vand.u32 %v2486, 65535
    %v2488 = vshra.s32 %v2486, 16
    %v2489 = vcvt.s32.f32 %v2487
    %v2490 = vcvt.s32.f32 %v2488
    %2491 = vmin.xlane.f32.xlu0 %v2490
    %v2492 = vpop.xlane.xlu0 %2491
    %vm2493 = vcmp.eq.f32.partialorder %v2490, %v2492
    %v2494 = vsel %vm2493, %v2489, inf
    %2495 = vmin.xlane.f32.xlu0 %v2494
    %v2496 = vpop.xlane.xlu0 %2495
    %v2497 = vcvt.f32.s32 %v2496
    %v2498 = vcvt.f32.s32 %v2492
    %v2499 = vshll.u32 %v2498, 16
    %v2500 = vadd.s32 %v2499, %v2497
    %v2501 = vsel %vm2193, %v2423, 2147483647
    %v2502 = vand.u32 %v2501, 65535
    %v2503 = vshra.s32 %v2501, 16
    %v2504 = vcvt.s32.f32 %v2502
    %v2505 = vcvt.s32.f32 %v2503
    %2506 = vmin.xlane.f32.xlu0 %v2505
    %v2507 = vpop.xlane.xlu0 %2506
    %vm2508 = vcmp.eq.f32.partialorder %v2505, %v2507
    %v2509 = vsel %vm2508, %v2504, inf
    %2510 = vmin.xlane.f32.xlu0 %v2509
    %v2511 = vpop.xlane.xlu0 %2510
    %v2512 = vcvt.f32.s32 %v2511
    %v2513 = vcvt.f32.s32 %v2507
    %v2514 = vshll.u32 %v2513, 16
    %v2515 = vadd.s32 %v2514, %v2512
    %v2516 = vsel %vm2193, %v2424, 2147483647
    %v2517 = vand.u32 %v2516, 65535
    %v2518 = vshra.s32 %v2516, 16
    %v2519 = vcvt.s32.f32 %v2517
    %v2520 = vcvt.s32.f32 %v2518
    %2521 = vmin.xlane.f32.xlu0 %v2520
    %v2522 = vpop.xlane.xlu0 %2521
    %vm2523 = vcmp.eq.f32.partialorder %v2520, %v2522
    %v2524 = vsel %vm2523, %v2519, inf
    %2525 = vmin.xlane.f32.xlu0 %v2524
    %v2526 = vpop.xlane.xlu0 %2525
    %v2527 = vcvt.f32.s32 %v2526
    %v2528 = vcvt.f32.s32 %v2522
    %v2529 = vshll.u32 %v2528, 16
    %v2530 = vadd.s32 %v2529, %v2527
    %v2531 = vsel %vm2193, %v2425, 2147483647
    %v2532 = vand.u32 %v2531, 65535
    %v2533 = vshra.s32 %v2531, 16
    %v2534 = vcvt.s32.f32 %v2532
    %v2535 = vcvt.s32.f32 %v2533
    %2536 = vmin.xlane.f32.xlu0 %v2535
    %v2537 = vpop.xlane.xlu0 %2536
    %vm2538 = vcmp.eq.f32.partialorder %v2535, %v2537
    %v2539 = vsel %vm2538, %v2534, inf
    %2540 = vmin.xlane.f32.xlu0 %v2539
    %v2541 = vpop.xlane.xlu0 %2540
    %v2542 = vcvt.f32.s32 %v2541
    %v2543 = vcvt.f32.s32 %v2537
    %v2544 = vshll.u32 %v2543, 16
    %v2545 = vadd.s32 %v2544, %v2542
    %v2547 = vperm.slane %v2138, 0
    %v2548 = vlaneseq
    %v2549 = vshrl.u32 %v2548, 7
    %2551 = vset.pattern.permute.xlu0 %v2549
    %2552 = vperm.xlu0 %2551, %v2547
    %v2553 = vpop.permute.xlu0 %2552
    %v2554 = vperm.slane %v2138, 1
    %v2555 = vlaneseq
    %v2556 = vshrl.u32 %v2555, 7
    %2558 = vset.pattern.permute.xlu0 %v2556
    %2559 = vperm.xlu0 %2558, %v2554
    %v2560 = vpop.permute.xlu0 %2559
    %v2561 = vperm.slane %v2138, 2
    %v2562 = vlaneseq
    %v2563 = vshrl.u32 %v2562, 7
    %2565 = vset.pattern.permute.xlu0 %v2563
    %2566 = vperm.xlu0 %2565, %v2561
    %v2567 = vpop.permute.xlu0 %2566
    %v2568 = vperm.slane %v2138, 3
    %v2569 = vlaneseq
    %v2570 = vshrl.u32 %v2569, 7
    %2572 = vset.pattern.permute.xlu0 %v2570
    %2573 = vperm.xlu0 %2572, %v2568
    %v2574 = vpop.permute.xlu0 %2573
    %v2575 = vperm.slane %v2138, 4
    %v2576 = vlaneseq
    %v2577 = vshrl.u32 %v2576, 7
    %2579 = vset.pattern.permute.xlu0 %v2577
    %2580 = vperm.xlu0 %2579, %v2575
    %v2581 = vpop.permute.xlu0 %2580
    %v2582 = vperm.slane %v2138, 5
    %v2583 = vlaneseq
    %v2584 = vshrl.u32 %v2583, 7
    %2586 = vset.pattern.permute.xlu0 %v2584
    %2587 = vperm.xlu0 %2586, %v2582
    %v2588 = vpop.permute.xlu0 %2587
    %v2589 = vperm.slane %v2138, 6
    %v2590 = vlaneseq
    %v2591 = vshrl.u32 %v2590, 7
    %2593 = vset.pattern.permute.xlu0 %v2591
    %2594 = vperm.xlu0 %2593, %v2589
    %v2595 = vpop.permute.xlu0 %2594
    %v2596 = vperm.slane %v2138, 7
    %v2597 = vlaneseq
    %v2598 = vshrl.u32 %v2597, 7
    %2600 = vset.pattern.permute.xlu0 %v2598
    %2601 = vperm.xlu0 %2600, %v2596
    %v2602 = vpop.permute.xlu0 %2601
    %v2611 = vadd.f32 %v2388, %v2553
    %v2612 = vadd.f32 %v2391, %v2560
    %v2613 = vadd.f32 %v2394, %v2567
    %v2614 = vadd.f32 %v2397, %v2574
    %v2615 = vadd.f32 %v2400, %v2581
    %v2616 = vadd.f32 %v2403, %v2588
    %v2617 = vadd.f32 %v2406, %v2595
    %v2618 = vadd.f32 %v2409, %v2602
    %s2619 = scalar_lea.vmem %s14, 8
    %v2620 = vld [vmem:[%s2619] sm:$0xff]
    %vm2621 = vcmp.gt.f32.partialorder %v2620, 0.5
    %v2622 = vsel %vm2621, 1, 0
    %2623 = vset.pattern.permute.xlu0 0
    %2624 = vperm.xlu0 %2623, %v2622
    %v2625 = vpop.permute.xlu0 %2624
    %vm2626 = vcmp.eq.s32.totalorder %v2625, 1
    %2635 = vset.pattern.permute.xlu0 0
    %2636 = vperm.xlu0 %2635, %v2611
    %v2637 = vpop.permute.xlu0 %2636
    %2638 = vset.pattern.permute.xlu0 0
    %2639 = vperm.xlu0 %2638, %v2612
    %v2640 = vpop.permute.xlu0 %2639
    %2641 = vset.pattern.permute.xlu0 0
    %2642 = vperm.xlu0 %2641, %v2613
    %v2643 = vpop.permute.xlu0 %2642
    %2644 = vset.pattern.permute.xlu0 0
    %2645 = vperm.xlu0 %2644, %v2614
    %v2646 = vpop.permute.xlu0 %2645
    %2647 = vset.pattern.permute.xlu0 0
    %2648 = vperm.xlu0 %2647, %v2615
    %v2649 = vpop.permute.xlu0 %2648
    %2650 = vset.pattern.permute.xlu0 0
    %2651 = vperm.xlu0 %2650, %v2616
    %v2652 = vpop.permute.xlu0 %2651
    %2653 = vset.pattern.permute.xlu0 0
    %2654 = vperm.xlu0 %2653, %v2617
    %v2655 = vpop.permute.xlu0 %2654
    %2656 = vset.pattern.permute.xlu0 0
    %2657 = vperm.xlu0 %2656, %v2618
    %v2658 = vpop.permute.xlu0 %2657
    %v2659 = vperm.slane %v2637, %v259
    %v2660 = vperm.slane %v2640, %v259
    %v2661 = vperm.slane %v2643, %v259
    %v2662 = vperm.slane %v2646, %v259
    %v2663 = vperm.slane %v2649, %v259
    %v2664 = vperm.slane %v2652, %v259
    %v2665 = vperm.slane %v2655, %v259
    %v2666 = vperm.slane %v2658, %v259
    %v2667 = vsel %vm2338, %v2660, %v2659
    %v2668 = vsel %vm2340, %v2661, %v2667
    %v2669 = vsel %vm2342, %v2662, %v2668
    %v2670 = vsel %vm2344, %v2663, %v2669
    %v2671 = vsel %vm2346, %v2664, %v2670
    %v2672 = vsel %vm2348, %v2665, %v2671
    %v2673 = vsel %vm2350, %v2666, %v2672
    %v2675 = vsel %vm2626, %v2673, %v2353
    %v2676 = vperm.slane %v2440, %v259
    %v2677 = vperm.slane %v2455, %v259
    %v2678 = vperm.slane %v2470, %v259
    %v2679 = vperm.slane %v2485, %v259
    %v2680 = vperm.slane %v2500, %v259
    %v2681 = vperm.slane %v2515, %v259
    %v2682 = vperm.slane %v2530, %v259
    %v2683 = vperm.slane %v2545, %v259
    %v2684 = vsel %vm2338, %v2677, %v2676
    %v2685 = vsel %vm2340, %v2678, %v2684
    %v2686 = vsel %vm2342, %v2679, %v2685
    %v2687 = vsel %vm2344, %v2680, %v2686
    %v2688 = vsel %vm2346, %v2681, %v2687
    %v2689 = vsel %vm2348, %v2682, %v2688
    %v2690 = vsel %vm2350, %v2683, %v2689
    %v2691 = vsel %vm2626, %v2690, %v259
    %v2693 = vrot.slane %v2675, 1
    %v2694 = vrot.slane %v2675, 2
    %v2695 = vrot.slane %v2675, 3
    %v2696 = vrot.slane %v2675, 4
    %v2697 = vrot.slane %v2675, 5
    %v2698 = vrot.slane %v2675, 6
    %v2699 = vrot.slane %v2675, 7
    %v2700 = vperm.slane %v2675, 0
    %v2701 = vperm.slane %v2693, 0
    %v2702 = vperm.slane %v2694, 0
    %v2703 = vperm.slane %v2695, 0
    %v2704 = vperm.slane %v2696, 0
    %v2705 = vperm.slane %v2697, 0
    %v2706 = vperm.slane %v2698, 0
    %v2707 = vperm.slane %v2699, 0
    %v2716 = vadd.f32 %v2700, %v2158
    %v2717 = vadd.f32 %v2701, %v2158
    %v2718 = vadd.f32 %v2702, %v2158
    %v2719 = vadd.f32 %v2703, %v2158
    %v2720 = vadd.f32 %v2704, %v2158
    %v2721 = vadd.f32 %v2705, %v2158
    %v2722 = vadd.f32 %v2706, %v2158
    %v2723 = vadd.f32 %v2707, %v2158
    %v2724 = vsel %vm2193, %v2716, -inf
    %2725 = vmax.xlane.f32.xlu0 %v2724
    %v2726 = vpop.xlane.xlu0 %2725
    %v2727 = vsel %vm2193, %v2717, -inf
    %2728 = vmax.xlane.f32.xlu0 %v2727
    %v2729 = vpop.xlane.xlu0 %2728
    %v2730 = vsel %vm2193, %v2718, -inf
    %2731 = vmax.xlane.f32.xlu0 %v2730
    %v2732 = vpop.xlane.xlu0 %2731
    %v2733 = vsel %vm2193, %v2719, -inf
    %2734 = vmax.xlane.f32.xlu0 %v2733
    %v2735 = vpop.xlane.xlu0 %2734
    %v2736 = vsel %vm2193, %v2720, -inf
    %2737 = vmax.xlane.f32.xlu0 %v2736
    %v2738 = vpop.xlane.xlu0 %2737
    %v2739 = vsel %vm2193, %v2721, -inf
    %2740 = vmax.xlane.f32.xlu0 %v2739
    %v2741 = vpop.xlane.xlu0 %2740
    %v2742 = vsel %vm2193, %v2722, -inf
    %2743 = vmax.xlane.f32.xlu0 %v2742
    %v2744 = vpop.xlane.xlu0 %2743
    %v2745 = vsel %vm2193, %v2723, -inf
    %2746 = vmax.xlane.f32.xlu0 %v2745
    %v2747 = vpop.xlane.xlu0 %2746
    %vm2748 = vcmp.ge.f32.partialorder %v2716, %v2726
    %vm2749 = vcmp.ge.f32.partialorder %v2717, %v2729
    %vm2750 = vcmp.ge.f32.partialorder %v2718, %v2732
    %vm2751 = vcmp.ge.f32.partialorder %v2719, %v2735
    %vm2752 = vcmp.ge.f32.partialorder %v2720, %v2738
    %vm2753 = vcmp.ge.f32.partialorder %v2721, %v2741
    %vm2754 = vcmp.ge.f32.partialorder %v2722, %v2744
    %vm2755 = vcmp.ge.f32.partialorder %v2723, %v2747
    %v2756 = vsel %vm2748, %v259, 7
    %v2757 = vsel %vm2749, %v259, 7
    %v2758 = vsel %vm2750, %v259, 7
    %v2759 = vsel %vm2751, %v259, 7
    %v2760 = vsel %vm2752, %v259, 7
    %v2761 = vsel %vm2753, %v259, 7
    %v2762 = vsel %vm2754, %v259, 7
    %v2763 = vsel %vm2755, %v259, 7
    %v2764 = vsel %vm2193, %v2756, 2147483647
    %v2765 = vand.u32 %v2764, 65535
    %v2766 = vshra.s32 %v2764, 16
    %v2767 = vcvt.s32.f32 %v2765
    %v2768 = vcvt.s32.f32 %v2766
    %2769 = vmin.xlane.f32.xlu0 %v2768
    %v2770 = vpop.xlane.xlu0 %2769
    %vm2771 = vcmp.eq.f32.partialorder %v2768, %v2770
    %v2772 = vsel %vm2771, %v2767, inf
    %2773 = vmin.xlane.f32.xlu0 %v2772
    %v2774 = vpop.xlane.xlu0 %2773
    %v2775 = vcvt.f32.s32 %v2774
    %v2776 = vcvt.f32.s32 %v2770
    %v2777 = vshll.u32 %v2776, 16
    %v2778 = vadd.s32 %v2777, %v2775
    %v2779 = vsel %vm2193, %v2757, 2147483647
    %v2780 = vand.u32 %v2779, 65535
    %v2781 = vshra.s32 %v2779, 16
    %v2782 = vcvt.s32.f32 %v2780
    %v2783 = vcvt.s32.f32 %v2781
    %2784 = vmin.xlane.f32.xlu0 %v2783
    %v2785 = vpop.xlane.xlu0 %2784
    %vm2786 = vcmp.eq.f32.partialorder %v2783, %v2785
    %v2787 = vsel %vm2786, %v2782, inf
    %2788 = vmin.xlane.f32.xlu0 %v2787
    %v2789 = vpop.xlane.xlu0 %2788
    %v2790 = vcvt.f32.s32 %v2789
    %v2791 = vcvt.f32.s32 %v2785
    %v2792 = vshll.u32 %v2791, 16
    %v2793 = vadd.s32 %v2792, %v2790
    %v2794 = vsel %vm2193, %v2758, 2147483647
    %v2795 = vand.u32 %v2794, 65535
    %v2796 = vshra.s32 %v2794, 16
    %v2797 = vcvt.s32.f32 %v2795
    %v2798 = vcvt.s32.f32 %v2796
    %2799 = vmin.xlane.f32.xlu0 %v2798
    %v2800 = vpop.xlane.xlu0 %2799
    %vm2801 = vcmp.eq.f32.partialorder %v2798, %v2800
    %v2802 = vsel %vm2801, %v2797, inf
    %2803 = vmin.xlane.f32.xlu0 %v2802
    %v2804 = vpop.xlane.xlu0 %2803
    %v2805 = vcvt.f32.s32 %v2804
    %v2806 = vcvt.f32.s32 %v2800
    %v2807 = vshll.u32 %v2806, 16
    %v2808 = vadd.s32 %v2807, %v2805
    %v2809 = vsel %vm2193, %v2759, 2147483647
    %v2810 = vand.u32 %v2809, 65535
    %v2811 = vshra.s32 %v2809, 16
    %v2812 = vcvt.s32.f32 %v2810
    %v2813 = vcvt.s32.f32 %v2811
    %2814 = vmin.xlane.f32.xlu0 %v2813
    %v2815 = vpop.xlane.xlu0 %2814
    %vm2816 = vcmp.eq.f32.partialorder %v2813, %v2815
    %v2817 = vsel %vm2816, %v2812, inf
    %2818 = vmin.xlane.f32.xlu0 %v2817
    %v2819 = vpop.xlane.xlu0 %2818
    %v2820 = vcvt.f32.s32 %v2819
    %v2821 = vcvt.f32.s32 %v2815
    %v2822 = vshll.u32 %v2821, 16
    %v2823 = vadd.s32 %v2822, %v2820
    %v2824 = vsel %vm2193, %v2760, 2147483647
    %v2825 = vand.u32 %v2824, 65535
    %v2826 = vshra.s32 %v2824, 16
    %v2827 = vcvt.s32.f32 %v2825
    %v2828 = vcvt.s32.f32 %v2826
    %2829 = vmin.xlane.f32.xlu0 %v2828
    %v2830 = vpop.xlane.xlu0 %2829
    %vm2831 = vcmp.eq.f32.partialorder %v2828, %v2830
    %v2832 = vsel %vm2831, %v2827, inf
    %2833 = vmin.xlane.f32.xlu0 %v2832
    %v2834 = vpop.xlane.xlu0 %2833
    %v2835 = vcvt.f32.s32 %v2834
    %v2836 = vcvt.f32.s32 %v2830
    %v2837 = vshll.u32 %v2836, 16
    %v2838 = vadd.s32 %v2837, %v2835
    %v2839 = vsel %vm2193, %v2761, 2147483647
    %v2840 = vand.u32 %v2839, 65535
    %v2841 = vshra.s32 %v2839, 16
    %v2842 = vcvt.s32.f32 %v2840
    %v2843 = vcvt.s32.f32 %v2841
    %2844 = vmin.xlane.f32.xlu0 %v2843
    %v2845 = vpop.xlane.xlu0 %2844
    %vm2846 = vcmp.eq.f32.partialorder %v2843, %v2845
    %v2847 = vsel %vm2846, %v2842, inf
    %2848 = vmin.xlane.f32.xlu0 %v2847
    %v2849 = vpop.xlane.xlu0 %2848
    %v2850 = vcvt.f32.s32 %v2849
    %v2851 = vcvt.f32.s32 %v2845
    %v2852 = vshll.u32 %v2851, 16
    %v2853 = vadd.s32 %v2852, %v2850
    %v2854 = vsel %vm2193, %v2762, 2147483647
    %v2855 = vand.u32 %v2854, 65535
    %v2856 = vshra.s32 %v2854, 16
    %v2857 = vcvt.s32.f32 %v2855
    %v2858 = vcvt.s32.f32 %v2856
    %2859 = vmin.xlane.f32.xlu0 %v2858
    %v2860 = vpop.xlane.xlu0 %2859
    %vm2861 = vcmp.eq.f32.partialorder %v2858, %v2860
    %v2862 = vsel %vm2861, %v2857, inf
    %2863 = vmin.xlane.f32.xlu0 %v2862
    %v2864 = vpop.xlane.xlu0 %2863
    %v2865 = vcvt.f32.s32 %v2864
    %v2866 = vcvt.f32.s32 %v2860
    %v2867 = vshll.u32 %v2866, 16
    %v2868 = vadd.s32 %v2867, %v2865
    %v2869 = vsel %vm2193, %v2763, 2147483647
    %v2870 = vand.u32 %v2869, 65535
    %v2871 = vshra.s32 %v2869, 16
    %v2872 = vcvt.s32.f32 %v2870
    %v2873 = vcvt.s32.f32 %v2871
    %2874 = vmin.xlane.f32.xlu0 %v2873
    %v2875 = vpop.xlane.xlu0 %2874
    %vm2876 = vcmp.eq.f32.partialorder %v2873, %v2875
    %v2877 = vsel %vm2876, %v2872, inf
    %2878 = vmin.xlane.f32.xlu0 %v2877
    %v2879 = vpop.xlane.xlu0 %2878
    %v2880 = vcvt.f32.s32 %v2879
    %v2881 = vcvt.f32.s32 %v2875
    %v2882 = vshll.u32 %v2881, 16
    %v2883 = vadd.s32 %v2882, %v2880
    %v2885 = vperm.slane %v2141, 0
    %v2886 = vlaneseq
    %v2887 = vshrl.u32 %v2886, 7
    %2889 = vset.pattern.permute.xlu0 %v2887
    %2890 = vperm.xlu0 %2889, %v2885
    %v2891 = vpop.permute.xlu0 %2890
    %v2892 = vperm.slane %v2141, 1
    %v2893 = vlaneseq
    %v2894 = vshrl.u32 %v2893, 7
    %2896 = vset.pattern.permute.xlu0 %v2894
    %2897 = vperm.xlu0 %2896, %v2892
    %v2898 = vpop.permute.xlu0 %2897
    %v2899 = vperm.slane %v2141, 2
    %v2900 = vlaneseq
    %v2901 = vshrl.u32 %v2900, 7
    %2903 = vset.pattern.permute.xlu0 %v2901
    %2904 = vperm.xlu0 %2903, %v2899
    %v2905 = vpop.permute.xlu0 %2904
    %v2906 = vperm.slane %v2141, 3
    %v2907 = vlaneseq
    %v2908 = vshrl.u32 %v2907, 7
    %2910 = vset.pattern.permute.xlu0 %v2908
    %2911 = vperm.xlu0 %2910, %v2906
    %v2912 = vpop.permute.xlu0 %2911
    %v2913 = vperm.slane %v2141, 4
    %v2914 = vlaneseq
    %v2915 = vshrl.u32 %v2914, 7
    %2917 = vset.pattern.permute.xlu0 %v2915
    %2918 = vperm.xlu0 %2917, %v2913
    %v2919 = vpop.permute.xlu0 %2918
    %v2920 = vperm.slane %v2141, 5
    %v2921 = vlaneseq
    %v2922 = vshrl.u32 %v2921, 7
    %2924 = vset.pattern.permute.xlu0 %v2922
    %2925 = vperm.xlu0 %2924, %v2920
    %v2926 = vpop.permute.xlu0 %2925
    %v2927 = vperm.slane %v2141, 6
    %v2928 = vlaneseq
    %v2929 = vshrl.u32 %v2928, 7
    %2931 = vset.pattern.permute.xlu0 %v2929
    %2932 = vperm.xlu0 %2931, %v2927
    %v2933 = vpop.permute.xlu0 %2932
    %v2934 = vperm.slane %v2141, 7
    %v2935 = vlaneseq
    %v2936 = vshrl.u32 %v2935, 7
    %2938 = vset.pattern.permute.xlu0 %v2936
    %2939 = vperm.xlu0 %2938, %v2934
    %v2940 = vpop.permute.xlu0 %2939
    %v2949 = vadd.f32 %v2726, %v2891
    %v2950 = vadd.f32 %v2729, %v2898
    %v2951 = vadd.f32 %v2732, %v2905
    %v2952 = vadd.f32 %v2735, %v2912
    %v2953 = vadd.f32 %v2738, %v2919
    %v2954 = vadd.f32 %v2741, %v2926
    %v2955 = vadd.f32 %v2744, %v2933
    %v2956 = vadd.f32 %v2747, %v2940
    %s2957 = scalar_lea.vmem %s14, 16
    %v2958 = vld [vmem:[%s2957] sm:$0xff]
    %vm2959 = vcmp.gt.f32.partialorder %v2958, 0.5
    %v2960 = vsel %vm2959, 1, 0
    %2961 = vset.pattern.permute.xlu0 0
    %2962 = vperm.xlu0 %2961, %v2960
    %v2963 = vpop.permute.xlu0 %2962
    %vm2964 = vcmp.eq.s32.totalorder %v2963, 1
    %2973 = vset.pattern.permute.xlu0 0
    %2974 = vperm.xlu0 %2973, %v2949
    %v2975 = vpop.permute.xlu0 %2974
    %2976 = vset.pattern.permute.xlu0 0
    %2977 = vperm.xlu0 %2976, %v2950
    %v2978 = vpop.permute.xlu0 %2977
    %2979 = vset.pattern.permute.xlu0 0
    %2980 = vperm.xlu0 %2979, %v2951
    %v2981 = vpop.permute.xlu0 %2980
    %2982 = vset.pattern.permute.xlu0 0
    %2983 = vperm.xlu0 %2982, %v2952
    %v2984 = vpop.permute.xlu0 %2983
    %2985 = vset.pattern.permute.xlu0 0
    %2986 = vperm.xlu0 %2985, %v2953
    %v2987 = vpop.permute.xlu0 %2986
    %2988 = vset.pattern.permute.xlu0 0
    %2989 = vperm.xlu0 %2988, %v2954
    %v2990 = vpop.permute.xlu0 %2989
    %2991 = vset.pattern.permute.xlu0 0
    %2992 = vperm.xlu0 %2991, %v2955
    %v2993 = vpop.permute.xlu0 %2992
    %2994 = vset.pattern.permute.xlu0 0
    %2995 = vperm.xlu0 %2994, %v2956
    %v2996 = vpop.permute.xlu0 %2995
    %v2997 = vperm.slane %v2975, %v259
    %v2998 = vperm.slane %v2978, %v259
    %v2999 = vperm.slane %v2981, %v259
    %v3000 = vperm.slane %v2984, %v259
    %v3001 = vperm.slane %v2987, %v259
    %v3002 = vperm.slane %v2990, %v259
    %v3003 = vperm.slane %v2993, %v259
    %v3004 = vperm.slane %v2996, %v259
    %v3005 = vsel %vm2338, %v2998, %v2997
    %v3006 = vsel %vm2340, %v2999, %v3005
    %v3007 = vsel %vm2342, %v3000, %v3006
    %v3008 = vsel %vm2344, %v3001, %v3007
    %v3009 = vsel %vm2346, %v3002, %v3008
    %v3010 = vsel %vm2348, %v3003, %v3009
    %v3011 = vsel %vm2350, %v3004, %v3010
    %v3013 = vsel %vm2964, %v3011, %v2675
    %v3014 = vperm.slane %v2778, %v259
    %v3015 = vperm.slane %v2793, %v259
    %v3016 = vperm.slane %v2808, %v259
    %v3017 = vperm.slane %v2823, %v259
    %v3018 = vperm.slane %v2838, %v259
    %v3019 = vperm.slane %v2853, %v259
    %v3020 = vperm.slane %v2868, %v259
    %v3021 = vperm.slane %v2883, %v259
    %v3022 = vsel %vm2338, %v3015, %v3014
    %v3023 = vsel %vm2340, %v3016, %v3022
    %v3024 = vsel %vm2342, %v3017, %v3023
    %v3025 = vsel %vm2344, %v3018, %v3024
    %v3026 = vsel %vm2346, %v3019, %v3025
    %v3027 = vsel %vm2348, %v3020, %v3026
    %v3028 = vsel %vm2350, %v3021, %v3027
    %v3029 = vsel %vm2964, %v3028, %v259
    %v3031 = vrot.slane %v3013, 1
    %v3032 = vrot.slane %v3013, 2
    %v3033 = vrot.slane %v3013, 3
    %v3034 = vrot.slane %v3013, 4
    %v3035 = vrot.slane %v3013, 5
    %v3036 = vrot.slane %v3013, 6
    %v3037 = vrot.slane %v3013, 7
    %v3038 = vperm.slane %v3013, 0
    %v3039 = vperm.slane %v3031, 0
    %v3040 = vperm.slane %v3032, 0
    %v3041 = vperm.slane %v3033, 0
    %v3042 = vperm.slane %v3034, 0
    %v3043 = vperm.slane %v3035, 0
    %v3044 = vperm.slane %v3036, 0
    %v3045 = vperm.slane %v3037, 0
    %v3054 = vadd.f32 %v3038, %v2158
    %v3055 = vadd.f32 %v3039, %v2158
    %v3056 = vadd.f32 %v3040, %v2158
    %v3057 = vadd.f32 %v3041, %v2158
    %v3058 = vadd.f32 %v3042, %v2158
    %v3059 = vadd.f32 %v3043, %v2158
    %v3060 = vadd.f32 %v3044, %v2158
    %v3061 = vadd.f32 %v3045, %v2158
    %v3062 = vsel %vm2193, %v3054, -inf
    %3063 = vmax.xlane.f32.xlu0 %v3062
    %v3064 = vpop.xlane.xlu0 %3063
    %v3065 = vsel %vm2193, %v3055, -inf
    %3066 = vmax.xlane.f32.xlu0 %v3065
    %v3067 = vpop.xlane.xlu0 %3066
    %v3068 = vsel %vm2193, %v3056, -inf
    %3069 = vmax.xlane.f32.xlu0 %v3068
    %v3070 = vpop.xlane.xlu0 %3069
    %v3071 = vsel %vm2193, %v3057, -inf
    %3072 = vmax.xlane.f32.xlu0 %v3071
    %v3073 = vpop.xlane.xlu0 %3072
    %v3074 = vsel %vm2193, %v3058, -inf
    %3075 = vmax.xlane.f32.xlu0 %v3074
    %v3076 = vpop.xlane.xlu0 %3075
    %v3077 = vsel %vm2193, %v3059, -inf
    %3078 = vmax.xlane.f32.xlu0 %v3077
    %v3079 = vpop.xlane.xlu0 %3078
    %v3080 = vsel %vm2193, %v3060, -inf
    %3081 = vmax.xlane.f32.xlu0 %v3080
    %v3082 = vpop.xlane.xlu0 %3081
    %v3083 = vsel %vm2193, %v3061, -inf
    %3084 = vmax.xlane.f32.xlu0 %v3083
    %v3085 = vpop.xlane.xlu0 %3084
    %vm3086 = vcmp.ge.f32.partialorder %v3054, %v3064
    %vm3087 = vcmp.ge.f32.partialorder %v3055, %v3067
    %vm3088 = vcmp.ge.f32.partialorder %v3056, %v3070
    %vm3089 = vcmp.ge.f32.partialorder %v3057, %v3073
    %vm3090 = vcmp.ge.f32.partialorder %v3058, %v3076
    %vm3091 = vcmp.ge.f32.partialorder %v3059, %v3079
    %vm3092 = vcmp.ge.f32.partialorder %v3060, %v3082
    %vm3093 = vcmp.ge.f32.partialorder %v3061, %v3085
    %v3094 = vsel %vm3086, %v259, 7
    %v3095 = vsel %vm3087, %v259, 7
    %v3096 = vsel %vm3088, %v259, 7
    %v3097 = vsel %vm3089, %v259, 7
    %v3098 = vsel %vm3090, %v259, 7
    %v3099 = vsel %vm3091, %v259, 7
    %v3100 = vsel %vm3092, %v259, 7
    %v3101 = vsel %vm3093, %v259, 7
    %v3102 = vsel %vm2193, %v3094, 2147483647
    %v3103 = vand.u32 %v3102, 65535
    %v3104 = vshra.s32 %v3102, 16
    %v3105 = vcvt.s32.f32 %v3103
    %v3106 = vcvt.s32.f32 %v3104
    %3107 = vmin.xlane.f32.xlu0 %v3106
    %v3108 = vpop.xlane.xlu0 %3107
    %vm3109 = vcmp.eq.f32.partialorder %v3106, %v3108
    %v3110 = vsel %vm3109, %v3105, inf
    %3111 = vmin.xlane.f32.xlu0 %v3110
    %v3112 = vpop.xlane.xlu0 %3111
    %v3113 = vcvt.f32.s32 %v3112
    %v3114 = vcvt.f32.s32 %v3108
    %v3115 = vshll.u32 %v3114, 16
    %v3116 = vadd.s32 %v3115, %v3113
    %v3117 = vsel %vm2193, %v3095, 2147483647
    %v3118 = vand.u32 %v3117, 65535
    %v3119 = vshra.s32 %v3117, 16
    %v3120 = vcvt.s32.f32 %v3118
    %v3121 = vcvt.s32.f32 %v3119
    %3122 = vmin.xlane.f32.xlu0 %v3121
    %v3123 = vpop.xlane.xlu0 %3122
    %vm3124 = vcmp.eq.f32.partialorder %v3121, %v3123
    %v3125 = vsel %vm3124, %v3120, inf
    %3126 = vmin.xlane.f32.xlu0 %v3125
    %v3127 = vpop.xlane.xlu0 %3126
    %v3128 = vcvt.f32.s32 %v3127
    %v3129 = vcvt.f32.s32 %v3123
    %v3130 = vshll.u32 %v3129, 16
    %v3131 = vadd.s32 %v3130, %v3128
    %v3132 = vsel %vm2193, %v3096, 2147483647
    %v3133 = vand.u32 %v3132, 65535
    %v3134 = vshra.s32 %v3132, 16
    %v3135 = vcvt.s32.f32 %v3133
    %v3136 = vcvt.s32.f32 %v3134
    %3137 = vmin.xlane.f32.xlu0 %v3136
    %v3138 = vpop.xlane.xlu0 %3137
    %vm3139 = vcmp.eq.f32.partialorder %v3136, %v3138
    %v3140 = vsel %vm3139, %v3135, inf
    %3141 = vmin.xlane.f32.xlu0 %v3140
    %v3142 = vpop.xlane.xlu0 %3141
    %v3143 = vcvt.f32.s32 %v3142
    %v3144 = vcvt.f32.s32 %v3138
    %v3145 = vshll.u32 %v3144, 16
    %v3146 = vadd.s32 %v3145, %v3143
    %v3147 = vsel %vm2193, %v3097, 2147483647
    %v3148 = vand.u32 %v3147, 65535
    %v3149 = vshra.s32 %v3147, 16
    %v3150 = vcvt.s32.f32 %v3148
    %v3151 = vcvt.s32.f32 %v3149
    %3152 = vmin.xlane.f32.xlu0 %v3151
    %v3153 = vpop.xlane.xlu0 %3152
    %vm3154 = vcmp.eq.f32.partialorder %v3151, %v3153
    %v3155 = vsel %vm3154, %v3150, inf
    %3156 = vmin.xlane.f32.xlu0 %v3155
    %v3157 = vpop.xlane.xlu0 %3156
    %v3158 = vcvt.f32.s32 %v3157
    %v3159 = vcvt.f32.s32 %v3153
    %v3160 = vshll.u32 %v3159, 16
    %v3161 = vadd.s32 %v3160, %v3158
    %v3162 = vsel %vm2193, %v3098, 2147483647
    %v3163 = vand.u32 %v3162, 65535
    %v3164 = vshra.s32 %v3162, 16
    %v3165 = vcvt.s32.f32 %v3163
    %v3166 = vcvt.s32.f32 %v3164
    %3167 = vmin.xlane.f32.xlu0 %v3166
    %v3168 = vpop.xlane.xlu0 %3167
    %vm3169 = vcmp.eq.f32.partialorder %v3166, %v3168
    %v3170 = vsel %vm3169, %v3165, inf
    %3171 = vmin.xlane.f32.xlu0 %v3170
    %v3172 = vpop.xlane.xlu0 %3171
    %v3173 = vcvt.f32.s32 %v3172
    %v3174 = vcvt.f32.s32 %v3168
    %v3175 = vshll.u32 %v3174, 16
    %v3176 = vadd.s32 %v3175, %v3173
    %v3177 = vsel %vm2193, %v3099, 2147483647
    %v3178 = vand.u32 %v3177, 65535
    %v3179 = vshra.s32 %v3177, 16
    %v3180 = vcvt.s32.f32 %v3178
    %v3181 = vcvt.s32.f32 %v3179
    %3182 = vmin.xlane.f32.xlu0 %v3181
    %v3183 = vpop.xlane.xlu0 %3182
    %vm3184 = vcmp.eq.f32.partialorder %v3181, %v3183
    %v3185 = vsel %vm3184, %v3180, inf
    %3186 = vmin.xlane.f32.xlu0 %v3185
    %v3187 = vpop.xlane.xlu0 %3186
    %v3188 = vcvt.f32.s32 %v3187
    %v3189 = vcvt.f32.s32 %v3183
    %v3190 = vshll.u32 %v3189, 16
    %v3191 = vadd.s32 %v3190, %v3188
    %v3192 = vsel %vm2193, %v3100, 2147483647
    %v3193 = vand.u32 %v3192, 65535
    %v3194 = vshra.s32 %v3192, 16
    %v3195 = vcvt.s32.f32 %v3193
    %v3196 = vcvt.s32.f32 %v3194
    %3197 = vmin.xlane.f32.xlu0 %v3196
    %v3198 = vpop.xlane.xlu0 %3197
    %vm3199 = vcmp.eq.f32.partialorder %v3196, %v3198
    %v3200 = vsel %vm3199, %v3195, inf
    %3201 = vmin.xlane.f32.xlu0 %v3200
    %v3202 = vpop.xlane.xlu0 %3201
    %v3203 = vcvt.f32.s32 %v3202
    %v3204 = vcvt.f32.s32 %v3198
    %v3205 = vshll.u32 %v3204, 16
    %v3206 = vadd.s32 %v3205, %v3203
    %v3207 = vsel %vm2193, %v3101, 2147483647
    %v3208 = vand.u32 %v3207, 65535
    %v3209 = vshra.s32 %v3207, 16
    %v3210 = vcvt.s32.f32 %v3208
    %v3211 = vcvt.s32.f32 %v3209
    %3212 = vmin.xlane.f32.xlu0 %v3211
    %v3213 = vpop.xlane.xlu0 %3212
    %vm3214 = vcmp.eq.f32.partialorder %v3211, %v3213
    %v3215 = vsel %vm3214, %v3210, inf
    %3216 = vmin.xlane.f32.xlu0 %v3215
    %v3217 = vpop.xlane.xlu0 %3216
    %v3218 = vcvt.f32.s32 %v3217
    %v3219 = vcvt.f32.s32 %v3213
    %v3220 = vshll.u32 %v3219, 16
    %v3221 = vadd.s32 %v3220, %v3218
    %v3223 = vperm.slane %v2144, 0
    %v3224 = vlaneseq
    %v3225 = vshrl.u32 %v3224, 7
    %3227 = vset.pattern.permute.xlu0 %v3225
    %3228 = vperm.xlu0 %3227, %v3223
    %v3229 = vpop.permute.xlu0 %3228
    %v3230 = vperm.slane %v2144, 1
    %v3231 = vlaneseq
    %v3232 = vshrl.u32 %v3231, 7
    %3234 = vset.pattern.permute.xlu0 %v3232
    %3235 = vperm.xlu0 %3234, %v3230
    %v3236 = vpop.permute.xlu0 %3235
    %v3237 = vperm.slane %v2144, 2
    %v3238 = vlaneseq
    %v3239 = vshrl.u32 %v3238, 7
    %3241 = vset.pattern.permute.xlu0 %v3239
    %3242 = vperm.xlu0 %3241, %v3237
    %v3243 = vpop.permute.xlu0 %3242
    %v3244 = vperm.slane %v2144, 3
    %v3245 = vlaneseq
    %v3246 = vshrl.u32 %v3245, 7
    %3248 = vset.pattern.permute.xlu0 %v3246
    %3249 = vperm.xlu0 %3248, %v3244
    %v3250 = vpop.permute.xlu0 %3249
    %v3251 = vperm.slane %v2144, 4
    %v3252 = vlaneseq
    %v3253 = vshrl.u32 %v3252, 7
    %3255 = vset.pattern.permute.xlu0 %v3253
    %3256 = vperm.xlu0 %3255, %v3251
    %v3257 = vpop.permute.xlu0 %3256
    %v3258 = vperm.slane %v2144, 5
    %v3259 = vlaneseq
    %v3260 = vshrl.u32 %v3259, 7
    %3262 = vset.pattern.permute.xlu0 %v3260
    %3263 = vperm.xlu0 %3262, %v3258
    %v3264 = vpop.permute.xlu0 %3263
    %v3265 = vperm.slane %v2144, 6
    %v3266 = vlaneseq
    %v3267 = vshrl.u32 %v3266, 7
    %3269 = vset.pattern.permute.xlu0 %v3267
    %3270 = vperm.xlu0 %3269, %v3265
    %v3271 = vpop.permute.xlu0 %3270
    %v3272 = vperm.slane %v2144, 7
    %v3273 = vlaneseq
    %v3274 = vshrl.u32 %v3273, 7
    %3276 = vset.pattern.permute.xlu0 %v3274
    %3277 = vperm.xlu0 %3276, %v3272
    %v3278 = vpop.permute.xlu0 %3277
    %v3287 = vadd.f32 %v3064, %v3229
    %v3288 = vadd.f32 %v3067, %v3236
    %v3289 = vadd.f32 %v3070, %v3243
    %v3290 = vadd.f32 %v3073, %v3250
    %v3291 = vadd.f32 %v3076, %v3257
    %v3292 = vadd.f32 %v3079, %v3264
    %v3293 = vadd.f32 %v3082, %v3271
    %v3294 = vadd.f32 %v3085, %v3278
    %s3295 = scalar_lea.vmem %s14, 24
    %v3296 = vld [vmem:[%s3295] sm:$0xff]
    %vm3297 = vcmp.gt.f32.partialorder %v3296, 0.5
    %v3298 = vsel %vm3297, 1, 0
    %3299 = vset.pattern.permute.xlu0 0
    %3300 = vperm.xlu0 %3299, %v3298
    %v3301 = vpop.permute.xlu0 %3300
    %vm3302 = vcmp.eq.s32.totalorder %v3301, 1
    %3311 = vset.pattern.permute.xlu0 0
    %3312 = vperm.xlu0 %3311, %v3287
    %v3313 = vpop.permute.xlu0 %3312
    %3314 = vset.pattern.permute.xlu0 0
    %3315 = vperm.xlu0 %3314, %v3288
    %v3316 = vpop.permute.xlu0 %3315
    %3317 = vset.pattern.permute.xlu0 0
    %3318 = vperm.xlu0 %3317, %v3289
    %v3319 = vpop.permute.xlu0 %3318
    %3320 = vset.pattern.permute.xlu0 0
    %3321 = vperm.xlu0 %3320, %v3290
    %v3322 = vpop.permute.xlu0 %3321
    %3323 = vset.pattern.permute.xlu0 0
    %3324 = vperm.xlu0 %3323, %v3291
    %v3325 = vpop.permute.xlu0 %3324
    %3326 = vset.pattern.permute.xlu0 0
    %3327 = vperm.xlu0 %3326, %v3292
    %v3328 = vpop.permute.xlu0 %3327
    %3329 = vset.pattern.permute.xlu0 0
    %3330 = vperm.xlu0 %3329, %v3293
    %v3331 = vpop.permute.xlu0 %3330
    %3332 = vset.pattern.permute.xlu0 0
    %3333 = vperm.xlu0 %3332, %v3294
    %v3334 = vpop.permute.xlu0 %3333
    %v3335 = vperm.slane %v3313, %v259
    %v3336 = vperm.slane %v3316, %v259
    %v3337 = vperm.slane %v3319, %v259
    %v3338 = vperm.slane %v3322, %v259
    %v3339 = vperm.slane %v3325, %v259
    %v3340 = vperm.slane %v3328, %v259
    %v3341 = vperm.slane %v3331, %v259
    %v3342 = vperm.slane %v3334, %v259
    %v3343 = vsel %vm2338, %v3336, %v3335
    %v3344 = vsel %vm2340, %v3337, %v3343
    %v3345 = vsel %vm2342, %v3338, %v3344
    %v3346 = vsel %vm2344, %v3339, %v3345
    %v3347 = vsel %vm2346, %v3340, %v3346
    %v3348 = vsel %vm2348, %v3341, %v3347
    %v3349 = vsel %vm2350, %v3342, %v3348
    %v3351 = vsel %vm3302, %v3349, %v3013
    %v3352 = vperm.slane %v3116, %v259
    %v3353 = vperm.slane %v3131, %v259
    %v3354 = vperm.slane %v3146, %v259
    %v3355 = vperm.slane %v3161, %v259
    %v3356 = vperm.slane %v3176, %v259
    %v3357 = vperm.slane %v3191, %v259
    %v3358 = vperm.slane %v3206, %v259
    %v3359 = vperm.slane %v3221, %v259
    %v3360 = vsel %vm2338, %v3353, %v3352
    %v3361 = vsel %vm2340, %v3354, %v3360
    %v3362 = vsel %vm2342, %v3355, %v3361
    %v3363 = vsel %vm2344, %v3356, %v3362
    %v3364 = vsel %vm2346, %v3357, %v3363
    %v3365 = vsel %vm2348, %v3358, %v3364
    %v3366 = vsel %vm2350, %v3359, %v3365
    %v3367 = vsel %vm3302, %v3366, %v259
    %v3369 = vrot.slane %v3351, 1
    %v3370 = vrot.slane %v3351, 2
    %v3371 = vrot.slane %v3351, 3
    %v3372 = vrot.slane %v3351, 4
    %v3373 = vrot.slane %v3351, 5
    %v3374 = vrot.slane %v3351, 6
    %v3375 = vrot.slane %v3351, 7
    %v3376 = vperm.slane %v3351, 0
    %v3377 = vperm.slane %v3369, 0
    %v3378 = vperm.slane %v3370, 0
    %v3379 = vperm.slane %v3371, 0
    %v3380 = vperm.slane %v3372, 0
    %v3381 = vperm.slane %v3373, 0
    %v3382 = vperm.slane %v3374, 0
    %v3383 = vperm.slane %v3375, 0
    %v3392 = vadd.f32 %v3376, %v2158
    %v3393 = vadd.f32 %v3377, %v2158
    %v3394 = vadd.f32 %v3378, %v2158
    %v3395 = vadd.f32 %v3379, %v2158
    %v3396 = vadd.f32 %v3380, %v2158
    %v3397 = vadd.f32 %v3381, %v2158
    %v3398 = vadd.f32 %v3382, %v2158
    %v3399 = vadd.f32 %v3383, %v2158
    %v3400 = vsel %vm2193, %v3392, -inf
    %3401 = vmax.xlane.f32.xlu0 %v3400
    %v3402 = vpop.xlane.xlu0 %3401
    %v3403 = vsel %vm2193, %v3393, -inf
    %3404 = vmax.xlane.f32.xlu0 %v3403
    %v3405 = vpop.xlane.xlu0 %3404
    %v3406 = vsel %vm2193, %v3394, -inf
    %3407 = vmax.xlane.f32.xlu0 %v3406
    %v3408 = vpop.xlane.xlu0 %3407
    %v3409 = vsel %vm2193, %v3395, -inf
    %3410 = vmax.xlane.f32.xlu0 %v3409
    %v3411 = vpop.xlane.xlu0 %3410
    %v3412 = vsel %vm2193, %v3396, -inf
    %3413 = vmax.xlane.f32.xlu0 %v3412
    %v3414 = vpop.xlane.xlu0 %3413
    %v3415 = vsel %vm2193, %v3397, -inf
    %3416 = vmax.xlane.f32.xlu0 %v3415
    %v3417 = vpop.xlane.xlu0 %3416
    %v3418 = vsel %vm2193, %v3398, -inf
    %3419 = vmax.xlane.f32.xlu0 %v3418
    %v3420 = vpop.xlane.xlu0 %3419
    %v3421 = vsel %vm2193, %v3399, -inf
    %3422 = vmax.xlane.f32.xlu0 %v3421
    %v3423 = vpop.xlane.xlu0 %3422
    %vm3424 = vcmp.ge.f32.partialorder %v3392, %v3402
    %vm3425 = vcmp.ge.f32.partialorder %v3393, %v3405
    %vm3426 = vcmp.ge.f32.partialorder %v3394, %v3408
    %vm3427 = vcmp.ge.f32.partialorder %v3395, %v3411
    %vm3428 = vcmp.ge.f32.partialorder %v3396, %v3414
    %vm3429 = vcmp.ge.f32.partialorder %v3397, %v3417
    %vm3430 = vcmp.ge.f32.partialorder %v3398, %v3420
    %vm3431 = vcmp.ge.f32.partialorder %v3399, %v3423
    %v3432 = vsel %vm3424, %v259, 7
    %v3433 = vsel %vm3425, %v259, 7
    %v3434 = vsel %vm3426, %v259, 7
    %v3435 = vsel %vm3427, %v259, 7
    %v3436 = vsel %vm3428, %v259, 7
    %v3437 = vsel %vm3429, %v259, 7
    %v3438 = vsel %vm3430, %v259, 7
    %v3439 = vsel %vm3431, %v259, 7
    %v3440 = vsel %vm2193, %v3432, 2147483647
    %v3441 = vand.u32 %v3440, 65535
    %v3442 = vshra.s32 %v3440, 16
    %v3443 = vcvt.s32.f32 %v3441
    %v3444 = vcvt.s32.f32 %v3442
    %3445 = vmin.xlane.f32.xlu0 %v3444
    %v3446 = vpop.xlane.xlu0 %3445
    %vm3447 = vcmp.eq.f32.partialorder %v3444, %v3446
    %v3448 = vsel %vm3447, %v3443, inf
    %3449 = vmin.xlane.f32.xlu0 %v3448
    %v3450 = vpop.xlane.xlu0 %3449
    %v3451 = vcvt.f32.s32 %v3450
    %v3452 = vcvt.f32.s32 %v3446
    %v3453 = vshll.u32 %v3452, 16
    %v3454 = vadd.s32 %v3453, %v3451
    %v3455 = vsel %vm2193, %v3433, 2147483647
    %v3456 = vand.u32 %v3455, 65535
    %v3457 = vshra.s32 %v3455, 16
    %v3458 = vcvt.s32.f32 %v3456
    %v3459 = vcvt.s32.f32 %v3457
    %3460 = vmin.xlane.f32.xlu0 %v3459
    %v3461 = vpop.xlane.xlu0 %3460
    %vm3462 = vcmp.eq.f32.partialorder %v3459, %v3461
    %v3463 = vsel %vm3462, %v3458, inf
    %3464 = vmin.xlane.f32.xlu0 %v3463
    %v3465 = vpop.xlane.xlu0 %3464
    %v3466 = vcvt.f32.s32 %v3465
    %v3467 = vcvt.f32.s32 %v3461
    %v3468 = vshll.u32 %v3467, 16
    %v3469 = vadd.s32 %v3468, %v3466
    %v3470 = vsel %vm2193, %v3434, 2147483647
    %v3471 = vand.u32 %v3470, 65535
    %v3472 = vshra.s32 %v3470, 16
    %v3473 = vcvt.s32.f32 %v3471
    %v3474 = vcvt.s32.f32 %v3472
    %3475 = vmin.xlane.f32.xlu0 %v3474
    %v3476 = vpop.xlane.xlu0 %3475
    %vm3477 = vcmp.eq.f32.partialorder %v3474, %v3476
    %v3478 = vsel %vm3477, %v3473, inf
    %3479 = vmin.xlane.f32.xlu0 %v3478
    %v3480 = vpop.xlane.xlu0 %3479
    %v3481 = vcvt.f32.s32 %v3480
    %v3482 = vcvt.f32.s32 %v3476
    %v3483 = vshll.u32 %v3482, 16
    %v3484 = vadd.s32 %v3483, %v3481
    %v3485 = vsel %vm2193, %v3435, 2147483647
    %v3486 = vand.u32 %v3485, 65535
    %v3487 = vshra.s32 %v3485, 16
    %v3488 = vcvt.s32.f32 %v3486
    %v3489 = vcvt.s32.f32 %v3487
    %3490 = vmin.xlane.f32.xlu0 %v3489
    %v3491 = vpop.xlane.xlu0 %3490
    %vm3492 = vcmp.eq.f32.partialorder %v3489, %v3491
    %v3493 = vsel %vm3492, %v3488, inf
    %3494 = vmin.xlane.f32.xlu0 %v3493
    %v3495 = vpop.xlane.xlu0 %3494
    %v3496 = vcvt.f32.s32 %v3495
    %v3497 = vcvt.f32.s32 %v3491
    %v3498 = vshll.u32 %v3497, 16
    %v3499 = vadd.s32 %v3498, %v3496
    %v3500 = vsel %vm2193, %v3436, 2147483647
    %v3501 = vand.u32 %v3500, 65535
    %v3502 = vshra.s32 %v3500, 16
    %v3503 = vcvt.s32.f32 %v3501
    %v3504 = vcvt.s32.f32 %v3502
    %3505 = vmin.xlane.f32.xlu0 %v3504
    %v3506 = vpop.xlane.xlu0 %3505
    %vm3507 = vcmp.eq.f32.partialorder %v3504, %v3506
    %v3508 = vsel %vm3507, %v3503, inf
    %3509 = vmin.xlane.f32.xlu0 %v3508
    %v3510 = vpop.xlane.xlu0 %3509
    %v3511 = vcvt.f32.s32 %v3510
    %v3512 = vcvt.f32.s32 %v3506
    %v3513 = vshll.u32 %v3512, 16
    %v3514 = vadd.s32 %v3513, %v3511
    %v3515 = vsel %vm2193, %v3437, 2147483647
    %v3516 = vand.u32 %v3515, 65535
    %v3517 = vshra.s32 %v3515, 16
    %v3518 = vcvt.s32.f32 %v3516
    %v3519 = vcvt.s32.f32 %v3517
    %3520 = vmin.xlane.f32.xlu0 %v3519
    %v3521 = vpop.xlane.xlu0 %3520
    %vm3522 = vcmp.eq.f32.partialorder %v3519, %v3521
    %v3523 = vsel %vm3522, %v3518, inf
    %3524 = vmin.xlane.f32.xlu0 %v3523
    %v3525 = vpop.xlane.xlu0 %3524
    %v3526 = vcvt.f32.s32 %v3525
    %v3527 = vcvt.f32.s32 %v3521
    %v3528 = vshll.u32 %v3527, 16
    %v3529 = vadd.s32 %v3528, %v3526
    %v3530 = vsel %vm2193, %v3438, 2147483647
    %v3531 = vand.u32 %v3530, 65535
    %v3532 = vshra.s32 %v3530, 16
    %v3533 = vcvt.s32.f32 %v3531
    %v3534 = vcvt.s32.f32 %v3532
    %3535 = vmin.xlane.f32.xlu0 %v3534
    %v3536 = vpop.xlane.xlu0 %3535
    %vm3537 = vcmp.eq.f32.partialorder %v3534, %v3536
    %v3538 = vsel %vm3537, %v3533, inf
    %3539 = vmin.xlane.f32.xlu0 %v3538
    %v3540 = vpop.xlane.xlu0 %3539
    %v3541 = vcvt.f32.s32 %v3540
    %v3542 = vcvt.f32.s32 %v3536
    %v3543 = vshll.u32 %v3542, 16
    %v3544 = vadd.s32 %v3543, %v3541
    %v3545 = vsel %vm2193, %v3439, 2147483647
    %v3546 = vand.u32 %v3545, 65535
    %v3547 = vshra.s32 %v3545, 16
    %v3548 = vcvt.s32.f32 %v3546
    %v3549 = vcvt.s32.f32 %v3547
    %3550 = vmin.xlane.f32.xlu0 %v3549
    %v3551 = vpop.xlane.xlu0 %3550
    %vm3552 = vcmp.eq.f32.partialorder %v3549, %v3551
    %v3553 = vsel %vm3552, %v3548, inf
    %3554 = vmin.xlane.f32.xlu0 %v3553
    %v3555 = vpop.xlane.xlu0 %3554
    %v3556 = vcvt.f32.s32 %v3555
    %v3557 = vcvt.f32.s32 %v3551
    %v3558 = vshll.u32 %v3557, 16
    %v3559 = vadd.s32 %v3558, %v3556
    %v3561 = vperm.slane %v2147, 0
    %v3562 = vlaneseq
    %v3563 = vshrl.u32 %v3562, 7
    %3565 = vset.pattern.permute.xlu0 %v3563
    %3566 = vperm.xlu0 %3565, %v3561
    %v3567 = vpop.permute.xlu0 %3566
    %v3568 = vperm.slane %v2147, 1
    %v3569 = vlaneseq
    %v3570 = vshrl.u32 %v3569, 7
    %3572 = vset.pattern.permute.xlu0 %v3570
    %3573 = vperm.xlu0 %3572, %v3568
    %v3574 = vpop.permute.xlu0 %3573
    %v3575 = vperm.slane %v2147, 2
    %v3576 = vlaneseq
    %v3577 = vshrl.u32 %v3576, 7
    %3579 = vset.pattern.permute.xlu0 %v3577
    %3580 = vperm.xlu0 %3579, %v3575
    %v3581 = vpop.permute.xlu0 %3580
    %v3582 = vperm.slane %v2147, 3
    %v3583 = vlaneseq
    %v3584 = vshrl.u32 %v3583, 7
    %3586 = vset.pattern.permute.xlu0 %v3584
    %3587 = vperm.xlu0 %3586, %v3582
    %v3588 = vpop.permute.xlu0 %3587
    %v3589 = vperm.slane %v2147, 4
    %v3590 = vlaneseq
    %v3591 = vshrl.u32 %v3590, 7
    %3593 = vset.pattern.permute.xlu0 %v3591
    %3594 = vperm.xlu0 %3593, %v3589
    %v3595 = vpop.permute.xlu0 %3594
    %v3596 = vperm.slane %v2147, 5
    %v3597 = vlaneseq
    %v3598 = vshrl.u32 %v3597, 7
    %3600 = vset.pattern.permute.xlu0 %v3598
    %3601 = vperm.xlu0 %3600, %v3596
    %v3602 = vpop.permute.xlu0 %3601
    %v3603 = vperm.slane %v2147, 6
    %v3604 = vlaneseq
    %v3605 = vshrl.u32 %v3604, 7
    %3607 = vset.pattern.permute.xlu0 %v3605
    %3608 = vperm.xlu0 %3607, %v3603
    %v3609 = vpop.permute.xlu0 %3608
    %v3610 = vperm.slane %v2147, 7
    %v3611 = vlaneseq
    %v3612 = vshrl.u32 %v3611, 7
    %3614 = vset.pattern.permute.xlu0 %v3612
    %3615 = vperm.xlu0 %3614, %v3610
    %v3616 = vpop.permute.xlu0 %3615
    %v3625 = vadd.f32 %v3402, %v3567
    %v3626 = vadd.f32 %v3405, %v3574
    %v3627 = vadd.f32 %v3408, %v3581
    %v3628 = vadd.f32 %v3411, %v3588
    %v3629 = vadd.f32 %v3414, %v3595
    %v3630 = vadd.f32 %v3417, %v3602
    %v3631 = vadd.f32 %v3420, %v3609
    %v3632 = vadd.f32 %v3423, %v3616
    %s3633 = scalar_lea.vmem %s14, 32
    %v3634 = vld [vmem:[%s3633] sm:$0xff]
    %vm3635 = vcmp.gt.f32.partialorder %v3634, 0.5
    %v3636 = vsel %vm3635, 1, 0
    %3637 = vset.pattern.permute.xlu0 0
    %3638 = vperm.xlu0 %3637, %v3636
    %v3639 = vpop.permute.xlu0 %3638
    %vm3640 = vcmp.eq.s32.totalorder %v3639, 1
    %3649 = vset.pattern.permute.xlu0 0
    %3650 = vperm.xlu0 %3649, %v3625
    %v3651 = vpop.permute.xlu0 %3650
    %3652 = vset.pattern.permute.xlu0 0
    %3653 = vperm.xlu0 %3652, %v3626
    %v3654 = vpop.permute.xlu0 %3653
    %3655 = vset.pattern.permute.xlu0 0
    %3656 = vperm.xlu0 %3655, %v3627
    %v3657 = vpop.permute.xlu0 %3656
    %3658 = vset.pattern.permute.xlu0 0
    %3659 = vperm.xlu0 %3658, %v3628
    %v3660 = vpop.permute.xlu0 %3659
    %3661 = vset.pattern.permute.xlu0 0
    %3662 = vperm.xlu0 %3661, %v3629
    %v3663 = vpop.permute.xlu0 %3662
    %3664 = vset.pattern.permute.xlu0 0
    %3665 = vperm.xlu0 %3664, %v3630
    %v3666 = vpop.permute.xlu0 %3665
    %3667 = vset.pattern.permute.xlu0 0
    %3668 = vperm.xlu0 %3667, %v3631
    %v3669 = vpop.permute.xlu0 %3668
    %3670 = vset.pattern.permute.xlu0 0
    %3671 = vperm.xlu0 %3670, %v3632
    %v3672 = vpop.permute.xlu0 %3671
    %v3673 = vperm.slane %v3651, %v259
    %v3674 = vperm.slane %v3654, %v259
    %v3675 = vperm.slane %v3657, %v259
    %v3676 = vperm.slane %v3660, %v259
    %v3677 = vperm.slane %v3663, %v259
    %v3678 = vperm.slane %v3666, %v259
    %v3679 = vperm.slane %v3669, %v259
    %v3680 = vperm.slane %v3672, %v259
    %v3681 = vsel %vm2338, %v3674, %v3673
    %v3682 = vsel %vm2340, %v3675, %v3681
    %v3683 = vsel %vm2342, %v3676, %v3682
    %v3684 = vsel %vm2344, %v3677, %v3683
    %v3685 = vsel %vm2346, %v3678, %v3684
    %v3686 = vsel %vm2348, %v3679, %v3685
    %v3687 = vsel %vm2350, %v3680, %v3686
    %v3689 = vsel %vm3640, %v3687, %v3351
    %v3690 = vperm.slane %v3454, %v259
    %v3691 = vperm.slane %v3469, %v259
    %v3692 = vperm.slane %v3484, %v259
    %v3693 = vperm.slane %v3499, %v259
    %v3694 = vperm.slane %v3514, %v259
    %v3695 = vperm.slane %v3529, %v259
    %v3696 = vperm.slane %v3544, %v259
    %v3697 = vperm.slane %v3559, %v259
    %v3698 = vsel %vm2338, %v3691, %v3690
    %v3699 = vsel %vm2340, %v3692, %v3698
    %v3700 = vsel %vm2342, %v3693, %v3699
    %v3701 = vsel %vm2344, %v3694, %v3700
    %v3702 = vsel %vm2346, %v3695, %v3701
    %v3703 = vsel %vm2348, %v3696, %v3702
    %v3704 = vsel %vm2350, %v3697, %v3703
    %v3705 = vsel %vm3640, %v3704, %v259
    %v3707 = vrot.slane %v3689, 1
    %v3708 = vrot.slane %v3689, 2
    %v3709 = vrot.slane %v3689, 3
    %v3710 = vrot.slane %v3689, 4
    %v3711 = vrot.slane %v3689, 5
    %v3712 = vrot.slane %v3689, 6
    %v3713 = vrot.slane %v3689, 7
    %v3714 = vperm.slane %v3689, 0
    %v3715 = vperm.slane %v3707, 0
    %v3716 = vperm.slane %v3708, 0
    %v3717 = vperm.slane %v3709, 0
    %v3718 = vperm.slane %v3710, 0
    %v3719 = vperm.slane %v3711, 0
    %v3720 = vperm.slane %v3712, 0
    %v3721 = vperm.slane %v3713, 0
    %v3730 = vadd.f32 %v3714, %v2158
    %v3731 = vadd.f32 %v3715, %v2158
    %v3732 = vadd.f32 %v3716, %v2158
    %v3733 = vadd.f32 %v3717, %v2158
    %v3734 = vadd.f32 %v3718, %v2158
    %v3735 = vadd.f32 %v3719, %v2158
    %v3736 = vadd.f32 %v3720, %v2158
    %v3737 = vadd.f32 %v3721, %v2158
    %v3738 = vsel %vm2193, %v3730, -inf
    %3739 = vmax.xlane.f32.xlu0 %v3738
    %v3740 = vpop.xlane.xlu0 %3739
    %v3741 = vsel %vm2193, %v3731, -inf
    %3742 = vmax.xlane.f32.xlu0 %v3741
    %v3743 = vpop.xlane.xlu0 %3742
    %v3744 = vsel %vm2193, %v3732, -inf
    %3745 = vmax.xlane.f32.xlu0 %v3744
    %v3746 = vpop.xlane.xlu0 %3745
    %v3747 = vsel %vm2193, %v3733, -inf
    %3748 = vmax.xlane.f32.xlu0 %v3747
    %v3749 = vpop.xlane.xlu0 %3748
    %v3750 = vsel %vm2193, %v3734, -inf
    %3751 = vmax.xlane.f32.xlu0 %v3750
    %v3752 = vpop.xlane.xlu0 %3751
    %v3753 = vsel %vm2193, %v3735, -inf
    %3754 = vmax.xlane.f32.xlu0 %v3753
    %v3755 = vpop.xlane.xlu0 %3754
    %v3756 = vsel %vm2193, %v3736, -inf
    %3757 = vmax.xlane.f32.xlu0 %v3756
    %v3758 = vpop.xlane.xlu0 %3757
    %v3759 = vsel %vm2193, %v3737, -inf
    %3760 = vmax.xlane.f32.xlu0 %v3759
    %v3761 = vpop.xlane.xlu0 %3760
    %vm3762 = vcmp.ge.f32.partialorder %v3730, %v3740
    %vm3763 = vcmp.ge.f32.partialorder %v3731, %v3743
    %vm3764 = vcmp.ge.f32.partialorder %v3732, %v3746
    %vm3765 = vcmp.ge.f32.partialorder %v3733, %v3749
    %vm3766 = vcmp.ge.f32.partialorder %v3734, %v3752
    %vm3767 = vcmp.ge.f32.partialorder %v3735, %v3755
    %vm3768 = vcmp.ge.f32.partialorder %v3736, %v3758
    %vm3769 = vcmp.ge.f32.partialorder %v3737, %v3761
    %v3770 = vsel %vm3762, %v259, 7
    %v3771 = vsel %vm3763, %v259, 7
    %v3772 = vsel %vm3764, %v259, 7
    %v3773 = vsel %vm3765, %v259, 7
    %v3774 = vsel %vm3766, %v259, 7
    %v3775 = vsel %vm3767, %v259, 7
    %v3776 = vsel %vm3768, %v259, 7
    %v3777 = vsel %vm3769, %v259, 7
    %v3778 = vsel %vm2193, %v3770, 2147483647
    %v3779 = vand.u32 %v3778, 65535
    %v3780 = vshra.s32 %v3778, 16
    %v3781 = vcvt.s32.f32 %v3779
    %v3782 = vcvt.s32.f32 %v3780
    %3783 = vmin.xlane.f32.xlu0 %v3782
    %v3784 = vpop.xlane.xlu0 %3783
    %vm3785 = vcmp.eq.f32.partialorder %v3782, %v3784
    %v3786 = vsel %vm3785, %v3781, inf
    %3787 = vmin.xlane.f32.xlu0 %v3786
    %v3788 = vpop.xlane.xlu0 %3787
    %v3789 = vcvt.f32.s32 %v3788
    %v3790 = vcvt.f32.s32 %v3784
    %v3791 = vshll.u32 %v3790, 16
    %v3792 = vadd.s32 %v3791, %v3789
    %v3793 = vsel %vm2193, %v3771, 2147483647
    %v3794 = vand.u32 %v3793, 65535
    %v3795 = vshra.s32 %v3793, 16
    %v3796 = vcvt.s32.f32 %v3794
    %v3797 = vcvt.s32.f32 %v3795
    %3798 = vmin.xlane.f32.xlu0 %v3797
    %v3799 = vpop.xlane.xlu0 %3798
    %vm3800 = vcmp.eq.f32.partialorder %v3797, %v3799
    %v3801 = vsel %vm3800, %v3796, inf
    %3802 = vmin.xlane.f32.xlu0 %v3801
    %v3803 = vpop.xlane.xlu0 %3802
    %v3804 = vcvt.f32.s32 %v3803
    %v3805 = vcvt.f32.s32 %v3799
    %v3806 = vshll.u32 %v3805, 16
    %v3807 = vadd.s32 %v3806, %v3804
    %v3808 = vsel %vm2193, %v3772, 2147483647
    %v3809 = vand.u32 %v3808, 65535
    %v3810 = vshra.s32 %v3808, 16
    %v3811 = vcvt.s32.f32 %v3809
    %v3812 = vcvt.s32.f32 %v3810
    %3813 = vmin.xlane.f32.xlu0 %v3812
    %v3814 = vpop.xlane.xlu0 %3813
    %vm3815 = vcmp.eq.f32.partialorder %v3812, %v3814
    %v3816 = vsel %vm3815, %v3811, inf
    %3817 = vmin.xlane.f32.xlu0 %v3816
    %v3818 = vpop.xlane.xlu0 %3817
    %v3819 = vcvt.f32.s32 %v3818
    %v3820 = vcvt.f32.s32 %v3814
    %v3821 = vshll.u32 %v3820, 16
    %v3822 = vadd.s32 %v3821, %v3819
    %v3823 = vsel %vm2193, %v3773, 2147483647
    %v3824 = vand.u32 %v3823, 65535
    %v3825 = vshra.s32 %v3823, 16
    %v3826 = vcvt.s32.f32 %v3824
    %v3827 = vcvt.s32.f32 %v3825
    %3828 = vmin.xlane.f32.xlu0 %v3827
    %v3829 = vpop.xlane.xlu0 %3828
    %vm3830 = vcmp.eq.f32.partialorder %v3827, %v3829
    %v3831 = vsel %vm3830, %v3826, inf
    %3832 = vmin.xlane.f32.xlu0 %v3831
    %v3833 = vpop.xlane.xlu0 %3832
    %v3834 = vcvt.f32.s32 %v3833
    %v3835 = vcvt.f32.s32 %v3829
    %v3836 = vshll.u32 %v3835, 16
    %v3837 = vadd.s32 %v3836, %v3834
    %v3838 = vsel %vm2193, %v3774, 2147483647
    %v3839 = vand.u32 %v3838, 65535
    %v3840 = vshra.s32 %v3838, 16
    %v3841 = vcvt.s32.f32 %v3839
    %v3842 = vcvt.s32.f32 %v3840
    %3843 = vmin.xlane.f32.xlu0 %v3842
    %v3844 = vpop.xlane.xlu0 %3843
    %vm3845 = vcmp.eq.f32.partialorder %v3842, %v3844
    %v3846 = vsel %vm3845, %v3841, inf
    %3847 = vmin.xlane.f32.xlu0 %v3846
    %v3848 = vpop.xlane.xlu0 %3847
    %v3849 = vcvt.f32.s32 %v3848
    %v3850 = vcvt.f32.s32 %v3844
    %v3851 = vshll.u32 %v3850, 16
    %v3852 = vadd.s32 %v3851, %v3849
    %v3853 = vsel %vm2193, %v3775, 2147483647
    %v3854 = vand.u32 %v3853, 65535
    %v3855 = vshra.s32 %v3853, 16
    %v3856 = vcvt.s32.f32 %v3854
    %v3857 = vcvt.s32.f32 %v3855
    %3858 = vmin.xlane.f32.xlu0 %v3857
    %v3859 = vpop.xlane.xlu0 %3858
    %vm3860 = vcmp.eq.f32.partialorder %v3857, %v3859
    %v3861 = vsel %vm3860, %v3856, inf
    %3862 = vmin.xlane.f32.xlu0 %v3861
    %v3863 = vpop.xlane.xlu0 %3862
    %v3864 = vcvt.f32.s32 %v3863
    %v3865 = vcvt.f32.s32 %v3859
    %v3866 = vshll.u32 %v3865, 16
    %v3867 = vadd.s32 %v3866, %v3864
    %v3868 = vsel %vm2193, %v3776, 2147483647
    %v3869 = vand.u32 %v3868, 65535
    %v3870 = vshra.s32 %v3868, 16
    %v3871 = vcvt.s32.f32 %v3869
    %v3872 = vcvt.s32.f32 %v3870
    %3873 = vmin.xlane.f32.xlu0 %v3872
    %v3874 = vpop.xlane.xlu0 %3873
    %vm3875 = vcmp.eq.f32.partialorder %v3872, %v3874
    %v3876 = vsel %vm3875, %v3871, inf
    %3877 = vmin.xlane.f32.xlu0 %v3876
    %v3878 = vpop.xlane.xlu0 %3877
    %v3879 = vcvt.f32.s32 %v3878
    %v3880 = vcvt.f32.s32 %v3874
    %v3881 = vshll.u32 %v3880, 16
    %v3882 = vadd.s32 %v3881, %v3879
    %v3883 = vsel %vm2193, %v3777, 2147483647
    %v3884 = vand.u32 %v3883, 65535
    %v3885 = vshra.s32 %v3883, 16
    %v3886 = vcvt.s32.f32 %v3884
    %v3887 = vcvt.s32.f32 %v3885
    %3888 = vmin.xlane.f32.xlu0 %v3887
    %v3889 = vpop.xlane.xlu0 %3888
    %vm3890 = vcmp.eq.f32.partialorder %v3887, %v3889
    %v3891 = vsel %vm3890, %v3886, inf
    %3892 = vmin.xlane.f32.xlu0 %v3891
    %v3893 = vpop.xlane.xlu0 %3892
    %v3894 = vcvt.f32.s32 %v3893
    %v3895 = vcvt.f32.s32 %v3889
    %v3896 = vshll.u32 %v3895, 16
    %v3897 = vadd.s32 %v3896, %v3894
    %v3899 = vperm.slane %v2150, 0
    %v3900 = vlaneseq
    %v3901 = vshrl.u32 %v3900, 7
    %3903 = vset.pattern.permute.xlu0 %v3901
    %3904 = vperm.xlu0 %3903, %v3899
    %v3905 = vpop.permute.xlu0 %3904
    %v3906 = vperm.slane %v2150, 1
    %v3907 = vlaneseq
    %v3908 = vshrl.u32 %v3907, 7
    %3910 = vset.pattern.permute.xlu0 %v3908
    %3911 = vperm.xlu0 %3910, %v3906
    %v3912 = vpop.permute.xlu0 %3911
    %v3913 = vperm.slane %v2150, 2
    %v3914 = vlaneseq
    %v3915 = vshrl.u32 %v3914, 7
    %3917 = vset.pattern.permute.xlu0 %v3915
    %3918 = vperm.xlu0 %3917, %v3913
    %v3919 = vpop.permute.xlu0 %3918
    %v3920 = vperm.slane %v2150, 3
    %v3921 = vlaneseq
    %v3922 = vshrl.u32 %v3921, 7
    %3924 = vset.pattern.permute.xlu0 %v3922
    %3925 = vperm.xlu0 %3924, %v3920
    %v3926 = vpop.permute.xlu0 %3925
    %v3927 = vperm.slane %v2150, 4
    %v3928 = vlaneseq
    %v3929 = vshrl.u32 %v3928, 7
    %3931 = vset.pattern.permute.xlu0 %v3929
    %3932 = vperm.xlu0 %3931, %v3927
    %v3933 = vpop.permute.xlu0 %3932
    %v3934 = vperm.slane %v2150, 5
    %v3935 = vlaneseq
    %v3936 = vshrl.u32 %v3935, 7
    %3938 = vset.pattern.permute.xlu0 %v3936
    %3939 = vperm.xlu0 %3938, %v3934
    %v3940 = vpop.permute.xlu0 %3939
    %v3941 = vperm.slane %v2150, 6
    %v3942 = vlaneseq
    %v3943 = vshrl.u32 %v3942, 7
    %3945 = vset.pattern.permute.xlu0 %v3943
    %3946 = vperm.xlu0 %3945, %v3941
    %v3947 = vpop.permute.xlu0 %3946
    %v3948 = vperm.slane %v2150, 7
    %v3949 = vlaneseq
    %v3950 = vshrl.u32 %v3949, 7
    %3952 = vset.pattern.permute.xlu0 %v3950
    %3953 = vperm.xlu0 %3952, %v3948
    %v3954 = vpop.permute.xlu0 %3953
    %v3963 = vadd.f32 %v3740, %v3905
    %v3964 = vadd.f32 %v3743, %v3912
    %v3965 = vadd.f32 %v3746, %v3919
    %v3966 = vadd.f32 %v3749, %v3926
    %v3967 = vadd.f32 %v3752, %v3933
    %v3968 = vadd.f32 %v3755, %v3940
    %v3969 = vadd.f32 %v3758, %v3947
    %v3970 = vadd.f32 %v3761, %v3954
    %s3971 = scalar_lea.vmem %s14, 40
    %v3972 = vld [vmem:[%s3971] sm:$0xff]
    %vm3973 = vcmp.gt.f32.partialorder %v3972, 0.5
    %v3974 = vsel %vm3973, 1, 0
    %3975 = vset.pattern.permute.xlu0 0
    %3976 = vperm.xlu0 %3975, %v3974
    %v3977 = vpop.permute.xlu0 %3976
    %vm3978 = vcmp.eq.s32.totalorder %v3977, 1
    %3987 = vset.pattern.permute.xlu0 0
    %3988 = vperm.xlu0 %3987, %v3963
    %v3989 = vpop.permute.xlu0 %3988
    %3990 = vset.pattern.permute.xlu0 0
    %3991 = vperm.xlu0 %3990, %v3964
    %v3992 = vpop.permute.xlu0 %3991
    %3993 = vset.pattern.permute.xlu0 0
    %3994 = vperm.xlu0 %3993, %v3965
    %v3995 = vpop.permute.xlu0 %3994
    %3996 = vset.pattern.permute.xlu0 0
    %3997 = vperm.xlu0 %3996, %v3966
    %v3998 = vpop.permute.xlu0 %3997
    %3999 = vset.pattern.permute.xlu0 0
    %4000 = vperm.xlu0 %3999, %v3967
    %v4001 = vpop.permute.xlu0 %4000
    %4002 = vset.pattern.permute.xlu0 0
    %4003 = vperm.xlu0 %4002, %v3968
    %v4004 = vpop.permute.xlu0 %4003
    %4005 = vset.pattern.permute.xlu0 0
    %4006 = vperm.xlu0 %4005, %v3969
    %v4007 = vpop.permute.xlu0 %4006
    %4008 = vset.pattern.permute.xlu0 0
    %4009 = vperm.xlu0 %4008, %v3970
    %v4010 = vpop.permute.xlu0 %4009
    %v4011 = vperm.slane %v3989, %v259
    %v4012 = vperm.slane %v3992, %v259
    %v4013 = vperm.slane %v3995, %v259
    %v4014 = vperm.slane %v3998, %v259
    %v4015 = vperm.slane %v4001, %v259
    %v4016 = vperm.slane %v4004, %v259
    %v4017 = vperm.slane %v4007, %v259
    %v4018 = vperm.slane %v4010, %v259
    %v4019 = vsel %vm2338, %v4012, %v4011
    %v4020 = vsel %vm2340, %v4013, %v4019
    %v4021 = vsel %vm2342, %v4014, %v4020
    %v4022 = vsel %vm2344, %v4015, %v4021
    %v4023 = vsel %vm2346, %v4016, %v4022
    %v4024 = vsel %vm2348, %v4017, %v4023
    %v4025 = vsel %vm2350, %v4018, %v4024
    %v4027 = vsel %vm3978, %v4025, %v3689
    %v4028 = vperm.slane %v3792, %v259
    %v4029 = vperm.slane %v3807, %v259
    %v4030 = vperm.slane %v3822, %v259
    %v4031 = vperm.slane %v3837, %v259
    %v4032 = vperm.slane %v3852, %v259
    %v4033 = vperm.slane %v3867, %v259
    %v4034 = vperm.slane %v3882, %v259
    %v4035 = vperm.slane %v3897, %v259
    %v4036 = vsel %vm2338, %v4029, %v4028
    %v4037 = vsel %vm2340, %v4030, %v4036
    %v4038 = vsel %vm2342, %v4031, %v4037
    %v4039 = vsel %vm2344, %v4032, %v4038
    %v4040 = vsel %vm2346, %v4033, %v4039
    %v4041 = vsel %vm2348, %v4034, %v4040
    %v4042 = vsel %vm2350, %v4035, %v4041
    %v4043 = vsel %vm3978, %v4042, %v259
    %v4045 = vrot.slane %v4027, 1
    %v4046 = vrot.slane %v4027, 2
    %v4047 = vrot.slane %v4027, 3
    %v4048 = vrot.slane %v4027, 4
    %v4049 = vrot.slane %v4027, 5
    %v4050 = vrot.slane %v4027, 6
    %v4051 = vrot.slane %v4027, 7
    %v4052 = vperm.slane %v4027, 0
    %v4053 = vperm.slane %v4045, 0
    %v4054 = vperm.slane %v4046, 0
    %v4055 = vperm.slane %v4047, 0
    %v4056 = vperm.slane %v4048, 0
    %v4057 = vperm.slane %v4049, 0
    %v4058 = vperm.slane %v4050, 0
    %v4059 = vperm.slane %v4051, 0
    %v4068 = vadd.f32 %v4052, %v2158
    %v4069 = vadd.f32 %v4053, %v2158
    %v4070 = vadd.f32 %v4054, %v2158
    %v4071 = vadd.f32 %v4055, %v2158
    %v4072 = vadd.f32 %v4056, %v2158
    %v4073 = vadd.f32 %v4057, %v2158
    %v4074 = vadd.f32 %v4058, %v2158
    %v4075 = vadd.f32 %v4059, %v2158
    %v4076 = vsel %vm2193, %v4068, -inf
    %4077 = vmax.xlane.f32.xlu0 %v4076
    %v4078 = vpop.xlane.xlu0 %4077
    %v4079 = vsel %vm2193, %v4069, -inf
    %4080 = vmax.xlane.f32.xlu0 %v4079
    %v4081 = vpop.xlane.xlu0 %4080
    %v4082 = vsel %vm2193, %v4070, -inf
    %4083 = vmax.xlane.f32.xlu0 %v4082
    %v4084 = vpop.xlane.xlu0 %4083
    %v4085 = vsel %vm2193, %v4071, -inf
    %4086 = vmax.xlane.f32.xlu0 %v4085
    %v4087 = vpop.xlane.xlu0 %4086
    %v4088 = vsel %vm2193, %v4072, -inf
    %4089 = vmax.xlane.f32.xlu0 %v4088
    %v4090 = vpop.xlane.xlu0 %4089
    %v4091 = vsel %vm2193, %v4073, -inf
    %4092 = vmax.xlane.f32.xlu0 %v4091
    %v4093 = vpop.xlane.xlu0 %4092
    %v4094 = vsel %vm2193, %v4074, -inf
    %4095 = vmax.xlane.f32.xlu0 %v4094
    %v4096 = vpop.xlane.xlu0 %4095
    %v4097 = vsel %vm2193, %v4075, -inf
    %4098 = vmax.xlane.f32.xlu0 %v4097
    %v4099 = vpop.xlane.xlu0 %4098
    %vm4100 = vcmp.ge.f32.partialorder %v4068, %v4078
    %vm4101 = vcmp.ge.f32.partialorder %v4069, %v4081
    %vm4102 = vcmp.ge.f32.partialorder %v4070, %v4084
    %vm4103 = vcmp.ge.f32.partialorder %v4071, %v4087
    %vm4104 = vcmp.ge.f32.partialorder %v4072, %v4090
    %vm4105 = vcmp.ge.f32.partialorder %v4073, %v4093
    %vm4106 = vcmp.ge.f32.partialorder %v4074, %v4096
    %vm4107 = vcmp.ge.f32.partialorder %v4075, %v4099
    %v4108 = vsel %vm4100, %v259, 7
    %v4109 = vsel %vm4101, %v259, 7
    %v4110 = vsel %vm4102, %v259, 7
    %v4111 = vsel %vm4103, %v259, 7
    %v4112 = vsel %vm4104, %v259, 7
    %v4113 = vsel %vm4105, %v259, 7
    %v4114 = vsel %vm4106, %v259, 7
    %v4115 = vsel %vm4107, %v259, 7
    %v4116 = vsel %vm2193, %v4108, 2147483647
    %v4117 = vand.u32 %v4116, 65535
    %v4118 = vshra.s32 %v4116, 16
    %v4119 = vcvt.s32.f32 %v4117
    %v4120 = vcvt.s32.f32 %v4118
    %4121 = vmin.xlane.f32.xlu0 %v4120
    %v4122 = vpop.xlane.xlu0 %4121
    %vm4123 = vcmp.eq.f32.partialorder %v4120, %v4122
    %v4124 = vsel %vm4123, %v4119, inf
    %4125 = vmin.xlane.f32.xlu0 %v4124
    %v4126 = vpop.xlane.xlu0 %4125
    %v4127 = vcvt.f32.s32 %v4126
    %v4128 = vcvt.f32.s32 %v4122
    %v4129 = vshll.u32 %v4128, 16
    %v4130 = vadd.s32 %v4129, %v4127
    %v4131 = vsel %vm2193, %v4109, 2147483647
    %v4132 = vand.u32 %v4131, 65535
    %v4133 = vshra.s32 %v4131, 16
    %v4134 = vcvt.s32.f32 %v4132
    %v4135 = vcvt.s32.f32 %v4133
    %4136 = vmin.xlane.f32.xlu0 %v4135
    %v4137 = vpop.xlane.xlu0 %4136
    %vm4138 = vcmp.eq.f32.partialorder %v4135, %v4137
    %v4139 = vsel %vm4138, %v4134, inf
    %4140 = vmin.xlane.f32.xlu0 %v4139
    %v4141 = vpop.xlane.xlu0 %4140
    %v4142 = vcvt.f32.s32 %v4141
    %v4143 = vcvt.f32.s32 %v4137
    %v4144 = vshll.u32 %v4143, 16
    %v4145 = vadd.s32 %v4144, %v4142
    %v4146 = vsel %vm2193, %v4110, 2147483647
    %v4147 = vand.u32 %v4146, 65535
    %v4148 = vshra.s32 %v4146, 16
    %v4149 = vcvt.s32.f32 %v4147
    %v4150 = vcvt.s32.f32 %v4148
    %4151 = vmin.xlane.f32.xlu0 %v4150
    %v4152 = vpop.xlane.xlu0 %4151
    %vm4153 = vcmp.eq.f32.partialorder %v4150, %v4152
    %v4154 = vsel %vm4153, %v4149, inf
    %4155 = vmin.xlane.f32.xlu0 %v4154
    %v4156 = vpop.xlane.xlu0 %4155
    %v4157 = vcvt.f32.s32 %v4156
    %v4158 = vcvt.f32.s32 %v4152
    %v4159 = vshll.u32 %v4158, 16
    %v4160 = vadd.s32 %v4159, %v4157
    %v4161 = vsel %vm2193, %v4111, 2147483647
    %v4162 = vand.u32 %v4161, 65535
    %v4163 = vshra.s32 %v4161, 16
    %v4164 = vcvt.s32.f32 %v4162
    %v4165 = vcvt.s32.f32 %v4163
    %4166 = vmin.xlane.f32.xlu0 %v4165
    %v4167 = vpop.xlane.xlu0 %4166
    %vm4168 = vcmp.eq.f32.partialorder %v4165, %v4167
    %v4169 = vsel %vm4168, %v4164, inf
    %4170 = vmin.xlane.f32.xlu0 %v4169
    %v4171 = vpop.xlane.xlu0 %4170
    %v4172 = vcvt.f32.s32 %v4171
    %v4173 = vcvt.f32.s32 %v4167
    %v4174 = vshll.u32 %v4173, 16
    %v4175 = vadd.s32 %v4174, %v4172
    %v4176 = vsel %vm2193, %v4112, 2147483647
    %v4177 = vand.u32 %v4176, 65535
    %v4178 = vshra.s32 %v4176, 16
    %v4179 = vcvt.s32.f32 %v4177
    %v4180 = vcvt.s32.f32 %v4178
    %4181 = vmin.xlane.f32.xlu0 %v4180
    %v4182 = vpop.xlane.xlu0 %4181
    %vm4183 = vcmp.eq.f32.partialorder %v4180, %v4182
    %v4184 = vsel %vm4183, %v4179, inf
    %4185 = vmin.xlane.f32.xlu0 %v4184
    %v4186 = vpop.xlane.xlu0 %4185
    %v4187 = vcvt.f32.s32 %v4186
    %v4188 = vcvt.f32.s32 %v4182
    %v4189 = vshll.u32 %v4188, 16
    %v4190 = vadd.s32 %v4189, %v4187
    %v4191 = vsel %vm2193, %v4113, 2147483647
    %v4192 = vand.u32 %v4191, 65535
    %v4193 = vshra.s32 %v4191, 16
    %v4194 = vcvt.s32.f32 %v4192
    %v4195 = vcvt.s32.f32 %v4193
    %4196 = vmin.xlane.f32.xlu0 %v4195
    %v4197 = vpop.xlane.xlu0 %4196
    %vm4198 = vcmp.eq.f32.partialorder %v4195, %v4197
    %v4199 = vsel %vm4198, %v4194, inf
    %4200 = vmin.xlane.f32.xlu0 %v4199
    %v4201 = vpop.xlane.xlu0 %4200
    %v4202 = vcvt.f32.s32 %v4201
    %v4203 = vcvt.f32.s32 %v4197
    %v4204 = vshll.u32 %v4203, 16
    %v4205 = vadd.s32 %v4204, %v4202
    %v4206 = vsel %vm2193, %v4114, 2147483647
    %v4207 = vand.u32 %v4206, 65535
    %v4208 = vshra.s32 %v4206, 16
    %v4209 = vcvt.s32.f32 %v4207
    %v4210 = vcvt.s32.f32 %v4208
    %4211 = vmin.xlane.f32.xlu0 %v4210
    %v4212 = vpop.xlane.xlu0 %4211
    %vm4213 = vcmp.eq.f32.partialorder %v4210, %v4212
    %v4214 = vsel %vm4213, %v4209, inf
    %4215 = vmin.xlane.f32.xlu0 %v4214
    %v4216 = vpop.xlane.xlu0 %4215
    %v4217 = vcvt.f32.s32 %v4216
    %v4218 = vcvt.f32.s32 %v4212
    %v4219 = vshll.u32 %v4218, 16
    %v4220 = vadd.s32 %v4219, %v4217
    %v4221 = vsel %vm2193, %v4115, 2147483647
    %v4222 = vand.u32 %v4221, 65535
    %v4223 = vshra.s32 %v4221, 16
    %v4224 = vcvt.s32.f32 %v4222
    %v4225 = vcvt.s32.f32 %v4223
    %4226 = vmin.xlane.f32.xlu0 %v4225
    %v4227 = vpop.xlane.xlu0 %4226
    %vm4228 = vcmp.eq.f32.partialorder %v4225, %v4227
    %v4229 = vsel %vm4228, %v4224, inf
    %4230 = vmin.xlane.f32.xlu0 %v4229
    %v4231 = vpop.xlane.xlu0 %4230
    %v4232 = vcvt.f32.s32 %v4231
    %v4233 = vcvt.f32.s32 %v4227
    %v4234 = vshll.u32 %v4233, 16
    %v4235 = vadd.s32 %v4234, %v4232
    %v4237 = vperm.slane %v2153, 0
    %v4238 = vlaneseq
    %v4239 = vshrl.u32 %v4238, 7
    %4241 = vset.pattern.permute.xlu0 %v4239
    %4242 = vperm.xlu0 %4241, %v4237
    %v4243 = vpop.permute.xlu0 %4242
    %v4244 = vperm.slane %v2153, 1
    %v4245 = vlaneseq
    %v4246 = vshrl.u32 %v4245, 7
    %4248 = vset.pattern.permute.xlu0 %v4246
    %4249 = vperm.xlu0 %4248, %v4244
    %v4250 = vpop.permute.xlu0 %4249
    %v4251 = vperm.slane %v2153, 2
    %v4252 = vlaneseq
    %v4253 = vshrl.u32 %v4252, 7
    %4255 = vset.pattern.permute.xlu0 %v4253
    %4256 = vperm.xlu0 %4255, %v4251
    %v4257 = vpop.permute.xlu0 %4256
    %v4258 = vperm.slane %v2153, 3
    %v4259 = vlaneseq
    %v4260 = vshrl.u32 %v4259, 7
    %4262 = vset.pattern.permute.xlu0 %v4260
    %4263 = vperm.xlu0 %4262, %v4258
    %v4264 = vpop.permute.xlu0 %4263
    %v4265 = vperm.slane %v2153, 4
    %v4266 = vlaneseq
    %v4267 = vshrl.u32 %v4266, 7
    %4269 = vset.pattern.permute.xlu0 %v4267
    %4270 = vperm.xlu0 %4269, %v4265
    %v4271 = vpop.permute.xlu0 %4270
    %v4272 = vperm.slane %v2153, 5
    %v4273 = vlaneseq
    %v4274 = vshrl.u32 %v4273, 7
    %4276 = vset.pattern.permute.xlu0 %v4274
    %4277 = vperm.xlu0 %4276, %v4272
    %v4278 = vpop.permute.xlu0 %4277
    %v4279 = vperm.slane %v2153, 6
    %v4280 = vlaneseq
    %v4281 = vshrl.u32 %v4280, 7
    %4283 = vset.pattern.permute.xlu0 %v4281
    %4284 = vperm.xlu0 %4283, %v4279
    %v4285 = vpop.permute.xlu0 %4284
    %v4286 = vperm.slane %v2153, 7
    %v4287 = vlaneseq
    %v4288 = vshrl.u32 %v4287, 7
    %4290 = vset.pattern.permute.xlu0 %v4288
    %4291 = vperm.xlu0 %4290, %v4286
    %v4292 = vpop.permute.xlu0 %4291
    %v4301 = vadd.f32 %v4078, %v4243
    %v4302 = vadd.f32 %v4081, %v4250
    %v4303 = vadd.f32 %v4084, %v4257
    %v4304 = vadd.f32 %v4087, %v4264
    %v4305 = vadd.f32 %v4090, %v4271
    %v4306 = vadd.f32 %v4093, %v4278
    %v4307 = vadd.f32 %v4096, %v4285
    %v4308 = vadd.f32 %v4099, %v4292
    %s4309 = scalar_lea.vmem %s14, 48
    %v4310 = vld [vmem:[%s4309] sm:$0xff]
    %vm4311 = vcmp.gt.f32.partialorder %v4310, 0.5
    %v4312 = vsel %vm4311, 1, 0
    %4313 = vset.pattern.permute.xlu0 0
    %4314 = vperm.xlu0 %4313, %v4312
    %v4315 = vpop.permute.xlu0 %4314
    %vm4316 = vcmp.eq.s32.totalorder %v4315, 1
    %4325 = vset.pattern.permute.xlu0 0
    %4326 = vperm.xlu0 %4325, %v4301
    %v4327 = vpop.permute.xlu0 %4326
    %4328 = vset.pattern.permute.xlu0 0
    %4329 = vperm.xlu0 %4328, %v4302
    %v4330 = vpop.permute.xlu0 %4329
    %4331 = vset.pattern.permute.xlu0 0
    %4332 = vperm.xlu0 %4331, %v4303
    %v4333 = vpop.permute.xlu0 %4332
    %4334 = vset.pattern.permute.xlu0 0
    %4335 = vperm.xlu0 %4334, %v4304
    %v4336 = vpop.permute.xlu0 %4335
    %4337 = vset.pattern.permute.xlu0 0
    %4338 = vperm.xlu0 %4337, %v4305
    %v4339 = vpop.permute.xlu0 %4338
    %4340 = vset.pattern.permute.xlu0 0
    %4341 = vperm.xlu0 %4340, %v4306
    %v4342 = vpop.permute.xlu0 %4341
    %4343 = vset.pattern.permute.xlu0 0
    %4344 = vperm.xlu0 %4343, %v4307
    %v4345 = vpop.permute.xlu0 %4344
    %4346 = vset.pattern.permute.xlu0 0
    %4347 = vperm.xlu0 %4346, %v4308
    %v4348 = vpop.permute.xlu0 %4347
    %v4349 = vperm.slane %v4327, %v259
    %v4350 = vperm.slane %v4330, %v259
    %v4351 = vperm.slane %v4333, %v259
    %v4352 = vperm.slane %v4336, %v259
    %v4353 = vperm.slane %v4339, %v259
    %v4354 = vperm.slane %v4342, %v259
    %v4355 = vperm.slane %v4345, %v259
    %v4356 = vperm.slane %v4348, %v259
    %v4357 = vsel %vm2338, %v4350, %v4349
    %v4358 = vsel %vm2340, %v4351, %v4357
    %v4359 = vsel %vm2342, %v4352, %v4358
    %v4360 = vsel %vm2344, %v4353, %v4359
    %v4361 = vsel %vm2346, %v4354, %v4360
    %v4362 = vsel %vm2348, %v4355, %v4361
    %v4363 = vsel %vm2350, %v4356, %v4362
    %v4365 = vsel %vm4316, %v4363, %v4027
    %v4366 = vperm.slane %v4130, %v259
    %v4367 = vperm.slane %v4145, %v259
    %v4368 = vperm.slane %v4160, %v259
    %v4369 = vperm.slane %v4175, %v259
    %v4370 = vperm.slane %v4190, %v259
    %v4371 = vperm.slane %v4205, %v259
    %v4372 = vperm.slane %v4220, %v259
    %v4373 = vperm.slane %v4235, %v259
    %v4374 = vsel %vm2338, %v4367, %v4366
    %v4375 = vsel %vm2340, %v4368, %v4374
    %v4376 = vsel %vm2342, %v4369, %v4375
    %v4377 = vsel %vm2344, %v4370, %v4376
    %v4378 = vsel %vm2346, %v4371, %v4377
    %v4379 = vsel %vm2348, %v4372, %v4378
    %v4380 = vsel %vm2350, %v4373, %v4379
    %v4381 = vsel %vm4316, %v4380, %v259
    %v4383 = vrot.slane %v4365, 1
    %v4384 = vrot.slane %v4365, 2
    %v4385 = vrot.slane %v4365, 3
    %v4386 = vrot.slane %v4365, 4
    %v4387 = vrot.slane %v4365, 5
    %v4388 = vrot.slane %v4365, 6
    %v4389 = vrot.slane %v4365, 7
    %v4390 = vperm.slane %v4365, 0
    %v4391 = vperm.slane %v4383, 0
    %v4392 = vperm.slane %v4384, 0
    %v4393 = vperm.slane %v4385, 0
    %v4394 = vperm.slane %v4386, 0
    %v4395 = vperm.slane %v4387, 0
    %v4396 = vperm.slane %v4388, 0
    %v4397 = vperm.slane %v4389, 0
    %v4406 = vadd.f32 %v4390, %v2158
    %v4407 = vadd.f32 %v4391, %v2158
    %v4408 = vadd.f32 %v4392, %v2158
    %v4409 = vadd.f32 %v4393, %v2158
    %v4410 = vadd.f32 %v4394, %v2158
    %v4411 = vadd.f32 %v4395, %v2158
    %v4412 = vadd.f32 %v4396, %v2158
    %v4413 = vadd.f32 %v4397, %v2158
    %v4414 = vsel %vm2193, %v4406, -inf
    %4415 = vmax.xlane.f32.xlu0 %v4414
    %v4416 = vpop.xlane.xlu0 %4415
    %v4417 = vsel %vm2193, %v4407, -inf
    %4418 = vmax.xlane.f32.xlu0 %v4417
    %v4419 = vpop.xlane.xlu0 %4418
    %v4420 = vsel %vm2193, %v4408, -inf
    %4421 = vmax.xlane.f32.xlu0 %v4420
    %v4422 = vpop.xlane.xlu0 %4421
    %v4423 = vsel %vm2193, %v4409, -inf
    %4424 = vmax.xlane.f32.xlu0 %v4423
    %v4425 = vpop.xlane.xlu0 %4424
    %v4426 = vsel %vm2193, %v4410, -inf
    %4427 = vmax.xlane.f32.xlu0 %v4426
    %v4428 = vpop.xlane.xlu0 %4427
    %v4429 = vsel %vm2193, %v4411, -inf
    %4430 = vmax.xlane.f32.xlu0 %v4429
    %v4431 = vpop.xlane.xlu0 %4430
    %v4432 = vsel %vm2193, %v4412, -inf
    %4433 = vmax.xlane.f32.xlu0 %v4432
    %v4434 = vpop.xlane.xlu0 %4433
    %v4435 = vsel %vm2193, %v4413, -inf
    %4436 = vmax.xlane.f32.xlu0 %v4435
    %v4437 = vpop.xlane.xlu0 %4436
    %vm4438 = vcmp.ge.f32.partialorder %v4406, %v4416
    %vm4439 = vcmp.ge.f32.partialorder %v4407, %v4419
    %vm4440 = vcmp.ge.f32.partialorder %v4408, %v4422
    %vm4441 = vcmp.ge.f32.partialorder %v4409, %v4425
    %vm4442 = vcmp.ge.f32.partialorder %v4410, %v4428
    %vm4443 = vcmp.ge.f32.partialorder %v4411, %v4431
    %vm4444 = vcmp.ge.f32.partialorder %v4412, %v4434
    %vm4445 = vcmp.ge.f32.partialorder %v4413, %v4437
    %v4446 = vsel %vm4438, %v259, 7
    %v4447 = vsel %vm4439, %v259, 7
    %v4448 = vsel %vm4440, %v259, 7
    %v4449 = vsel %vm4441, %v259, 7
    %v4450 = vsel %vm4442, %v259, 7
    %v4451 = vsel %vm4443, %v259, 7
    %v4452 = vsel %vm4444, %v259, 7
    %v4453 = vsel %vm4445, %v259, 7
    %v4454 = vsel %vm2193, %v4446, 2147483647
    %v4455 = vand.u32 %v4454, 65535
    %v4456 = vshra.s32 %v4454, 16
    %v4457 = vcvt.s32.f32 %v4455
    %v4458 = vcvt.s32.f32 %v4456
    %4459 = vmin.xlane.f32.xlu0 %v4458
    %v4460 = vpop.xlane.xlu0 %4459
    %vm4461 = vcmp.eq.f32.partialorder %v4458, %v4460
    %v4462 = vsel %vm4461, %v4457, inf
    %4463 = vmin.xlane.f32.xlu0 %v4462
    %v4464 = vpop.xlane.xlu0 %4463
    %v4465 = vcvt.f32.s32 %v4464
    %v4466 = vcvt.f32.s32 %v4460
    %v4467 = vshll.u32 %v4466, 16
    %v4468 = vadd.s32 %v4467, %v4465
    %v4469 = vsel %vm2193, %v4447, 2147483647
    %v4470 = vand.u32 %v4469, 65535
    %v4471 = vshra.s32 %v4469, 16
    %v4472 = vcvt.s32.f32 %v4470
    %v4473 = vcvt.s32.f32 %v4471
    %4474 = vmin.xlane.f32.xlu0 %v4473
    %v4475 = vpop.xlane.xlu0 %4474
    %vm4476 = vcmp.eq.f32.partialorder %v4473, %v4475
    %v4477 = vsel %vm4476, %v4472, inf
    %4478 = vmin.xlane.f32.xlu0 %v4477
    %v4479 = vpop.xlane.xlu0 %4478
    %v4480 = vcvt.f32.s32 %v4479
    %v4481 = vcvt.f32.s32 %v4475
    %v4482 = vshll.u32 %v4481, 16
    %v4483 = vadd.s32 %v4482, %v4480
    %v4484 = vsel %vm2193, %v4448, 2147483647
    %v4485 = vand.u32 %v4484, 65535
    %v4486 = vshra.s32 %v4484, 16
    %v4487 = vcvt.s32.f32 %v4485
    %v4488 = vcvt.s32.f32 %v4486
    %4489 = vmin.xlane.f32.xlu0 %v4488
    %v4490 = vpop.xlane.xlu0 %4489
    %vm4491 = vcmp.eq.f32.partialorder %v4488, %v4490
    %v4492 = vsel %vm4491, %v4487, inf
    %4493 = vmin.xlane.f32.xlu0 %v4492
    %v4494 = vpop.xlane.xlu0 %4493
    %v4495 = vcvt.f32.s32 %v4494
    %v4496 = vcvt.f32.s32 %v4490
    %v4497 = vshll.u32 %v4496, 16
    %v4498 = vadd.s32 %v4497, %v4495
    %v4499 = vsel %vm2193, %v4449, 2147483647
    %v4500 = vand.u32 %v4499, 65535
    %v4501 = vshra.s32 %v4499, 16
    %v4502 = vcvt.s32.f32 %v4500
    %v4503 = vcvt.s32.f32 %v4501
    %4504 = vmin.xlane.f32.xlu0 %v4503
    %v4505 = vpop.xlane.xlu0 %4504
    %vm4506 = vcmp.eq.f32.partialorder %v4503, %v4505
    %v4507 = vsel %vm4506, %v4502, inf
    %4508 = vmin.xlane.f32.xlu0 %v4507
    %v4509 = vpop.xlane.xlu0 %4508
    %v4510 = vcvt.f32.s32 %v4509
    %v4511 = vcvt.f32.s32 %v4505
    %v4512 = vshll.u32 %v4511, 16
    %v4513 = vadd.s32 %v4512, %v4510
    %v4514 = vsel %vm2193, %v4450, 2147483647
    %v4515 = vand.u32 %v4514, 65535
    %v4516 = vshra.s32 %v4514, 16
    %v4517 = vcvt.s32.f32 %v4515
    %v4518 = vcvt.s32.f32 %v4516
    %4519 = vmin.xlane.f32.xlu0 %v4518
    %v4520 = vpop.xlane.xlu0 %4519
    %vm4521 = vcmp.eq.f32.partialorder %v4518, %v4520
    %v4522 = vsel %vm4521, %v4517, inf
    %4523 = vmin.xlane.f32.xlu0 %v4522
    %v4524 = vpop.xlane.xlu0 %4523
    %v4525 = vcvt.f32.s32 %v4524
    %v4526 = vcvt.f32.s32 %v4520
    %v4527 = vshll.u32 %v4526, 16
    %v4528 = vadd.s32 %v4527, %v4525
    %v4529 = vsel %vm2193, %v4451, 2147483647
    %v4530 = vand.u32 %v4529, 65535
    %v4531 = vshra.s32 %v4529, 16
    %v4532 = vcvt.s32.f32 %v4530
    %v4533 = vcvt.s32.f32 %v4531
    %4534 = vmin.xlane.f32.xlu0 %v4533
    %v4535 = vpop.xlane.xlu0 %4534
    %vm4536 = vcmp.eq.f32.partialorder %v4533, %v4535
    %v4537 = vsel %vm4536, %v4532, inf
    %4538 = vmin.xlane.f32.xlu0 %v4537
    %v4539 = vpop.xlane.xlu0 %4538
    %v4540 = vcvt.f32.s32 %v4539
    %v4541 = vcvt.f32.s32 %v4535
    %v4542 = vshll.u32 %v4541, 16
    %v4543 = vadd.s32 %v4542, %v4540
    %v4544 = vsel %vm2193, %v4452, 2147483647
    %v4545 = vand.u32 %v4544, 65535
    %v4546 = vshra.s32 %v4544, 16
    %v4547 = vcvt.s32.f32 %v4545
    %v4548 = vcvt.s32.f32 %v4546
    %4549 = vmin.xlane.f32.xlu0 %v4548
    %v4550 = vpop.xlane.xlu0 %4549
    %vm4551 = vcmp.eq.f32.partialorder %v4548, %v4550
    %v4552 = vsel %vm4551, %v4547, inf
    %4553 = vmin.xlane.f32.xlu0 %v4552
    %v4554 = vpop.xlane.xlu0 %4553
    %v4555 = vcvt.f32.s32 %v4554
    %v4556 = vcvt.f32.s32 %v4550
    %v4557 = vshll.u32 %v4556, 16
    %v4558 = vadd.s32 %v4557, %v4555
    %v4559 = vsel %vm2193, %v4453, 2147483647
    %v4560 = vand.u32 %v4559, 65535
    %v4561 = vshra.s32 %v4559, 16
    %v4562 = vcvt.s32.f32 %v4560
    %v4563 = vcvt.s32.f32 %v4561
    %4564 = vmin.xlane.f32.xlu0 %v4563
    %v4565 = vpop.xlane.xlu0 %4564
    %vm4566 = vcmp.eq.f32.partialorder %v4563, %v4565
    %v4567 = vsel %vm4566, %v4562, inf
    %4568 = vmin.xlane.f32.xlu0 %v4567
    %v4569 = vpop.xlane.xlu0 %4568
    %v4570 = vcvt.f32.s32 %v4569
    %v4571 = vcvt.f32.s32 %v4565
    %v4572 = vshll.u32 %v4571, 16
    %v4573 = vadd.s32 %v4572, %v4570
    %v4575 = vperm.slane %v2156, 0
    %v4576 = vlaneseq
    %v4577 = vshrl.u32 %v4576, 7
    %4579 = vset.pattern.permute.xlu0 %v4577
    %4580 = vperm.xlu0 %4579, %v4575
    %v4581 = vpop.permute.xlu0 %4580
    %v4582 = vperm.slane %v2156, 1
    %v4583 = vlaneseq
    %v4584 = vshrl.u32 %v4583, 7
    %4586 = vset.pattern.permute.xlu0 %v4584
    %4587 = vperm.xlu0 %4586, %v4582
    %v4588 = vpop.permute.xlu0 %4587
    %v4589 = vperm.slane %v2156, 2
    %v4590 = vlaneseq
    %v4591 = vshrl.u32 %v4590, 7
    %4593 = vset.pattern.permute.xlu0 %v4591
    %4594 = vperm.xlu0 %4593, %v4589
    %v4595 = vpop.permute.xlu0 %4594
    %v4596 = vperm.slane %v2156, 3
    %v4597 = vlaneseq
    %v4598 = vshrl.u32 %v4597, 7
    %4600 = vset.pattern.permute.xlu0 %v4598
    %4601 = vperm.xlu0 %4600, %v4596
    %v4602 = vpop.permute.xlu0 %4601
    %v4603 = vperm.slane %v2156, 4
    %v4604 = vlaneseq
    %v4605 = vshrl.u32 %v4604, 7
    %4607 = vset.pattern.permute.xlu0 %v4605
    %4608 = vperm.xlu0 %4607, %v4603
    %v4609 = vpop.permute.xlu0 %4608
    %v4610 = vperm.slane %v2156, 5
    %v4611 = vlaneseq
    %v4612 = vshrl.u32 %v4611, 7
    %4614 = vset.pattern.permute.xlu0 %v4612
    %4615 = vperm.xlu0 %4614, %v4610
    %v4616 = vpop.permute.xlu0 %4615
    %v4617 = vperm.slane %v2156, 6
    %v4618 = vlaneseq
    %v4619 = vshrl.u32 %v4618, 7
    %4621 = vset.pattern.permute.xlu0 %v4619
    %4622 = vperm.xlu0 %4621, %v4617
    %v4623 = vpop.permute.xlu0 %4622
    %v4624 = vperm.slane %v2156, 7
    %v4625 = vlaneseq
    %v4626 = vshrl.u32 %v4625, 7
    %4628 = vset.pattern.permute.xlu0 %v4626
    %4629 = vperm.xlu0 %4628, %v4624
    %v4630 = vpop.permute.xlu0 %4629
    %v4639 = vadd.f32 %v4416, %v4581
    %v4640 = vadd.f32 %v4419, %v4588
    %v4641 = vadd.f32 %v4422, %v4595
    %v4642 = vadd.f32 %v4425, %v4602
    %v4643 = vadd.f32 %v4428, %v4609
    %v4644 = vadd.f32 %v4431, %v4616
    %v4645 = vadd.f32 %v4434, %v4623
    %v4646 = vadd.f32 %v4437, %v4630
    %s4647 = scalar_lea.vmem %s14, 56
    %v4648 = vld [vmem:[%s4647] sm:$0xff]
    %vm4649 = vcmp.gt.f32.partialorder %v4648, 0.5
    %v4650 = vsel %vm4649, 1, 0
    %4651 = vset.pattern.permute.xlu0 0
    %4652 = vperm.xlu0 %4651, %v4650
    %v4653 = vpop.permute.xlu0 %4652
    %vm4654 = vcmp.eq.s32.totalorder %v4653, 1
    %4663 = vset.pattern.permute.xlu0 0
    %4664 = vperm.xlu0 %4663, %v4639
    %v4665 = vpop.permute.xlu0 %4664
    %4666 = vset.pattern.permute.xlu0 0
    %4667 = vperm.xlu0 %4666, %v4640
    %v4668 = vpop.permute.xlu0 %4667
    %4669 = vset.pattern.permute.xlu0 0
    %4670 = vperm.xlu0 %4669, %v4641
    %v4671 = vpop.permute.xlu0 %4670
    %4672 = vset.pattern.permute.xlu0 0
    %4673 = vperm.xlu0 %4672, %v4642
    %v4674 = vpop.permute.xlu0 %4673
    %4675 = vset.pattern.permute.xlu0 0
    %4676 = vperm.xlu0 %4675, %v4643
    %v4677 = vpop.permute.xlu0 %4676
    %4678 = vset.pattern.permute.xlu0 0
    %4679 = vperm.xlu0 %4678, %v4644
    %v4680 = vpop.permute.xlu0 %4679
    %4681 = vset.pattern.permute.xlu0 0
    %4682 = vperm.xlu0 %4681, %v4645
    %v4683 = vpop.permute.xlu0 %4682
    %4684 = vset.pattern.permute.xlu0 0
    %4685 = vperm.xlu0 %4684, %v4646
    %v4686 = vpop.permute.xlu0 %4685
    %v4687 = vperm.slane %v4665, %v259
    %v4688 = vperm.slane %v4668, %v259
    %v4689 = vperm.slane %v4671, %v259
    %v4690 = vperm.slane %v4674, %v259
    %v4691 = vperm.slane %v4677, %v259
    %v4692 = vperm.slane %v4680, %v259
    %v4693 = vperm.slane %v4683, %v259
    %v4694 = vperm.slane %v4686, %v259
    %v4695 = vsel %vm2338, %v4688, %v4687
    %v4696 = vsel %vm2340, %v4689, %v4695
    %v4697 = vsel %vm2342, %v4690, %v4696
    %v4698 = vsel %vm2344, %v4691, %v4697
    %v4699 = vsel %vm2346, %v4692, %v4698
    %v4700 = vsel %vm2348, %v4693, %v4699
    %v4701 = vsel %vm2350, %v4694, %v4700
    %v4703 = vsel %vm4654, %v4701, %v4365
    %v4704 = vperm.slane %v4468, %v259
    %v4705 = vperm.slane %v4483, %v259
    %v4706 = vperm.slane %v4498, %v259
    %v4707 = vperm.slane %v4513, %v259
    %v4708 = vperm.slane %v4528, %v259
    %v4709 = vperm.slane %v4543, %v259
    %v4710 = vperm.slane %v4558, %v259
    %v4711 = vperm.slane %v4573, %v259
    %v4712 = vsel %vm2338, %v4705, %v4704
    %v4713 = vsel %vm2340, %v4706, %v4712
    %v4714 = vsel %vm2342, %v4707, %v4713
    %v4715 = vsel %vm2344, %v4708, %v4714
    %v4716 = vsel %vm2346, %v4709, %v4715
    %v4717 = vsel %vm2348, %v4710, %v4716
    %v4718 = vsel %vm2350, %v4711, %v4717
    %v4719 = vsel %vm4654, %v4718, %v259
    %v4720 = vperm.slane %v2158, 6
    %v4721 = vadd.f32 %v4703, %v4720
    %vm4722 = vcmask 56320
    %v4723 = vsel %vm4722, %v4721, -inf
    %4724 = vmax.xlane.f32.xlu0 %v4723
    %v4725 = vpop.xlane.xlu0 %4724
    %vm4726 = vcmask 7168
    %4727 = vst.msk [vmem:[%s15] sm:$0xff] %vm4726, %v4725
    %vm4728 = vcmp.ge.f32.partialorder %v4721, %v4725
    %v4729 = vsel %vm4728, %v259, 7
    %v4730 = vsel %vm4722, %v4729, 2147483647
    %v4731 = vand.u32 %v4730, 65535
    %v4732 = vshra.s32 %v4730, 16
    %v4733 = vcvt.s32.f32 %v4731
    %v4734 = vcvt.s32.f32 %v4732
    %4735 = vmin.xlane.f32.xlu0 %v4734
    %v4736 = vpop.xlane.xlu0 %4735
    %vm4737 = vcmp.eq.f32.partialorder %v4734, %v4736
    %v4738 = vsel %vm4737, %v4733, inf
    %4739 = vmin.xlane.f32.xlu0 %v4738
    %v4740 = vpop.xlane.xlu0 %4739
    %v4741 = vcvt.f32.s32 %v4740
    %v4742 = vcvt.f32.s32 %v4736
    %v4743 = vshll.u32 %v4742, 16
    %v4744 = vadd.s32 %v4743, %v4741
    %vm4745 = vcmp.eq.s32.totalorder %v259, %v4744
    %v4746 = vsel %vm4745, %v4719, 0
    %v4747 = vsel %vm4722, %v4746, 0
    %v4748 = vand.u32 %v4747, 65535
    %v4749 = vshrl.u32 %v4747, 16
    %v4750 = vcvt.s32.f32 %v4748
    %v4751 = vcvt.s32.f32 %v4749
    %4752 = vadd.xlane.f32.xlu0 %v4750
    %v4753 = vpop.xlane.xlu0 %4752
    %4754 = vadd.xlane.f32.xlu0 %v4751
    %v4755 = vpop.xlane.xlu0 %4754
    %v4756 = vcvt.f32.s32 %v4753
    %v4757 = vcvt.f32.s32 %v4755
    %v4758 = vshll.u32 %v4757, 16
    %v4759 = vadd.s32 %v4758, %v4756
    %vm4760 = vcmp.eq.s32.totalorder %v259, %v4759
    %v4761 = vsel %vm4760, %v4381, 0
    %v4762 = vsel %vm4722, %v4761, 0
    %v4763 = vand.u32 %v4762, 65535
    %v4764 = vshrl.u32 %v4762, 16
    %v4765 = vcvt.s32.f32 %v4763
    %v4766 = vcvt.s32.f32 %v4764
    %4767 = vadd.xlane.f32.xlu0 %v4765
    %v4768 = vpop.xlane.xlu0 %4767
    %4769 = vadd.xlane.f32.xlu0 %v4766
    %v4770 = vpop.xlane.xlu0 %4769
    %v4771 = vcvt.f32.s32 %v4768
    %v4772 = vcvt.f32.s32 %v4770
    %v4773 = vshll.u32 %v4772, 16
    %v4774 = vadd.s32 %v4773, %v4771
    %vm4775 = vcmp.eq.s32.totalorder %v259, %v4774
    %v4776 = vsel %vm4775, %v4043, 0
    %v4777 = vsel %vm4722, %v4776, 0
    %v4778 = vand.u32 %v4777, 65535
    %v4779 = vshrl.u32 %v4777, 16
    %v4780 = vcvt.s32.f32 %v4778
    %v4781 = vcvt.s32.f32 %v4779
    %4782 = vadd.xlane.f32.xlu0 %v4780
    %v4783 = vpop.xlane.xlu0 %4782
    %4784 = vadd.xlane.f32.xlu0 %v4781
    %v4785 = vpop.xlane.xlu0 %4784
    %v4786 = vcvt.f32.s32 %v4783
    %v4787 = vcvt.f32.s32 %v4785
    %v4788 = vshll.u32 %v4787, 16
    %v4789 = vadd.s32 %v4788, %v4786
    %vm4790 = vcmp.eq.s32.totalorder %v259, %v4789
    %v4791 = vsel %vm4790, %v3705, 0
    %v4792 = vsel %vm4722, %v4791, 0
    %v4793 = vand.u32 %v4792, 65535
    %v4794 = vshrl.u32 %v4792, 16
    %v4795 = vcvt.s32.f32 %v4793
    %v4796 = vcvt.s32.f32 %v4794
    %4797 = vadd.xlane.f32.xlu0 %v4795
    %v4798 = vpop.xlane.xlu0 %4797
    %4799 = vadd.xlane.f32.xlu0 %v4796
    %v4800 = vpop.xlane.xlu0 %4799
    %v4801 = vcvt.f32.s32 %v4798
    %v4802 = vcvt.f32.s32 %v4800
    %v4803 = vshll.u32 %v4802, 16
    %v4804 = vadd.s32 %v4803, %v4801
    %vm4805 = vcmp.eq.s32.totalorder %v259, %v4804
    %v4806 = vsel %vm4805, %v3367, 0
    %v4807 = vsel %vm4722, %v4806, 0
    %v4808 = vand.u32 %v4807, 65535
    %v4809 = vshrl.u32 %v4807, 16
    %v4810 = vcvt.s32.f32 %v4808
    %v4811 = vcvt.s32.f32 %v4809
    %4812 = vadd.xlane.f32.xlu0 %v4810
    %v4813 = vpop.xlane.xlu0 %4812
    %4814 = vadd.xlane.f32.xlu0 %v4811
    %v4815 = vpop.xlane.xlu0 %4814
    %v4816 = vcvt.f32.s32 %v4813
    %v4817 = vcvt.f32.s32 %v4815
    %v4818 = vshll.u32 %v4817, 16
    %v4819 = vadd.s32 %v4818, %v4816
    %vm4820 = vcmp.eq.s32.totalorder %v259, %v4819
    %v4821 = vsel %vm4820, %v3029, 0
    %v4822 = vsel %vm4722, %v4821, 0
    %v4823 = vand.u32 %v4822, 65535
    %v4824 = vshrl.u32 %v4822, 16
    %v4825 = vcvt.s32.f32 %v4823
    %v4826 = vcvt.s32.f32 %v4824
    %4827 = vadd.xlane.f32.xlu0 %v4825
    %v4828 = vpop.xlane.xlu0 %4827
    %4829 = vadd.xlane.f32.xlu0 %v4826
    %v4830 = vpop.xlane.xlu0 %4829
    %v4831 = vcvt.f32.s32 %v4828
    %v4832 = vcvt.f32.s32 %v4830
    %v4833 = vshll.u32 %v4832, 16
    %v4834 = vadd.s32 %v4833, %v4831
    %vm4835 = vcmp.eq.s32.totalorder %v259, %v4834
    %v4836 = vsel %vm4835, %v2691, 0
    %v4837 = vsel %vm4722, %v4836, 0
    %v4838 = vand.u32 %v4837, 65535
    %v4839 = vshrl.u32 %v4837, 16
    %v4840 = vcvt.s32.f32 %v4838
    %v4841 = vcvt.s32.f32 %v4839
    %4842 = vadd.xlane.f32.xlu0 %v4840
    %v4843 = vpop.xlane.xlu0 %4842
    %4844 = vadd.xlane.f32.xlu0 %v4841
    %v4845 = vpop.xlane.xlu0 %4844
    %v4846 = vcvt.f32.s32 %v4843
    %v4847 = vcvt.f32.s32 %v4845
    %v4848 = vshll.u32 %v4847, 16
    %v4849 = vadd.s32 %v4848, %v4846
    %v4850 = vsel %vm4726, %v4849, %v4834
    %vm4851 = vcmask 15360
    %v4852 = vsel %vm4851, %v4850, %v4819
    %vm4853 = vcmask 23552
    %v4854 = vsel %vm4853, %v4852, %v4804
    %vm4855 = vcmask 31744
    %v4856 = vsel %vm4855, %v4854, %v4789
    %vm4857 = vcmask 39936
    %v4858 = vsel %vm4857, %v4856, %v4774
    %vm4859 = vcmask 48128
    %v4860 = vsel %vm4859, %v4858, %v4759
    %v4861 = vsel %vm4722, %v4860, %v4744
    %vm4862 = vcmask 64512
    %4863 = vst.msk [vmem:[#allocation18] sm:$0xff] %vm4862, %v4861
    // Predicated region
    $region94: #{tpu_custom_call.1} parent=1 // pred_check
      _
    $region95: #{tpu_custom_call.1} parent=1 // pred_check_branch
      %4865 = sbr.rel (0) target = $region97
    $region96: #{tpu_custom_call.1} parent=1 // pred_region
      _
    $region97: #{tpu_custom_call.1} parent=1 // pred_fallthru
      _
    // Predicated region
    $region98: #{tpu_custom_call.1} parent=1 // pred_check
      _
    $region99: #{tpu_custom_call.1} parent=1 // pred_check_branch
      %4867 = sbr.rel (0) target = $region101
    $region100: #{tpu_custom_call.1} parent=1 // pred_region
      %4869 = vsyncadd [#allocation6], 0
      %s4871 = sshll.u32 [#allocation18], 4
      %s4872 = int_to_ptr.vmem [resolvable:$true] %s4871
      %s4873 = sshll.u32 %s16, 4
      %s4874 = int_to_ptr.hbm [resolvable:$true] %s4873
      %4876 = dma.vmem_to_hbm [thread:$0]  %s4872, 128, %s4874, [#allocation6]
    $region101: #{tpu_custom_call.1} parent=1 // pred_fallthru
      _
    // Predicated region
    $region102: #{tpu_custom_call.1} parent=1 // pred_check
      _
    $region103: #{tpu_custom_call.1} parent=1 // pred_check_branch
      %4878 = sbr.rel (0) target = $region105
    $region104: #{tpu_custom_call.1} parent=1 // pred_region
      _
    $region105: #{tpu_custom_call.1} parent=1 // pred_fallthru
      _
    // Predicated region
    $region106: #{tpu_custom_call.1} parent=1 // pred_check
      _
    $region107: #{tpu_custom_call.1} parent=1 // pred_check_branch
      %4880 = sbr.rel (0) target = $region109
    $region108: #{tpu_custom_call.1} parent=1 // pred_region
      %4882 = dma.done [#allocation6], 128
    $region109: #{tpu_custom_call.1} parent=1 // pred_fallthru
      _
    %4883 = vsyncpa [#allocation5], 1
    %4884 = vsyncpa [#allocation8], 1
    %4885 = vsyncpa [#allocation11], 1
    %4886 = vsyncpa [#allocation14], 1
    %4887 = vsyncpa [#allocation17], 1
    %4888 = vsyncpa [#allocation6], 1

</llo_original>
